<compile_context>
chip_gen: v7x
topology: tpu7x:2x2x1
jax: 0.10.0
libtpu: 0.0.40
codegen_flags: <defaults>
</compile_context>

<pallas_src>
import math

import jax
import jax.numpy as jnp
from jax.experimental import pallas as pl
from jax.experimental.pallas import tpu as pltpu

HIDDEN = 1024
MAX_ROW_TILE = 128        # MXU-friendly tile height for large N
K_TILE = 1024             # fc1 reduction chunk when w1 is too big to hold whole
RESIDENT_K_LIMIT = 2048   # keep w1 as one block (resident) if padded K <= this


def _round_up(x, m):
    return (x + m - 1) // m * m


def _k_tiling(d):
    """Return (d_pad, tk): padded fc1 input size and per-step K chunk."""
    d128 = _round_up(d, 128)
    if d128 <= RESIDENT_K_LIMIT:
        return d128, d128                    # single K step, w1 resident in VMEM
    return _round_up(d, K_TILE), K_TILE      # stream w1 in K_TILE-wide chunks


def roi_head_kernel(x_ref, w1_ref, b1_ref, w2_ref, b2_ref, wh_ref, bh_ref,
                    out_ref, acc_ref):
    # x:   (row_tile, tk)        bf16   streams over rows and K
    # w1:  (tk, 1024)            bf16   streams over K (resident if one K step)
    # w2:  (1024, 1024)          bf16   resident
    # wh:  (1024, h_out)         bf16   resident (fused cls+bbox head, lane-padded)
    # b1/b2: (1, 1024) f32, bh: (1, h_out) f32
    # out: (row_tile, h_out)     f32
    # acc: (row_tile, 1024)      f32    fc1 accumulator across K steps
    k = pl.program_id(1)

    @pl.when(k == 0)
    def _():
        acc_ref[...] = jnp.zeros_like(acc_ref)

    acc_ref[...] += jnp.dot(x_ref[...], w1_ref[...],
                            preferred_element_type=jnp.float32)

    @pl.when(k == pl.num_programs(1) - 1)
    def _():
        # fc1 bias + ReLU (f32), back to bf16 for the next MXU pass.
        h1 = jnp.maximum(acc_ref[...] + b1_ref[...], 0.0).astype(jnp.bfloat16)
        # fc2 + ReLU
        h2 = jnp.dot(h1, w2_ref[...], preferred_element_type=jnp.float32) + b2_ref[...]
        h2 = jnp.maximum(h2, 0.0).astype(jnp.bfloat16)
        # fused cls_score + bbox_pred head (single lane-dense MXU pass)
        out_ref[...] = (jnp.dot(h2, wh_ref[...], preferred_element_type=jnp.float32)
                        + bh_ref[...]).astype(out_ref.dtype)


def init_params(key, in_channels, num_classes):
    """torch.nn.Linear-style init (uniform +/- 1/sqrt(fan_in)); weights stored
    transposed relative to torch: (in_features, out_features)."""
    in_dim = in_channels * 7 * 7

    def linear(key, fan_in, fan_out):
        kw, kb = jax.random.split(key)
        bound = 1.0 / math.sqrt(fan_in)
        w = jax.random.uniform(kw, (fan_in, fan_out), jnp.float32, -bound, bound)
        b = jax.random.uniform(kb, (1, fan_out), jnp.float32, -bound, bound)
        return w, b

    k1, k2, k3, k4 = jax.random.split(key, 4)
    w1, b1 = linear(k1, in_dim, HIDDEN)
    w2, b2 = linear(k2, HIDDEN, HIDDEN)
    wc, bc = linear(k3, HIDDEN, num_classes)
    wb, bb = linear(k4, HIDDEN, 5)
    return dict(w1=w1, b1=b1, w2=w2, b2=b2, wc=wc, bc=bc, wb=wb, bb=bb)


def prepare_kernel_params(params, in_channels, num_classes):
    """Pad K to the kernel's K tiling, fuse + lane-pad the two heads, cast
    weights to bf16.  All padding is zero so it is numerically inert."""
    d = in_channels * 7 * 7
    d_pad, _ = _k_tiling(d)
    h_out = _round_up(num_classes + 5, 128)

    w1 = jnp.zeros((d_pad, HIDDEN), jnp.bfloat16)
    w1 = w1.at[:d, :].set(params["w1"].astype(jnp.bfloat16))
    w2 = params["w2"].astype(jnp.bfloat16)

    wh = jnp.zeros((HIDDEN, h_out), jnp.bfloat16)
    wh = wh.at[:, :num_classes].set(params["wc"].astype(jnp.bfloat16))
    wh = wh.at[:, num_classes:num_classes + 5].set(params["wb"].astype(jnp.bfloat16))

    bh = jnp.zeros((1, h_out), jnp.float32)
    bh = bh.at[:, :num_classes].set(params["bc"])
    bh = bh.at[:, num_classes:num_classes + 5].set(params["bb"])

    return dict(w1=w1, b1=params["b1"], w2=w2, b2=params["b2"], wh=wh, bh=bh)


def oriented_roi_head_forward(pooled_features, kparams, num_classes):
    """pooled_features: (N, C, 7, 7) float32.  kparams from prepare_kernel_params."""
    n, c, ph, pw = pooled_features.shape
    d = c * ph * pw
    d_pad, tk = _k_tiling(d)
    assert kparams["w1"].shape[0] == d_pad, "params prepared for a different in_channels"
    h_out = kparams["wh"].shape[1]

    # Small-N friendly row tile: don't pad 8 RoIs up to 128 rows of wasted MXU work.
    row_tile = MAX_ROW_TILE if n >= MAX_ROW_TILE else _round_up(max(n, 1), 8)
    n_pad = _round_up(max(n, 1), row_tile)

    # Same flatten order as torch .view(N, -1) on NCHW; bf16; zero-pad rows and K.
    x = pooled_features.reshape(n, d).astype(jnp.bfloat16)
    x = jnp.pad(x, ((0, n_pad - n), (0, d_pad - d)))

    row_tiles = n_pad // row_tile
    k_tiles = d_pad // tk
    grid = (row_tiles, k_tiles)

    flops = 2 * n_pad * (d_pad * HIDDEN + HIDDEN * HIDDEN + HIDDEN * h_out)
    bytes_accessed = (
        x.size * 2
        + kparams["w1"].size * 2 * (row_tiles if k_tiles > 1 else 1)
        + kparams["w2"].size * 2 + kparams["wh"].size * 2
        + (kparams["b1"].size + kparams["b2"].size + kparams["bh"].size) * 4
        + n_pad * h_out * 4)

    # VMEM budget: double-buffered streaming blocks + resident weights + scratch.
    vmem_need = (
        2 * (row_tile * tk * 2 + tk * HIDDEN * 2 + row_tile * h_out * 4)   # x, w1, out
        + 2 * (HIDDEN * HIDDEN * 2 + HIDDEN * h_out * 2                    # w2, wh
               + 2 * HIDDEN * 4 + h_out * 4)                               # biases
        + row_tile * HIDDEN * 4)                                           # accumulator
    vmem_limit = int(min(max(2 * vmem_need, 16 * 1024 * 1024), 48 * 1024 * 1024))

    out = pl.pallas_call(
        roi_head_kernel,
        out_shape=jax.ShapeDtypeStruct((n_pad, h_out), jnp.float32),
        grid_spec=pltpu.PrefetchScalarGridSpec(
            num_scalar_prefetch=0,
            grid=grid,
            in_specs=[
                pl.BlockSpec((row_tile, tk), lambda i, k: (i, k)),     # x streams
                pl.BlockSpec((tk, HIDDEN), lambda i, k: (k, 0)),       # w1 streams over K
                pl.BlockSpec((1, HIDDEN), lambda i, k: (0, 0)),        # b1 resident
                pl.BlockSpec((HIDDEN, HIDDEN), lambda i, k: (0, 0)),   # w2 resident
                pl.BlockSpec((1, HIDDEN), lambda i, k: (0, 0)),        # b2 resident
                pl.BlockSpec((HIDDEN, h_out), lambda i, k: (0, 0)),    # fused head W
                pl.BlockSpec((1, h_out), lambda i, k: (0, 0)),         # fused head b
            ],
            out_specs=pl.BlockSpec((row_tile, h_out), lambda i, k: (i, 0)),
            scratch_shapes=[pltpu.VMEM((row_tile, HIDDEN), jnp.float32)],
        ),
        compiler_params=pltpu.CompilerParams(
            dimension_semantics=("parallel", "arbitrary"),
            vmem_limit_bytes=vmem_limit,
        ),
        cost_estimate=pl.CostEstimate(
            flops=flops, transcendentals=0, bytes_accessed=bytes_accessed),
    )(x, kparams["w1"], kparams["b1"], kparams["w2"], kparams["b2"],
      kparams["wh"], kparams["bh"])

    cls_scores = out[:n, :num_classes]
    bbox_preds = out[:n, num_classes:num_classes + 5]
    return cls_scores, bbox_preds


def reference_forward(pooled_features, params):
    """Pure-JAX reference mirroring the module's forward with the same numeric
    path as the kernel (bf16 operands, f32 accumulation) for a tight check."""
    n = pooled_features.shape[0]
    x = pooled_features.reshape(n, -1).astype(jnp.bfloat16)
    w1 = params["w1"].astype(jnp.bfloat16)
    w2 = params["w2"].astype(jnp.bfloat16)
    wc = params["wc"].astype(jnp.bfloat16)
    wb = params["wb"].astype(jnp.bfloat16)

    h1 = jnp.maximum(jnp.dot(x, w1, preferred_element_type=jnp.float32)
                     + params["b1"], 0.0).astype(jnp.bfloat16)
    h2 = jnp.maximum(jnp.dot(h1, w2, preferred_element_type=jnp.float32)
                     + params["b2"], 0.0).astype(jnp.bfloat16)
    cls = jnp.dot(h2, wc, preferred_element_type=jnp.float32) + params["bc"]
    bbox = jnp.dot(h2, wb, preferred_element_type=jnp.float32) + params["bb"]
    return cls, bbox


def _run_check(key, num_rois, in_channels, num_classes):
    k_params, k_x = jax.random.split(key)
    params = init_params(k_params, in_channels, num_classes)
    kparams = prepare_kernel_params(params, in_channels, num_classes)
    pooled = jax.random.normal(k_x, (num_rois, in_channels, 7, 7), jnp.float32)

    cls_scores, bbox_preds = oriented_roi_head_forward(pooled, kparams, num_classes)
    cls_scores = jax.block_until_ready(cls_scores)
    bbox_preds = jax.block_until_ready(bbox_preds)

    ref_cls, ref_bbox = reference_forward(pooled, params)
    assert cls_scores.shape == (num_rois, num_classes)
    assert bbox_preds.shape == (num_rois, 5)
    assert jnp.allclose(cls_scores, ref_cls, atol=2e-2, rtol=2e-2)
    assert jnp.allclose(bbox_preds, ref_bbox, atol=2e-2, rtol=2e-2)


if __name__ == "__main__":
    key = jax.random.PRNGKey(0)
    k_a, k_b = jax.random.split(key)

    # Config A (module-typical tiny case): single K step, w1 resident.
    _run_check(k_a, num_rois=8, in_channels=16, num_classes=8)

    # Config B: larger K (48*49=2352 -> padded 3072) exercises the K-tiled
    # accumulator path (3 reduction steps) plus non-multiple-of-8 RoI count.
    _run_check(k_b, num_rois=20, in_channels=48, num_classes=11)

    print("KERNEL_OK")
</pallas_src>

<mosaic_0001>
module attributes {stable_mosaic.version = 11 : i64} {
  func.func @roi_head_kernel(%arg0: i32, %arg1: i32, %arg2: memref<8x896xbf16, #tpu.memory_space<vmem>>, %arg3: memref<896x1024xbf16, #tpu.memory_space<vmem>>, %arg4: memref<1x1024xf32, #tpu.memory_space<vmem>>, %arg5: memref<1024x1024xbf16, #tpu.memory_space<vmem>>, %arg6: memref<1x1024xf32, #tpu.memory_space<vmem>>, %arg7: memref<1024x128xbf16, #tpu.memory_space<vmem>>, %arg8: memref<1x128xf32, #tpu.memory_space<vmem>>, %arg9: memref<8x128xf32, #tpu.memory_space<vmem>>, %arg10: memref<8x1024xf32, #tpu.memory_space<vmem>>) attributes {dimension_semantics = [#tpu.dimension_semantics<parallel>, #tpu.dimension_semantics<arbitrary>], iteration_bounds = array<i64: 1, 1>, scalar_prefetch = 0 : i64, scratch_operands = 1 : i64, tpu.core_type = #tpu.core_type<tc>, window_params = [{transform_indices = @transform_0, window_bounds = array<i64: 8, 896>}, {transform_indices = @transform_1, window_bounds = array<i64: 896, 1024>}, {pipeline_mode = #tpu.pipeline_mode<synchronous>, transform_indices = @transform_2, window_bounds = array<i64: 1, 1024>}, {pipeline_mode = #tpu.pipeline_mode<synchronous>, transform_indices = @transform_3, window_bounds = array<i64: 1024, 1024>}, {pipeline_mode = #tpu.pipeline_mode<synchronous>, transform_indices = @transform_4, window_bounds = array<i64: 1, 1024>}, {pipeline_mode = #tpu.pipeline_mode<synchronous>, transform_indices = @transform_5, window_bounds = array<i64: 1024, 128>}, {pipeline_mode = #tpu.pipeline_mode<synchronous>, transform_indices = @transform_6, window_bounds = array<i64: 1, 128>}, {transform_indices = @transform_7, window_bounds = array<i64: 8, 128>}]} {
    %c0_i32 = arith.constant 0 : i32
    %0 = arith.cmpi eq, %arg1, %c0_i32 : i32
    %1 = arith.extui %0 : i1 to i32
    %c0_i32_0 = arith.constant 0 : i32
    %2 = arith.cmpi ne, %1, %c0_i32_0 : i32
    scf.if %2 {
      %cst_10 = arith.constant 0.000000e+00 : f32
      %12 = vector.broadcast %cst_10 : f32 to vector<8x1024xf32>
      %c0_11 = arith.constant 0 : index
      %c0_12 = arith.constant 0 : index
      %13 = vector.load %arg10[%c0_11, %c0_12] : memref<8x1024xf32, #tpu.memory_space<vmem>>, vector<8x1024xf32>
      tpu.vector_store %arg10[%c0_11, %c0_12], %12 {strides = array<i32>} : memref<8x1024xf32, #tpu.memory_space<vmem>>, vector<8x1024xf32>,
    } else {
    }
    %c0 = arith.constant 0 : index
    %c0_1 = arith.constant 0 : index
    %3 = vector.load %arg10[%c0, %c0_1] : memref<8x1024xf32, #tpu.memory_space<vmem>>, vector<8x1024xf32>
    %c0_2 = arith.constant 0 : index
    %c0_3 = arith.constant 0 : index
    %4 = vector.load %arg2[%c0_2, %c0_3] : memref<8x896xbf16, #tpu.memory_space<vmem>>, vector<8x896xbf16>
    %c0_4 = arith.constant 0 : index
    %c0_5 = arith.constant 0 : index
    %5 = vector.load %arg3[%c0_4, %c0_5] : memref<896x1024xbf16, #tpu.memory_space<vmem>>, vector<896x1024xbf16>
    %cst = arith.constant dense<0.000000e+00> : vector<8x1024xf32>
    %6 = tpu.matmul %4, %5, %cst {dimension_numbers = #tpu.dot_dimension_numbers<[1], [0], [0], [1], [0, 0, 1, 1], [], []>} : vector<8x896xbf16>, vector<896x1024xbf16>, vector<8x1024xf32> -> vector<8x1024xf32>
    %7 = arith.addf %3, %6 : vector<8x1024xf32>
    %c0_6 = arith.constant 0 : index
    %c0_7 = arith.constant 0 : index
    %8 = vector.load %arg10[%c0_6, %c0_7] : memref<8x1024xf32, #tpu.memory_space<vmem>>, vector<8x1024xf32>
    tpu.vector_store %arg10[%c0_6, %c0_7], %7 {strides = array<i32>} : memref<8x1024xf32, #tpu.memory_space<vmem>>, vector<8x1024xf32>,
    %c0_i32_8 = arith.constant 0 : i32
    %9 = arith.cmpi eq, %arg1, %c0_i32_8 : i32
    %10 = arith.extui %9 : i1 to i32
    %c0_i32_9 = arith.constant 0 : i32
    %11 = arith.cmpi ne, %10, %c0_i32_9 : i32
    scf.if %11 {
      %c0_10 = arith.constant 0 : index
      %c0_11 = arith.constant 0 : index
      %12 = vector.load %arg10[%c0_10, %c0_11] : memref<8x1024xf32, #tpu.memory_space<vmem>>, vector<8x1024xf32>
      %c0_12 = arith.constant 0 : index
      %c0_13 = arith.constant 0 : index
      %13 = vector.load %arg4[%c0_12, %c0_13] : memref<1x1024xf32, #tpu.memory_space<vmem>>, vector<1x1024xf32>
      %14 = vector.broadcast %13 : vector<1x1024xf32> to vector<8x1024xf32>
      %15 = arith.addf %12, %14 : vector<8x1024xf32>
      %cst_14 = arith.constant 0.000000e+00 : f32
      %16 = vector.broadcast %cst_14 : f32 to vector<8x1024xf32>
      %17 = arith.maximumf %15, %16 : vector<8x1024xf32>
      %18 = arith.truncf %17 : vector<8x1024xf32> to vector<8x1024xbf16>
      %c0_15 = arith.constant 0 : index
      %c0_16 = arith.constant 0 : index
      %19 = vector.load %arg5[%c0_15, %c0_16] : memref<1024x1024xbf16, #tpu.memory_space<vmem>>, vector<1024x1024xbf16>
      %cst_17 = arith.constant dense<0.000000e+00> : vector<8x1024xf32>
      %20 = tpu.matmul %18, %19, %cst_17 {dimension_numbers = #tpu.dot_dimension_numbers<[1], [0], [0], [1], [0, 0, 1, 1], [], []>} : vector<8x1024xbf16>, vector<1024x1024xbf16>, vector<8x1024xf32> -> vector<8x1024xf32>
      %c0_18 = arith.constant 0 : index
      %c0_19 = arith.constant 0 : index
      %21 = vector.load %arg6[%c0_18, %c0_19] : memref<1x1024xf32, #tpu.memory_space<vmem>>, vector<1x1024xf32>
      %22 = vector.broadcast %21 : vector<1x1024xf32> to vector<8x1024xf32>
      %23 = arith.addf %20, %22 : vector<8x1024xf32>
      %cst_20 = arith.constant 0.000000e+00 : f32
      %24 = vector.broadcast %cst_20 : f32 to vector<8x1024xf32>
      %25 = arith.maximumf %23, %24 : vector<8x1024xf32>
      %26 = arith.truncf %25 : vector<8x1024xf32> to vector<8x1024xbf16>
      %c0_21 = arith.constant 0 : index
      %c0_22 = arith.constant 0 : index
      %27 = vector.load %arg7[%c0_21, %c0_22] : memref<1024x128xbf16, #tpu.memory_space<vmem>>, vector<1024x128xbf16>
      %cst_23 = arith.constant dense<0.000000e+00> : vector<8x128xf32>
      %28 = tpu.matmul %26, %27, %cst_23 {dimension_numbers = #tpu.dot_dimension_numbers<[1], [0], [0], [1], [0, 0, 1, 1], [], []>} : vector<8x1024xbf16>, vector<1024x128xbf16>, vector<8x128xf32> -> vector<8x128xf32>
      %c0_24 = arith.constant 0 : index
      %c0_25 = arith.constant 0 : index
      %29 = vector.load %arg8[%c0_24, %c0_25] : memref<1x128xf32, #tpu.memory_space<vmem>>, vector<1x128xf32>
      %30 = vector.broadcast %29 : vector<1x128xf32> to vector<8x128xf32>
      %31 = arith.addf %28, %30 : vector<8x128xf32>
      %c0_26 = arith.constant 0 : index
      %c0_27 = arith.constant 0 : index
      %32 = vector.load %arg9[%c0_26, %c0_27] : memref<8x128xf32, #tpu.memory_space<vmem>>, vector<8x128xf32>
      tpu.vector_store %arg9[%c0_26, %c0_27], %31 {strides = array<i32>} : memref<8x128xf32, #tpu.memory_space<vmem>>, vector<8x128xf32>,
    } else {
    }
    return
  }
  func.func @transform_0(%arg0: i32, %arg1: i32) -> (i32, i32) {
    %c0_i32 = arith.constant 0 : i32
    return %arg0, %arg1 : i32, i32
  }
  func.func @transform_1(%arg0: i32, %arg1: i32) -> (i32, i32) {
    %c0_i32 = arith.constant 0 : i32
    %c0_i32_0 = arith.constant 0 : i32
    return %arg1, %c0_i32 : i32, i32
  }
  func.func @transform_2(%arg0: i32, %arg1: i32) -> (i32, i32) {
    %c0_i32 = arith.constant 0 : i32
    %c0_i32_0 = arith.constant 0 : i32
    %c0_i32_1 = arith.constant 0 : i32
    return %c0_i32, %c0_i32_0 : i32, i32
  }
  func.func @transform_3(%arg0: i32, %arg1: i32) -> (i32, i32) {
    %c0_i32 = arith.constant 0 : i32
    %c0_i32_0 = arith.constant 0 : i32
    %c0_i32_1 = arith.constant 0 : i32
    return %c0_i32, %c0_i32_0 : i32, i32
  }
  func.func @transform_4(%arg0: i32, %arg1: i32) -> (i32, i32) {
    %c0_i32 = arith.constant 0 : i32
    %c0_i32_0 = arith.constant 0 : i32
    %c0_i32_1 = arith.constant 0 : i32
    return %c0_i32, %c0_i32_0 : i32, i32
  }
  func.func @transform_5(%arg0: i32, %arg1: i32) -> (i32, i32) {
    %c0_i32 = arith.constant 0 : i32
    %c0_i32_0 = arith.constant 0 : i32
    %c0_i32_1 = arith.constant 0 : i32
    return %c0_i32, %c0_i32_0 : i32, i32
  }
  func.func @transform_6(%arg0: i32, %arg1: i32) -> (i32, i32) {
    %c0_i32 = arith.constant 0 : i32
    %c0_i32_0 = arith.constant 0 : i32
    %c0_i32_1 = arith.constant 0 : i32
    return %c0_i32, %c0_i32_0 : i32, i32
  }
  func.func @transform_7(%arg0: i32, %arg1: i32) -> (i32, i32) {
    %c0_i32 = arith.constant 0 : i32
    %c0_i32_0 = arith.constant 0 : i32
    return %arg0, %c0_i32 : i32, i32
  }
}

</mosaic_0001>

<llo_original>
// kernel: tpu_custom_call.1
$region0: #{tpu_custom_call.1}
  #allocation0 [shape = 'u32[]', space=smem, size = 0x4, offset = 0x4, fixed_abs, tag = 'smem constant byte address 0x4 - core index']
  #allocation1 [shape = 'u32[144,128]{1,0:T(1,128)}', space=vmem, size = 0x12000, scoped, tag = 'internal scratch']
  #allocation2 [shape = 'f32[8,1024]{1,0:T(8,128)}', space=vmem, size = 0x8000, scoped, tag = 'scratch operand']
  %s0 = inlined_call_operand.hbm [shape: bf16[8,896], index: 0, kind: input, shape index: {}]
  %s1 = inlined_call_operand.hbm [shape: bf16[896,1024], index: 1, kind: input, shape index: {}]
  %s2 = inlined_call_operand.hbm [shape: f32[1,1024], index: 2, kind: input, shape index: {}]
  %s3 = inlined_call_operand.hbm [shape: bf16[1024,1024], index: 3, kind: input, shape index: {}]
  %s4 = inlined_call_operand.hbm [shape: f32[1,1024], index: 4, kind: input, shape index: {}]
  %s5 = inlined_call_operand.hbm [shape: bf16[1024,128], index: 5, kind: input, shape index: {}]
  %s6 = inlined_call_operand.hbm [shape: f32[1,128], index: 6, kind: input, shape index: {}]
  %s7 = inlined_call_operand.hbm [shape: f32[8,128], index: 7, kind: output, shape index: {}]
  %s8 = sld [smem:[#allocation0]]
  $region74: #{tpu_custom_call.1} parent=0
    _
  %s10 = ssub.s32 1, %s8
  %s11 = scalar_select 0, %s10, %s8
  $region1: #{tpu_custom_call.1} parent=0
    #allocation3 [shape = 'u8[14336]{0}', space=vmem, size = 0x3800, scoped, tag = 'input window, operand 0, single buffered']
    #allocation4 [shape = 's32[1]{0}', space=sflag, size = 0x4, scoped, tag = 'scoped memory for tpu_custom_call.1']
    #allocation5 [shape = 's32[1]{0}', space=sflag, size = 0x4, scoped, tag = 'scoped memory for tpu_custom_call.1']
    #allocation6 [shape = 'u8[1835008]{0}', space=vmem, size = 0x1c0000, scoped, tag = 'input window, operand 1, single buffered']
    #allocation7 [shape = 's32[1]{0}', space=sflag, size = 0x4, scoped, tag = 'scoped memory for tpu_custom_call.1']
    #allocation8 [shape = 'u8[4096]{0}', space=vmem, size = 0x1000, scoped, tag = 'input window, operand 2, single buffered']
    #allocation9 [shape = 'u8[2097152]{0}', space=vmem, size = 0x200000, scoped, tag = 'input window, operand 3, single buffered']
    #allocation10 [shape = 's32[1]{0}', space=sflag, size = 0x4, scoped, tag = 'scoped memory for tpu_custom_call.1']
    #allocation11 [shape = 'u8[4096]{0}', space=vmem, size = 0x1000, scoped, tag = 'input window, operand 4, single buffered']
    #allocation12 [shape = 'u8[262144]{0}', space=vmem, size = 0x40000, scoped, tag = 'input window, operand 5, single buffered']
    #allocation13 [shape = 's32[1]{0}', space=sflag, size = 0x4, scoped, tag = 'scoped memory for tpu_custom_call.1']
    #allocation14 [shape = 'u8[512]{0}', space=vmem, size = 0x400, scoped, tag = 'input window, operand 6, single buffered']
    #allocation15 [shape = 'u8[4096]{0}', space=vmem, size = 0x1000, scoped, tag = 'output window, operand 0, single buffered']
    %12 = vsyncpa [#allocation4], 0
    %13 = vsyncpa [#allocation7], 0
    %14 = vsyncpa [#allocation10], 0
    %15 = vsyncpa [#allocation13], 0
    %16 = vsyncpa [#allocation5], 0
    // Predicated region
    $region2: #{tpu_custom_call.1} parent=1 // pred_check
      _
    $region3: #{tpu_custom_call.1} parent=1 // pred_check_branch
      %18 = sbr.rel (0) target = $region5
    $region4: #{tpu_custom_call.1} parent=1 // pred_region
      %s20 = ssub.s32 448, 448
      %21 = vsyncadd [#allocation4], %s20
      %s23 = sshll.u32 [#allocation3], 4
      %s24 = int_to_ptr.vmem [resolvable:$true] %s23
      %26 = dma.hbm_to_vmem [thread:$0]  %s0, 448, %s24, [#allocation4]
    $region5: #{tpu_custom_call.1} parent=1 // pred_fallthru
      _
    // Predicated region
    $region6: #{tpu_custom_call.1} parent=1 // pred_check
      _
    $region7: #{tpu_custom_call.1} parent=1 // pred_check_branch
      %28 = sbr.rel (0) target = $region9
    $region8: #{tpu_custom_call.1} parent=1 // pred_region
      %s30 = ssub.s32 57344, 57344
      %31 = vsyncadd [#allocation7], %s30
      %s32 = sshll.u32 [#allocation6], 4
      %s33 = int_to_ptr.vmem [resolvable:$true] %s32
      %38 = dma.hbm_to_vmem [thread:$0]  %s1, 57344, %s33, [#allocation7], 512, 512, 32
    $region9: #{tpu_custom_call.1} parent=1 // pred_fallthru
      _
    // Predicated region
    $region10: #{tpu_custom_call.1} parent=1 // pred_check
      _
    $region11: #{tpu_custom_call.1} parent=1 // pred_check_branch
      %40 = sbr.rel (0) target = $region13
    $region12: #{tpu_custom_call.1} parent=1 // pred_region
      %s42 = ssub.s32 128, 128
      %43 = vsyncadd [#allocation7], %s42
      %s45 = sshll.u32 [#allocation8], 4
      %s46 = int_to_ptr.vmem [resolvable:$true] %s45
      %48 = dma.hbm_to_vmem [thread:$0]  %s2, 128, %s46, [#allocation7]
    $region13: #{tpu_custom_call.1} parent=1 // pred_fallthru
      _
    // Predicated region
    $region14: #{tpu_custom_call.1} parent=1 // pred_check
      _
    $region15: #{tpu_custom_call.1} parent=1 // pred_check_branch
      %50 = sbr.rel (0) target = $region17
    $region16: #{tpu_custom_call.1} parent=1 // pred_region
      %s52 = ssub.s32 65536, 65536
      %53 = vsyncadd [#allocation10], %s52
      %s54 = sshll.u32 [#allocation9], 4
      %s55 = int_to_ptr.vmem [resolvable:$true] %s54
      %60 = dma.hbm_to_vmem [thread:$0]  %s3, 65536, %s55, [#allocation10], 512, 512, 32
    $region17: #{tpu_custom_call.1} parent=1 // pred_fallthru
      _
    // Predicated region
    $region18: #{tpu_custom_call.1} parent=1 // pred_check
      _
    $region19: #{tpu_custom_call.1} parent=1 // pred_check_branch
      %62 = sbr.rel (0) target = $region21
    $region20: #{tpu_custom_call.1} parent=1 // pred_region
      %s64 = ssub.s32 128, 128
      %65 = vsyncadd [#allocation10], %s64
      %s67 = sshll.u32 [#allocation11], 4
      %s68 = int_to_ptr.vmem [resolvable:$true] %s67
      %70 = dma.hbm_to_vmem [thread:$0]  %s4, 128, %s68, [#allocation10]
    $region21: #{tpu_custom_call.1} parent=1 // pred_fallthru
      _
    // Predicated region
    $region22: #{tpu_custom_call.1} parent=1 // pred_check
      _
    $region23: #{tpu_custom_call.1} parent=1 // pred_check_branch
      %72 = sbr.rel (0) target = $region25
    $region24: #{tpu_custom_call.1} parent=1 // pred_region
      %s74 = ssub.s32 8192, 8192
      %75 = vsyncadd [#allocation13], %s74
      %s76 = sshll.u32 [#allocation12], 4
      %s77 = int_to_ptr.vmem [resolvable:$true] %s76
      %82 = dma.hbm_to_vmem [thread:$0]  %s5, 8192, %s77, [#allocation13], 64, 64, 4
    $region25: #{tpu_custom_call.1} parent=1 // pred_fallthru
      _
    // Predicated region
    $region26: #{tpu_custom_call.1} parent=1 // pred_check
      _
    $region27: #{tpu_custom_call.1} parent=1 // pred_check_branch
      %84 = sbr.rel (0) target = $region29
    $region28: #{tpu_custom_call.1} parent=1 // pred_region
      %s86 = ssub.s32 16, 16
      %87 = vsyncadd [#allocation13], %s86
      %s89 = sshll.u32 [#allocation14], 4
      %s90 = int_to_ptr.vmem [resolvable:$true] %s89
      %92 = dma.hbm_to_vmem [thread:$0]  %s6, 16, %s90, [#allocation13]
    $region29: #{tpu_custom_call.1} parent=1 // pred_fallthru
      _
    // Predicated region
    $region30: #{tpu_custom_call.1} parent=1 // pred_check
      _
    $region31: #{tpu_custom_call.1} parent=1 // pred_check_branch
      %94 = sbr.rel (0) target = $region33
    $region32: #{tpu_custom_call.1} parent=1 // pred_region
      %95 = dma.done [#allocation4], 448
    $region33: #{tpu_custom_call.1} parent=1 // pred_fallthru
      _
    // Predicated region
    $region34: #{tpu_custom_call.1} parent=1 // pred_check
      _
    $region35: #{tpu_custom_call.1} parent=1 // pred_check_branch
      %97 = sbr.rel (0) target = $region37
    $region36: #{tpu_custom_call.1} parent=1 // pred_region
      %98 = dma.done [#allocation7], 57344
    $region37: #{tpu_custom_call.1} parent=1 // pred_fallthru
      _
    // Predicated region
    $region38: #{tpu_custom_call.1} parent=1 // pred_check
      _
    $region39: #{tpu_custom_call.1} parent=1 // pred_check_branch
      %100 = sbr.rel (0) target = $region41
    $region40: #{tpu_custom_call.1} parent=1 // pred_region
      %101 = dma.done [#allocation7], 128
    $region41: #{tpu_custom_call.1} parent=1 // pred_fallthru
      _
    // Predicated region
    $region42: #{tpu_custom_call.1} parent=1 // pred_check
      _
    $region43: #{tpu_custom_call.1} parent=1 // pred_check_branch
      %103 = sbr.rel (0) target = $region45
    $region44: #{tpu_custom_call.1} parent=1 // pred_region
      %104 = dma.done [#allocation10], 65536
    $region45: #{tpu_custom_call.1} parent=1 // pred_fallthru
      _
    // Predicated region
    $region46: #{tpu_custom_call.1} parent=1 // pred_check
      _
    $region47: #{tpu_custom_call.1} parent=1 // pred_check_branch
      %106 = sbr.rel (0) target = $region49
    $region48: #{tpu_custom_call.1} parent=1 // pred_region
      %107 = dma.done [#allocation10], 128
    $region49: #{tpu_custom_call.1} parent=1 // pred_fallthru
      _
    // Predicated region
    $region50: #{tpu_custom_call.1} parent=1 // pred_check
      _
    $region51: #{tpu_custom_call.1} parent=1 // pred_check_branch
      %109 = sbr.rel (0) target = $region53
    $region52: #{tpu_custom_call.1} parent=1 // pred_region
      %110 = dma.done [#allocation13], 8192
    $region53: #{tpu_custom_call.1} parent=1 // pred_fallthru
      _
    // Predicated region
    $region54: #{tpu_custom_call.1} parent=1 // pred_check
      _
    $region55: #{tpu_custom_call.1} parent=1 // pred_check_branch
      %112 = sbr.rel (0) target = $region57
    $region56: #{tpu_custom_call.1} parent=1 // pred_region
      %113 = dma.done [#allocation13], 16
    $region57: #{tpu_custom_call.1} parent=1 // pred_fallthru
      _
    %p115 = scmp.eq.s32.totalorder 0, 0
    // Predicated region
    $region58: #{tpu_custom_call.1} parent=1 // pred_check
      %p116 = pneg %p115
    $region59: #{tpu_custom_call.1} parent=1 // pred_check_branch
      %118 = sbr.rel (%p116) target = $region61
    $region60: #{tpu_custom_call.1} parent=1 // pred_region
      %119 = vst [vmem:[#allocation2] sm:$0xff] 0.0
      %120 = vst [vmem:[#allocation2 + $0x8] sm:$0xff] 0.0
      %121 = vst [vmem:[#allocation2 + $0x10] sm:$0xff] 0.0
      %122 = vst [vmem:[#allocation2 + $0x18] sm:$0xff] 0.0
      %123 = vst [vmem:[#allocation2 + $0x20] sm:$0xff] 0.0
      %124 = vst [vmem:[#allocation2 + $0x28] sm:$0xff] 0.0
      %125 = vst [vmem:[#allocation2 + $0x30] sm:$0xff] 0.0
      %126 = vst [vmem:[#allocation2 + $0x38] sm:$0xff] 0.0
    $region61: #{tpu_custom_call.1} parent=1 // pred_fallthru
      _
    %v127 = vld [vmem:[#allocation2] sm:$0xff]
    %v128 = vld [vmem:[#allocation2 + $0x8] sm:$0xff]
    %v129 = vld [vmem:[#allocation2 + $0x10] sm:$0xff]
    %v130 = vld [vmem:[#allocation2 + $0x18] sm:$0xff]
    %v131 = vld [vmem:[#allocation2 + $0x20] sm:$0xff]
    %v132 = vld [vmem:[#allocation2 + $0x28] sm:$0xff]
    %v133 = vld [vmem:[#allocation2 + $0x30] sm:$0xff]
    %v134 = vld [vmem:[#allocation2 + $0x38] sm:$0xff]
    %v135 = vld [vmem:[#allocation3] sm:$0xff]
    %v136 = vld [vmem:[#allocation3 + $0x8] sm:$0xff]
    %v137 = vld [vmem:[#allocation3 + $0x10] sm:$0xff]
    %v138 = vld [vmem:[#allocation3 + $0x18] sm:$0xf]
    %v139 = vld [vmem:[#allocation6] sm:$0xff]
    %v140 = vld [vmem:[#allocation6 + $0x8] sm:$0xff]
    %v141 = vld [vmem:[#allocation6 + $0x10] sm:$0xff]
    %v142 = vld [vmem:[#allocation6 + $0x18] sm:$0xff]
    %v143 = vld [vmem:[#allocation6 + $0x20] sm:$0xff]
    %v144 = vld [vmem:[#allocation6 + $0x28] sm:$0xff]
    %v145 = vld [vmem:[#allocation6 + $0x30] sm:$0xff]
    %v146 = vld [vmem:[#allocation6 + $0x38] sm:$0xff]
    %v147 = vld [vmem:[#allocation6 + $0x40] sm:$0xff]
    %v148 = vld [vmem:[#allocation6 + $0x48] sm:$0xff]
    %v149 = vld [vmem:[#allocation6 + $0x50] sm:$0xff]
    %v150 = vld [vmem:[#allocation6 + $0x58] sm:$0xff]
    %v151 = vld [vmem:[#allocation6 + $0x60] sm:$0xff]
    %v152 = vld [vmem:[#allocation6 + $0x68] sm:$0xff]
    %v153 = vld [vmem:[#allocation6 + $0x70] sm:$0xff]
    %v154 = vld [vmem:[#allocation6 + $0x78] sm:$0xff]
    %v155 = vld [vmem:[#allocation6 + $0x80] sm:$0xff]
    %v156 = vld [vmem:[#allocation6 + $0x88] sm:$0xff]
    %v157 = vld [vmem:[#allocation6 + $0x90] sm:$0xff]
    %v158 = vld [vmem:[#allocation6 + $0x98] sm:$0xff]
    %v159 = vld [vmem:[#allocation6 + $0xa0] sm:$0xff]
    %v160 = vld [vmem:[#allocation6 + $0xa8] sm:$0xff]
    %v161 = vld [vmem:[#allocation6 + $0xb0] sm:$0xff]
    %v162 = vld [vmem:[#allocation6 + $0xb8] sm:$0xff]
    %v163 = vld [vmem:[#allocation6 + $0xc0] sm:$0xff]
    %v164 = vld [vmem:[#allocation6 + $0xc8] sm:$0xff]
    %v165 = vld [vmem:[#allocation6 + $0xd0] sm:$0xff]
    %v166 = vld [vmem:[#allocation6 + $0xd8] sm:$0xff]
    %v167 = vld [vmem:[#allocation6 + $0xe0] sm:$0xff]
    %v168 = vld [vmem:[#allocation6 + $0xe8] sm:$0xff]
    %v169 = vld [vmem:[#allocation6 + $0xf0] sm:$0xff]
    %v170 = vld [vmem:[#allocation6 + $0xf8] sm:$0xff]
    %v171 = vld [vmem:[#allocation6 + $0x100] sm:$0xff]
    %v172 = vld [vmem:[#allocation6 + $0x108] sm:$0xff]
    %v173 = vld [vmem:[#allocation6 + $0x110] sm:$0xff]
    %v174 = vld [vmem:[#allocation6 + $0x118] sm:$0xff]
    %v175 = vld [vmem:[#allocation6 + $0x120] sm:$0xff]
    %v176 = vld [vmem:[#allocation6 + $0x128] sm:$0xff]
    %v177 = vld [vmem:[#allocation6 + $0x130] sm:$0xff]
    %v178 = vld [vmem:[#allocation6 + $0x138] sm:$0xff]
    %v179 = vld [vmem:[#allocation6 + $0x140] sm:$0xff]
    %v180 = vld [vmem:[#allocation6 + $0x148] sm:$0xff]
    %v181 = vld [vmem:[#allocation6 + $0x150] sm:$0xff]
    %v182 = vld [vmem:[#allocation6 + $0x158] sm:$0xff]
    %v183 = vld [vmem:[#allocation6 + $0x160] sm:$0xff]
    %v184 = vld [vmem:[#allocation6 + $0x168] sm:$0xff]
    %v185 = vld [vmem:[#allocation6 + $0x170] sm:$0xff]
    %v186 = vld [vmem:[#allocation6 + $0x178] sm:$0xff]
    %v187 = vld [vmem:[#allocation6 + $0x180] sm:$0xff]
    %v188 = vld [vmem:[#allocation6 + $0x188] sm:$0xff]
    %v189 = vld [vmem:[#allocation6 + $0x190] sm:$0xff]
    %v190 = vld [vmem:[#allocation6 + $0x198] sm:$0xff]
    %v191 = vld [vmem:[#allocation6 + $0x1a0] sm:$0xff]
    %v192 = vld [vmem:[#allocation6 + $0x1a8] sm:$0xff]
    %v193 = vld [vmem:[#allocation6 + $0x1b0] sm:$0xff]
    %v194 = vld [vmem:[#allocation6 + $0x1b8] sm:$0xff]
    %v195 = vld [vmem:[#allocation6 + $0x1c0] sm:$0xff]
    %v196 = vld [vmem:[#allocation6 + $0x1c8] sm:$0xff]
    %v197 = vld [vmem:[#allocation6 + $0x1d0] sm:$0xff]
    %v198 = vld [vmem:[#allocation6 + $0x1d8] sm:$0xff]
    %v199 = vld [vmem:[#allocation6 + $0x1e0] sm:$0xff]
    %v200 = vld [vmem:[#allocation6 + $0x1e8] sm:$0xff]
    %v201 = vld [vmem:[#allocation6 + $0x1f0] sm:$0xff]
    %v202 = vld [vmem:[#allocation6 + $0x1f8] sm:$0xff]
    %v203 = vld [vmem:[#allocation6 + $0x200] sm:$0xff]
    %v204 = vld [vmem:[#allocation6 + $0x208] sm:$0xff]
    %v205 = vld [vmem:[#allocation6 + $0x210] sm:$0xff]
    %v206 = vld [vmem:[#allocation6 + $0x218] sm:$0xff]
    %v207 = vld [vmem:[#allocation6 + $0x220] sm:$0xff]
    %v208 = vld [vmem:[#allocation6 + $0x228] sm:$0xff]
    %v209 = vld [vmem:[#allocation6 + $0x230] sm:$0xff]
    %v210 = vld [vmem:[#allocation6 + $0x238] sm:$0xff]
    %v211 = vld [vmem:[#allocation6 + $0x240] sm:$0xff]
    %v212 = vld [vmem:[#allocation6 + $0x248] sm:$0xff]
    %v213 = vld [vmem:[#allocation6 + $0x250] sm:$0xff]
    %v214 = vld [vmem:[#allocation6 + $0x258] sm:$0xff]
    %v215 = vld [vmem:[#allocation6 + $0x260] sm:$0xff]
    %v216 = vld [vmem:[#allocation6 + $0x268] sm:$0xff]
    %v217 = vld [vmem:[#allocation6 + $0x270] sm:$0xff]
    %v218 = vld [vmem:[#allocation6 + $0x278] sm:$0xff]
    %v219 = vld [vmem:[#allocation6 + $0x280] sm:$0xff]
    %v220 = vld [vmem:[#allocation6 + $0x288] sm:$0xff]
    %v221 = vld [vmem:[#allocation6 + $0x290] sm:$0xff]
    %v222 = vld [vmem:[#allocation6 + $0x298] sm:$0xff]
    %v223 = vld [vmem:[#allocation6 + $0x2a0] sm:$0xff]
    %v224 = vld [vmem:[#allocation6 + $0x2a8] sm:$0xff]
    %v225 = vld [vmem:[#allocation6 + $0x2b0] sm:$0xff]
    %v226 = vld [vmem:[#allocation6 + $0x2b8] sm:$0xff]
    %v227 = vld [vmem:[#allocation6 + $0x2c0] sm:$0xff]
    %v228 = vld [vmem:[#allocation6 + $0x2c8] sm:$0xff]
    %v229 = vld [vmem:[#allocation6 + $0x2d0] sm:$0xff]
    %v230 = vld [vmem:[#allocation6 + $0x2d8] sm:$0xff]
    %v231 = vld [vmem:[#allocation6 + $0x2e0] sm:$0xff]
    %v232 = vld [vmem:[#allocation6 + $0x2e8] sm:$0xff]
    %v233 = vld [vmem:[#allocation6 + $0x2f0] sm:$0xff]
    %v234 = vld [vmem:[#allocation6 + $0x2f8] sm:$0xff]
    %v235 = vld [vmem:[#allocation6 + $0x300] sm:$0xff]
    %v236 = vld [vmem:[#allocation6 + $0x308] sm:$0xff]
    %v237 = vld [vmem:[#allocation6 + $0x310] sm:$0xff]
    %v238 = vld [vmem:[#allocation6 + $0x318] sm:$0xff]
    %v239 = vld [vmem:[#allocation6 + $0x320] sm:$0xff]
    %v240 = vld [vmem:[#allocation6 + $0x328] sm:$0xff]
    %v241 = vld [vmem:[#allocation6 + $0x330] sm:$0xff]
    %v242 = vld [vmem:[#allocation6 + $0x338] sm:$0xff]
    %v243 = vld [vmem:[#allocation6 + $0x340] sm:$0xff]
    %v244 = vld [vmem:[#allocation6 + $0x348] sm:$0xff]
    %v245 = vld [vmem:[#allocation6 + $0x350] sm:$0xff]
    %v246 = vld [vmem:[#allocation6 + $0x358] sm:$0xff]
    %v247 = vld [vmem:[#allocation6 + $0x360] sm:$0xff]
    %v248 = vld [vmem:[#allocation6 + $0x368] sm:$0xff]
    %v249 = vld [vmem:[#allocation6 + $0x370] sm:$0xff]
    %v250 = vld [vmem:[#allocation6 + $0x378] sm:$0xff]
    %v251 = vld [vmem:[#allocation6 + $0x380] sm:$0xff]
    %v252 = vld [vmem:[#allocation6 + $0x388] sm:$0xff]
    %v253 = vld [vmem:[#allocation6 + $0x390] sm:$0xff]
    %v254 = vld [vmem:[#allocation6 + $0x398] sm:$0xff]
    %v255 = vld [vmem:[#allocation6 + $0x3a0] sm:$0xff]
    %v256 = vld [vmem:[#allocation6 + $0x3a8] sm:$0xff]
    %v257 = vld [vmem:[#allocation6 + $0x3b0] sm:$0xff]
    %v258 = vld [vmem:[#allocation6 + $0x3b8] sm:$0xff]
    %v259 = vld [vmem:[#allocation6 + $0x3c0] sm:$0xff]
    %v260 = vld [vmem:[#allocation6 + $0x3c8] sm:$0xff]
    %v261 = vld [vmem:[#allocation6 + $0x3d0] sm:$0xff]
    %v262 = vld [vmem:[#allocation6 + $0x3d8] sm:$0xff]
    %v263 = vld [vmem:[#allocation6 + $0x3e0] sm:$0xff]
    %v264 = vld [vmem:[#allocation6 + $0x3e8] sm:$0xff]
    %v265 = vld [vmem:[#allocation6 + $0x3f0] sm:$0xff]
    %v266 = vld [vmem:[#allocation6 + $0x3f8] sm:$0xff]
    %v267 = vld [vmem:[#allocation6 + $0x400] sm:$0xff]
    %v268 = vld [vmem:[#allocation6 + $0x408] sm:$0xff]
    %v269 = vld [vmem:[#allocation6 + $0x410] sm:$0xff]
    %v270 = vld [vmem:[#allocation6 + $0x418] sm:$0xff]
    %v271 = vld [vmem:[#allocation6 + $0x420] sm:$0xff]
    %v272 = vld [vmem:[#allocation6 + $0x428] sm:$0xff]
    %v273 = vld [vmem:[#allocation6 + $0x430] sm:$0xff]
    %v274 = vld [vmem:[#allocation6 + $0x438] sm:$0xff]
    %v275 = vld [vmem:[#allocation6 + $0x440] sm:$0xff]
    %v276 = vld [vmem:[#allocation6 + $0x448] sm:$0xff]
    %v277 = vld [vmem:[#allocation6 + $0x450] sm:$0xff]
    %v278 = vld [vmem:[#allocation6 + $0x458] sm:$0xff]
    %v279 = vld [vmem:[#allocation6 + $0x460] sm:$0xff]
    %v280 = vld [vmem:[#allocation6 + $0x468] sm:$0xff]
    %v281 = vld [vmem:[#allocation6 + $0x470] sm:$0xff]
    %v282 = vld [vmem:[#allocation6 + $0x478] sm:$0xff]
    %v283 = vld [vmem:[#allocation6 + $0x480] sm:$0xff]
    %v284 = vld [vmem:[#allocation6 + $0x488] sm:$0xff]
    %v285 = vld [vmem:[#allocation6 + $0x490] sm:$0xff]
    %v286 = vld [vmem:[#allocation6 + $0x498] sm:$0xff]
    %v287 = vld [vmem:[#allocation6 + $0x4a0] sm:$0xff]
    %v288 = vld [vmem:[#allocation6 + $0x4a8] sm:$0xff]
    %v289 = vld [vmem:[#allocation6 + $0x4b0] sm:$0xff]
    %v290 = vld [vmem:[#allocation6 + $0x4b8] sm:$0xff]
    %v291 = vld [vmem:[#allocation6 + $0x4c0] sm:$0xff]
    %v292 = vld [vmem:[#allocation6 + $0x4c8] sm:$0xff]
    %v293 = vld [vmem:[#allocation6 + $0x4d0] sm:$0xff]
    %v294 = vld [vmem:[#allocation6 + $0x4d8] sm:$0xff]
    %v295 = vld [vmem:[#allocation6 + $0x4e0] sm:$0xff]
    %v296 = vld [vmem:[#allocation6 + $0x4e8] sm:$0xff]
    %v297 = vld [vmem:[#allocation6 + $0x4f0] sm:$0xff]
    %v298 = vld [vmem:[#allocation6 + $0x4f8] sm:$0xff]
    %v299 = vld [vmem:[#allocation6 + $0x500] sm:$0xff]
    %v300 = vld [vmem:[#allocation6 + $0x508] sm:$0xff]
    %v301 = vld [vmem:[#allocation6 + $0x510] sm:$0xff]
    %v302 = vld [vmem:[#allocation6 + $0x518] sm:$0xff]
    %v303 = vld [vmem:[#allocation6 + $0x520] sm:$0xff]
    %v304 = vld [vmem:[#allocation6 + $0x528] sm:$0xff]
    %v305 = vld [vmem:[#allocation6 + $0x530] sm:$0xff]
    %v306 = vld [vmem:[#allocation6 + $0x538] sm:$0xff]
    %v307 = vld [vmem:[#allocation6 + $0x540] sm:$0xff]
    %v308 = vld [vmem:[#allocation6 + $0x548] sm:$0xff]
    %v309 = vld [vmem:[#allocation6 + $0x550] sm:$0xff]
    %v310 = vld [vmem:[#allocation6 + $0x558] sm:$0xff]
    %v311 = vld [vmem:[#allocation6 + $0x560] sm:$0xff]
    %v312 = vld [vmem:[#allocation6 + $0x568] sm:$0xff]
    %v313 = vld [vmem:[#allocation6 + $0x570] sm:$0xff]
    %v314 = vld [vmem:[#allocation6 + $0x578] sm:$0xff]
    %v315 = vld [vmem:[#allocation6 + $0x580] sm:$0xff]
    %v316 = vld [vmem:[#allocation6 + $0x588] sm:$0xff]
    %v317 = vld [vmem:[#allocation6 + $0x590] sm:$0xff]
    %v318 = vld [vmem:[#allocation6 + $0x598] sm:$0xff]
    %v319 = vld [vmem:[#allocation6 + $0x5a0] sm:$0xff]
    %v320 = vld [vmem:[#allocation6 + $0x5a8] sm:$0xff]
    %v321 = vld [vmem:[#allocation6 + $0x5b0] sm:$0xff]
    %v322 = vld [vmem:[#allocation6 + $0x5b8] sm:$0xff]
    %v323 = vld [vmem:[#allocation6 + $0x5c0] sm:$0xff]
    %v324 = vld [vmem:[#allocation6 + $0x5c8] sm:$0xff]
    %v325 = vld [vmem:[#allocation6 + $0x5d0] sm:$0xff]
    %v326 = vld [vmem:[#allocation6 + $0x5d8] sm:$0xff]
    %v327 = vld [vmem:[#allocation6 + $0x5e0] sm:$0xff]
    %v328 = vld [vmem:[#allocation6 + $0x5e8] sm:$0xff]
    %v329 = vld [vmem:[#allocation6 + $0x5f0] sm:$0xff]
    %v330 = vld [vmem:[#allocation6 + $0x5f8] sm:$0xff]
    %v331 = vld [vmem:[#allocation6 + $0x600] sm:$0xff]
    %v332 = vld [vmem:[#allocation6 + $0x608] sm:$0xff]
    %v333 = vld [vmem:[#allocation6 + $0x610] sm:$0xff]
    %v334 = vld [vmem:[#allocation6 + $0x618] sm:$0xff]
    %v335 = vld [vmem:[#allocation6 + $0x620] sm:$0xff]
    %v336 = vld [vmem:[#allocation6 + $0x628] sm:$0xff]
    %v337 = vld [vmem:[#allocation6 + $0x630] sm:$0xff]
    %v338 = vld [vmem:[#allocation6 + $0x638] sm:$0xff]
    %v339 = vld [vmem:[#allocation6 + $0x640] sm:$0xff]
    %v340 = vld [vmem:[#allocation6 + $0x648] sm:$0xff]
    %v341 = vld [vmem:[#allocation6 + $0x650] sm:$0xff]
    %v342 = vld [vmem:[#allocation6 + $0x658] sm:$0xff]
    %v343 = vld [vmem:[#allocation6 + $0x660] sm:$0xff]
    %v344 = vld [vmem:[#allocation6 + $0x668] sm:$0xff]
    %v345 = vld [vmem:[#allocation6 + $0x670] sm:$0xff]
    %v346 = vld [vmem:[#allocation6 + $0x678] sm:$0xff]
    %v347 = vld [vmem:[#allocation6 + $0x680] sm:$0xff]
    %v348 = vld [vmem:[#allocation6 + $0x688] sm:$0xff]
    %v349 = vld [vmem:[#allocation6 + $0x690] sm:$0xff]
    %v350 = vld [vmem:[#allocation6 + $0x698] sm:$0xff]
    %v351 = vld [vmem:[#allocation6 + $0x6a0] sm:$0xff]
    %v352 = vld [vmem:[#allocation6 + $0x6a8] sm:$0xff]
    %v353 = vld [vmem:[#allocation6 + $0x6b0] sm:$0xff]
    %v354 = vld [vmem:[#allocation6 + $0x6b8] sm:$0xff]
    %v355 = vld [vmem:[#allocation6 + $0x6c0] sm:$0xff]
    %v356 = vld [vmem:[#allocation6 + $0x6c8] sm:$0xff]
    %v357 = vld [vmem:[#allocation6 + $0x6d0] sm:$0xff]
    %v358 = vld [vmem:[#allocation6 + $0x6d8] sm:$0xff]
    %v359 = vld [vmem:[#allocation6 + $0x6e0] sm:$0xff]
    %v360 = vld [vmem:[#allocation6 + $0x6e8] sm:$0xff]
    %v361 = vld [vmem:[#allocation6 + $0x6f0] sm:$0xff]
    %v362 = vld [vmem:[#allocation6 + $0x6f8] sm:$0xff]
    %v363 = vld [vmem:[#allocation6 + $0x700] sm:$0xff]
    %v364 = vld [vmem:[#allocation6 + $0x708] sm:$0xff]
    %v365 = vld [vmem:[#allocation6 + $0x710] sm:$0xff]
    %v366 = vld [vmem:[#allocation6 + $0x718] sm:$0xff]
    %v367 = vld [vmem:[#allocation6 + $0x720] sm:$0xff]
    %v368 = vld [vmem:[#allocation6 + $0x728] sm:$0xff]
    %v369 = vld [vmem:[#allocation6 + $0x730] sm:$0xff]
    %v370 = vld [vmem:[#allocation6 + $0x738] sm:$0xff]
    %v371 = vld [vmem:[#allocation6 + $0x740] sm:$0xff]
    %v372 = vld [vmem:[#allocation6 + $0x748] sm:$0xff]
    %v373 = vld [vmem:[#allocation6 + $0x750] sm:$0xff]
    %v374 = vld [vmem:[#allocation6 + $0x758] sm:$0xff]
    %v375 = vld [vmem:[#allocation6 + $0x760] sm:$0xff]
    %v376 = vld [vmem:[#allocation6 + $0x768] sm:$0xff]
    %v377 = vld [vmem:[#allocation6 + $0x770] sm:$0xff]
    %v378 = vld [vmem:[#allocation6 + $0x778] sm:$0xff]
    %v379 = vld [vmem:[#allocation6 + $0x780] sm:$0xff]
    %v380 = vld [vmem:[#allocation6 + $0x788] sm:$0xff]
    %v381 = vld [vmem:[#allocation6 + $0x790] sm:$0xff]
    %v382 = vld [vmem:[#allocation6 + $0x798] sm:$0xff]
    %v383 = vld [vmem:[#allocation6 + $0x7a0] sm:$0xff]
    %v384 = vld [vmem:[#allocation6 + $0x7a8] sm:$0xff]
    %v385 = vld [vmem:[#allocation6 + $0x7b0] sm:$0xff]
    %v386 = vld [vmem:[#allocation6 + $0x7b8] sm:$0xff]
    %v387 = vld [vmem:[#allocation6 + $0x7c0] sm:$0xff]
    %v388 = vld [vmem:[#allocation6 + $0x7c8] sm:$0xff]
    %v389 = vld [vmem:[#allocation6 + $0x7d0] sm:$0xff]
    %v390 = vld [vmem:[#allocation6 + $0x7d8] sm:$0xff]
    %v391 = vld [vmem:[#allocation6 + $0x7e0] sm:$0xff]
    %v392 = vld [vmem:[#allocation6 + $0x7e8] sm:$0xff]
    %v393 = vld [vmem:[#allocation6 + $0x7f0] sm:$0xff]
    %v394 = vld [vmem:[#allocation6 + $0x7f8] sm:$0xff]
    %v395 = vld [vmem:[#allocation6 + $0x800] sm:$0xff]
    %v396 = vld [vmem:[#allocation6 + $0x808] sm:$0xff]
    %v397 = vld [vmem:[#allocation6 + $0x810] sm:$0xff]
    %v398 = vld [vmem:[#allocation6 + $0x818] sm:$0xff]
    %v399 = vld [vmem:[#allocation6 + $0x820] sm:$0xff]
    %v400 = vld [vmem:[#allocation6 + $0x828] sm:$0xff]
    %v401 = vld [vmem:[#allocation6 + $0x830] sm:$0xff]
    %v402 = vld [vmem:[#allocation6 + $0x838] sm:$0xff]
    %v403 = vld [vmem:[#allocation6 + $0x840] sm:$0xff]
    %v404 = vld [vmem:[#allocation6 + $0x848] sm:$0xff]
    %v405 = vld [vmem:[#allocation6 + $0x850] sm:$0xff]
    %v406 = vld [vmem:[#allocation6 + $0x858] sm:$0xff]
    %v407 = vld [vmem:[#allocation6 + $0x860] sm:$0xff]
    %v408 = vld [vmem:[#allocation6 + $0x868] sm:$0xff]
    %v409 = vld [vmem:[#allocation6 + $0x870] sm:$0xff]
    %v410 = vld [vmem:[#allocation6 + $0x878] sm:$0xff]
    %v411 = vld [vmem:[#allocation6 + $0x880] sm:$0xff]
    %v412 = vld [vmem:[#allocation6 + $0x888] sm:$0xff]
    %v413 = vld [vmem:[#allocation6 + $0x890] sm:$0xff]
    %v414 = vld [vmem:[#allocation6 + $0x898] sm:$0xff]
    %v415 = vld [vmem:[#allocation6 + $0x8a0] sm:$0xff]
    %v416 = vld [vmem:[#allocation6 + $0x8a8] sm:$0xff]
    %v417 = vld [vmem:[#allocation6 + $0x8b0] sm:$0xff]
    %v418 = vld [vmem:[#allocation6 + $0x8b8] sm:$0xff]
    %v419 = vld [vmem:[#allocation6 + $0x8c0] sm:$0xff]
    %v420 = vld [vmem:[#allocation6 + $0x8c8] sm:$0xff]
    %v421 = vld [vmem:[#allocation6 + $0x8d0] sm:$0xff]
    %v422 = vld [vmem:[#allocation6 + $0x8d8] sm:$0xff]
    %v423 = vld [vmem:[#allocation6 + $0x8e0] sm:$0xff]
    %v424 = vld [vmem:[#allocation6 + $0x8e8] sm:$0xff]
    %v425 = vld [vmem:[#allocation6 + $0x8f0] sm:$0xff]
    %v426 = vld [vmem:[#allocation6 + $0x8f8] sm:$0xff]
    %v427 = vld [vmem:[#allocation6 + $0x900] sm:$0xff]
    %v428 = vld [vmem:[#allocation6 + $0x908] sm:$0xff]
    %v429 = vld [vmem:[#allocation6 + $0x910] sm:$0xff]
    %v430 = vld [vmem:[#allocation6 + $0x918] sm:$0xff]
    %v431 = vld [vmem:[#allocation6 + $0x920] sm:$0xff]
    %v432 = vld [vmem:[#allocation6 + $0x928] sm:$0xff]
    %v433 = vld [vmem:[#allocation6 + $0x930] sm:$0xff]
    %v434 = vld [vmem:[#allocation6 + $0x938] sm:$0xff]
    %v435 = vld [vmem:[#allocation6 + $0x940] sm:$0xff]
    %v436 = vld [vmem:[#allocation6 + $0x948] sm:$0xff]
    %v437 = vld [vmem:[#allocation6 + $0x950] sm:$0xff]
    %v438 = vld [vmem:[#allocation6 + $0x958] sm:$0xff]
    %v439 = vld [vmem:[#allocation6 + $0x960] sm:$0xff]
    %v440 = vld [vmem:[#allocation6 + $0x968] sm:$0xff]
    %v441 = vld [vmem:[#allocation6 + $0x970] sm:$0xff]
    %v442 = vld [vmem:[#allocation6 + $0x978] sm:$0xff]
    %v443 = vld [vmem:[#allocation6 + $0x980] sm:$0xff]
    %v444 = vld [vmem:[#allocation6 + $0x988] sm:$0xff]
    %v445 = vld [vmem:[#allocation6 + $0x990] sm:$0xff]
    %v446 = vld [vmem:[#allocation6 + $0x998] sm:$0xff]
    %v447 = vld [vmem:[#allocation6 + $0x9a0] sm:$0xff]
    %v448 = vld [vmem:[#allocation6 + $0x9a8] sm:$0xff]
    %v449 = vld [vmem:[#allocation6 + $0x9b0] sm:$0xff]
    %v450 = vld [vmem:[#allocation6 + $0x9b8] sm:$0xff]
    %v451 = vld [vmem:[#allocation6 + $0x9c0] sm:$0xff]
    %v452 = vld [vmem:[#allocation6 + $0x9c8] sm:$0xff]
    %v453 = vld [vmem:[#allocation6 + $0x9d0] sm:$0xff]
    %v454 = vld [vmem:[#allocation6 + $0x9d8] sm:$0xff]
    %v455 = vld [vmem:[#allocation6 + $0x9e0] sm:$0xff]
    %v456 = vld [vmem:[#allocation6 + $0x9e8] sm:$0xff]
    %v457 = vld [vmem:[#allocation6 + $0x9f0] sm:$0xff]
    %v458 = vld [vmem:[#allocation6 + $0x9f8] sm:$0xff]
    %v459 = vld [vmem:[#allocation6 + $0xa00] sm:$0xff]
    %v460 = vld [vmem:[#allocation6 + $0xa08] sm:$0xff]
    %v461 = vld [vmem:[#allocation6 + $0xa10] sm:$0xff]
    %v462 = vld [vmem:[#allocation6 + $0xa18] sm:$0xff]
    %v463 = vld [vmem:[#allocation6 + $0xa20] sm:$0xff]
    %v464 = vld [vmem:[#allocation6 + $0xa28] sm:$0xff]
    %v465 = vld [vmem:[#allocation6 + $0xa30] sm:$0xff]
    %v466 = vld [vmem:[#allocation6 + $0xa38] sm:$0xff]
    %v467 = vld [vmem:[#allocation6 + $0xa40] sm:$0xff]
    %v468 = vld [vmem:[#allocation6 + $0xa48] sm:$0xff]
    %v469 = vld [vmem:[#allocation6 + $0xa50] sm:$0xff]
    %v470 = vld [vmem:[#allocation6 + $0xa58] sm:$0xff]
    %v471 = vld [vmem:[#allocation6 + $0xa60] sm:$0xff]
    %v472 = vld [vmem:[#allocation6 + $0xa68] sm:$0xff]
    %v473 = vld [vmem:[#allocation6 + $0xa70] sm:$0xff]
    %v474 = vld [vmem:[#allocation6 + $0xa78] sm:$0xff]
    %v475 = vld [vmem:[#allocation6 + $0xa80] sm:$0xff]
    %v476 = vld [vmem:[#allocation6 + $0xa88] sm:$0xff]
    %v477 = vld [vmem:[#allocation6 + $0xa90] sm:$0xff]
    %v478 = vld [vmem:[#allocation6 + $0xa98] sm:$0xff]
    %v479 = vld [vmem:[#allocation6 + $0xaa0] sm:$0xff]
    %v480 = vld [vmem:[#allocation6 + $0xaa8] sm:$0xff]
    %v481 = vld [vmem:[#allocation6 + $0xab0] sm:$0xff]
    %v482 = vld [vmem:[#allocation6 + $0xab8] sm:$0xff]
    %v483 = vld [vmem:[#allocation6 + $0xac0] sm:$0xff]
    %v484 = vld [vmem:[#allocation6 + $0xac8] sm:$0xff]
    %v485 = vld [vmem:[#allocation6 + $0xad0] sm:$0xff]
    %v486 = vld [vmem:[#allocation6 + $0xad8] sm:$0xff]
    %v487 = vld [vmem:[#allocation6 + $0xae0] sm:$0xff]
    %v488 = vld [vmem:[#allocation6 + $0xae8] sm:$0xff]
    %v489 = vld [vmem:[#allocation6 + $0xaf0] sm:$0xff]
    %v490 = vld [vmem:[#allocation6 + $0xaf8] sm:$0xff]
    %v491 = vld [vmem:[#allocation6 + $0xb00] sm:$0xff]
    %v492 = vld [vmem:[#allocation6 + $0xb08] sm:$0xff]
    %v493 = vld [vmem:[#allocation6 + $0xb10] sm:$0xff]
    %v494 = vld [vmem:[#allocation6 + $0xb18] sm:$0xff]
    %v495 = vld [vmem:[#allocation6 + $0xb20] sm:$0xff]
    %v496 = vld [vmem:[#allocation6 + $0xb28] sm:$0xff]
    %v497 = vld [vmem:[#allocation6 + $0xb30] sm:$0xff]
    %v498 = vld [vmem:[#allocation6 + $0xb38] sm:$0xff]
    %v499 = vld [vmem:[#allocation6 + $0xb40] sm:$0xff]
    %v500 = vld [vmem:[#allocation6 + $0xb48] sm:$0xff]
    %v501 = vld [vmem:[#allocation6 + $0xb50] sm:$0xff]
    %v502 = vld [vmem:[#allocation6 + $0xb58] sm:$0xff]
    %v503 = vld [vmem:[#allocation6 + $0xb60] sm:$0xff]
    %v504 = vld [vmem:[#allocation6 + $0xb68] sm:$0xff]
    %v505 = vld [vmem:[#allocation6 + $0xb70] sm:$0xff]
    %v506 = vld [vmem:[#allocation6 + $0xb78] sm:$0xff]
    %v507 = vld [vmem:[#allocation6 + $0xb80] sm:$0xff]
    %v508 = vld [vmem:[#allocation6 + $0xb88] sm:$0xff]
    %v509 = vld [vmem:[#allocation6 + $0xb90] sm:$0xff]
    %v510 = vld [vmem:[#allocation6 + $0xb98] sm:$0xff]
    %v511 = vld [vmem:[#allocation6 + $0xba0] sm:$0xff]
    %v512 = vld [vmem:[#allocation6 + $0xba8] sm:$0xff]
    %v513 = vld [vmem:[#allocation6 + $0xbb0] sm:$0xff]
    %v514 = vld [vmem:[#allocation6 + $0xbb8] sm:$0xff]
    %v515 = vld [vmem:[#allocation6 + $0xbc0] sm:$0xff]
    %v516 = vld [vmem:[#allocation6 + $0xbc8] sm:$0xff]
    %v517 = vld [vmem:[#allocation6 + $0xbd0] sm:$0xff]
    %v518 = vld [vmem:[#allocation6 + $0xbd8] sm:$0xff]
    %v519 = vld [vmem:[#allocation6 + $0xbe0] sm:$0xff]
    %v520 = vld [vmem:[#allocation6 + $0xbe8] sm:$0xff]
    %v521 = vld [vmem:[#allocation6 + $0xbf0] sm:$0xff]
    %v522 = vld [vmem:[#allocation6 + $0xbf8] sm:$0xff]
    %v523 = vld [vmem:[#allocation6 + $0xc00] sm:$0xff]
    %v524 = vld [vmem:[#allocation6 + $0xc08] sm:$0xff]
    %v525 = vld [vmem:[#allocation6 + $0xc10] sm:$0xff]
    %v526 = vld [vmem:[#allocation6 + $0xc18] sm:$0xff]
    %v527 = vld [vmem:[#allocation6 + $0xc20] sm:$0xff]
    %v528 = vld [vmem:[#allocation6 + $0xc28] sm:$0xff]
    %v529 = vld [vmem:[#allocation6 + $0xc30] sm:$0xff]
    %v530 = vld [vmem:[#allocation6 + $0xc38] sm:$0xff]
    %v531 = vld [vmem:[#allocation6 + $0xc40] sm:$0xff]
    %v532 = vld [vmem:[#allocation6 + $0xc48] sm:$0xff]
    %v533 = vld [vmem:[#allocation6 + $0xc50] sm:$0xff]
    %v534 = vld [vmem:[#allocation6 + $0xc58] sm:$0xff]
    %v535 = vld [vmem:[#allocation6 + $0xc60] sm:$0xff]
    %v536 = vld [vmem:[#allocation6 + $0xc68] sm:$0xff]
    %v537 = vld [vmem:[#allocation6 + $0xc70] sm:$0xff]
    %v538 = vld [vmem:[#allocation6 + $0xc78] sm:$0xff]
    %v539 = vld [vmem:[#allocation6 + $0xc80] sm:$0xff]
    %v540 = vld [vmem:[#allocation6 + $0xc88] sm:$0xff]
    %v541 = vld [vmem:[#allocation6 + $0xc90] sm:$0xff]
    %v542 = vld [vmem:[#allocation6 + $0xc98] sm:$0xff]
    %v543 = vld [vmem:[#allocation6 + $0xca0] sm:$0xff]
    %v544 = vld [vmem:[#allocation6 + $0xca8] sm:$0xff]
    %v545 = vld [vmem:[#allocation6 + $0xcb0] sm:$0xff]
    %v546 = vld [vmem:[#allocation6 + $0xcb8] sm:$0xff]
    %v547 = vld [vmem:[#allocation6 + $0xcc0] sm:$0xff]
    %v548 = vld [vmem:[#allocation6 + $0xcc8] sm:$0xff]
    %v549 = vld [vmem:[#allocation6 + $0xcd0] sm:$0xff]
    %v550 = vld [vmem:[#allocation6 + $0xcd8] sm:$0xff]
    %v551 = vld [vmem:[#allocation6 + $0xce0] sm:$0xff]
    %v552 = vld [vmem:[#allocation6 + $0xce8] sm:$0xff]
    %v553 = vld [vmem:[#allocation6 + $0xcf0] sm:$0xff]
    %v554 = vld [vmem:[#allocation6 + $0xcf8] sm:$0xff]
    %v555 = vld [vmem:[#allocation6 + $0xd00] sm:$0xff]
    %v556 = vld [vmem:[#allocation6 + $0xd08] sm:$0xff]
    %v557 = vld [vmem:[#allocation6 + $0xd10] sm:$0xff]
    %v558 = vld [vmem:[#allocation6 + $0xd18] sm:$0xff]
    %v559 = vld [vmem:[#allocation6 + $0xd20] sm:$0xff]
    %v560 = vld [vmem:[#allocation6 + $0xd28] sm:$0xff]
    %v561 = vld [vmem:[#allocation6 + $0xd30] sm:$0xff]
    %v562 = vld [vmem:[#allocation6 + $0xd38] sm:$0xff]
    %v563 = vld [vmem:[#allocation6 + $0xd40] sm:$0xff]
    %v564 = vld [vmem:[#allocation6 + $0xd48] sm:$0xff]
    %v565 = vld [vmem:[#allocation6 + $0xd50] sm:$0xff]
    %v566 = vld [vmem:[#allocation6 + $0xd58] sm:$0xff]
    %v567 = vld [vmem:[#allocation6 + $0xd60] sm:$0xff]
    %v568 = vld [vmem:[#allocation6 + $0xd68] sm:$0xff]
    %v569 = vld [vmem:[#allocation6 + $0xd70] sm:$0xff]
    %v570 = vld [vmem:[#allocation6 + $0xd78] sm:$0xff]
    %v571 = vld [vmem:[#allocation6 + $0xd80] sm:$0xff]
    %v572 = vld [vmem:[#allocation6 + $0xd88] sm:$0xff]
    %v573 = vld [vmem:[#allocation6 + $0xd90] sm:$0xff]
    %v574 = vld [vmem:[#allocation6 + $0xd98] sm:$0xff]
    %v575 = vld [vmem:[#allocation6 + $0xda0] sm:$0xff]
    %v576 = vld [vmem:[#allocation6 + $0xda8] sm:$0xff]
    %v577 = vld [vmem:[#allocation6 + $0xdb0] sm:$0xff]
    %v578 = vld [vmem:[#allocation6 + $0xdb8] sm:$0xff]
    %v579 = vld [vmem:[#allocation6 + $0xdc0] sm:$0xff]
    %v580 = vld [vmem:[#allocation6 + $0xdc8] sm:$0xff]
    %v581 = vld [vmem:[#allocation6 + $0xdd0] sm:$0xff]
    %v582 = vld [vmem:[#allocation6 + $0xdd8] sm:$0xff]
    %v583 = vld [vmem:[#allocation6 + $0xde0] sm:$0xff]
    %v584 = vld [vmem:[#allocation6 + $0xde8] sm:$0xff]
    %v585 = vld [vmem:[#allocation6 + $0xdf0] sm:$0xff]
    %v586 = vld [vmem:[#allocation6 + $0xdf8] sm:$0xff]
    %v591 = vunpack.c.l.b16 %v135
    %v592 = vunpack.c.h.b16 %v135
    %v593 = vunpack.c.l.b16 %v136
    %v594 = vunpack.c.h.b16 %v136
    %v595 = vunpack.c.l.b16 %v137
    %v596 = vunpack.c.h.b16 %v137
    %v597 = vunpack.c.l.b16 %v138
    %v598 = vpack.c.b16 %v591, %v591
    %v599 = vpack.c.b16 %v592, %v592
    %v600 = vpack.c.b16 %v593, %v593
    %v601 = vpack.c.b16 %v594, %v594
    %v602 = vpack.c.b16 %v595, %v595
    %v603 = vpack.c.b16 %v596, %v596
    %v604 = vpack.c.b16 %v597, %v597
    %v1060 = vunpack.c.l.b16 %v139
    %v1061 = vunpack.c.h.b16 %v139
    %v1062 = vunpack.c.l.b16 %v140
    %v1063 = vunpack.c.h.b16 %v140
    %v1064 = vunpack.c.l.b16 %v141
    %v1065 = vunpack.c.h.b16 %v141
    %v1066 = vunpack.c.l.b16 %v142
    %v1067 = vunpack.c.h.b16 %v142
    %v1068 = vunpack.c.l.b16 %v143
    %v1069 = vunpack.c.h.b16 %v143
    %v1070 = vunpack.c.l.b16 %v144
    %v1071 = vunpack.c.h.b16 %v144
    %v1072 = vunpack.c.l.b16 %v145
    %v1073 = vunpack.c.h.b16 %v145
    %v1074 = vunpack.c.l.b16 %v146
    %v1075 = vunpack.c.h.b16 %v146
    %v1076 = vunpack.c.l.b16 %v147
    %v1077 = vunpack.c.h.b16 %v147
    %v1078 = vunpack.c.l.b16 %v148
    %v1079 = vunpack.c.h.b16 %v148
    %v1080 = vunpack.c.l.b16 %v149
    %v1081 = vunpack.c.h.b16 %v149
    %v1082 = vunpack.c.l.b16 %v150
    %v1083 = vunpack.c.h.b16 %v150
    %v1084 = vunpack.c.l.b16 %v151
    %v1085 = vunpack.c.h.b16 %v151
    %v1086 = vunpack.c.l.b16 %v152
    %v1087 = vunpack.c.h.b16 %v152
    %v1088 = vunpack.c.l.b16 %v153
    %v1089 = vunpack.c.h.b16 %v153
    %v1090 = vunpack.c.l.b16 %v154
    %v1091 = vunpack.c.h.b16 %v154
    %v1092 = vunpack.c.l.b16 %v155
    %v1093 = vunpack.c.h.b16 %v155
    %v1094 = vunpack.c.l.b16 %v156
    %v1095 = vunpack.c.h.b16 %v156
    %v1096 = vunpack.c.l.b16 %v157
    %v1097 = vunpack.c.h.b16 %v157
    %v1098 = vunpack.c.l.b16 %v158
    %v1099 = vunpack.c.h.b16 %v158
    %v1100 = vunpack.c.l.b16 %v159
    %v1101 = vunpack.c.h.b16 %v159
    %v1102 = vunpack.c.l.b16 %v160
    %v1103 = vunpack.c.h.b16 %v160
    %v1104 = vunpack.c.l.b16 %v161
    %v1105 = vunpack.c.h.b16 %v161
    %v1106 = vunpack.c.l.b16 %v162
    %v1107 = vunpack.c.h.b16 %v162
    %v1108 = vunpack.c.l.b16 %v163
    %v1109 = vunpack.c.h.b16 %v163
    %v1110 = vunpack.c.l.b16 %v164
    %v1111 = vunpack.c.h.b16 %v164
    %v1112 = vunpack.c.l.b16 %v165
    %v1113 = vunpack.c.h.b16 %v165
    %v1114 = vunpack.c.l.b16 %v166
    %v1115 = vunpack.c.h.b16 %v166
    %v1116 = vunpack.c.l.b16 %v167
    %v1117 = vunpack.c.h.b16 %v167
    %v1118 = vunpack.c.l.b16 %v168
    %v1119 = vunpack.c.h.b16 %v168
    %v1120 = vunpack.c.l.b16 %v169
    %v1121 = vunpack.c.h.b16 %v169
    %v1122 = vunpack.c.l.b16 %v170
    %v1123 = vunpack.c.h.b16 %v170
    %v1124 = vunpack.c.l.b16 %v171
    %v1125 = vunpack.c.h.b16 %v171
    %v1126 = vunpack.c.l.b16 %v172
    %v1127 = vunpack.c.h.b16 %v172
    %v1128 = vunpack.c.l.b16 %v173
    %v1129 = vunpack.c.h.b16 %v173
    %v1130 = vunpack.c.l.b16 %v174
    %v1131 = vunpack.c.h.b16 %v174
    %v1132 = vunpack.c.l.b16 %v175
    %v1133 = vunpack.c.h.b16 %v175
    %v1134 = vunpack.c.l.b16 %v176
    %v1135 = vunpack.c.h.b16 %v176
    %v1136 = vunpack.c.l.b16 %v177
    %v1137 = vunpack.c.h.b16 %v177
    %v1138 = vunpack.c.l.b16 %v178
    %v1139 = vunpack.c.h.b16 %v178
    %v1140 = vunpack.c.l.b16 %v179
    %v1141 = vunpack.c.h.b16 %v179
    %v1142 = vunpack.c.l.b16 %v180
    %v1143 = vunpack.c.h.b16 %v180
    %v1144 = vunpack.c.l.b16 %v181
    %v1145 = vunpack.c.h.b16 %v181
    %v1146 = vunpack.c.l.b16 %v182
    %v1147 = vunpack.c.h.b16 %v182
    %v1148 = vunpack.c.l.b16 %v183
    %v1149 = vunpack.c.h.b16 %v183
    %v1150 = vunpack.c.l.b16 %v184
    %v1151 = vunpack.c.h.b16 %v184
    %v1152 = vunpack.c.l.b16 %v185
    %v1153 = vunpack.c.h.b16 %v185
    %v1154 = vunpack.c.l.b16 %v186
    %v1155 = vunpack.c.h.b16 %v186
    %v1156 = vunpack.c.l.b16 %v187
    %v1157 = vunpack.c.h.b16 %v187
    %v1158 = vunpack.c.l.b16 %v188
    %v1159 = vunpack.c.h.b16 %v188
    %v1160 = vunpack.c.l.b16 %v189
    %v1161 = vunpack.c.h.b16 %v189
    %v1162 = vunpack.c.l.b16 %v190
    %v1163 = vunpack.c.h.b16 %v190
    %v1164 = vunpack.c.l.b16 %v191
    %v1165 = vunpack.c.h.b16 %v191
    %v1166 = vunpack.c.l.b16 %v192
    %v1167 = vunpack.c.h.b16 %v192
    %v1168 = vunpack.c.l.b16 %v193
    %v1169 = vunpack.c.h.b16 %v193
    %v1170 = vunpack.c.l.b16 %v194
    %v1171 = vunpack.c.h.b16 %v194
    %v1172 = vunpack.c.l.b16 %v195
    %v1173 = vunpack.c.h.b16 %v195
    %v1174 = vunpack.c.l.b16 %v196
    %v1175 = vunpack.c.h.b16 %v196
    %v1176 = vunpack.c.l.b16 %v197
    %v1177 = vunpack.c.h.b16 %v197
    %v1178 = vunpack.c.l.b16 %v198
    %v1179 = vunpack.c.h.b16 %v198
    %v1180 = vunpack.c.l.b16 %v199
    %v1181 = vunpack.c.h.b16 %v199
    %v1182 = vunpack.c.l.b16 %v200
    %v1183 = vunpack.c.h.b16 %v200
    %v1184 = vunpack.c.l.b16 %v201
    %v1185 = vunpack.c.h.b16 %v201
    %v1186 = vunpack.c.l.b16 %v202
    %v1187 = vunpack.c.h.b16 %v202
    %v1188 = vunpack.c.l.b16 %v203
    %v1189 = vunpack.c.h.b16 %v203
    %v1190 = vunpack.c.l.b16 %v204
    %v1191 = vunpack.c.h.b16 %v204
    %v1192 = vunpack.c.l.b16 %v205
    %v1193 = vunpack.c.h.b16 %v205
    %v1194 = vunpack.c.l.b16 %v206
    %v1195 = vunpack.c.h.b16 %v206
    %v1196 = vunpack.c.l.b16 %v207
    %v1197 = vunpack.c.h.b16 %v207
    %v1198 = vunpack.c.l.b16 %v208
    %v1199 = vunpack.c.h.b16 %v208
    %v1200 = vunpack.c.l.b16 %v209
    %v1201 = vunpack.c.h.b16 %v209
    %v1202 = vunpack.c.l.b16 %v210
    %v1203 = vunpack.c.h.b16 %v210
    %v1204 = vunpack.c.l.b16 %v211
    %v1205 = vunpack.c.h.b16 %v211
    %v1206 = vunpack.c.l.b16 %v212
    %v1207 = vunpack.c.h.b16 %v212
    %v1208 = vunpack.c.l.b16 %v213
    %v1209 = vunpack.c.h.b16 %v213
    %v1210 = vunpack.c.l.b16 %v214
    %v1211 = vunpack.c.h.b16 %v214
    %v1212 = vunpack.c.l.b16 %v215
    %v1213 = vunpack.c.h.b16 %v215
    %v1214 = vunpack.c.l.b16 %v216
    %v1215 = vunpack.c.h.b16 %v216
    %v1216 = vunpack.c.l.b16 %v217
    %v1217 = vunpack.c.h.b16 %v217
    %v1218 = vunpack.c.l.b16 %v218
    %v1219 = vunpack.c.h.b16 %v218
    %v1220 = vunpack.c.l.b16 %v219
    %v1221 = vunpack.c.h.b16 %v219
    %v1222 = vunpack.c.l.b16 %v220
    %v1223 = vunpack.c.h.b16 %v220
    %v1224 = vunpack.c.l.b16 %v221
    %v1225 = vunpack.c.h.b16 %v221
    %v1226 = vunpack.c.l.b16 %v222
    %v1227 = vunpack.c.h.b16 %v222
    %v1228 = vunpack.c.l.b16 %v223
    %v1229 = vunpack.c.h.b16 %v223
    %v1230 = vunpack.c.l.b16 %v224
    %v1231 = vunpack.c.h.b16 %v224
    %v1232 = vunpack.c.l.b16 %v225
    %v1233 = vunpack.c.h.b16 %v225
    %v1234 = vunpack.c.l.b16 %v226
    %v1235 = vunpack.c.h.b16 %v226
    %v1236 = vunpack.c.l.b16 %v227
    %v1237 = vunpack.c.h.b16 %v227
    %v1238 = vunpack.c.l.b16 %v228
    %v1239 = vunpack.c.h.b16 %v228
    %v1240 = vunpack.c.l.b16 %v229
    %v1241 = vunpack.c.h.b16 %v229
    %v1242 = vunpack.c.l.b16 %v230
    %v1243 = vunpack.c.h.b16 %v230
    %v1244 = vunpack.c.l.b16 %v231
    %v1245 = vunpack.c.h.b16 %v231
    %v1246 = vunpack.c.l.b16 %v232
    %v1247 = vunpack.c.h.b16 %v232
    %v1248 = vunpack.c.l.b16 %v233
    %v1249 = vunpack.c.h.b16 %v233
    %v1250 = vunpack.c.l.b16 %v234
    %v1251 = vunpack.c.h.b16 %v234
    %v1252 = vunpack.c.l.b16 %v235
    %v1253 = vunpack.c.h.b16 %v235
    %v1254 = vunpack.c.l.b16 %v236
    %v1255 = vunpack.c.h.b16 %v236
    %v1256 = vunpack.c.l.b16 %v237
    %v1257 = vunpack.c.h.b16 %v237
    %v1258 = vunpack.c.l.b16 %v238
    %v1259 = vunpack.c.h.b16 %v238
    %v1260 = vunpack.c.l.b16 %v239
    %v1261 = vunpack.c.h.b16 %v239
    %v1262 = vunpack.c.l.b16 %v240
    %v1263 = vunpack.c.h.b16 %v240
    %v1264 = vunpack.c.l.b16 %v241
    %v1265 = vunpack.c.h.b16 %v241
    %v1266 = vunpack.c.l.b16 %v242
    %v1267 = vunpack.c.h.b16 %v242
    %v1268 = vunpack.c.l.b16 %v243
    %v1269 = vunpack.c.h.b16 %v243
    %v1270 = vunpack.c.l.b16 %v244
    %v1271 = vunpack.c.h.b16 %v244
    %v1272 = vunpack.c.l.b16 %v245
    %v1273 = vunpack.c.h.b16 %v245
    %v1274 = vunpack.c.l.b16 %v246
    %v1275 = vunpack.c.h.b16 %v246
    %v1276 = vunpack.c.l.b16 %v247
    %v1277 = vunpack.c.h.b16 %v247
    %v1278 = vunpack.c.l.b16 %v248
    %v1279 = vunpack.c.h.b16 %v248
    %v1280 = vunpack.c.l.b16 %v249
    %v1281 = vunpack.c.h.b16 %v249
    %v1282 = vunpack.c.l.b16 %v250
    %v1283 = vunpack.c.h.b16 %v250
    %v1284 = vunpack.c.l.b16 %v251
    %v1285 = vunpack.c.h.b16 %v251
    %v1286 = vunpack.c.l.b16 %v252
    %v1287 = vunpack.c.h.b16 %v252
    %v1288 = vunpack.c.l.b16 %v253
    %v1289 = vunpack.c.h.b16 %v253
    %v1290 = vunpack.c.l.b16 %v254
    %v1291 = vunpack.c.h.b16 %v254
    %v1292 = vunpack.c.l.b16 %v255
    %v1293 = vunpack.c.h.b16 %v255
    %v1294 = vunpack.c.l.b16 %v256
    %v1295 = vunpack.c.h.b16 %v256
    %v1296 = vunpack.c.l.b16 %v257
    %v1297 = vunpack.c.h.b16 %v257
    %v1298 = vunpack.c.l.b16 %v258
    %v1299 = vunpack.c.h.b16 %v258
    %v1300 = vunpack.c.l.b16 %v259
    %v1301 = vunpack.c.h.b16 %v259
    %v1302 = vunpack.c.l.b16 %v260
    %v1303 = vunpack.c.h.b16 %v260
    %v1304 = vunpack.c.l.b16 %v261
    %v1305 = vunpack.c.h.b16 %v261
    %v1306 = vunpack.c.l.b16 %v262
    %v1307 = vunpack.c.h.b16 %v262
    %v1308 = vunpack.c.l.b16 %v263
    %v1309 = vunpack.c.h.b16 %v263
    %v1310 = vunpack.c.l.b16 %v264
    %v1311 = vunpack.c.h.b16 %v264
    %v1312 = vunpack.c.l.b16 %v265
    %v1313 = vunpack.c.h.b16 %v265
    %v1314 = vunpack.c.l.b16 %v266
    %v1315 = vunpack.c.h.b16 %v266
    %v1316 = vunpack.c.l.b16 %v267
    %v1317 = vunpack.c.h.b16 %v267
    %v1318 = vunpack.c.l.b16 %v268
    %v1319 = vunpack.c.h.b16 %v268
    %v1320 = vunpack.c.l.b16 %v269
    %v1321 = vunpack.c.h.b16 %v269
    %v1322 = vunpack.c.l.b16 %v270
    %v1323 = vunpack.c.h.b16 %v270
    %v1324 = vunpack.c.l.b16 %v271
    %v1325 = vunpack.c.h.b16 %v271
    %v1326 = vunpack.c.l.b16 %v272
    %v1327 = vunpack.c.h.b16 %v272
    %v1328 = vunpack.c.l.b16 %v273
    %v1329 = vunpack.c.h.b16 %v273
    %v1330 = vunpack.c.l.b16 %v274
    %v1331 = vunpack.c.h.b16 %v274
    %v1332 = vunpack.c.l.b16 %v275
    %v1333 = vunpack.c.h.b16 %v275
    %v1334 = vunpack.c.l.b16 %v276
    %v1335 = vunpack.c.h.b16 %v276
    %v1336 = vunpack.c.l.b16 %v277
    %v1337 = vunpack.c.h.b16 %v277
    %v1338 = vunpack.c.l.b16 %v278
    %v1339 = vunpack.c.h.b16 %v278
    %v1340 = vunpack.c.l.b16 %v279
    %v1341 = vunpack.c.h.b16 %v279
    %v1342 = vunpack.c.l.b16 %v280
    %v1343 = vunpack.c.h.b16 %v280
    %v1344 = vunpack.c.l.b16 %v281
    %v1345 = vunpack.c.h.b16 %v281
    %v1346 = vunpack.c.l.b16 %v282
    %v1347 = vunpack.c.h.b16 %v282
    %v1348 = vunpack.c.l.b16 %v283
    %v1349 = vunpack.c.h.b16 %v283
    %v1350 = vunpack.c.l.b16 %v284
    %v1351 = vunpack.c.h.b16 %v284
    %v1352 = vunpack.c.l.b16 %v285
    %v1353 = vunpack.c.h.b16 %v285
    %v1354 = vunpack.c.l.b16 %v286
    %v1355 = vunpack.c.h.b16 %v286
    %v1356 = vunpack.c.l.b16 %v287
    %v1357 = vunpack.c.h.b16 %v287
    %v1358 = vunpack.c.l.b16 %v288
    %v1359 = vunpack.c.h.b16 %v288
    %v1360 = vunpack.c.l.b16 %v289
    %v1361 = vunpack.c.h.b16 %v289
    %v1362 = vunpack.c.l.b16 %v290
    %v1363 = vunpack.c.h.b16 %v290
    %v1364 = vunpack.c.l.b16 %v291
    %v1365 = vunpack.c.h.b16 %v291
    %v1366 = vunpack.c.l.b16 %v292
    %v1367 = vunpack.c.h.b16 %v292
    %v1368 = vunpack.c.l.b16 %v293
    %v1369 = vunpack.c.h.b16 %v293
    %v1370 = vunpack.c.l.b16 %v294
    %v1371 = vunpack.c.h.b16 %v294
    %v1372 = vunpack.c.l.b16 %v295
    %v1373 = vunpack.c.h.b16 %v295
    %v1374 = vunpack.c.l.b16 %v296
    %v1375 = vunpack.c.h.b16 %v296
    %v1376 = vunpack.c.l.b16 %v297
    %v1377 = vunpack.c.h.b16 %v297
    %v1378 = vunpack.c.l.b16 %v298
    %v1379 = vunpack.c.h.b16 %v298
    %v1380 = vunpack.c.l.b16 %v299
    %v1381 = vunpack.c.h.b16 %v299
    %v1382 = vunpack.c.l.b16 %v300
    %v1383 = vunpack.c.h.b16 %v300
    %v1384 = vunpack.c.l.b16 %v301
    %v1385 = vunpack.c.h.b16 %v301
    %v1386 = vunpack.c.l.b16 %v302
    %v1387 = vunpack.c.h.b16 %v302
    %v1388 = vunpack.c.l.b16 %v303
    %v1389 = vunpack.c.h.b16 %v303
    %v1390 = vunpack.c.l.b16 %v304
    %v1391 = vunpack.c.h.b16 %v304
    %v1392 = vunpack.c.l.b16 %v305
    %v1393 = vunpack.c.h.b16 %v305
    %v1394 = vunpack.c.l.b16 %v306
    %v1395 = vunpack.c.h.b16 %v306
    %v1396 = vunpack.c.l.b16 %v307
    %v1397 = vunpack.c.h.b16 %v307
    %v1398 = vunpack.c.l.b16 %v308
    %v1399 = vunpack.c.h.b16 %v308
    %v1400 = vunpack.c.l.b16 %v309
    %v1401 = vunpack.c.h.b16 %v309
    %v1402 = vunpack.c.l.b16 %v310
    %v1403 = vunpack.c.h.b16 %v310
    %v1404 = vunpack.c.l.b16 %v311
    %v1405 = vunpack.c.h.b16 %v311
    %v1406 = vunpack.c.l.b16 %v312
    %v1407 = vunpack.c.h.b16 %v312
    %v1408 = vunpack.c.l.b16 %v313
    %v1409 = vunpack.c.h.b16 %v313
    %v1410 = vunpack.c.l.b16 %v314
    %v1411 = vunpack.c.h.b16 %v314
    %v1412 = vunpack.c.l.b16 %v315
    %v1413 = vunpack.c.h.b16 %v315
    %v1414 = vunpack.c.l.b16 %v316
    %v1415 = vunpack.c.h.b16 %v316
    %v1416 = vunpack.c.l.b16 %v317
    %v1417 = vunpack.c.h.b16 %v317
    %v1418 = vunpack.c.l.b16 %v318
    %v1419 = vunpack.c.h.b16 %v318
    %v1420 = vunpack.c.l.b16 %v319
    %v1421 = vunpack.c.h.b16 %v319
    %v1422 = vunpack.c.l.b16 %v320
    %v1423 = vunpack.c.h.b16 %v320
    %v1424 = vunpack.c.l.b16 %v321
    %v1425 = vunpack.c.h.b16 %v321
    %v1426 = vunpack.c.l.b16 %v322
    %v1427 = vunpack.c.h.b16 %v322
    %v1428 = vunpack.c.l.b16 %v323
    %v1429 = vunpack.c.h.b16 %v323
    %v1430 = vunpack.c.l.b16 %v324
    %v1431 = vunpack.c.h.b16 %v324
    %v1432 = vunpack.c.l.b16 %v325
    %v1433 = vunpack.c.h.b16 %v325
    %v1434 = vunpack.c.l.b16 %v326
    %v1435 = vunpack.c.h.b16 %v326
    %v1436 = vunpack.c.l.b16 %v327
    %v1437 = vunpack.c.h.b16 %v327
    %v1438 = vunpack.c.l.b16 %v328
    %v1439 = vunpack.c.h.b16 %v328
    %v1440 = vunpack.c.l.b16 %v329
    %v1441 = vunpack.c.h.b16 %v329
    %v1442 = vunpack.c.l.b16 %v330
    %v1443 = vunpack.c.h.b16 %v330
    %v1444 = vunpack.c.l.b16 %v331
    %v1445 = vunpack.c.h.b16 %v331
    %v1446 = vunpack.c.l.b16 %v332
    %v1447 = vunpack.c.h.b16 %v332
    %v1448 = vunpack.c.l.b16 %v333
    %v1449 = vunpack.c.h.b16 %v333
    %v1450 = vunpack.c.l.b16 %v334
    %v1451 = vunpack.c.h.b16 %v334
    %v1452 = vunpack.c.l.b16 %v335
    %v1453 = vunpack.c.h.b16 %v335
    %v1454 = vunpack.c.l.b16 %v336
    %v1455 = vunpack.c.h.b16 %v336
    %v1456 = vunpack.c.l.b16 %v337
    %v1457 = vunpack.c.h.b16 %v337
    %v1458 = vunpack.c.l.b16 %v338
    %v1459 = vunpack.c.h.b16 %v338
    %v1460 = vunpack.c.l.b16 %v339
    %v1461 = vunpack.c.h.b16 %v339
    %v1462 = vunpack.c.l.b16 %v340
    %v1463 = vunpack.c.h.b16 %v340
    %v1464 = vunpack.c.l.b16 %v341
    %v1465 = vunpack.c.h.b16 %v341
    %v1466 = vunpack.c.l.b16 %v342
    %v1467 = vunpack.c.h.b16 %v342
    %v1468 = vunpack.c.l.b16 %v343
    %v1469 = vunpack.c.h.b16 %v343
    %v1470 = vunpack.c.l.b16 %v344
    %v1471 = vunpack.c.h.b16 %v344
    %v1472 = vunpack.c.l.b16 %v345
    %v1473 = vunpack.c.h.b16 %v345
    %v1474 = vunpack.c.l.b16 %v346
    %v1475 = vunpack.c.h.b16 %v346
    %v1476 = vunpack.c.l.b16 %v347
    %v1477 = vunpack.c.h.b16 %v347
    %v1478 = vunpack.c.l.b16 %v348
    %v1479 = vunpack.c.h.b16 %v348
    %v1480 = vunpack.c.l.b16 %v349
    %v1481 = vunpack.c.h.b16 %v349
    %v1482 = vunpack.c.l.b16 %v350
    %v1483 = vunpack.c.h.b16 %v350
    %v1484 = vunpack.c.l.b16 %v351
    %v1485 = vunpack.c.h.b16 %v351
    %v1486 = vunpack.c.l.b16 %v352
    %v1487 = vunpack.c.h.b16 %v352
    %v1488 = vunpack.c.l.b16 %v353
    %v1489 = vunpack.c.h.b16 %v353
    %v1490 = vunpack.c.l.b16 %v354
    %v1491 = vunpack.c.h.b16 %v354
    %v1492 = vunpack.c.l.b16 %v355
    %v1493 = vunpack.c.h.b16 %v355
    %v1494 = vunpack.c.l.b16 %v356
    %v1495 = vunpack.c.h.b16 %v356
    %v1496 = vunpack.c.l.b16 %v357
    %v1497 = vunpack.c.h.b16 %v357
    %v1498 = vunpack.c.l.b16 %v358
    %v1499 = vunpack.c.h.b16 %v358
    %v1500 = vunpack.c.l.b16 %v359
    %v1501 = vunpack.c.h.b16 %v359
    %v1502 = vunpack.c.l.b16 %v360
    %v1503 = vunpack.c.h.b16 %v360
    %v1504 = vunpack.c.l.b16 %v361
    %v1505 = vunpack.c.h.b16 %v361
    %v1506 = vunpack.c.l.b16 %v362
    %v1507 = vunpack.c.h.b16 %v362
    %v1508 = vunpack.c.l.b16 %v363
    %v1509 = vunpack.c.h.b16 %v363
    %v1510 = vunpack.c.l.b16 %v364
    %v1511 = vunpack.c.h.b16 %v364
    %v1512 = vunpack.c.l.b16 %v365
    %v1513 = vunpack.c.h.b16 %v365
    %v1514 = vunpack.c.l.b16 %v366
    %v1515 = vunpack.c.h.b16 %v366
    %v1516 = vunpack.c.l.b16 %v367
    %v1517 = vunpack.c.h.b16 %v367
    %v1518 = vunpack.c.l.b16 %v368
    %v1519 = vunpack.c.h.b16 %v368
    %v1520 = vunpack.c.l.b16 %v369
    %v1521 = vunpack.c.h.b16 %v369
    %v1522 = vunpack.c.l.b16 %v370
    %v1523 = vunpack.c.h.b16 %v370
    %v1524 = vunpack.c.l.b16 %v371
    %v1525 = vunpack.c.h.b16 %v371
    %v1526 = vunpack.c.l.b16 %v372
    %v1527 = vunpack.c.h.b16 %v372
    %v1528 = vunpack.c.l.b16 %v373
    %v1529 = vunpack.c.h.b16 %v373
    %v1530 = vunpack.c.l.b16 %v374
    %v1531 = vunpack.c.h.b16 %v374
    %v1532 = vunpack.c.l.b16 %v375
    %v1533 = vunpack.c.h.b16 %v375
    %v1534 = vunpack.c.l.b16 %v376
    %v1535 = vunpack.c.h.b16 %v376
    %v1536 = vunpack.c.l.b16 %v377
    %v1537 = vunpack.c.h.b16 %v377
    %v1538 = vunpack.c.l.b16 %v378
    %v1539 = vunpack.c.h.b16 %v378
    %v1540 = vunpack.c.l.b16 %v379
    %v1541 = vunpack.c.h.b16 %v379
    %v1542 = vunpack.c.l.b16 %v380
    %v1543 = vunpack.c.h.b16 %v380
    %v1544 = vunpack.c.l.b16 %v381
    %v1545 = vunpack.c.h.b16 %v381
    %v1546 = vunpack.c.l.b16 %v382
    %v1547 = vunpack.c.h.b16 %v382
    %v1548 = vunpack.c.l.b16 %v383
    %v1549 = vunpack.c.h.b16 %v383
    %v1550 = vunpack.c.l.b16 %v384
    %v1551 = vunpack.c.h.b16 %v384
    %v1552 = vunpack.c.l.b16 %v385
    %v1553 = vunpack.c.h.b16 %v385
    %v1554 = vunpack.c.l.b16 %v386
    %v1555 = vunpack.c.h.b16 %v386
    %v1556 = vunpack.c.l.b16 %v387
    %v1557 = vunpack.c.h.b16 %v387
    %v1558 = vunpack.c.l.b16 %v388
    %v1559 = vunpack.c.h.b16 %v388
    %v1560 = vunpack.c.l.b16 %v389
    %v1561 = vunpack.c.h.b16 %v389
    %v1562 = vunpack.c.l.b16 %v390
    %v1563 = vunpack.c.h.b16 %v390
    %v1564 = vunpack.c.l.b16 %v391
    %v1565 = vunpack.c.h.b16 %v391
    %v1566 = vunpack.c.l.b16 %v392
    %v1567 = vunpack.c.h.b16 %v392
    %v1568 = vunpack.c.l.b16 %v393
    %v1569 = vunpack.c.h.b16 %v393
    %v1570 = vunpack.c.l.b16 %v394
    %v1571 = vunpack.c.h.b16 %v394
    %v1572 = vunpack.c.l.b16 %v395
    %v1573 = vunpack.c.h.b16 %v395
    %v1574 = vunpack.c.l.b16 %v396
    %v1575 = vunpack.c.h.b16 %v396
    %v1576 = vunpack.c.l.b16 %v397
    %v1577 = vunpack.c.h.b16 %v397
    %v1578 = vunpack.c.l.b16 %v398
    %v1579 = vunpack.c.h.b16 %v398
    %v1580 = vunpack.c.l.b16 %v399
    %v1581 = vunpack.c.h.b16 %v399
    %v1582 = vunpack.c.l.b16 %v400
    %v1583 = vunpack.c.h.b16 %v400
    %v1584 = vunpack.c.l.b16 %v401
    %v1585 = vunpack.c.h.b16 %v401
    %v1586 = vunpack.c.l.b16 %v402
    %v1587 = vunpack.c.h.b16 %v402
    %v1588 = vunpack.c.l.b16 %v403
    %v1589 = vunpack.c.h.b16 %v403
    %v1590 = vunpack.c.l.b16 %v404
    %v1591 = vunpack.c.h.b16 %v404
    %v1592 = vunpack.c.l.b16 %v405
    %v1593 = vunpack.c.h.b16 %v405
    %v1594 = vunpack.c.l.b16 %v406
    %v1595 = vunpack.c.h.b16 %v406
    %v1596 = vunpack.c.l.b16 %v407
    %v1597 = vunpack.c.h.b16 %v407
    %v1598 = vunpack.c.l.b16 %v408
    %v1599 = vunpack.c.h.b16 %v408
    %v1600 = vunpack.c.l.b16 %v409
    %v1601 = vunpack.c.h.b16 %v409
    %v1602 = vunpack.c.l.b16 %v410
    %v1603 = vunpack.c.h.b16 %v410
    %v1604 = vunpack.c.l.b16 %v411
    %v1605 = vunpack.c.h.b16 %v411
    %v1606 = vunpack.c.l.b16 %v412
    %v1607 = vunpack.c.h.b16 %v412
    %v1608 = vunpack.c.l.b16 %v413
    %v1609 = vunpack.c.h.b16 %v413
    %v1610 = vunpack.c.l.b16 %v414
    %v1611 = vunpack.c.h.b16 %v414
    %v1612 = vunpack.c.l.b16 %v415
    %v1613 = vunpack.c.h.b16 %v415
    %v1614 = vunpack.c.l.b16 %v416
    %v1615 = vunpack.c.h.b16 %v416
    %v1616 = vunpack.c.l.b16 %v417
    %v1617 = vunpack.c.h.b16 %v417
    %v1618 = vunpack.c.l.b16 %v418
    %v1619 = vunpack.c.h.b16 %v418
    %v1620 = vunpack.c.l.b16 %v419
    %v1621 = vunpack.c.h.b16 %v419
    %v1622 = vunpack.c.l.b16 %v420
    %v1623 = vunpack.c.h.b16 %v420
    %v1624 = vunpack.c.l.b16 %v421
    %v1625 = vunpack.c.h.b16 %v421
    %v1626 = vunpack.c.l.b16 %v422
    %v1627 = vunpack.c.h.b16 %v422
    %v1628 = vunpack.c.l.b16 %v423
    %v1629 = vunpack.c.h.b16 %v423
    %v1630 = vunpack.c.l.b16 %v424
    %v1631 = vunpack.c.h.b16 %v424
    %v1632 = vunpack.c.l.b16 %v425
    %v1633 = vunpack.c.h.b16 %v425
    %v1634 = vunpack.c.l.b16 %v426
    %v1635 = vunpack.c.h.b16 %v426
    %v1636 = vunpack.c.l.b16 %v427
    %v1637 = vunpack.c.h.b16 %v427
    %v1638 = vunpack.c.l.b16 %v428
    %v1639 = vunpack.c.h.b16 %v428
    %v1640 = vunpack.c.l.b16 %v429
    %v1641 = vunpack.c.h.b16 %v429
    %v1642 = vunpack.c.l.b16 %v430
    %v1643 = vunpack.c.h.b16 %v430
    %v1644 = vunpack.c.l.b16 %v431
    %v1645 = vunpack.c.h.b16 %v431
    %v1646 = vunpack.c.l.b16 %v432
    %v1647 = vunpack.c.h.b16 %v432
    %v1648 = vunpack.c.l.b16 %v433
    %v1649 = vunpack.c.h.b16 %v433
    %v1650 = vunpack.c.l.b16 %v434
    %v1651 = vunpack.c.h.b16 %v434
    %v1652 = vunpack.c.l.b16 %v435
    %v1653 = vunpack.c.h.b16 %v435
    %v1654 = vunpack.c.l.b16 %v436
    %v1655 = vunpack.c.h.b16 %v436
    %v1656 = vunpack.c.l.b16 %v437
    %v1657 = vunpack.c.h.b16 %v437
    %v1658 = vunpack.c.l.b16 %v438
    %v1659 = vunpack.c.h.b16 %v438
    %v1660 = vunpack.c.l.b16 %v439
    %v1661 = vunpack.c.h.b16 %v439
    %v1662 = vunpack.c.l.b16 %v440
    %v1663 = vunpack.c.h.b16 %v440
    %v1664 = vunpack.c.l.b16 %v441
    %v1665 = vunpack.c.h.b16 %v441
    %v1666 = vunpack.c.l.b16 %v442
    %v1667 = vunpack.c.h.b16 %v442
    %v1668 = vunpack.c.l.b16 %v443
    %v1669 = vunpack.c.h.b16 %v443
    %v1670 = vunpack.c.l.b16 %v444
    %v1671 = vunpack.c.h.b16 %v444
    %v1672 = vunpack.c.l.b16 %v445
    %v1673 = vunpack.c.h.b16 %v445
    %v1674 = vunpack.c.l.b16 %v446
    %v1675 = vunpack.c.h.b16 %v446
    %v1676 = vunpack.c.l.b16 %v447
    %v1677 = vunpack.c.h.b16 %v447
    %v1678 = vunpack.c.l.b16 %v448
    %v1679 = vunpack.c.h.b16 %v448
    %v1680 = vunpack.c.l.b16 %v449
    %v1681 = vunpack.c.h.b16 %v449
    %v1682 = vunpack.c.l.b16 %v450
    %v1683 = vunpack.c.h.b16 %v450
    %v1684 = vunpack.c.l.b16 %v451
    %v1685 = vunpack.c.h.b16 %v451
    %v1686 = vunpack.c.l.b16 %v452
    %v1687 = vunpack.c.h.b16 %v452
    %v1688 = vunpack.c.l.b16 %v453
    %v1689 = vunpack.c.h.b16 %v453
    %v1690 = vunpack.c.l.b16 %v454
    %v1691 = vunpack.c.h.b16 %v454
    %v1692 = vunpack.c.l.b16 %v455
    %v1693 = vunpack.c.h.b16 %v455
    %v1694 = vunpack.c.l.b16 %v456
    %v1695 = vunpack.c.h.b16 %v456
    %v1696 = vunpack.c.l.b16 %v457
    %v1697 = vunpack.c.h.b16 %v457
    %v1698 = vunpack.c.l.b16 %v458
    %v1699 = vunpack.c.h.b16 %v458
    %v1700 = vunpack.c.l.b16 %v459
    %v1701 = vunpack.c.h.b16 %v459
    %v1702 = vunpack.c.l.b16 %v460
    %v1703 = vunpack.c.h.b16 %v460
    %v1704 = vunpack.c.l.b16 %v461
    %v1705 = vunpack.c.h.b16 %v461
    %v1706 = vunpack.c.l.b16 %v462
    %v1707 = vunpack.c.h.b16 %v462
    %v1708 = vunpack.c.l.b16 %v463
    %v1709 = vunpack.c.h.b16 %v463
    %v1710 = vunpack.c.l.b16 %v464
    %v1711 = vunpack.c.h.b16 %v464
    %v1712 = vunpack.c.l.b16 %v465
    %v1713 = vunpack.c.h.b16 %v465
    %v1714 = vunpack.c.l.b16 %v466
    %v1715 = vunpack.c.h.b16 %v466
    %v1716 = vunpack.c.l.b16 %v467
    %v1717 = vunpack.c.h.b16 %v467
    %v1718 = vunpack.c.l.b16 %v468
    %v1719 = vunpack.c.h.b16 %v468
    %v1720 = vunpack.c.l.b16 %v469
    %v1721 = vunpack.c.h.b16 %v469
    %v1722 = vunpack.c.l.b16 %v470
    %v1723 = vunpack.c.h.b16 %v470
    %v1724 = vunpack.c.l.b16 %v471
    %v1725 = vunpack.c.h.b16 %v471
    %v1726 = vunpack.c.l.b16 %v472
    %v1727 = vunpack.c.h.b16 %v472
    %v1728 = vunpack.c.l.b16 %v473
    %v1729 = vunpack.c.h.b16 %v473
    %v1730 = vunpack.c.l.b16 %v474
    %v1731 = vunpack.c.h.b16 %v474
    %v1732 = vunpack.c.l.b16 %v475
    %v1733 = vunpack.c.h.b16 %v475
    %v1734 = vunpack.c.l.b16 %v476
    %v1735 = vunpack.c.h.b16 %v476
    %v1736 = vunpack.c.l.b16 %v477
    %v1737 = vunpack.c.h.b16 %v477
    %v1738 = vunpack.c.l.b16 %v478
    %v1739 = vunpack.c.h.b16 %v478
    %v1740 = vunpack.c.l.b16 %v479
    %v1741 = vunpack.c.h.b16 %v479
    %v1742 = vunpack.c.l.b16 %v480
    %v1743 = vunpack.c.h.b16 %v480
    %v1744 = vunpack.c.l.b16 %v481
    %v1745 = vunpack.c.h.b16 %v481
    %v1746 = vunpack.c.l.b16 %v482
    %v1747 = vunpack.c.h.b16 %v482
    %v1748 = vunpack.c.l.b16 %v483
    %v1749 = vunpack.c.h.b16 %v483
    %v1750 = vunpack.c.l.b16 %v484
    %v1751 = vunpack.c.h.b16 %v484
    %v1752 = vunpack.c.l.b16 %v485
    %v1753 = vunpack.c.h.b16 %v485
    %v1754 = vunpack.c.l.b16 %v486
    %v1755 = vunpack.c.h.b16 %v486
    %v1756 = vunpack.c.l.b16 %v487
    %v1757 = vunpack.c.h.b16 %v487
    %v1758 = vunpack.c.l.b16 %v488
    %v1759 = vunpack.c.h.b16 %v488
    %v1760 = vunpack.c.l.b16 %v489
    %v1761 = vunpack.c.h.b16 %v489
    %v1762 = vunpack.c.l.b16 %v490
    %v1763 = vunpack.c.h.b16 %v490
    %v1764 = vunpack.c.l.b16 %v491
    %v1765 = vunpack.c.h.b16 %v491
    %v1766 = vunpack.c.l.b16 %v492
    %v1767 = vunpack.c.h.b16 %v492
    %v1768 = vunpack.c.l.b16 %v493
    %v1769 = vunpack.c.h.b16 %v493
    %v1770 = vunpack.c.l.b16 %v494
    %v1771 = vunpack.c.h.b16 %v494
    %v1772 = vunpack.c.l.b16 %v495
    %v1773 = vunpack.c.h.b16 %v495
    %v1774 = vunpack.c.l.b16 %v496
    %v1775 = vunpack.c.h.b16 %v496
    %v1776 = vunpack.c.l.b16 %v497
    %v1777 = vunpack.c.h.b16 %v497
    %v1778 = vunpack.c.l.b16 %v498
    %v1779 = vunpack.c.h.b16 %v498
    %v1780 = vunpack.c.l.b16 %v499
    %v1781 = vunpack.c.h.b16 %v499
    %v1782 = vunpack.c.l.b16 %v500
    %v1783 = vunpack.c.h.b16 %v500
    %v1784 = vunpack.c.l.b16 %v501
    %v1785 = vunpack.c.h.b16 %v501
    %v1786 = vunpack.c.l.b16 %v502
    %v1787 = vunpack.c.h.b16 %v502
    %v1788 = vunpack.c.l.b16 %v503
    %v1789 = vunpack.c.h.b16 %v503
    %v1790 = vunpack.c.l.b16 %v504
    %v1791 = vunpack.c.h.b16 %v504
    %v1792 = vunpack.c.l.b16 %v505
    %v1793 = vunpack.c.h.b16 %v505
    %v1794 = vunpack.c.l.b16 %v506
    %v1795 = vunpack.c.h.b16 %v506
    %v1796 = vunpack.c.l.b16 %v507
    %v1797 = vunpack.c.h.b16 %v507
    %v1798 = vunpack.c.l.b16 %v508
    %v1799 = vunpack.c.h.b16 %v508
    %v1800 = vunpack.c.l.b16 %v509
    %v1801 = vunpack.c.h.b16 %v509
    %v1802 = vunpack.c.l.b16 %v510
    %v1803 = vunpack.c.h.b16 %v510
    %v1804 = vunpack.c.l.b16 %v511
    %v1805 = vunpack.c.h.b16 %v511
    %v1806 = vunpack.c.l.b16 %v512
    %v1807 = vunpack.c.h.b16 %v512
    %v1808 = vunpack.c.l.b16 %v513
    %v1809 = vunpack.c.h.b16 %v513
    %v1810 = vunpack.c.l.b16 %v514
    %v1811 = vunpack.c.h.b16 %v514
    %v1812 = vunpack.c.l.b16 %v515
    %v1813 = vunpack.c.h.b16 %v515
    %v1814 = vunpack.c.l.b16 %v516
    %v1815 = vunpack.c.h.b16 %v516
    %v1816 = vunpack.c.l.b16 %v517
    %v1817 = vunpack.c.h.b16 %v517
    %v1818 = vunpack.c.l.b16 %v518
    %v1819 = vunpack.c.h.b16 %v518
    %v1820 = vunpack.c.l.b16 %v519
    %v1821 = vunpack.c.h.b16 %v519
    %v1822 = vunpack.c.l.b16 %v520
    %v1823 = vunpack.c.h.b16 %v520
    %v1824 = vunpack.c.l.b16 %v521
    %v1825 = vunpack.c.h.b16 %v521
    %v1826 = vunpack.c.l.b16 %v522
    %v1827 = vunpack.c.h.b16 %v522
    %v1828 = vunpack.c.l.b16 %v523
    %v1829 = vunpack.c.h.b16 %v523
    %v1830 = vunpack.c.l.b16 %v524
    %v1831 = vunpack.c.h.b16 %v524
    %v1832 = vunpack.c.l.b16 %v525
    %v1833 = vunpack.c.h.b16 %v525
    %v1834 = vunpack.c.l.b16 %v526
    %v1835 = vunpack.c.h.b16 %v526
    %v1836 = vunpack.c.l.b16 %v527
    %v1837 = vunpack.c.h.b16 %v527
    %v1838 = vunpack.c.l.b16 %v528
    %v1839 = vunpack.c.h.b16 %v528
    %v1840 = vunpack.c.l.b16 %v529
    %v1841 = vunpack.c.h.b16 %v529
    %v1842 = vunpack.c.l.b16 %v530
    %v1843 = vunpack.c.h.b16 %v530
    %v1844 = vunpack.c.l.b16 %v531
    %v1845 = vunpack.c.h.b16 %v531
    %v1846 = vunpack.c.l.b16 %v532
    %v1847 = vunpack.c.h.b16 %v532
    %v1848 = vunpack.c.l.b16 %v533
    %v1849 = vunpack.c.h.b16 %v533
    %v1850 = vunpack.c.l.b16 %v534
    %v1851 = vunpack.c.h.b16 %v534
    %v1852 = vunpack.c.l.b16 %v535
    %v1853 = vunpack.c.h.b16 %v535
    %v1854 = vunpack.c.l.b16 %v536
    %v1855 = vunpack.c.h.b16 %v536
    %v1856 = vunpack.c.l.b16 %v537
    %v1857 = vunpack.c.h.b16 %v537
    %v1858 = vunpack.c.l.b16 %v538
    %v1859 = vunpack.c.h.b16 %v538
    %v1860 = vunpack.c.l.b16 %v539
    %v1861 = vunpack.c.h.b16 %v539
    %v1862 = vunpack.c.l.b16 %v540
    %v1863 = vunpack.c.h.b16 %v540
    %v1864 = vunpack.c.l.b16 %v541
    %v1865 = vunpack.c.h.b16 %v541
    %v1866 = vunpack.c.l.b16 %v542
    %v1867 = vunpack.c.h.b16 %v542
    %v1868 = vunpack.c.l.b16 %v543
    %v1869 = vunpack.c.h.b16 %v543
    %v1870 = vunpack.c.l.b16 %v544
    %v1871 = vunpack.c.h.b16 %v544
    %v1872 = vunpack.c.l.b16 %v545
    %v1873 = vunpack.c.h.b16 %v545
    %v1874 = vunpack.c.l.b16 %v546
    %v1875 = vunpack.c.h.b16 %v546
    %v1876 = vunpack.c.l.b16 %v547
    %v1877 = vunpack.c.h.b16 %v547
    %v1878 = vunpack.c.l.b16 %v548
    %v1879 = vunpack.c.h.b16 %v548
    %v1880 = vunpack.c.l.b16 %v549
    %v1881 = vunpack.c.h.b16 %v549
    %v1882 = vunpack.c.l.b16 %v550
    %v1883 = vunpack.c.h.b16 %v550
    %v1884 = vunpack.c.l.b16 %v551
    %v1885 = vunpack.c.h.b16 %v551
    %v1886 = vunpack.c.l.b16 %v552
    %v1887 = vunpack.c.h.b16 %v552
    %v1888 = vunpack.c.l.b16 %v553
    %v1889 = vunpack.c.h.b16 %v553
    %v1890 = vunpack.c.l.b16 %v554
    %v1891 = vunpack.c.h.b16 %v554
    %v1892 = vunpack.c.l.b16 %v555
    %v1893 = vunpack.c.h.b16 %v555
    %v1894 = vunpack.c.l.b16 %v556
    %v1895 = vunpack.c.h.b16 %v556
    %v1896 = vunpack.c.l.b16 %v557
    %v1897 = vunpack.c.h.b16 %v557
    %v1898 = vunpack.c.l.b16 %v558
    %v1899 = vunpack.c.h.b16 %v558
    %v1900 = vunpack.c.l.b16 %v559
    %v1901 = vunpack.c.h.b16 %v559
    %v1902 = vunpack.c.l.b16 %v560
    %v1903 = vunpack.c.h.b16 %v560
    %v1904 = vunpack.c.l.b16 %v561
    %v1905 = vunpack.c.h.b16 %v561
    %v1906 = vunpack.c.l.b16 %v562
    %v1907 = vunpack.c.h.b16 %v562
    %v1908 = vunpack.c.l.b16 %v563
    %v1909 = vunpack.c.h.b16 %v563
    %v1910 = vunpack.c.l.b16 %v564
    %v1911 = vunpack.c.h.b16 %v564
    %v1912 = vunpack.c.l.b16 %v565
    %v1913 = vunpack.c.h.b16 %v565
    %v1914 = vunpack.c.l.b16 %v566
    %v1915 = vunpack.c.h.b16 %v566
    %v1916 = vunpack.c.l.b16 %v567
    %v1917 = vunpack.c.h.b16 %v567
    %v1918 = vunpack.c.l.b16 %v568
    %v1919 = vunpack.c.h.b16 %v568
    %v1920 = vunpack.c.l.b16 %v569
    %v1921 = vunpack.c.h.b16 %v569
    %v1922 = vunpack.c.l.b16 %v570
    %v1923 = vunpack.c.h.b16 %v570
    %v1924 = vunpack.c.l.b16 %v571
    %v1925 = vunpack.c.h.b16 %v571
    %v1926 = vunpack.c.l.b16 %v572
    %v1927 = vunpack.c.h.b16 %v572
    %v1928 = vunpack.c.l.b16 %v573
    %v1929 = vunpack.c.h.b16 %v573
    %v1930 = vunpack.c.l.b16 %v574
    %v1931 = vunpack.c.h.b16 %v574
    %v1932 = vunpack.c.l.b16 %v575
    %v1933 = vunpack.c.h.b16 %v575
    %v1934 = vunpack.c.l.b16 %v576
    %v1935 = vunpack.c.h.b16 %v576
    %v1936 = vunpack.c.l.b16 %v577
    %v1937 = vunpack.c.h.b16 %v577
    %v1938 = vunpack.c.l.b16 %v578
    %v1939 = vunpack.c.h.b16 %v578
    %v1940 = vunpack.c.l.b16 %v579
    %v1941 = vunpack.c.h.b16 %v579
    %v1942 = vunpack.c.l.b16 %v580
    %v1943 = vunpack.c.h.b16 %v580
    %v1944 = vunpack.c.l.b16 %v581
    %v1945 = vunpack.c.h.b16 %v581
    %v1946 = vunpack.c.l.b16 %v582
    %v1947 = vunpack.c.h.b16 %v582
    %v1948 = vunpack.c.l.b16 %v583
    %v1949 = vunpack.c.h.b16 %v583
    %v1950 = vunpack.c.l.b16 %v584
    %v1951 = vunpack.c.h.b16 %v584
    %v1952 = vunpack.c.l.b16 %v585
    %v1953 = vunpack.c.h.b16 %v585
    %v1954 = vunpack.c.l.b16 %v586
    %v1955 = vunpack.c.h.b16 %v586
    %v1956 = vpack.c.b16 %v1068, %v1060
    %v1957 = vpack.c.b16 %v1069, %v1061
    %v1958 = vpack.c.b16 %v1070, %v1062
    %v1959 = vpack.c.b16 %v1071, %v1063
    %v1960 = vpack.c.b16 %v1072, %v1064
    %v1961 = vpack.c.b16 %v1073, %v1065
    %v1962 = vpack.c.b16 %v1074, %v1066
    %v1963 = vpack.c.b16 %v1075, %v1067
    %v1964 = vpack.c.b16 %v1084, %v1076
    %v1965 = vpack.c.b16 %v1085, %v1077
    %v1966 = vpack.c.b16 %v1086, %v1078
    %v1967 = vpack.c.b16 %v1087, %v1079
    %v1968 = vpack.c.b16 %v1088, %v1080
    %v1969 = vpack.c.b16 %v1089, %v1081
    %v1970 = vpack.c.b16 %v1090, %v1082
    %v1971 = vpack.c.b16 %v1091, %v1083
    %v1972 = vpack.c.b16 %v1100, %v1092
    %v1973 = vpack.c.b16 %v1101, %v1093
    %v1974 = vpack.c.b16 %v1102, %v1094
    %v1975 = vpack.c.b16 %v1103, %v1095
    %v1976 = vpack.c.b16 %v1104, %v1096
    %v1977 = vpack.c.b16 %v1105, %v1097
    %v1978 = vpack.c.b16 %v1106, %v1098
    %v1979 = vpack.c.b16 %v1107, %v1099
    %v1980 = vpack.c.b16 %v1116, %v1108
    %v1981 = vpack.c.b16 %v1117, %v1109
    %v1982 = vpack.c.b16 %v1118, %v1110
    %v1983 = vpack.c.b16 %v1119, %v1111
    %v1984 = vpack.c.b16 %v1120, %v1112
    %v1985 = vpack.c.b16 %v1121, %v1113
    %v1986 = vpack.c.b16 %v1122, %v1114
    %v1987 = vpack.c.b16 %v1123, %v1115
    %v1988 = vpack.c.b16 %v1132, %v1124
    %v1989 = vpack.c.b16 %v1133, %v1125
    %v1990 = vpack.c.b16 %v1134, %v1126
    %v1991 = vpack.c.b16 %v1135, %v1127
    %v1992 = vpack.c.b16 %v1136, %v1128
    %v1993 = vpack.c.b16 %v1137, %v1129
    %v1994 = vpack.c.b16 %v1138, %v1130
    %v1995 = vpack.c.b16 %v1139, %v1131
    %v1996 = vpack.c.b16 %v1148, %v1140
    %v1997 = vpack.c.b16 %v1149, %v1141
    %v1998 = vpack.c.b16 %v1150, %v1142
    %v1999 = vpack.c.b16 %v1151, %v1143
    %v2000 = vpack.c.b16 %v1152, %v1144
    %v2001 = vpack.c.b16 %v1153, %v1145
    %v2002 = vpack.c.b16 %v1154, %v1146
    %v2003 = vpack.c.b16 %v1155, %v1147
    %v2004 = vpack.c.b16 %v1164, %v1156
    %v2005 = vpack.c.b16 %v1165, %v1157
    %v2006 = vpack.c.b16 %v1166, %v1158
    %v2007 = vpack.c.b16 %v1167, %v1159
    %v2008 = vpack.c.b16 %v1168, %v1160
    %v2009 = vpack.c.b16 %v1169, %v1161
    %v2010 = vpack.c.b16 %v1170, %v1162
    %v2011 = vpack.c.b16 %v1171, %v1163
    %v2012 = vpack.c.b16 %v1180, %v1172
    %v2013 = vpack.c.b16 %v1181, %v1173
    %v2014 = vpack.c.b16 %v1182, %v1174
    %v2015 = vpack.c.b16 %v1183, %v1175
    %v2016 = vpack.c.b16 %v1184, %v1176
    %v2017 = vpack.c.b16 %v1185, %v1177
    %v2018 = vpack.c.b16 %v1186, %v1178
    %v2019 = vpack.c.b16 %v1187, %v1179
    %v2020 = vpack.c.b16 %v1196, %v1188
    %v2021 = vpack.c.b16 %v1197, %v1189
    %v2022 = vpack.c.b16 %v1198, %v1190
    %v2023 = vpack.c.b16 %v1199, %v1191
    %v2024 = vpack.c.b16 %v1200, %v1192
    %v2025 = vpack.c.b16 %v1201, %v1193
    %v2026 = vpack.c.b16 %v1202, %v1194
    %v2027 = vpack.c.b16 %v1203, %v1195
    %v2028 = vpack.c.b16 %v1212, %v1204
    %v2029 = vpack.c.b16 %v1213, %v1205
    %v2030 = vpack.c.b16 %v1214, %v1206
    %v2031 = vpack.c.b16 %v1215, %v1207
    %v2032 = vpack.c.b16 %v1216, %v1208
    %v2033 = vpack.c.b16 %v1217, %v1209
    %v2034 = vpack.c.b16 %v1218, %v1210
    %v2035 = vpack.c.b16 %v1219, %v1211
    %v2036 = vpack.c.b16 %v1228, %v1220
    %v2037 = vpack.c.b16 %v1229, %v1221
    %v2038 = vpack.c.b16 %v1230, %v1222
    %v2039 = vpack.c.b16 %v1231, %v1223
    %v2040 = vpack.c.b16 %v1232, %v1224
    %v2041 = vpack.c.b16 %v1233, %v1225
    %v2042 = vpack.c.b16 %v1234, %v1226
    %v2043 = vpack.c.b16 %v1235, %v1227
    %v2044 = vpack.c.b16 %v1244, %v1236
    %v2045 = vpack.c.b16 %v1245, %v1237
    %v2046 = vpack.c.b16 %v1246, %v1238
    %v2047 = vpack.c.b16 %v1247, %v1239
    %v2048 = vpack.c.b16 %v1248, %v1240
    %v2049 = vpack.c.b16 %v1249, %v1241
    %v2050 = vpack.c.b16 %v1250, %v1242
    %v2051 = vpack.c.b16 %v1251, %v1243
    %v2052 = vpack.c.b16 %v1260, %v1252
    %v2053 = vpack.c.b16 %v1261, %v1253
    %v2054 = vpack.c.b16 %v1262, %v1254
    %v2055 = vpack.c.b16 %v1263, %v1255
    %v2056 = vpack.c.b16 %v1264, %v1256
    %v2057 = vpack.c.b16 %v1265, %v1257
    %v2058 = vpack.c.b16 %v1266, %v1258
    %v2059 = vpack.c.b16 %v1267, %v1259
    %v2060 = vpack.c.b16 %v1276, %v1268
    %v2061 = vpack.c.b16 %v1277, %v1269
    %v2062 = vpack.c.b16 %v1278, %v1270
    %v2063 = vpack.c.b16 %v1279, %v1271
    %v2064 = vpack.c.b16 %v1280, %v1272
    %v2065 = vpack.c.b16 %v1281, %v1273
    %v2066 = vpack.c.b16 %v1282, %v1274
    %v2067 = vpack.c.b16 %v1283, %v1275
    %v2068 = vpack.c.b16 %v1292, %v1284
    %v2069 = vpack.c.b16 %v1293, %v1285
    %v2070 = vpack.c.b16 %v1294, %v1286
    %v2071 = vpack.c.b16 %v1295, %v1287
    %v2072 = vpack.c.b16 %v1296, %v1288
    %v2073 = vpack.c.b16 %v1297, %v1289
    %v2074 = vpack.c.b16 %v1298, %v1290
    %v2075 = vpack.c.b16 %v1299, %v1291
    %v2076 = vpack.c.b16 %v1308, %v1300
    %v2077 = vpack.c.b16 %v1309, %v1301
    %v2078 = vpack.c.b16 %v1310, %v1302
    %v2079 = vpack.c.b16 %v1311, %v1303
    %v2080 = vpack.c.b16 %v1312, %v1304
    %v2081 = vpack.c.b16 %v1313, %v1305
    %v2082 = vpack.c.b16 %v1314, %v1306
    %v2083 = vpack.c.b16 %v1315, %v1307
    %v2084 = vpack.c.b16 %v1324, %v1316
    %v2085 = vpack.c.b16 %v1325, %v1317
    %v2086 = vpack.c.b16 %v1326, %v1318
    %v2087 = vpack.c.b16 %v1327, %v1319
    %v2088 = vpack.c.b16 %v1328, %v1320
    %v2089 = vpack.c.b16 %v1329, %v1321
    %v2090 = vpack.c.b16 %v1330, %v1322
    %v2091 = vpack.c.b16 %v1331, %v1323
    %v2092 = vpack.c.b16 %v1340, %v1332
    %v2093 = vpack.c.b16 %v1341, %v1333
    %v2094 = vpack.c.b16 %v1342, %v1334
    %v2095 = vpack.c.b16 %v1343, %v1335
    %v2096 = vpack.c.b16 %v1344, %v1336
    %v2097 = vpack.c.b16 %v1345, %v1337
    %v2098 = vpack.c.b16 %v1346, %v1338
    %v2099 = vpack.c.b16 %v1347, %v1339
    %v2100 = vpack.c.b16 %v1356, %v1348
    %v2101 = vpack.c.b16 %v1357, %v1349
    %v2102 = vpack.c.b16 %v1358, %v1350
    %v2103 = vpack.c.b16 %v1359, %v1351
    %v2104 = vpack.c.b16 %v1360, %v1352
    %v2105 = vpack.c.b16 %v1361, %v1353
    %v2106 = vpack.c.b16 %v1362, %v1354
    %v2107 = vpack.c.b16 %v1363, %v1355
    %v2108 = vpack.c.b16 %v1372, %v1364
    %v2109 = vpack.c.b16 %v1373, %v1365
    %v2110 = vpack.c.b16 %v1374, %v1366
    %v2111 = vpack.c.b16 %v1375, %v1367
    %v2112 = vpack.c.b16 %v1376, %v1368
    %v2113 = vpack.c.b16 %v1377, %v1369
    %v2114 = vpack.c.b16 %v1378, %v1370
    %v2115 = vpack.c.b16 %v1379, %v1371
    %v2116 = vpack.c.b16 %v1388, %v1380
    %v2117 = vpack.c.b16 %v1389, %v1381
    %v2118 = vpack.c.b16 %v1390, %v1382
    %v2119 = vpack.c.b16 %v1391, %v1383
    %v2120 = vpack.c.b16 %v1392, %v1384
    %v2121 = vpack.c.b16 %v1393, %v1385
    %v2122 = vpack.c.b16 %v1394, %v1386
    %v2123 = vpack.c.b16 %v1395, %v1387
    %v2124 = vpack.c.b16 %v1404, %v1396
    %v2125 = vpack.c.b16 %v1405, %v1397
    %v2126 = vpack.c.b16 %v1406, %v1398
    %v2127 = vpack.c.b16 %v1407, %v1399
    %v2128 = vpack.c.b16 %v1408, %v1400
    %v2129 = vpack.c.b16 %v1409, %v1401
    %v2130 = vpack.c.b16 %v1410, %v1402
    %v2131 = vpack.c.b16 %v1411, %v1403
    %v2132 = vpack.c.b16 %v1420, %v1412
    %v2133 = vpack.c.b16 %v1421, %v1413
    %v2134 = vpack.c.b16 %v1422, %v1414
    %v2135 = vpack.c.b16 %v1423, %v1415
    %v2136 = vpack.c.b16 %v1424, %v1416
    %v2137 = vpack.c.b16 %v1425, %v1417
    %v2138 = vpack.c.b16 %v1426, %v1418
    %v2139 = vpack.c.b16 %v1427, %v1419
    %v2140 = vpack.c.b16 %v1436, %v1428
    %v2141 = vpack.c.b16 %v1437, %v1429
    %v2142 = vpack.c.b16 %v1438, %v1430
    %v2143 = vpack.c.b16 %v1439, %v1431
    %v2144 = vpack.c.b16 %v1440, %v1432
    %v2145 = vpack.c.b16 %v1441, %v1433
    %v2146 = vpack.c.b16 %v1442, %v1434
    %v2147 = vpack.c.b16 %v1443, %v1435
    %v2148 = vpack.c.b16 %v1452, %v1444
    %v2149 = vpack.c.b16 %v1453, %v1445
    %v2150 = vpack.c.b16 %v1454, %v1446
    %v2151 = vpack.c.b16 %v1455, %v1447
    %v2152 = vpack.c.b16 %v1456, %v1448
    %v2153 = vpack.c.b16 %v1457, %v1449
    %v2154 = vpack.c.b16 %v1458, %v1450
    %v2155 = vpack.c.b16 %v1459, %v1451
    %v2156 = vpack.c.b16 %v1468, %v1460
    %v2157 = vpack.c.b16 %v1469, %v1461
    %v2158 = vpack.c.b16 %v1470, %v1462
    %v2159 = vpack.c.b16 %v1471, %v1463
    %v2160 = vpack.c.b16 %v1472, %v1464
    %v2161 = vpack.c.b16 %v1473, %v1465
    %v2162 = vpack.c.b16 %v1474, %v1466
    %v2163 = vpack.c.b16 %v1475, %v1467
    %v2164 = vpack.c.b16 %v1484, %v1476
    %v2165 = vpack.c.b16 %v1485, %v1477
    %v2166 = vpack.c.b16 %v1486, %v1478
    %v2167 = vpack.c.b16 %v1487, %v1479
    %v2168 = vpack.c.b16 %v1488, %v1480
    %v2169 = vpack.c.b16 %v1489, %v1481
    %v2170 = vpack.c.b16 %v1490, %v1482
    %v2171 = vpack.c.b16 %v1491, %v1483
    %v2172 = vpack.c.b16 %v1500, %v1492
    %v2173 = vpack.c.b16 %v1501, %v1493
    %v2174 = vpack.c.b16 %v1502, %v1494
    %v2175 = vpack.c.b16 %v1503, %v1495
    %v2176 = vpack.c.b16 %v1504, %v1496
    %v2177 = vpack.c.b16 %v1505, %v1497
    %v2178 = vpack.c.b16 %v1506, %v1498
    %v2179 = vpack.c.b16 %v1507, %v1499
    %v2180 = vpack.c.b16 %v1516, %v1508
    %v2181 = vpack.c.b16 %v1517, %v1509
    %v2182 = vpack.c.b16 %v1518, %v1510
    %v2183 = vpack.c.b16 %v1519, %v1511
    %v2184 = vpack.c.b16 %v1520, %v1512
    %v2185 = vpack.c.b16 %v1521, %v1513
    %v2186 = vpack.c.b16 %v1522, %v1514
    %v2187 = vpack.c.b16 %v1523, %v1515
    %v2188 = vpack.c.b16 %v1532, %v1524
    %v2189 = vpack.c.b16 %v1533, %v1525
    %v2190 = vpack.c.b16 %v1534, %v1526
    %v2191 = vpack.c.b16 %v1535, %v1527
    %v2192 = vpack.c.b16 %v1536, %v1528
    %v2193 = vpack.c.b16 %v1537, %v1529
    %v2194 = vpack.c.b16 %v1538, %v1530
    %v2195 = vpack.c.b16 %v1539, %v1531
    %v2196 = vpack.c.b16 %v1548, %v1540
    %v2197 = vpack.c.b16 %v1549, %v1541
    %v2198 = vpack.c.b16 %v1550, %v1542
    %v2199 = vpack.c.b16 %v1551, %v1543
    %v2200 = vpack.c.b16 %v1552, %v1544
    %v2201 = vpack.c.b16 %v1553, %v1545
    %v2202 = vpack.c.b16 %v1554, %v1546
    %v2203 = vpack.c.b16 %v1555, %v1547
    %v2204 = vpack.c.b16 %v1564, %v1556
    %v2205 = vpack.c.b16 %v1565, %v1557
    %v2206 = vpack.c.b16 %v1566, %v1558
    %v2207 = vpack.c.b16 %v1567, %v1559
    %v2208 = vpack.c.b16 %v1568, %v1560
    %v2209 = vpack.c.b16 %v1569, %v1561
    %v2210 = vpack.c.b16 %v1570, %v1562
    %v2211 = vpack.c.b16 %v1571, %v1563
    %v2212 = vpack.c.b16 %v1580, %v1572
    %v2213 = vpack.c.b16 %v1581, %v1573
    %v2214 = vpack.c.b16 %v1582, %v1574
    %v2215 = vpack.c.b16 %v1583, %v1575
    %v2216 = vpack.c.b16 %v1584, %v1576
    %v2217 = vpack.c.b16 %v1585, %v1577
    %v2218 = vpack.c.b16 %v1586, %v1578
    %v2219 = vpack.c.b16 %v1587, %v1579
    %v2220 = vpack.c.b16 %v1596, %v1588
    %v2221 = vpack.c.b16 %v1597, %v1589
    %v2222 = vpack.c.b16 %v1598, %v1590
    %v2223 = vpack.c.b16 %v1599, %v1591
    %v2224 = vpack.c.b16 %v1600, %v1592
    %v2225 = vpack.c.b16 %v1601, %v1593
    %v2226 = vpack.c.b16 %v1602, %v1594
    %v2227 = vpack.c.b16 %v1603, %v1595
    %v2228 = vpack.c.b16 %v1612, %v1604
    %v2229 = vpack.c.b16 %v1613, %v1605
    %v2230 = vpack.c.b16 %v1614, %v1606
    %v2231 = vpack.c.b16 %v1615, %v1607
    %v2232 = vpack.c.b16 %v1616, %v1608
    %v2233 = vpack.c.b16 %v1617, %v1609
    %v2234 = vpack.c.b16 %v1618, %v1610
    %v2235 = vpack.c.b16 %v1619, %v1611
    %v2236 = vpack.c.b16 %v1628, %v1620
    %v2237 = vpack.c.b16 %v1629, %v1621
    %v2238 = vpack.c.b16 %v1630, %v1622
    %v2239 = vpack.c.b16 %v1631, %v1623
    %v2240 = vpack.c.b16 %v1632, %v1624
    %v2241 = vpack.c.b16 %v1633, %v1625
    %v2242 = vpack.c.b16 %v1634, %v1626
    %v2243 = vpack.c.b16 %v1635, %v1627
    %v2244 = vpack.c.b16 %v1644, %v1636
    %v2245 = vpack.c.b16 %v1645, %v1637
    %v2246 = vpack.c.b16 %v1646, %v1638
    %v2247 = vpack.c.b16 %v1647, %v1639
    %v2248 = vpack.c.b16 %v1648, %v1640
    %v2249 = vpack.c.b16 %v1649, %v1641
    %v2250 = vpack.c.b16 %v1650, %v1642
    %v2251 = vpack.c.b16 %v1651, %v1643
    %v2252 = vpack.c.b16 %v1660, %v1652
    %v2253 = vpack.c.b16 %v1661, %v1653
    %v2254 = vpack.c.b16 %v1662, %v1654
    %v2255 = vpack.c.b16 %v1663, %v1655
    %v2256 = vpack.c.b16 %v1664, %v1656
    %v2257 = vpack.c.b16 %v1665, %v1657
    %v2258 = vpack.c.b16 %v1666, %v1658
    %v2259 = vpack.c.b16 %v1667, %v1659
    %v2260 = vpack.c.b16 %v1676, %v1668
    %v2261 = vpack.c.b16 %v1677, %v1669
    %v2262 = vpack.c.b16 %v1678, %v1670
    %v2263 = vpack.c.b16 %v1679, %v1671
    %v2264 = vpack.c.b16 %v1680, %v1672
    %v2265 = vpack.c.b16 %v1681, %v1673
    %v2266 = vpack.c.b16 %v1682, %v1674
    %v2267 = vpack.c.b16 %v1683, %v1675
    %v2268 = vpack.c.b16 %v1692, %v1684
    %v2269 = vpack.c.b16 %v1693, %v1685
    %v2270 = vpack.c.b16 %v1694, %v1686
    %v2271 = vpack.c.b16 %v1695, %v1687
    %v2272 = vpack.c.b16 %v1696, %v1688
    %v2273 = vpack.c.b16 %v1697, %v1689
    %v2274 = vpack.c.b16 %v1698, %v1690
    %v2275 = vpack.c.b16 %v1699, %v1691
    %v2276 = vpack.c.b16 %v1708, %v1700
    %v2277 = vpack.c.b16 %v1709, %v1701
    %v2278 = vpack.c.b16 %v1710, %v1702
    %v2279 = vpack.c.b16 %v1711, %v1703
    %v2280 = vpack.c.b16 %v1712, %v1704
    %v2281 = vpack.c.b16 %v1713, %v1705
    %v2282 = vpack.c.b16 %v1714, %v1706
    %v2283 = vpack.c.b16 %v1715, %v1707
    %v2284 = vpack.c.b16 %v1724, %v1716
    %v2285 = vpack.c.b16 %v1725, %v1717
    %v2286 = vpack.c.b16 %v1726, %v1718
    %v2287 = vpack.c.b16 %v1727, %v1719
    %v2288 = vpack.c.b16 %v1728, %v1720
    %v2289 = vpack.c.b16 %v1729, %v1721
    %v2290 = vpack.c.b16 %v1730, %v1722
    %v2291 = vpack.c.b16 %v1731, %v1723
    %v2292 = vpack.c.b16 %v1740, %v1732
    %v2293 = vpack.c.b16 %v1741, %v1733
    %v2294 = vpack.c.b16 %v1742, %v1734
    %v2295 = vpack.c.b16 %v1743, %v1735
    %v2296 = vpack.c.b16 %v1744, %v1736
    %v2297 = vpack.c.b16 %v1745, %v1737
    %v2298 = vpack.c.b16 %v1746, %v1738
    %v2299 = vpack.c.b16 %v1747, %v1739
    %v2300 = vpack.c.b16 %v1756, %v1748
    %v2301 = vpack.c.b16 %v1757, %v1749
    %v2302 = vpack.c.b16 %v1758, %v1750
    %v2303 = vpack.c.b16 %v1759, %v1751
    %v2304 = vpack.c.b16 %v1760, %v1752
    %v2305 = vpack.c.b16 %v1761, %v1753
    %v2306 = vpack.c.b16 %v1762, %v1754
    %v2307 = vpack.c.b16 %v1763, %v1755
    %v2308 = vpack.c.b16 %v1772, %v1764
    %v2309 = vpack.c.b16 %v1773, %v1765
    %v2310 = vpack.c.b16 %v1774, %v1766
    %v2311 = vpack.c.b16 %v1775, %v1767
    %v2312 = vpack.c.b16 %v1776, %v1768
    %v2313 = vpack.c.b16 %v1777, %v1769
    %v2314 = vpack.c.b16 %v1778, %v1770
    %v2315 = vpack.c.b16 %v1779, %v1771
    %v2316 = vpack.c.b16 %v1788, %v1780
    %v2317 = vpack.c.b16 %v1789, %v1781
    %v2318 = vpack.c.b16 %v1790, %v1782
    %v2319 = vpack.c.b16 %v1791, %v1783
    %v2320 = vpack.c.b16 %v1792, %v1784
    %v2321 = vpack.c.b16 %v1793, %v1785
    %v2322 = vpack.c.b16 %v1794, %v1786
    %v2323 = vpack.c.b16 %v1795, %v1787
    %v2324 = vpack.c.b16 %v1804, %v1796
    %v2325 = vpack.c.b16 %v1805, %v1797
    %v2326 = vpack.c.b16 %v1806, %v1798
    %v2327 = vpack.c.b16 %v1807, %v1799
    %v2328 = vpack.c.b16 %v1808, %v1800
    %v2329 = vpack.c.b16 %v1809, %v1801
    %v2330 = vpack.c.b16 %v1810, %v1802
    %v2331 = vpack.c.b16 %v1811, %v1803
    %v2332 = vpack.c.b16 %v1820, %v1812
    %v2333 = vpack.c.b16 %v1821, %v1813
    %v2334 = vpack.c.b16 %v1822, %v1814
    %v2335 = vpack.c.b16 %v1823, %v1815
    %v2336 = vpack.c.b16 %v1824, %v1816
    %v2337 = vpack.c.b16 %v1825, %v1817
    %v2338 = vpack.c.b16 %v1826, %v1818
    %v2339 = vpack.c.b16 %v1827, %v1819
    %v2340 = vpack.c.b16 %v1836, %v1828
    %v2341 = vpack.c.b16 %v1837, %v1829
    %v2342 = vpack.c.b16 %v1838, %v1830
    %v2343 = vpack.c.b16 %v1839, %v1831
    %v2344 = vpack.c.b16 %v1840, %v1832
    %v2345 = vpack.c.b16 %v1841, %v1833
    %v2346 = vpack.c.b16 %v1842, %v1834
    %v2347 = vpack.c.b16 %v1843, %v1835
    %v2348 = vpack.c.b16 %v1852, %v1844
    %v2349 = vpack.c.b16 %v1853, %v1845
    %v2350 = vpack.c.b16 %v1854, %v1846
    %v2351 = vpack.c.b16 %v1855, %v1847
    %v2352 = vpack.c.b16 %v1856, %v1848
    %v2353 = vpack.c.b16 %v1857, %v1849
    %v2354 = vpack.c.b16 %v1858, %v1850
    %v2355 = vpack.c.b16 %v1859, %v1851
    %v2356 = vpack.c.b16 %v1868, %v1860
    %v2357 = vpack.c.b16 %v1869, %v1861
    %v2358 = vpack.c.b16 %v1870, %v1862
    %v2359 = vpack.c.b16 %v1871, %v1863
    %v2360 = vpack.c.b16 %v1872, %v1864
    %v2361 = vpack.c.b16 %v1873, %v1865
    %v2362 = vpack.c.b16 %v1874, %v1866
    %v2363 = vpack.c.b16 %v1875, %v1867
    %v2364 = vpack.c.b16 %v1884, %v1876
    %v2365 = vpack.c.b16 %v1885, %v1877
    %v2366 = vpack.c.b16 %v1886, %v1878
    %v2367 = vpack.c.b16 %v1887, %v1879
    %v2368 = vpack.c.b16 %v1888, %v1880
    %v2369 = vpack.c.b16 %v1889, %v1881
    %v2370 = vpack.c.b16 %v1890, %v1882
    %v2371 = vpack.c.b16 %v1891, %v1883
    %v2372 = vpack.c.b16 %v1900, %v1892
    %v2373 = vpack.c.b16 %v1901, %v1893
    %v2374 = vpack.c.b16 %v1902, %v1894
    %v2375 = vpack.c.b16 %v1903, %v1895
    %v2376 = vpack.c.b16 %v1904, %v1896
    %v2377 = vpack.c.b16 %v1905, %v1897
    %v2378 = vpack.c.b16 %v1906, %v1898
    %v2379 = vpack.c.b16 %v1907, %v1899
    %v2380 = vpack.c.b16 %v1916, %v1908
    %v2381 = vpack.c.b16 %v1917, %v1909
    %v2382 = vpack.c.b16 %v1918, %v1910
    %v2383 = vpack.c.b16 %v1919, %v1911
    %v2384 = vpack.c.b16 %v1920, %v1912
    %v2385 = vpack.c.b16 %v1921, %v1913
    %v2386 = vpack.c.b16 %v1922, %v1914
    %v2387 = vpack.c.b16 %v1923, %v1915
    %v2388 = vpack.c.b16 %v1932, %v1924
    %v2389 = vpack.c.b16 %v1933, %v1925
    %v2390 = vpack.c.b16 %v1934, %v1926
    %v2391 = vpack.c.b16 %v1935, %v1927
    %v2392 = vpack.c.b16 %v1936, %v1928
    %v2393 = vpack.c.b16 %v1937, %v1929
    %v2394 = vpack.c.b16 %v1938, %v1930
    %v2395 = vpack.c.b16 %v1939, %v1931
    %v2396 = vpack.c.b16 %v1948, %v1940
    %v2397 = vpack.c.b16 %v1949, %v1941
    %v2398 = vpack.c.b16 %v1950, %v1942
    %v2399 = vpack.c.b16 %v1951, %v1943
    %v2400 = vpack.c.b16 %v1952, %v1944
    %v2401 = vpack.c.b16 %v1953, %v1945
    %v2402 = vpack.c.b16 %v1954, %v1946
    %v2403 = vpack.c.b16 %v1955, %v1947
    %2852 = vmatprep.subr.bf16.mxu0 %v1957
    %2853 = vmatpush1.bf16.msra.mxu0 %v1956
    %2854 = vmatprep.subr.bf16.mxu0 %v1965
    %2855 = vmatpush1.bf16.msra.mxu0 %v1964
    %2856 = vmatprep.subr.bf16.mxu0 %v1973
    %2857 = vmatpush1.bf16.msra.mxu0 %v1972
    %2858 = vmatprep.subr.bf16.mxu0 %v1981
    %2859 = vmatpush1.bf16.msra.mxu0 %v1980
    %2860 = vmatprep.subr.bf16.mxu0 %v1989
    %2861 = vmatpush1.bf16.msra.mxu0 %v1988
    %2862 = vmatprep.subr.bf16.mxu0 %v1997
    %2863 = vmatpush1.bf16.msra.mxu0 %v1996
    %2864 = vmatprep.subr.bf16.mxu0 %v2005
    %2865 = vmatpush1.bf16.msra.mxu0 %v2004
    %2866 = vmatprep.subr.bf16.mxu0 %v2013
    %2867 = vmatpush1.bf16.msra.mxu0 %v2012
    %2868 = vmatprep.subr.bf16.mxu0 %v2021
    %2869 = vmatpush1.bf16.msra.mxu0 %v2020
    %2870 = vmatprep.subr.bf16.mxu0 %v2029
    %2871 = vmatpush1.bf16.msra.mxu0 %v2028
    %2872 = vmatprep.subr.bf16.mxu0 %v2037
    %2873 = vmatpush1.bf16.msra.mxu0 %v2036
    %2874 = vmatprep.subr.bf16.mxu0 %v2045
    %2875 = vmatpush1.bf16.msra.mxu0 %v2044
    %2876 = vmatprep.subr.bf16.mxu0 %v2053
    %2877 = vmatpush1.bf16.msra.mxu0 %v2052
    %2878 = vmatprep.subr.bf16.mxu0 %v2061
    %2879 = vmatpush1.bf16.msra.mxu0 %v2060
    %2880 = vmatprep.subr.bf16.mxu0 %v2069
    %2881 = vmatpush1.bf16.msra.mxu0 %v2068
    %2882 = vmatprep.subr.bf16.mxu0 %v2077
    %2883 = vmatpush1.bf16.msra.mxu0 %v2076
    %2884 = vmatprep.mubr.bf16.mxu0 %v599
    %2885 = vmatmul.mubr.bf16.gmra.mrb[0].mxu0 %v598
    %v2886 = vpop.f32.mrb[0].mxu0
    %v2887 = vadd.f32 0.0, %v2886
    %v2888 = vpop.f32.mrb[0].mxu0
    %v2889 = vadd.f32 0.0, %v2888
    %v2890 = vpop.f32.mrb[0].mxu0
    %v2891 = vpop.f32.mrb[0].mxu0
    %2892 = vdwg.mxu0
    %2893 = vmatprep.subr.bf16.mxu0 %v2085
    %2894 = vmatpush1.bf16.msra.mxu0 %v2084
    %2895 = vmatprep.subr.bf16.mxu0 %v2093
    %2896 = vmatpush1.bf16.msra.mxu0 %v2092
    %2897 = vmatprep.subr.bf16.mxu0 %v2101
    %2898 = vmatpush1.bf16.msra.mxu0 %v2100
    %2899 = vmatprep.subr.bf16.mxu0 %v2109
    %2900 = vmatpush1.bf16.msra.mxu0 %v2108
    %2901 = vmatprep.subr.bf16.mxu0 %v2117
    %2902 = vmatpush1.bf16.msra.mxu0 %v2116
    %2903 = vmatprep.subr.bf16.mxu0 %v2125
    %2904 = vmatpush1.bf16.msra.mxu0 %v2124
    %2905 = vmatprep.subr.bf16.mxu0 %v2133
    %2906 = vmatpush1.bf16.msra.mxu0 %v2132
    %2907 = vmatprep.subr.bf16.mxu0 %v2141
    %2908 = vmatpush1.bf16.msra.mxu0 %v2140
    %2909 = vmatprep.subr.bf16.mxu0 %v2149
    %2910 = vmatpush1.bf16.msra.mxu0 %v2148
    %2911 = vmatprep.subr.bf16.mxu0 %v2157
    %2912 = vmatpush1.bf16.msra.mxu0 %v2156
    %2913 = vmatprep.subr.bf16.mxu0 %v2165
    %2914 = vmatpush1.bf16.msra.mxu0 %v2164
    %2915 = vmatprep.subr.bf16.mxu0 %v2173
    %2916 = vmatpush1.bf16.msra.mxu0 %v2172
    %2917 = vmatprep.subr.bf16.mxu0 %v2181
    %2918 = vmatpush1.bf16.msra.mxu0 %v2180
    %2919 = vmatprep.subr.bf16.mxu0 %v2189
    %2920 = vmatpush1.bf16.msra.mxu0 %v2188
    %2921 = vmatprep.subr.bf16.mxu0 %v2197
    %2922 = vmatpush1.bf16.msra.mxu0 %v2196
    %2923 = vmatprep.subr.bf16.mxu0 %v2205
    %2924 = vmatpush1.bf16.msra.mxu0 %v2204
    %2925 = vmatprep.mubr.bf16.mxu0 %v601
    %2926 = vmatmul.mubr.bf16.gmra.mrb[0].mxu0 %v600
    %v2927 = vpop.f32.mrb[0].mxu0
    %v2928 = vadd.f32 %v2887, %v2927
    %v2929 = vpop.f32.mrb[0].mxu0
    %v2930 = vadd.f32 %v2889, %v2929
    %v2931 = vpop.f32.mrb[0].mxu0
    %v2932 = vpop.f32.mrb[0].mxu0
    %2933 = vdwg.mxu0
    %2934 = vmatprep.subr.bf16.mxu0 %v2213
    %2935 = vmatpush1.bf16.msra.mxu0 %v2212
    %2936 = vmatprep.subr.bf16.mxu0 %v2221
    %2937 = vmatpush1.bf16.msra.mxu0 %v2220
    %2938 = vmatprep.subr.bf16.mxu0 %v2229
    %2939 = vmatpush1.bf16.msra.mxu0 %v2228
    %2940 = vmatprep.subr.bf16.mxu0 %v2237
    %2941 = vmatpush1.bf16.msra.mxu0 %v2236
    %2942 = vmatprep.subr.bf16.mxu0 %v2245
    %2943 = vmatpush1.bf16.msra.mxu0 %v2244
    %2944 = vmatprep.subr.bf16.mxu0 %v2253
    %2945 = vmatpush1.bf16.msra.mxu0 %v2252
    %2946 = vmatprep.subr.bf16.mxu0 %v2261
    %2947 = vmatpush1.bf16.msra.mxu0 %v2260
    %2948 = vmatprep.subr.bf16.mxu0 %v2269
    %2949 = vmatpush1.bf16.msra.mxu0 %v2268
    %2950 = vmatprep.subr.bf16.mxu0 %v2277
    %2951 = vmatpush1.bf16.msra.mxu0 %v2276
    %2952 = vmatprep.subr.bf16.mxu0 %v2285
    %2953 = vmatpush1.bf16.msra.mxu0 %v2284
    %2954 = vmatprep.subr.bf16.mxu0 %v2293
    %2955 = vmatpush1.bf16.msra.mxu0 %v2292
    %2956 = vmatprep.subr.bf16.mxu0 %v2301
    %2957 = vmatpush1.bf16.msra.mxu0 %v2300
    %2958 = vmatprep.subr.bf16.mxu0 %v2309
    %2959 = vmatpush1.bf16.msra.mxu0 %v2308
    %2960 = vmatprep.subr.bf16.mxu0 %v2317
    %2961 = vmatpush1.bf16.msra.mxu0 %v2316
    %2962 = vmatprep.subr.bf16.mxu0 %v2325
    %2963 = vmatpush1.bf16.msra.mxu0 %v2324
    %2964 = vmatprep.subr.bf16.mxu0 %v2333
    %2965 = vmatpush1.bf16.msra.mxu0 %v2332
    %2966 = vmatprep.mubr.bf16.mxu0 %v603
    %2967 = vmatmul.mubr.bf16.gmra.mrb[0].mxu0 %v602
    %v2968 = vpop.f32.mrb[0].mxu0
    %v2969 = vadd.f32 %v2928, %v2968
    %v2970 = vpop.f32.mrb[0].mxu0
    %v2971 = vadd.f32 %v2930, %v2970
    %v2972 = vpop.f32.mrb[0].mxu0
    %v2973 = vpop.f32.mrb[0].mxu0
    %2974 = vdwg.mxu0
    %2975 = vmatprep.subr.bf16.mxu0 %v2341
    %2976 = vmatpush1.bf16.msra.mxu0 %v2340
    %2977 = vmatprep.subr.bf16.mxu0 %v2349
    %2978 = vmatpush1.bf16.msra.mxu0 %v2348
    %2979 = vmatprep.subr.bf16.mxu0 %v2357
    %2980 = vmatpush1.bf16.msra.mxu0 %v2356
    %2981 = vmatprep.subr.bf16.mxu0 %v2365
    %2982 = vmatpush1.bf16.msra.mxu0 %v2364
    %2983 = vmatprep.subr.bf16.mxu0 %v2373
    %2984 = vmatpush1.bf16.msra.mxu0 %v2372
    %2985 = vmatprep.subr.bf16.mxu0 %v2381
    %2986 = vmatpush1.bf16.msra.mxu0 %v2380
    %2987 = vmatprep.subr.bf16.mxu0 %v2389
    %2988 = vmatpush1.bf16.msra.mxu0 %v2388
    %2989 = vmatprep.subr.bf16.mxu0 %v2397
    %2990 = vmatpush1.bf16.msra.mxu0 %v2396
    %2991 = vmatprep.subr.bf16.mxu0 0
    %2992 = vmatpush1.bf16.msra.mxu0 0
    %2993 = vmatprep.subr.bf16.mxu0 0
    %2994 = vmatpush1.bf16.msra.mxu0 0
    %2995 = vmatprep.subr.bf16.mxu0 0
    %2996 = vmatpush1.bf16.msra.mxu0 0
    %2997 = vmatprep.subr.bf16.mxu0 0
    %2998 = vmatpush1.bf16.msra.mxu0 0
    %2999 = vmatprep.subr.bf16.mxu0 0
    %3000 = vmatpush1.bf16.msra.mxu0 0
    %3001 = vmatprep.subr.bf16.mxu0 0
    %3002 = vmatpush1.bf16.msra.mxu0 0
    %3003 = vmatprep.subr.bf16.mxu0 0
    %3004 = vmatpush1.bf16.msra.mxu0 0
    %3005 = vmatprep.subr.bf16.mxu0 0
    %3006 = vmatpush1.bf16.msra.mxu0 0
    %3007 = vmatprep.mubr.bf16.mxu0 0
    %3008 = vmatmul.mubr.bf16.gmra.mrb[0].mxu0 %v604
    %v3009 = vpop.f32.mrb[0].mxu0
    %v3010 = vadd.f32 %v2969, %v3009
    %v3011 = vpop.f32.mrb[0].mxu0
    %v3012 = vadd.f32 %v2971, %v3011
    %v3013 = vpop.f32.mrb[0].mxu0
    %v3014 = vpop.f32.mrb[0].mxu0
    %3015 = vdwg.mxu0
    %3016 = vmatprep.subr.bf16.mxu0 %v1959
    %3017 = vmatpush1.bf16.msra.mxu0 %v1958
    %3018 = vmatprep.subr.bf16.mxu0 %v1967
    %3019 = vmatpush1.bf16.msra.mxu0 %v1966
    %3020 = vmatprep.subr.bf16.mxu0 %v1975
    %3021 = vmatpush1.bf16.msra.mxu0 %v1974
    %3022 = vmatprep.subr.bf16.mxu0 %v1983
    %3023 = vmatpush1.bf16.msra.mxu0 %v1982
    %3024 = vmatprep.subr.bf16.mxu0 %v1991
    %3025 = vmatpush1.bf16.msra.mxu0 %v1990
    %3026 = vmatprep.subr.bf16.mxu0 %v1999
    %3027 = vmatpush1.bf16.msra.mxu0 %v1998
    %3028 = vmatprep.subr.bf16.mxu0 %v2007
    %3029 = vmatpush1.bf16.msra.mxu0 %v2006
    %3030 = vmatprep.subr.bf16.mxu0 %v2015
    %3031 = vmatpush1.bf16.msra.mxu0 %v2014
    %3032 = vmatprep.subr.bf16.mxu0 %v2023
    %3033 = vmatpush1.bf16.msra.mxu0 %v2022
    %3034 = vmatprep.subr.bf16.mxu0 %v2031
    %3035 = vmatpush1.bf16.msra.mxu0 %v2030
    %3036 = vmatprep.subr.bf16.mxu0 %v2039
    %3037 = vmatpush1.bf16.msra.mxu0 %v2038
    %3038 = vmatprep.subr.bf16.mxu0 %v2047
    %3039 = vmatpush1.bf16.msra.mxu0 %v2046
    %3040 = vmatprep.subr.bf16.mxu0 %v2055
    %3041 = vmatpush1.bf16.msra.mxu0 %v2054
    %3042 = vmatprep.subr.bf16.mxu0 %v2063
    %3043 = vmatpush1.bf16.msra.mxu0 %v2062
    %3044 = vmatprep.subr.bf16.mxu0 %v2071
    %3045 = vmatpush1.bf16.msra.mxu0 %v2070
    %3046 = vmatprep.subr.bf16.mxu0 %v2079
    %3047 = vmatpush1.bf16.msra.mxu0 %v2078
    %3048 = vmatprep.mubr.bf16.mxu0 %v599
    %3049 = vmatmul.mubr.bf16.gmra.mrb[0].mxu0 %v598
    %v3050 = vpop.f32.mrb[0].mxu0
    %v3051 = vadd.f32 0.0, %v3050
    %v3052 = vpop.f32.mrb[0].mxu0
    %v3053 = vadd.f32 0.0, %v3052
    %v3054 = vpop.f32.mrb[0].mxu0
    %v3055 = vpop.f32.mrb[0].mxu0
    %3056 = vdwg.mxu0
    %3057 = vmatprep.subr.bf16.mxu0 %v2087
    %3058 = vmatpush1.bf16.msra.mxu0 %v2086
    %3059 = vmatprep.subr.bf16.mxu0 %v2095
    %3060 = vmatpush1.bf16.msra.mxu0 %v2094
    %3061 = vmatprep.subr.bf16.mxu0 %v2103
    %3062 = vmatpush1.bf16.msra.mxu0 %v2102
    %3063 = vmatprep.subr.bf16.mxu0 %v2111
    %3064 = vmatpush1.bf16.msra.mxu0 %v2110
    %3065 = vmatprep.subr.bf16.mxu0 %v2119
    %3066 = vmatpush1.bf16.msra.mxu0 %v2118
    %3067 = vmatprep.subr.bf16.mxu0 %v2127
    %3068 = vmatpush1.bf16.msra.mxu0 %v2126
    %3069 = vmatprep.subr.bf16.mxu0 %v2135
    %3070 = vmatpush1.bf16.msra.mxu0 %v2134
    %3071 = vmatprep.subr.bf16.mxu0 %v2143
    %3072 = vmatpush1.bf16.msra.mxu0 %v2142
    %3073 = vmatprep.subr.bf16.mxu0 %v2151
    %3074 = vmatpush1.bf16.msra.mxu0 %v2150
    %3075 = vmatprep.subr.bf16.mxu0 %v2159
    %3076 = vmatpush1.bf16.msra.mxu0 %v2158
    %3077 = vmatprep.subr.bf16.mxu0 %v2167
    %3078 = vmatpush1.bf16.msra.mxu0 %v2166
    %3079 = vmatprep.subr.bf16.mxu0 %v2175
    %3080 = vmatpush1.bf16.msra.mxu0 %v2174
    %3081 = vmatprep.subr.bf16.mxu0 %v2183
    %3082 = vmatpush1.bf16.msra.mxu0 %v2182
    %3083 = vmatprep.subr.bf16.mxu0 %v2191
    %3084 = vmatpush1.bf16.msra.mxu0 %v2190
    %3085 = vmatprep.subr.bf16.mxu0 %v2199
    %3086 = vmatpush1.bf16.msra.mxu0 %v2198
    %3087 = vmatprep.subr.bf16.mxu0 %v2207
    %3088 = vmatpush1.bf16.msra.mxu0 %v2206
    %3089 = vmatprep.mubr.bf16.mxu0 %v601
    %3090 = vmatmul.mubr.bf16.gmra.mrb[0].mxu0 %v600
    %v3091 = vpop.f32.mrb[0].mxu0
    %v3092 = vadd.f32 %v3051, %v3091
    %v3093 = vpop.f32.mrb[0].mxu0
    %v3094 = vadd.f32 %v3053, %v3093
    %v3095 = vpop.f32.mrb[0].mxu0
    %v3096 = vpop.f32.mrb[0].mxu0
    %3097 = vdwg.mxu0
    %3098 = vmatprep.subr.bf16.mxu0 %v2215
    %3099 = vmatpush1.bf16.msra.mxu0 %v2214
    %3100 = vmatprep.subr.bf16.mxu0 %v2223
    %3101 = vmatpush1.bf16.msra.mxu0 %v2222
    %3102 = vmatprep.subr.bf16.mxu0 %v2231
    %3103 = vmatpush1.bf16.msra.mxu0 %v2230
    %3104 = vmatprep.subr.bf16.mxu0 %v2239
    %3105 = vmatpush1.bf16.msra.mxu0 %v2238
    %3106 = vmatprep.subr.bf16.mxu0 %v2247
    %3107 = vmatpush1.bf16.msra.mxu0 %v2246
    %3108 = vmatprep.subr.bf16.mxu0 %v2255
    %3109 = vmatpush1.bf16.msra.mxu0 %v2254
    %3110 = vmatprep.subr.bf16.mxu0 %v2263
    %3111 = vmatpush1.bf16.msra.mxu0 %v2262
    %3112 = vmatprep.subr.bf16.mxu0 %v2271
    %3113 = vmatpush1.bf16.msra.mxu0 %v2270
    %3114 = vmatprep.subr.bf16.mxu0 %v2279
    %3115 = vmatpush1.bf16.msra.mxu0 %v2278
    %3116 = vmatprep.subr.bf16.mxu0 %v2287
    %3117 = vmatpush1.bf16.msra.mxu0 %v2286
    %3118 = vmatprep.subr.bf16.mxu0 %v2295
    %3119 = vmatpush1.bf16.msra.mxu0 %v2294
    %3120 = vmatprep.subr.bf16.mxu0 %v2303
    %3121 = vmatpush1.bf16.msra.mxu0 %v2302
    %3122 = vmatprep.subr.bf16.mxu0 %v2311
    %3123 = vmatpush1.bf16.msra.mxu0 %v2310
    %3124 = vmatprep.subr.bf16.mxu0 %v2319
    %3125 = vmatpush1.bf16.msra.mxu0 %v2318
    %3126 = vmatprep.subr.bf16.mxu0 %v2327
    %3127 = vmatpush1.bf16.msra.mxu0 %v2326
    %3128 = vmatprep.subr.bf16.mxu0 %v2335
    %3129 = vmatpush1.bf16.msra.mxu0 %v2334
    %3130 = vmatprep.mubr.bf16.mxu0 %v603
    %3131 = vmatmul.mubr.bf16.gmra.mrb[0].mxu0 %v602
    %v3132 = vpop.f32.mrb[0].mxu0
    %v3133 = vadd.f32 %v3092, %v3132
    %v3134 = vpop.f32.mrb[0].mxu0
    %v3135 = vadd.f32 %v3094, %v3134
    %v3136 = vpop.f32.mrb[0].mxu0
    %v3137 = vpop.f32.mrb[0].mxu0
    %3138 = vdwg.mxu0
    %3139 = vmatprep.subr.bf16.mxu0 %v2343
    %3140 = vmatpush1.bf16.msra.mxu0 %v2342
    %3141 = vmatprep.subr.bf16.mxu0 %v2351
    %3142 = vmatpush1.bf16.msra.mxu0 %v2350
    %3143 = vmatprep.subr.bf16.mxu0 %v2359
    %3144 = vmatpush1.bf16.msra.mxu0 %v2358
    %3145 = vmatprep.subr.bf16.mxu0 %v2367
    %3146 = vmatpush1.bf16.msra.mxu0 %v2366
    %3147 = vmatprep.subr.bf16.mxu0 %v2375
    %3148 = vmatpush1.bf16.msra.mxu0 %v2374
    %3149 = vmatprep.subr.bf16.mxu0 %v2383
    %3150 = vmatpush1.bf16.msra.mxu0 %v2382
    %3151 = vmatprep.subr.bf16.mxu0 %v2391
    %3152 = vmatpush1.bf16.msra.mxu0 %v2390
    %3153 = vmatprep.subr.bf16.mxu0 %v2399
    %3154 = vmatpush1.bf16.msra.mxu0 %v2398
    %3155 = vmatprep.subr.bf16.mxu0 0
    %3156 = vmatpush1.bf16.msra.mxu0 0
    %3157 = vmatprep.subr.bf16.mxu0 0
    %3158 = vmatpush1.bf16.msra.mxu0 0
    %3159 = vmatprep.subr.bf16.mxu0 0
    %3160 = vmatpush1.bf16.msra.mxu0 0
    %3161 = vmatprep.subr.bf16.mxu0 0
    %3162 = vmatpush1.bf16.msra.mxu0 0
    %3163 = vmatprep.subr.bf16.mxu0 0
    %3164 = vmatpush1.bf16.msra.mxu0 0
    %3165 = vmatprep.subr.bf16.mxu0 0
    %3166 = vmatpush1.bf16.msra.mxu0 0
    %3167 = vmatprep.subr.bf16.mxu0 0
    %3168 = vmatpush1.bf16.msra.mxu0 0
    %3169 = vmatprep.subr.bf16.mxu0 0
    %3170 = vmatpush1.bf16.msra.mxu0 0
    %3171 = vmatprep.mubr.bf16.mxu0 0
    %3172 = vmatmul.mubr.bf16.gmra.mrb[0].mxu0 %v604
    %v3173 = vpop.f32.mrb[0].mxu0
    %v3174 = vadd.f32 %v3133, %v3173
    %v3175 = vpop.f32.mrb[0].mxu0
    %v3176 = vadd.f32 %v3135, %v3175
    %v3177 = vpop.f32.mrb[0].mxu0
    %v3178 = vpop.f32.mrb[0].mxu0
    %3179 = vdwg.mxu0
    %3180 = vmatprep.subr.bf16.mxu0 %v1961
    %3181 = vmatpush1.bf16.msra.mxu0 %v1960
    %3182 = vmatprep.subr.bf16.mxu0 %v1969
    %3183 = vmatpush1.bf16.msra.mxu0 %v1968
    %3184 = vmatprep.subr.bf16.mxu0 %v1977
    %3185 = vmatpush1.bf16.msra.mxu0 %v1976
    %3186 = vmatprep.subr.bf16.mxu0 %v1985
    %3187 = vmatpush1.bf16.msra.mxu0 %v1984
    %3188 = vmatprep.subr.bf16.mxu0 %v1993
    %3189 = vmatpush1.bf16.msra.mxu0 %v1992
    %3190 = vmatprep.subr.bf16.mxu0 %v2001
    %3191 = vmatpush1.bf16.msra.mxu0 %v2000
    %3192 = vmatprep.subr.bf16.mxu0 %v2009
    %3193 = vmatpush1.bf16.msra.mxu0 %v2008
    %3194 = vmatprep.subr.bf16.mxu0 %v2017
    %3195 = vmatpush1.bf16.msra.mxu0 %v2016
    %3196 = vmatprep.subr.bf16.mxu0 %v2025
    %3197 = vmatpush1.bf16.msra.mxu0 %v2024
    %3198 = vmatprep.subr.bf16.mxu0 %v2033
    %3199 = vmatpush1.bf16.msra.mxu0 %v2032
    %3200 = vmatprep.subr.bf16.mxu0 %v2041
    %3201 = vmatpush1.bf16.msra.mxu0 %v2040
    %3202 = vmatprep.subr.bf16.mxu0 %v2049
    %3203 = vmatpush1.bf16.msra.mxu0 %v2048
    %3204 = vmatprep.subr.bf16.mxu0 %v2057
    %3205 = vmatpush1.bf16.msra.mxu0 %v2056
    %3206 = vmatprep.subr.bf16.mxu0 %v2065
    %3207 = vmatpush1.bf16.msra.mxu0 %v2064
    %3208 = vmatprep.subr.bf16.mxu0 %v2073
    %3209 = vmatpush1.bf16.msra.mxu0 %v2072
    %3210 = vmatprep.subr.bf16.mxu0 %v2081
    %3211 = vmatpush1.bf16.msra.mxu0 %v2080
    %3212 = vmatprep.mubr.bf16.mxu0 %v599
    %3213 = vmatmul.mubr.bf16.gmra.mrb[0].mxu0 %v598
    %v3214 = vpop.f32.mrb[0].mxu0
    %v3215 = vadd.f32 0.0, %v3214
    %v3216 = vpop.f32.mrb[0].mxu0
    %v3217 = vadd.f32 0.0, %v3216
    %v3218 = vpop.f32.mrb[0].mxu0
    %v3219 = vpop.f32.mrb[0].mxu0
    %3220 = vdwg.mxu0
    %3221 = vmatprep.subr.bf16.mxu0 %v2089
    %3222 = vmatpush1.bf16.msra.mxu0 %v2088
    %3223 = vmatprep.subr.bf16.mxu0 %v2097
    %3224 = vmatpush1.bf16.msra.mxu0 %v2096
    %3225 = vmatprep.subr.bf16.mxu0 %v2105
    %3226 = vmatpush1.bf16.msra.mxu0 %v2104
    %3227 = vmatprep.subr.bf16.mxu0 %v2113
    %3228 = vmatpush1.bf16.msra.mxu0 %v2112
    %3229 = vmatprep.subr.bf16.mxu0 %v2121
    %3230 = vmatpush1.bf16.msra.mxu0 %v2120
    %3231 = vmatprep.subr.bf16.mxu0 %v2129
    %3232 = vmatpush1.bf16.msra.mxu0 %v2128
    %3233 = vmatprep.subr.bf16.mxu0 %v2137
    %3234 = vmatpush1.bf16.msra.mxu0 %v2136
    %3235 = vmatprep.subr.bf16.mxu0 %v2145
    %3236 = vmatpush1.bf16.msra.mxu0 %v2144
    %3237 = vmatprep.subr.bf16.mxu0 %v2153
    %3238 = vmatpush1.bf16.msra.mxu0 %v2152
    %3239 = vmatprep.subr.bf16.mxu0 %v2161
    %3240 = vmatpush1.bf16.msra.mxu0 %v2160
    %3241 = vmatprep.subr.bf16.mxu0 %v2169
    %3242 = vmatpush1.bf16.msra.mxu0 %v2168
    %3243 = vmatprep.subr.bf16.mxu0 %v2177
    %3244 = vmatpush1.bf16.msra.mxu0 %v2176
    %3245 = vmatprep.subr.bf16.mxu0 %v2185
    %3246 = vmatpush1.bf16.msra.mxu0 %v2184
    %3247 = vmatprep.subr.bf16.mxu0 %v2193
    %3248 = vmatpush1.bf16.msra.mxu0 %v2192
    %3249 = vmatprep.subr.bf16.mxu0 %v2201
    %3250 = vmatpush1.bf16.msra.mxu0 %v2200
    %3251 = vmatprep.subr.bf16.mxu0 %v2209
    %3252 = vmatpush1.bf16.msra.mxu0 %v2208
    %3253 = vmatprep.mubr.bf16.mxu0 %v601
    %3254 = vmatmul.mubr.bf16.gmra.mrb[0].mxu0 %v600
    %v3255 = vpop.f32.mrb[0].mxu0
    %v3256 = vadd.f32 %v3215, %v3255
    %v3257 = vpop.f32.mrb[0].mxu0
    %v3258 = vadd.f32 %v3217, %v3257
    %v3259 = vpop.f32.mrb[0].mxu0
    %v3260 = vpop.f32.mrb[0].mxu0
    %3261 = vdwg.mxu0
    %3262 = vmatprep.subr.bf16.mxu0 %v2217
    %3263 = vmatpush1.bf16.msra.mxu0 %v2216
    %3264 = vmatprep.subr.bf16.mxu0 %v2225
    %3265 = vmatpush1.bf16.msra.mxu0 %v2224
    %3266 = vmatprep.subr.bf16.mxu0 %v2233
    %3267 = vmatpush1.bf16.msra.mxu0 %v2232
    %3268 = vmatprep.subr.bf16.mxu0 %v2241
    %3269 = vmatpush1.bf16.msra.mxu0 %v2240
    %3270 = vmatprep.subr.bf16.mxu0 %v2249
    %3271 = vmatpush1.bf16.msra.mxu0 %v2248
    %3272 = vmatprep.subr.bf16.mxu0 %v2257
    %3273 = vmatpush1.bf16.msra.mxu0 %v2256
    %3274 = vmatprep.subr.bf16.mxu0 %v2265
    %3275 = vmatpush1.bf16.msra.mxu0 %v2264
    %3276 = vmatprep.subr.bf16.mxu0 %v2273
    %3277 = vmatpush1.bf16.msra.mxu0 %v2272
    %3278 = vmatprep.subr.bf16.mxu0 %v2281
    %3279 = vmatpush1.bf16.msra.mxu0 %v2280
    %3280 = vmatprep.subr.bf16.mxu0 %v2289
    %3281 = vmatpush1.bf16.msra.mxu0 %v2288
    %3282 = vmatprep.subr.bf16.mxu0 %v2297
    %3283 = vmatpush1.bf16.msra.mxu0 %v2296
    %3284 = vmatprep.subr.bf16.mxu0 %v2305
    %3285 = vmatpush1.bf16.msra.mxu0 %v2304
    %3286 = vmatprep.subr.bf16.mxu0 %v2313
    %3287 = vmatpush1.bf16.msra.mxu0 %v2312
    %3288 = vmatprep.subr.bf16.mxu0 %v2321
    %3289 = vmatpush1.bf16.msra.mxu0 %v2320
    %3290 = vmatprep.subr.bf16.mxu0 %v2329
    %3291 = vmatpush1.bf16.msra.mxu0 %v2328
    %3292 = vmatprep.subr.bf16.mxu0 %v2337
    %3293 = vmatpush1.bf16.msra.mxu0 %v2336
    %3294 = vmatprep.mubr.bf16.mxu0 %v603
    %3295 = vmatmul.mubr.bf16.gmra.mrb[0].mxu0 %v602
    %v3296 = vpop.f32.mrb[0].mxu0
    %v3297 = vadd.f32 %v3256, %v3296
    %v3298 = vpop.f32.mrb[0].mxu0
    %v3299 = vadd.f32 %v3258, %v3298
    %v3300 = vpop.f32.mrb[0].mxu0
    %v3301 = vpop.f32.mrb[0].mxu0
    %3302 = vdwg.mxu0
    %3303 = vmatprep.subr.bf16.mxu0 %v2345
    %3304 = vmatpush1.bf16.msra.mxu0 %v2344
    %3305 = vmatprep.subr.bf16.mxu0 %v2353
    %3306 = vmatpush1.bf16.msra.mxu0 %v2352
    %3307 = vmatprep.subr.bf16.mxu0 %v2361
    %3308 = vmatpush1.bf16.msra.mxu0 %v2360
    %3309 = vmatprep.subr.bf16.mxu0 %v2369
    %3310 = vmatpush1.bf16.msra.mxu0 %v2368
    %3311 = vmatprep.subr.bf16.mxu0 %v2377
    %3312 = vmatpush1.bf16.msra.mxu0 %v2376
    %3313 = vmatprep.subr.bf16.mxu0 %v2385
    %3314 = vmatpush1.bf16.msra.mxu0 %v2384
    %3315 = vmatprep.subr.bf16.mxu0 %v2393
    %3316 = vmatpush1.bf16.msra.mxu0 %v2392
    %3317 = vmatprep.subr.bf16.mxu0 %v2401
    %3318 = vmatpush1.bf16.msra.mxu0 %v2400
    %3319 = vmatprep.subr.bf16.mxu0 0
    %3320 = vmatpush1.bf16.msra.mxu0 0
    %3321 = vmatprep.subr.bf16.mxu0 0
    %3322 = vmatpush1.bf16.msra.mxu0 0
    %3323 = vmatprep.subr.bf16.mxu0 0
    %3324 = vmatpush1.bf16.msra.mxu0 0
    %3325 = vmatprep.subr.bf16.mxu0 0
    %3326 = vmatpush1.bf16.msra.mxu0 0
    %3327 = vmatprep.subr.bf16.mxu0 0
    %3328 = vmatpush1.bf16.msra.mxu0 0
    %3329 = vmatprep.subr.bf16.mxu0 0
    %3330 = vmatpush1.bf16.msra.mxu0 0
    %3331 = vmatprep.subr.bf16.mxu0 0
    %3332 = vmatpush1.bf16.msra.mxu0 0
    %3333 = vmatprep.subr.bf16.mxu0 0
    %3334 = vmatpush1.bf16.msra.mxu0 0
    %3335 = vmatprep.mubr.bf16.mxu0 0
    %3336 = vmatmul.mubr.bf16.gmra.mrb[0].mxu0 %v604
    %v3337 = vpop.f32.mrb[0].mxu0
    %v3338 = vadd.f32 %v3297, %v3337
    %v3339 = vpop.f32.mrb[0].mxu0
    %v3340 = vadd.f32 %v3299, %v3339
    %v3341 = vpop.f32.mrb[0].mxu0
    %v3342 = vpop.f32.mrb[0].mxu0
    %3343 = vdwg.mxu0
    %3344 = vmatprep.subr.bf16.mxu0 %v1963
    %3345 = vmatpush1.bf16.msra.mxu0 %v1962
    %3346 = vmatprep.subr.bf16.mxu0 %v1971
    %3347 = vmatpush1.bf16.msra.mxu0 %v1970
    %3348 = vmatprep.subr.bf16.mxu0 %v1979
    %3349 = vmatpush1.bf16.msra.mxu0 %v1978
    %3350 = vmatprep.subr.bf16.mxu0 %v1987
    %3351 = vmatpush1.bf16.msra.mxu0 %v1986
    %3352 = vmatprep.subr.bf16.mxu0 %v1995
    %3353 = vmatpush1.bf16.msra.mxu0 %v1994
    %3354 = vmatprep.subr.bf16.mxu0 %v2003
    %3355 = vmatpush1.bf16.msra.mxu0 %v2002
    %3356 = vmatprep.subr.bf16.mxu0 %v2011
    %3357 = vmatpush1.bf16.msra.mxu0 %v2010
    %3358 = vmatprep.subr.bf16.mxu0 %v2019
    %3359 = vmatpush1.bf16.msra.mxu0 %v2018
    %3360 = vmatprep.subr.bf16.mxu0 %v2027
    %3361 = vmatpush1.bf16.msra.mxu0 %v2026
    %3362 = vmatprep.subr.bf16.mxu0 %v2035
    %3363 = vmatpush1.bf16.msra.mxu0 %v2034
    %3364 = vmatprep.subr.bf16.mxu0 %v2043
    %3365 = vmatpush1.bf16.msra.mxu0 %v2042
    %3366 = vmatprep.subr.bf16.mxu0 %v2051
    %3367 = vmatpush1.bf16.msra.mxu0 %v2050
    %3368 = vmatprep.subr.bf16.mxu0 %v2059
    %3369 = vmatpush1.bf16.msra.mxu0 %v2058
    %3370 = vmatprep.subr.bf16.mxu0 %v2067
    %3371 = vmatpush1.bf16.msra.mxu0 %v2066
    %3372 = vmatprep.subr.bf16.mxu0 %v2075
    %3373 = vmatpush1.bf16.msra.mxu0 %v2074
    %3374 = vmatprep.subr.bf16.mxu0 %v2083
    %3375 = vmatpush1.bf16.msra.mxu0 %v2082
    %3376 = vmatprep.mubr.bf16.mxu0 %v599
    %3377 = vmatmul.mubr.bf16.gmra.mrb[0].mxu0 %v598
    %v3378 = vpop.f32.mrb[0].mxu0
    %v3379 = vadd.f32 0.0, %v3378
    %v3380 = vpop.f32.mrb[0].mxu0
    %v3381 = vadd.f32 0.0, %v3380
    %v3382 = vpop.f32.mrb[0].mxu0
    %v3383 = vpop.f32.mrb[0].mxu0
    %3384 = vdwg.mxu0
    %3385 = vmatprep.subr.bf16.mxu0 %v2091
    %3386 = vmatpush1.bf16.msra.mxu0 %v2090
    %3387 = vmatprep.subr.bf16.mxu0 %v2099
    %3388 = vmatpush1.bf16.msra.mxu0 %v2098
    %3389 = vmatprep.subr.bf16.mxu0 %v2107
    %3390 = vmatpush1.bf16.msra.mxu0 %v2106
    %3391 = vmatprep.subr.bf16.mxu0 %v2115
    %3392 = vmatpush1.bf16.msra.mxu0 %v2114
    %3393 = vmatprep.subr.bf16.mxu0 %v2123
    %3394 = vmatpush1.bf16.msra.mxu0 %v2122
    %3395 = vmatprep.subr.bf16.mxu0 %v2131
    %3396 = vmatpush1.bf16.msra.mxu0 %v2130
    %3397 = vmatprep.subr.bf16.mxu0 %v2139
    %3398 = vmatpush1.bf16.msra.mxu0 %v2138
    %3399 = vmatprep.subr.bf16.mxu0 %v2147
    %3400 = vmatpush1.bf16.msra.mxu0 %v2146
    %3401 = vmatprep.subr.bf16.mxu0 %v2155
    %3402 = vmatpush1.bf16.msra.mxu0 %v2154
    %3403 = vmatprep.subr.bf16.mxu0 %v2163
    %3404 = vmatpush1.bf16.msra.mxu0 %v2162
    %3405 = vmatprep.subr.bf16.mxu0 %v2171
    %3406 = vmatpush1.bf16.msra.mxu0 %v2170
    %3407 = vmatprep.subr.bf16.mxu0 %v2179
    %3408 = vmatpush1.bf16.msra.mxu0 %v2178
    %3409 = vmatprep.subr.bf16.mxu0 %v2187
    %3410 = vmatpush1.bf16.msra.mxu0 %v2186
    %3411 = vmatprep.subr.bf16.mxu0 %v2195
    %3412 = vmatpush1.bf16.msra.mxu0 %v2194
    %3413 = vmatprep.subr.bf16.mxu0 %v2203
    %3414 = vmatpush1.bf16.msra.mxu0 %v2202
    %3415 = vmatprep.subr.bf16.mxu0 %v2211
    %3416 = vmatpush1.bf16.msra.mxu0 %v2210
    %3417 = vmatprep.mubr.bf16.mxu0 %v601
    %3418 = vmatmul.mubr.bf16.gmra.mrb[0].mxu0 %v600
    %v3419 = vpop.f32.mrb[0].mxu0
    %v3420 = vadd.f32 %v3379, %v3419
    %v3421 = vpop.f32.mrb[0].mxu0
    %v3422 = vadd.f32 %v3381, %v3421
    %v3423 = vpop.f32.mrb[0].mxu0
    %v3424 = vpop.f32.mrb[0].mxu0
    %3425 = vdwg.mxu0
    %3426 = vmatprep.subr.bf16.mxu0 %v2219
    %3427 = vmatpush1.bf16.msra.mxu0 %v2218
    %3428 = vmatprep.subr.bf16.mxu0 %v2227
    %3429 = vmatpush1.bf16.msra.mxu0 %v2226
    %3430 = vmatprep.subr.bf16.mxu0 %v2235
    %3431 = vmatpush1.bf16.msra.mxu0 %v2234
    %3432 = vmatprep.subr.bf16.mxu0 %v2243
    %3433 = vmatpush1.bf16.msra.mxu0 %v2242
    %3434 = vmatprep.subr.bf16.mxu0 %v2251
    %3435 = vmatpush1.bf16.msra.mxu0 %v2250
    %3436 = vmatprep.subr.bf16.mxu0 %v2259
    %3437 = vmatpush1.bf16.msra.mxu0 %v2258
    %3438 = vmatprep.subr.bf16.mxu0 %v2267
    %3439 = vmatpush1.bf16.msra.mxu0 %v2266
    %3440 = vmatprep.subr.bf16.mxu0 %v2275
    %3441 = vmatpush1.bf16.msra.mxu0 %v2274
    %3442 = vmatprep.subr.bf16.mxu0 %v2283
    %3443 = vmatpush1.bf16.msra.mxu0 %v2282
    %3444 = vmatprep.subr.bf16.mxu0 %v2291
    %3445 = vmatpush1.bf16.msra.mxu0 %v2290
    %3446 = vmatprep.subr.bf16.mxu0 %v2299
    %3447 = vmatpush1.bf16.msra.mxu0 %v2298
    %3448 = vmatprep.subr.bf16.mxu0 %v2307
    %3449 = vmatpush1.bf16.msra.mxu0 %v2306
    %3450 = vmatprep.subr.bf16.mxu0 %v2315
    %3451 = vmatpush1.bf16.msra.mxu0 %v2314
    %3452 = vmatprep.subr.bf16.mxu0 %v2323
    %3453 = vmatpush1.bf16.msra.mxu0 %v2322
    %3454 = vmatprep.subr.bf16.mxu0 %v2331
    %3455 = vmatpush1.bf16.msra.mxu0 %v2330
    %3456 = vmatprep.subr.bf16.mxu0 %v2339
    %3457 = vmatpush1.bf16.msra.mxu0 %v2338
    %3458 = vmatprep.mubr.bf16.mxu0 %v603
    %3459 = vmatmul.mubr.bf16.gmra.mrb[0].mxu0 %v602
    %v3460 = vpop.f32.mrb[0].mxu0
    %v3461 = vadd.f32 %v3420, %v3460
    %v3462 = vpop.f32.mrb[0].mxu0
    %v3463 = vadd.f32 %v3422, %v3462
    %v3464 = vpop.f32.mrb[0].mxu0
    %v3465 = vpop.f32.mrb[0].mxu0
    %3466 = vdwg.mxu0
    %3467 = vmatprep.subr.bf16.mxu0 %v2347
    %3468 = vmatpush1.bf16.msra.mxu0 %v2346
    %3469 = vmatprep.subr.bf16.mxu0 %v2355
    %3470 = vmatpush1.bf16.msra.mxu0 %v2354
    %3471 = vmatprep.subr.bf16.mxu0 %v2363
    %3472 = vmatpush1.bf16.msra.mxu0 %v2362
    %3473 = vmatprep.subr.bf16.mxu0 %v2371
    %3474 = vmatpush1.bf16.msra.mxu0 %v2370
    %3475 = vmatprep.subr.bf16.mxu0 %v2379
    %3476 = vmatpush1.bf16.msra.mxu0 %v2378
    %3477 = vmatprep.subr.bf16.mxu0 %v2387
    %3478 = vmatpush1.bf16.msra.mxu0 %v2386
    %3479 = vmatprep.subr.bf16.mxu0 %v2395
    %3480 = vmatpush1.bf16.msra.mxu0 %v2394
    %3481 = vmatprep.subr.bf16.mxu0 %v2403
    %3482 = vmatpush1.bf16.msra.mxu0 %v2402
    %3483 = vmatprep.subr.bf16.mxu0 0
    %3484 = vmatpush1.bf16.msra.mxu0 0
    %3485 = vmatprep.subr.bf16.mxu0 0
    %3486 = vmatpush1.bf16.msra.mxu0 0
    %3487 = vmatprep.subr.bf16.mxu0 0
    %3488 = vmatpush1.bf16.msra.mxu0 0
    %3489 = vmatprep.subr.bf16.mxu0 0
    %3490 = vmatpush1.bf16.msra.mxu0 0
    %3491 = vmatprep.subr.bf16.mxu0 0
    %3492 = vmatpush1.bf16.msra.mxu0 0
    %3493 = vmatprep.subr.bf16.mxu0 0
    %3494 = vmatpush1.bf16.msra.mxu0 0
    %3495 = vmatprep.subr.bf16.mxu0 0
    %3496 = vmatpush1.bf16.msra.mxu0 0
    %3497 = vmatprep.subr.bf16.mxu0 0
    %3498 = vmatpush1.bf16.msra.mxu0 0
    %3499 = vmatprep.mubr.bf16.mxu0 0
    %3500 = vmatmul.mubr.bf16.gmra.mrb[0].mxu0 %v604
    %v3501 = vpop.f32.mrb[0].mxu0
    %v3502 = vadd.f32 %v3461, %v3501
    %v3503 = vpop.f32.mrb[0].mxu0
    %v3504 = vadd.f32 %v3463, %v3503
    %v3505 = vpop.f32.mrb[0].mxu0
    %v3506 = vpop.f32.mrb[0].mxu0
    %3507 = vdwg.mxu0
    %v3508 = vadd.f32 %v127, %v3010
    %v3509 = vadd.f32 %v128, %v3012
    %v3510 = vadd.f32 %v129, %v3174
    %v3511 = vadd.f32 %v130, %v3176
    %v3512 = vadd.f32 %v131, %v3338
    %v3513 = vadd.f32 %v132, %v3340
    %v3514 = vadd.f32 %v133, %v3502
    %v3515 = vadd.f32 %v134, %v3504
    %3516 = vst [vmem:[#allocation2] sm:$0xff] %v3508
    %3517 = vst [vmem:[#allocation2 + $0x8] sm:$0xff] %v3509
    %3518 = vst [vmem:[#allocation2 + $0x10] sm:$0xff] %v3510
    %3519 = vst [vmem:[#allocation2 + $0x18] sm:$0xff] %v3511
    %3520 = vst [vmem:[#allocation2 + $0x20] sm:$0xff] %v3512
    %3521 = vst [vmem:[#allocation2 + $0x28] sm:$0xff] %v3513
    %3522 = vst [vmem:[#allocation2 + $0x30] sm:$0xff] %v3514
    %3523 = vst [vmem:[#allocation2 + $0x38] sm:$0xff] %v3515
    // Predicated region
    $region62: #{tpu_custom_call.1} parent=1 // pred_check
      %p3524 = pneg %p115
    $region63: #{tpu_custom_call.1} parent=1 // pred_check_branch
      %3526 = sbr.rel (%p3524) target = $region65
    $region64: #{tpu_custom_call.1} parent=1 // pred_region
      %v3527 = vld [vmem:[#allocation2] sm:$0xff]
      %v3528 = vld [vmem:[#allocation2 + $0x8] sm:$0xff]
      %v3529 = vld [vmem:[#allocation2 + $0x10] sm:$0xff]
      %v3530 = vld [vmem:[#allocation2 + $0x18] sm:$0xff]
      %v3531 = vld [vmem:[#allocation2 + $0x20] sm:$0xff]
      %v3532 = vld [vmem:[#allocation2 + $0x28] sm:$0xff]
      %v3533 = vld [vmem:[#allocation2 + $0x30] sm:$0xff]
      %v3534 = vld [vmem:[#allocation2 + $0x38] sm:$0xff]
      %v3535 = vld [vmem:[#allocation8] sm:$0xff]
      %v3537 = vlaneseq
      %v3538 = vshrl.u32 %v3537, 7
      %v3539 = vsub.s32 0, %v3538
      %v3540 = vrot.slane %v3535, %v3539
      %v3541 = vlaneseq
      %v3542 = vshrl.u32 %v3541, 7
      %v3543 = vsub.s32 1, %v3542
      %v3544 = vrot.slane %v3535, %v3543
      %v3545 = vlaneseq
      %v3546 = vshrl.u32 %v3545, 7
      %v3547 = vsub.s32 2, %v3546
      %v3548 = vrot.slane %v3535, %v3547
      %v3549 = vlaneseq
      %v3550 = vshrl.u32 %v3549, 7
      %v3551 = vsub.s32 3, %v3550
      %v3552 = vrot.slane %v3535, %v3551
      %v3553 = vlaneseq
      %v3554 = vshrl.u32 %v3553, 7
      %v3555 = vsub.s32 4, %v3554
      %v3556 = vrot.slane %v3535, %v3555
      %v3557 = vlaneseq
      %v3558 = vshrl.u32 %v3557, 7
      %v3559 = vsub.s32 5, %v3558
      %v3560 = vrot.slane %v3535, %v3559
      %v3561 = vlaneseq
      %v3562 = vshrl.u32 %v3561, 7
      %v3563 = vsub.s32 6, %v3562
      %v3564 = vrot.slane %v3535, %v3563
      %v3565 = vlaneseq
      %v3566 = vshrl.u32 %v3565, 7
      %v3567 = vsub.s32 7, %v3566
      %v3568 = vrot.slane %v3535, %v3567
      %v3577 = vadd.f32 %v3527, %v3540
      %v3578 = vadd.f32 %v3528, %v3544
      %v3579 = vadd.f32 %v3529, %v3548
      %v3580 = vadd.f32 %v3530, %v3552
      %v3581 = vadd.f32 %v3531, %v3556
      %v3582 = vadd.f32 %v3532, %v3560
      %v3583 = vadd.f32 %v3533, %v3564
      %v3584 = vadd.f32 %v3534, %v3568
      %v3585 = vmax.f32 %v3577, 0.0
      %v3586 = vmax.f32 %v3578, 0.0
      %v3587 = vmax.f32 %v3579, 0.0
      %v3588 = vmax.f32 %v3580, 0.0
      %v3589 = vmax.f32 %v3581, 0.0
      %v3590 = vmax.f32 %v3582, 0.0
      %v3591 = vmax.f32 %v3583, 0.0
      %v3592 = vmax.f32 %v3584, 0.0
      %v3593 = vpack.c.bf16 %v3585, %v3585
      %v3594 = vpack.c.bf16 %v3586, %v3586
      %v3595 = vpack.c.bf16 %v3587, %v3587
      %v3596 = vpack.c.bf16 %v3588, %v3588
      %v3597 = vpack.c.bf16 %v3589, %v3589
      %v3598 = vpack.c.bf16 %v3590, %v3590
      %v3599 = vpack.c.bf16 %v3591, %v3591
      %v3600 = vpack.c.bf16 %v3592, %v3592
      %v3601 = vld [vmem:[#allocation9] sm:$0xff]
      %v3602 = vld [vmem:[#allocation9 + $0x8] sm:$0xff]
      %v3603 = vld [vmem:[#allocation9 + $0x10] sm:$0xff]
      %v3604 = vld [vmem:[#allocation9 + $0x18] sm:$0xff]
      %v3605 = vld [vmem:[#allocation9 + $0x20] sm:$0xff]
      %v3606 = vld [vmem:[#allocation9 + $0x28] sm:$0xff]
      %v3607 = vld [vmem:[#allocation9 + $0x30] sm:$0xff]
      %v3608 = vld [vmem:[#allocation9 + $0x38] sm:$0xff]
      %v3609 = vld [vmem:[#allocation9 + $0x40] sm:$0xff]
      %v3610 = vld [vmem:[#allocation9 + $0x48] sm:$0xff]
      %v3611 = vld [vmem:[#allocation9 + $0x50] sm:$0xff]
      %v3612 = vld [vmem:[#allocation9 + $0x58] sm:$0xff]
      %v3613 = vld [vmem:[#allocation9 + $0x60] sm:$0xff]
      %v3614 = vld [vmem:[#allocation9 + $0x68] sm:$0xff]
      %v3615 = vld [vmem:[#allocation9 + $0x70] sm:$0xff]
      %v3616 = vld [vmem:[#allocation9 + $0x78] sm:$0xff]
      %v3617 = vld [vmem:[#allocation9 + $0x80] sm:$0xff]
      %v3618 = vld [vmem:[#allocation9 + $0x88] sm:$0xff]
      %v3619 = vld [vmem:[#allocation9 + $0x90] sm:$0xff]
      %v3620 = vld [vmem:[#allocation9 + $0x98] sm:$0xff]
      %v3621 = vld [vmem:[#allocation9 + $0xa0] sm:$0xff]
      %v3622 = vld [vmem:[#allocation9 + $0xa8] sm:$0xff]
      %v3623 = vld [vmem:[#allocation9 + $0xb0] sm:$0xff]
      %v3624 = vld [vmem:[#allocation9 + $0xb8] sm:$0xff]
      %v3625 = vld [vmem:[#allocation9 + $0xc0] sm:$0xff]
      %v3626 = vld [vmem:[#allocation9 + $0xc8] sm:$0xff]
      %v3627 = vld [vmem:[#allocation9 + $0xd0] sm:$0xff]
      %v3628 = vld [vmem:[#allocation9 + $0xd8] sm:$0xff]
      %v3629 = vld [vmem:[#allocation9 + $0xe0] sm:$0xff]
      %v3630 = vld [vmem:[#allocation9 + $0xe8] sm:$0xff]
      %v3631 = vld [vmem:[#allocation9 + $0xf0] sm:$0xff]
      %v3632 = vld [vmem:[#allocation9 + $0xf8] sm:$0xff]
      %v3633 = vld [vmem:[#allocation9 + $0x100] sm:$0xff]
      %v3634 = vld [vmem:[#allocation9 + $0x108] sm:$0xff]
      %v3635 = vld [vmem:[#allocation9 + $0x110] sm:$0xff]
      %v3636 = vld [vmem:[#allocation9 + $0x118] sm:$0xff]
      %v3637 = vld [vmem:[#allocation9 + $0x120] sm:$0xff]
      %v3638 = vld [vmem:[#allocation9 + $0x128] sm:$0xff]
      %v3639 = vld [vmem:[#allocation9 + $0x130] sm:$0xff]
      %v3640 = vld [vmem:[#allocation9 + $0x138] sm:$0xff]
      %v3641 = vld [vmem:[#allocation9 + $0x140] sm:$0xff]
      %v3642 = vld [vmem:[#allocation9 + $0x148] sm:$0xff]
      %v3643 = vld [vmem:[#allocation9 + $0x150] sm:$0xff]
      %v3644 = vld [vmem:[#allocation9 + $0x158] sm:$0xff]
      %v3645 = vld [vmem:[#allocation9 + $0x160] sm:$0xff]
      %v3646 = vld [vmem:[#allocation9 + $0x168] sm:$0xff]
      %v3647 = vld [vmem:[#allocation9 + $0x170] sm:$0xff]
      %v3648 = vld [vmem:[#allocation9 + $0x178] sm:$0xff]
      %v3649 = vld [vmem:[#allocation9 + $0x180] sm:$0xff]
      %v3650 = vld [vmem:[#allocation9 + $0x188] sm:$0xff]
      %v3651 = vld [vmem:[#allocation9 + $0x190] sm:$0xff]
      %v3652 = vld [vmem:[#allocation9 + $0x198] sm:$0xff]
      %v3653 = vld [vmem:[#allocation9 + $0x1a0] sm:$0xff]
      %v3654 = vld [vmem:[#allocation9 + $0x1a8] sm:$0xff]
      %v3655 = vld [vmem:[#allocation9 + $0x1b0] sm:$0xff]
      %v3656 = vld [vmem:[#allocation9 + $0x1b8] sm:$0xff]
      %v3657 = vld [vmem:[#allocation9 + $0x1c0] sm:$0xff]
      %v3658 = vld [vmem:[#allocation9 + $0x1c8] sm:$0xff]
      %v3659 = vld [vmem:[#allocation9 + $0x1d0] sm:$0xff]
      %v3660 = vld [vmem:[#allocation9 + $0x1d8] sm:$0xff]
      %v3661 = vld [vmem:[#allocation9 + $0x1e0] sm:$0xff]
      %v3662 = vld [vmem:[#allocation9 + $0x1e8] sm:$0xff]
      %v3663 = vld [vmem:[#allocation9 + $0x1f0] sm:$0xff]
      %v3664 = vld [vmem:[#allocation9 + $0x1f8] sm:$0xff]
      %v3665 = vld [vmem:[#allocation9 + $0x200] sm:$0xff]
      %v3666 = vld [vmem:[#allocation9 + $0x208] sm:$0xff]
      %v3667 = vld [vmem:[#allocation9 + $0x210] sm:$0xff]
      %v3668 = vld [vmem:[#allocation9 + $0x218] sm:$0xff]
      %v3669 = vld [vmem:[#allocation9 + $0x220] sm:$0xff]
      %v3670 = vld [vmem:[#allocation9 + $0x228] sm:$0xff]
      %v3671 = vld [vmem:[#allocation9 + $0x230] sm:$0xff]
      %v3672 = vld [vmem:[#allocation9 + $0x238] sm:$0xff]
      %v3673 = vld [vmem:[#allocation9 + $0x240] sm:$0xff]
      %v3674 = vld [vmem:[#allocation9 + $0x248] sm:$0xff]
      %v3675 = vld [vmem:[#allocation9 + $0x250] sm:$0xff]
      %v3676 = vld [vmem:[#allocation9 + $0x258] sm:$0xff]
      %v3677 = vld [vmem:[#allocation9 + $0x260] sm:$0xff]
      %v3678 = vld [vmem:[#allocation9 + $0x268] sm:$0xff]
      %v3679 = vld [vmem:[#allocation9 + $0x270] sm:$0xff]
      %v3680 = vld [vmem:[#allocation9 + $0x278] sm:$0xff]
      %v3681 = vld [vmem:[#allocation9 + $0x280] sm:$0xff]
      %v3682 = vld [vmem:[#allocation9 + $0x288] sm:$0xff]
      %v3683 = vld [vmem:[#allocation9 + $0x290] sm:$0xff]
      %v3684 = vld [vmem:[#allocation9 + $0x298] sm:$0xff]
      %v3685 = vld [vmem:[#allocation9 + $0x2a0] sm:$0xff]
      %v3686 = vld [vmem:[#allocation9 + $0x2a8] sm:$0xff]
      %v3687 = vld [vmem:[#allocation9 + $0x2b0] sm:$0xff]
      %v3688 = vld [vmem:[#allocation9 + $0x2b8] sm:$0xff]
      %v3689 = vld [vmem:[#allocation9 + $0x2c0] sm:$0xff]
      %v3690 = vld [vmem:[#allocation9 + $0x2c8] sm:$0xff]
      %v3691 = vld [vmem:[#allocation9 + $0x2d0] sm:$0xff]
      %v3692 = vld [vmem:[#allocation9 + $0x2d8] sm:$0xff]
      %v3693 = vld [vmem:[#allocation9 + $0x2e0] sm:$0xff]
      %v3694 = vld [vmem:[#allocation9 + $0x2e8] sm:$0xff]
      %v3695 = vld [vmem:[#allocation9 + $0x2f0] sm:$0xff]
      %v3696 = vld [vmem:[#allocation9 + $0x2f8] sm:$0xff]
      %v3697 = vld [vmem:[#allocation9 + $0x300] sm:$0xff]
      %v3698 = vld [vmem:[#allocation9 + $0x308] sm:$0xff]
      %v3699 = vld [vmem:[#allocation9 + $0x310] sm:$0xff]
      %v3700 = vld [vmem:[#allocation9 + $0x318] sm:$0xff]
      %v3701 = vld [vmem:[#allocation9 + $0x320] sm:$0xff]
      %v3702 = vld [vmem:[#allocation9 + $0x328] sm:$0xff]
      %v3703 = vld [vmem:[#allocation9 + $0x330] sm:$0xff]
      %v3704 = vld [vmem:[#allocation9 + $0x338] sm:$0xff]
      %v3705 = vld [vmem:[#allocation9 + $0x340] sm:$0xff]
      %v3706 = vld [vmem:[#allocation9 + $0x348] sm:$0xff]
      %v3707 = vld [vmem:[#allocation9 + $0x350] sm:$0xff]
      %v3708 = vld [vmem:[#allocation9 + $0x358] sm:$0xff]
      %v3709 = vld [vmem:[#allocation9 + $0x360] sm:$0xff]
      %v3710 = vld [vmem:[#allocation9 + $0x368] sm:$0xff]
      %v3711 = vld [vmem:[#allocation9 + $0x370] sm:$0xff]
      %v3712 = vld [vmem:[#allocation9 + $0x378] sm:$0xff]
      %v3713 = vld [vmem:[#allocation9 + $0x380] sm:$0xff]
      %v3714 = vld [vmem:[#allocation9 + $0x388] sm:$0xff]
      %v3715 = vld [vmem:[#allocation9 + $0x390] sm:$0xff]
      %v3716 = vld [vmem:[#allocation9 + $0x398] sm:$0xff]
      %v3717 = vld [vmem:[#allocation9 + $0x3a0] sm:$0xff]
      %v3718 = vld [vmem:[#allocation9 + $0x3a8] sm:$0xff]
      %v3719 = vld [vmem:[#allocation9 + $0x3b0] sm:$0xff]
      %v3720 = vld [vmem:[#allocation9 + $0x3b8] sm:$0xff]
      %v3721 = vld [vmem:[#allocation9 + $0x3c0] sm:$0xff]
      %v3722 = vld [vmem:[#allocation9 + $0x3c8] sm:$0xff]
      %v3723 = vld [vmem:[#allocation9 + $0x3d0] sm:$0xff]
      %v3724 = vld [vmem:[#allocation9 + $0x3d8] sm:$0xff]
      %v3725 = vld [vmem:[#allocation9 + $0x3e0] sm:$0xff]
      %v3726 = vld [vmem:[#allocation9 + $0x3e8] sm:$0xff]
      %v3727 = vld [vmem:[#allocation9 + $0x3f0] sm:$0xff]
      %v3728 = vld [vmem:[#allocation9 + $0x3f8] sm:$0xff]
      %v3729 = vld [vmem:[#allocation9 + $0x400] sm:$0xff]
      %v3730 = vld [vmem:[#allocation9 + $0x408] sm:$0xff]
      %v3731 = vld [vmem:[#allocation9 + $0x410] sm:$0xff]
      %v3732 = vld [vmem:[#allocation9 + $0x418] sm:$0xff]
      %v3733 = vld [vmem:[#allocation9 + $0x420] sm:$0xff]
      %v3734 = vld [vmem:[#allocation9 + $0x428] sm:$0xff]
      %v3735 = vld [vmem:[#allocation9 + $0x430] sm:$0xff]
      %v3736 = vld [vmem:[#allocation9 + $0x438] sm:$0xff]
      %v3737 = vld [vmem:[#allocation9 + $0x440] sm:$0xff]
      %v3738 = vld [vmem:[#allocation9 + $0x448] sm:$0xff]
      %v3739 = vld [vmem:[#allocation9 + $0x450] sm:$0xff]
      %v3740 = vld [vmem:[#allocation9 + $0x458] sm:$0xff]
      %v3741 = vld [vmem:[#allocation9 + $0x460] sm:$0xff]
      %v3742 = vld [vmem:[#allocation9 + $0x468] sm:$0xff]
      %v3743 = vld [vmem:[#allocation9 + $0x470] sm:$0xff]
      %v3744 = vld [vmem:[#allocation9 + $0x478] sm:$0xff]
      %v3745 = vld [vmem:[#allocation9 + $0x480] sm:$0xff]
      %v3746 = vld [vmem:[#allocation9 + $0x488] sm:$0xff]
      %v3747 = vld [vmem:[#allocation9 + $0x490] sm:$0xff]
      %v3748 = vld [vmem:[#allocation9 + $0x498] sm:$0xff]
      %v3749 = vld [vmem:[#allocation9 + $0x4a0] sm:$0xff]
      %v3750 = vld [vmem:[#allocation9 + $0x4a8] sm:$0xff]
      %v3751 = vld [vmem:[#allocation9 + $0x4b0] sm:$0xff]
      %v3752 = vld [vmem:[#allocation9 + $0x4b8] sm:$0xff]
      %v3753 = vld [vmem:[#allocation9 + $0x4c0] sm:$0xff]
      %v3754 = vld [vmem:[#allocation9 + $0x4c8] sm:$0xff]
      %v3755 = vld [vmem:[#allocation9 + $0x4d0] sm:$0xff]
      %v3756 = vld [vmem:[#allocation9 + $0x4d8] sm:$0xff]
      %v3757 = vld [vmem:[#allocation9 + $0x4e0] sm:$0xff]
      %v3758 = vld [vmem:[#allocation9 + $0x4e8] sm:$0xff]
      %v3759 = vld [vmem:[#allocation9 + $0x4f0] sm:$0xff]
      %v3760 = vld [vmem:[#allocation9 + $0x4f8] sm:$0xff]
      %v3761 = vld [vmem:[#allocation9 + $0x500] sm:$0xff]
      %v3762 = vld [vmem:[#allocation9 + $0x508] sm:$0xff]
      %v3763 = vld [vmem:[#allocation9 + $0x510] sm:$0xff]
      %v3764 = vld [vmem:[#allocation9 + $0x518] sm:$0xff]
      %v3765 = vld [vmem:[#allocation9 + $0x520] sm:$0xff]
      %v3766 = vld [vmem:[#allocation9 + $0x528] sm:$0xff]
      %v3767 = vld [vmem:[#allocation9 + $0x530] sm:$0xff]
      %v3768 = vld [vmem:[#allocation9 + $0x538] sm:$0xff]
      %v3769 = vld [vmem:[#allocation9 + $0x540] sm:$0xff]
      %v3770 = vld [vmem:[#allocation9 + $0x548] sm:$0xff]
      %v3771 = vld [vmem:[#allocation9 + $0x550] sm:$0xff]
      %v3772 = vld [vmem:[#allocation9 + $0x558] sm:$0xff]
      %v3773 = vld [vmem:[#allocation9 + $0x560] sm:$0xff]
      %v3774 = vld [vmem:[#allocation9 + $0x568] sm:$0xff]
      %v3775 = vld [vmem:[#allocation9 + $0x570] sm:$0xff]
      %v3776 = vld [vmem:[#allocation9 + $0x578] sm:$0xff]
      %v3777 = vld [vmem:[#allocation9 + $0x580] sm:$0xff]
      %v3778 = vld [vmem:[#allocation9 + $0x588] sm:$0xff]
      %v3779 = vld [vmem:[#allocation9 + $0x590] sm:$0xff]
      %v3780 = vld [vmem:[#allocation9 + $0x598] sm:$0xff]
      %v3781 = vld [vmem:[#allocation9 + $0x5a0] sm:$0xff]
      %v3782 = vld [vmem:[#allocation9 + $0x5a8] sm:$0xff]
      %v3783 = vld [vmem:[#allocation9 + $0x5b0] sm:$0xff]
      %v3784 = vld [vmem:[#allocation9 + $0x5b8] sm:$0xff]
      %v3785 = vld [vmem:[#allocation9 + $0x5c0] sm:$0xff]
      %v3786 = vld [vmem:[#allocation9 + $0x5c8] sm:$0xff]
      %v3787 = vld [vmem:[#allocation9 + $0x5d0] sm:$0xff]
      %v3788 = vld [vmem:[#allocation9 + $0x5d8] sm:$0xff]
      %v3789 = vld [vmem:[#allocation9 + $0x5e0] sm:$0xff]
      %v3790 = vld [vmem:[#allocation9 + $0x5e8] sm:$0xff]
      %v3791 = vld [vmem:[#allocation9 + $0x5f0] sm:$0xff]
      %v3792 = vld [vmem:[#allocation9 + $0x5f8] sm:$0xff]
      %v3793 = vld [vmem:[#allocation9 + $0x600] sm:$0xff]
      %v3794 = vld [vmem:[#allocation9 + $0x608] sm:$0xff]
      %v3795 = vld [vmem:[#allocation9 + $0x610] sm:$0xff]
      %v3796 = vld [vmem:[#allocation9 + $0x618] sm:$0xff]
      %v3797 = vld [vmem:[#allocation9 + $0x620] sm:$0xff]
      %v3798 = vld [vmem:[#allocation9 + $0x628] sm:$0xff]
      %v3799 = vld [vmem:[#allocation9 + $0x630] sm:$0xff]
      %v3800 = vld [vmem:[#allocation9 + $0x638] sm:$0xff]
      %v3801 = vld [vmem:[#allocation9 + $0x640] sm:$0xff]
      %v3802 = vld [vmem:[#allocation9 + $0x648] sm:$0xff]
      %v3803 = vld [vmem:[#allocation9 + $0x650] sm:$0xff]
      %v3804 = vld [vmem:[#allocation9 + $0x658] sm:$0xff]
      %v3805 = vld [vmem:[#allocation9 + $0x660] sm:$0xff]
      %v3806 = vld [vmem:[#allocation9 + $0x668] sm:$0xff]
      %v3807 = vld [vmem:[#allocation9 + $0x670] sm:$0xff]
      %v3808 = vld [vmem:[#allocation9 + $0x678] sm:$0xff]
      %v3809 = vld [vmem:[#allocation9 + $0x680] sm:$0xff]
      %v3810 = vld [vmem:[#allocation9 + $0x688] sm:$0xff]
      %v3811 = vld [vmem:[#allocation9 + $0x690] sm:$0xff]
      %v3812 = vld [vmem:[#allocation9 + $0x698] sm:$0xff]
      %v3813 = vld [vmem:[#allocation9 + $0x6a0] sm:$0xff]
      %v3814 = vld [vmem:[#allocation9 + $0x6a8] sm:$0xff]
      %v3815 = vld [vmem:[#allocation9 + $0x6b0] sm:$0xff]
      %v3816 = vld [vmem:[#allocation9 + $0x6b8] sm:$0xff]
      %v3817 = vld [vmem:[#allocation9 + $0x6c0] sm:$0xff]
      %v3818 = vld [vmem:[#allocation9 + $0x6c8] sm:$0xff]
      %v3819 = vld [vmem:[#allocation9 + $0x6d0] sm:$0xff]
      %v3820 = vld [vmem:[#allocation9 + $0x6d8] sm:$0xff]
      %v3821 = vld [vmem:[#allocation9 + $0x6e0] sm:$0xff]
      %v3822 = vld [vmem:[#allocation9 + $0x6e8] sm:$0xff]
      %v3823 = vld [vmem:[#allocation9 + $0x6f0] sm:$0xff]
      %v3824 = vld [vmem:[#allocation9 + $0x6f8] sm:$0xff]
      %v3825 = vld [vmem:[#allocation9 + $0x700] sm:$0xff]
      %v3826 = vld [vmem:[#allocation9 + $0x708] sm:$0xff]
      %v3827 = vld [vmem:[#allocation9 + $0x710] sm:$0xff]
      %v3828 = vld [vmem:[#allocation9 + $0x718] sm:$0xff]
      %v3829 = vld [vmem:[#allocation9 + $0x720] sm:$0xff]
      %v3830 = vld [vmem:[#allocation9 + $0x728] sm:$0xff]
      %v3831 = vld [vmem:[#allocation9 + $0x730] sm:$0xff]
      %v3832 = vld [vmem:[#allocation9 + $0x738] sm:$0xff]
      %v3833 = vld [vmem:[#allocation9 + $0x740] sm:$0xff]
      %v3834 = vld [vmem:[#allocation9 + $0x748] sm:$0xff]
      %v3835 = vld [vmem:[#allocation9 + $0x750] sm:$0xff]
      %v3836 = vld [vmem:[#allocation9 + $0x758] sm:$0xff]
      %v3837 = vld [vmem:[#allocation9 + $0x760] sm:$0xff]
      %v3838 = vld [vmem:[#allocation9 + $0x768] sm:$0xff]
      %v3839 = vld [vmem:[#allocation9 + $0x770] sm:$0xff]
      %v3840 = vld [vmem:[#allocation9 + $0x778] sm:$0xff]
      %v3841 = vld [vmem:[#allocation9 + $0x780] sm:$0xff]
      %v3842 = vld [vmem:[#allocation9 + $0x788] sm:$0xff]
      %v3843 = vld [vmem:[#allocation9 + $0x790] sm:$0xff]
      %v3844 = vld [vmem:[#allocation9 + $0x798] sm:$0xff]
      %v3845 = vld [vmem:[#allocation9 + $0x7a0] sm:$0xff]
      %v3846 = vld [vmem:[#allocation9 + $0x7a8] sm:$0xff]
      %v3847 = vld [vmem:[#allocation9 + $0x7b0] sm:$0xff]
      %v3848 = vld [vmem:[#allocation9 + $0x7b8] sm:$0xff]
      %v3849 = vld [vmem:[#allocation9 + $0x7c0] sm:$0xff]
      %v3850 = vld [vmem:[#allocation9 + $0x7c8] sm:$0xff]
      %v3851 = vld [vmem:[#allocation9 + $0x7d0] sm:$0xff]
      %v3852 = vld [vmem:[#allocation9 + $0x7d8] sm:$0xff]
      %v3853 = vld [vmem:[#allocation9 + $0x7e0] sm:$0xff]
      %v3854 = vld [vmem:[#allocation9 + $0x7e8] sm:$0xff]
      %v3855 = vld [vmem:[#allocation9 + $0x7f0] sm:$0xff]
      %v3856 = vld [vmem:[#allocation9 + $0x7f8] sm:$0xff]
      %v3857 = vld [vmem:[#allocation9 + $0x800] sm:$0xff]
      %v3858 = vld [vmem:[#allocation9 + $0x808] sm:$0xff]
      %v3859 = vld [vmem:[#allocation9 + $0x810] sm:$0xff]
      %v3860 = vld [vmem:[#allocation9 + $0x818] sm:$0xff]
      %v3861 = vld [vmem:[#allocation9 + $0x820] sm:$0xff]
      %v3862 = vld [vmem:[#allocation9 + $0x828] sm:$0xff]
      %v3863 = vld [vmem:[#allocation9 + $0x830] sm:$0xff]
      %v3864 = vld [vmem:[#allocation9 + $0x838] sm:$0xff]
      %v3865 = vld [vmem:[#allocation9 + $0x840] sm:$0xff]
      %v3866 = vld [vmem:[#allocation9 + $0x848] sm:$0xff]
      %v3867 = vld [vmem:[#allocation9 + $0x850] sm:$0xff]
      %v3868 = vld [vmem:[#allocation9 + $0x858] sm:$0xff]
      %v3869 = vld [vmem:[#allocation9 + $0x860] sm:$0xff]
      %v3870 = vld [vmem:[#allocation9 + $0x868] sm:$0xff]
      %v3871 = vld [vmem:[#allocation9 + $0x870] sm:$0xff]
      %v3872 = vld [vmem:[#allocation9 + $0x878] sm:$0xff]
      %v3873 = vld [vmem:[#allocation9 + $0x880] sm:$0xff]
      %v3874 = vld [vmem:[#allocation9 + $0x888] sm:$0xff]
      %v3875 = vld [vmem:[#allocation9 + $0x890] sm:$0xff]
      %v3876 = vld [vmem:[#allocation9 + $0x898] sm:$0xff]
      %v3877 = vld [vmem:[#allocation9 + $0x8a0] sm:$0xff]
      %v3878 = vld [vmem:[#allocation9 + $0x8a8] sm:$0xff]
      %v3879 = vld [vmem:[#allocation9 + $0x8b0] sm:$0xff]
      %v3880 = vld [vmem:[#allocation9 + $0x8b8] sm:$0xff]
      %v3881 = vld [vmem:[#allocation9 + $0x8c0] sm:$0xff]
      %v3882 = vld [vmem:[#allocation9 + $0x8c8] sm:$0xff]
      %v3883 = vld [vmem:[#allocation9 + $0x8d0] sm:$0xff]
      %v3884 = vld [vmem:[#allocation9 + $0x8d8] sm:$0xff]
      %v3885 = vld [vmem:[#allocation9 + $0x8e0] sm:$0xff]
      %v3886 = vld [vmem:[#allocation9 + $0x8e8] sm:$0xff]
      %v3887 = vld [vmem:[#allocation9 + $0x8f0] sm:$0xff]
      %v3888 = vld [vmem:[#allocation9 + $0x8f8] sm:$0xff]
      %v3889 = vld [vmem:[#allocation9 + $0x900] sm:$0xff]
      %v3890 = vld [vmem:[#allocation9 + $0x908] sm:$0xff]
      %v3891 = vld [vmem:[#allocation9 + $0x910] sm:$0xff]
      %v3892 = vld [vmem:[#allocation9 + $0x918] sm:$0xff]
      %v3893 = vld [vmem:[#allocation9 + $0x920] sm:$0xff]
      %v3894 = vld [vmem:[#allocation9 + $0x928] sm:$0xff]
      %v3895 = vld [vmem:[#allocation9 + $0x930] sm:$0xff]
      %v3896 = vld [vmem:[#allocation9 + $0x938] sm:$0xff]
      %v3897 = vld [vmem:[#allocation9 + $0x940] sm:$0xff]
      %v3898 = vld [vmem:[#allocation9 + $0x948] sm:$0xff]
      %v3899 = vld [vmem:[#allocation9 + $0x950] sm:$0xff]
      %v3900 = vld [vmem:[#allocation9 + $0x958] sm:$0xff]
      %v3901 = vld [vmem:[#allocation9 + $0x960] sm:$0xff]
      %v3902 = vld [vmem:[#allocation9 + $0x968] sm:$0xff]
      %v3903 = vld [vmem:[#allocation9 + $0x970] sm:$0xff]
      %v3904 = vld [vmem:[#allocation9 + $0x978] sm:$0xff]
      %v3905 = vld [vmem:[#allocation9 + $0x980] sm:$0xff]
      %v3906 = vld [vmem:[#allocation9 + $0x988] sm:$0xff]
      %v3907 = vld [vmem:[#allocation9 + $0x990] sm:$0xff]
      %v3908 = vld [vmem:[#allocation9 + $0x998] sm:$0xff]
      %v3909 = vld [vmem:[#allocation9 + $0x9a0] sm:$0xff]
      %v3910 = vld [vmem:[#allocation9 + $0x9a8] sm:$0xff]
      %v3911 = vld [vmem:[#allocation9 + $0x9b0] sm:$0xff]
      %v3912 = vld [vmem:[#allocation9 + $0x9b8] sm:$0xff]
      %v3913 = vld [vmem:[#allocation9 + $0x9c0] sm:$0xff]
      %v3914 = vld [vmem:[#allocation9 + $0x9c8] sm:$0xff]
      %v3915 = vld [vmem:[#allocation9 + $0x9d0] sm:$0xff]
      %v3916 = vld [vmem:[#allocation9 + $0x9d8] sm:$0xff]
      %v3917 = vld [vmem:[#allocation9 + $0x9e0] sm:$0xff]
      %v3918 = vld [vmem:[#allocation9 + $0x9e8] sm:$0xff]
      %v3919 = vld [vmem:[#allocation9 + $0x9f0] sm:$0xff]
      %v3920 = vld [vmem:[#allocation9 + $0x9f8] sm:$0xff]
      %v3921 = vld [vmem:[#allocation9 + $0xa00] sm:$0xff]
      %v3922 = vld [vmem:[#allocation9 + $0xa08] sm:$0xff]
      %v3923 = vld [vmem:[#allocation9 + $0xa10] sm:$0xff]
      %v3924 = vld [vmem:[#allocation9 + $0xa18] sm:$0xff]
      %v3925 = vld [vmem:[#allocation9 + $0xa20] sm:$0xff]
      %v3926 = vld [vmem:[#allocation9 + $0xa28] sm:$0xff]
      %v3927 = vld [vmem:[#allocation9 + $0xa30] sm:$0xff]
      %v3928 = vld [vmem:[#allocation9 + $0xa38] sm:$0xff]
      %v3929 = vld [vmem:[#allocation9 + $0xa40] sm:$0xff]
      %v3930 = vld [vmem:[#allocation9 + $0xa48] sm:$0xff]
      %v3931 = vld [vmem:[#allocation9 + $0xa50] sm:$0xff]
      %v3932 = vld [vmem:[#allocation9 + $0xa58] sm:$0xff]
      %v3933 = vld [vmem:[#allocation9 + $0xa60] sm:$0xff]
      %v3934 = vld [vmem:[#allocation9 + $0xa68] sm:$0xff]
      %v3935 = vld [vmem:[#allocation9 + $0xa70] sm:$0xff]
      %v3936 = vld [vmem:[#allocation9 + $0xa78] sm:$0xff]
      %v3937 = vld [vmem:[#allocation9 + $0xa80] sm:$0xff]
      %v3938 = vld [vmem:[#allocation9 + $0xa88] sm:$0xff]
      %v3939 = vld [vmem:[#allocation9 + $0xa90] sm:$0xff]
      %v3940 = vld [vmem:[#allocation9 + $0xa98] sm:$0xff]
      %v3941 = vld [vmem:[#allocation9 + $0xaa0] sm:$0xff]
      %v3942 = vld [vmem:[#allocation9 + $0xaa8] sm:$0xff]
      %v3943 = vld [vmem:[#allocation9 + $0xab0] sm:$0xff]
      %v3944 = vld [vmem:[#allocation9 + $0xab8] sm:$0xff]
      %v3945 = vld [vmem:[#allocation9 + $0xac0] sm:$0xff]
      %v3946 = vld [vmem:[#allocation9 + $0xac8] sm:$0xff]
      %v3947 = vld [vmem:[#allocation9 + $0xad0] sm:$0xff]
      %v3948 = vld [vmem:[#allocation9 + $0xad8] sm:$0xff]
      %v3949 = vld [vmem:[#allocation9 + $0xae0] sm:$0xff]
      %v3950 = vld [vmem:[#allocation9 + $0xae8] sm:$0xff]
      %v3951 = vld [vmem:[#allocation9 + $0xaf0] sm:$0xff]
      %v3952 = vld [vmem:[#allocation9 + $0xaf8] sm:$0xff]
      %v3953 = vld [vmem:[#allocation9 + $0xb00] sm:$0xff]
      %v3954 = vld [vmem:[#allocation9 + $0xb08] sm:$0xff]
      %v3955 = vld [vmem:[#allocation9 + $0xb10] sm:$0xff]
      %v3956 = vld [vmem:[#allocation9 + $0xb18] sm:$0xff]
      %v3957 = vld [vmem:[#allocation9 + $0xb20] sm:$0xff]
      %v3958 = vld [vmem:[#allocation9 + $0xb28] sm:$0xff]
      %v3959 = vld [vmem:[#allocation9 + $0xb30] sm:$0xff]
      %v3960 = vld [vmem:[#allocation9 + $0xb38] sm:$0xff]
      %v3961 = vld [vmem:[#allocation9 + $0xb40] sm:$0xff]
      %v3962 = vld [vmem:[#allocation9 + $0xb48] sm:$0xff]
      %v3963 = vld [vmem:[#allocation9 + $0xb50] sm:$0xff]
      %v3964 = vld [vmem:[#allocation9 + $0xb58] sm:$0xff]
      %v3965 = vld [vmem:[#allocation9 + $0xb60] sm:$0xff]
      %v3966 = vld [vmem:[#allocation9 + $0xb68] sm:$0xff]
      %v3967 = vld [vmem:[#allocation9 + $0xb70] sm:$0xff]
      %v3968 = vld [vmem:[#allocation9 + $0xb78] sm:$0xff]
      %v3969 = vld [vmem:[#allocation9 + $0xb80] sm:$0xff]
      %v3970 = vld [vmem:[#allocation9 + $0xb88] sm:$0xff]
      %v3971 = vld [vmem:[#allocation9 + $0xb90] sm:$0xff]
      %v3972 = vld [vmem:[#allocation9 + $0xb98] sm:$0xff]
      %v3973 = vld [vmem:[#allocation9 + $0xba0] sm:$0xff]
      %v3974 = vld [vmem:[#allocation9 + $0xba8] sm:$0xff]
      %v3975 = vld [vmem:[#allocation9 + $0xbb0] sm:$0xff]
      %v3976 = vld [vmem:[#allocation9 + $0xbb8] sm:$0xff]
      %v3977 = vld [vmem:[#allocation9 + $0xbc0] sm:$0xff]
      %v3978 = vld [vmem:[#allocation9 + $0xbc8] sm:$0xff]
      %v3979 = vld [vmem:[#allocation9 + $0xbd0] sm:$0xff]
      %v3980 = vld [vmem:[#allocation9 + $0xbd8] sm:$0xff]
      %v3981 = vld [vmem:[#allocation9 + $0xbe0] sm:$0xff]
      %v3982 = vld [vmem:[#allocation9 + $0xbe8] sm:$0xff]
      %v3983 = vld [vmem:[#allocation9 + $0xbf0] sm:$0xff]
      %v3984 = vld [vmem:[#allocation9 + $0xbf8] sm:$0xff]
      %v3985 = vld [vmem:[#allocation9 + $0xc00] sm:$0xff]
      %v3986 = vld [vmem:[#allocation9 + $0xc08] sm:$0xff]
      %v3987 = vld [vmem:[#allocation9 + $0xc10] sm:$0xff]
      %v3988 = vld [vmem:[#allocation9 + $0xc18] sm:$0xff]
      %v3989 = vld [vmem:[#allocation9 + $0xc20] sm:$0xff]
      %v3990 = vld [vmem:[#allocation9 + $0xc28] sm:$0xff]
      %v3991 = vld [vmem:[#allocation9 + $0xc30] sm:$0xff]
      %v3992 = vld [vmem:[#allocation9 + $0xc38] sm:$0xff]
      %v3993 = vld [vmem:[#allocation9 + $0xc40] sm:$0xff]
      %v3994 = vld [vmem:[#allocation9 + $0xc48] sm:$0xff]
      %v3995 = vld [vmem:[#allocation9 + $0xc50] sm:$0xff]
      %v3996 = vld [vmem:[#allocation9 + $0xc58] sm:$0xff]
      %v3997 = vld [vmem:[#allocation9 + $0xc60] sm:$0xff]
      %v3998 = vld [vmem:[#allocation9 + $0xc68] sm:$0xff]
      %v3999 = vld [vmem:[#allocation9 + $0xc70] sm:$0xff]
      %v4000 = vld [vmem:[#allocation9 + $0xc78] sm:$0xff]
      %v4001 = vld [vmem:[#allocation9 + $0xc80] sm:$0xff]
      %v4002 = vld [vmem:[#allocation9 + $0xc88] sm:$0xff]
      %v4003 = vld [vmem:[#allocation9 + $0xc90] sm:$0xff]
      %v4004 = vld [vmem:[#allocation9 + $0xc98] sm:$0xff]
      %v4005 = vld [vmem:[#allocation9 + $0xca0] sm:$0xff]
      %v4006 = vld [vmem:[#allocation9 + $0xca8] sm:$0xff]
      %v4007 = vld [vmem:[#allocation9 + $0xcb0] sm:$0xff]
      %v4008 = vld [vmem:[#allocation9 + $0xcb8] sm:$0xff]
      %v4009 = vld [vmem:[#allocation9 + $0xcc0] sm:$0xff]
      %v4010 = vld [vmem:[#allocation9 + $0xcc8] sm:$0xff]
      %v4011 = vld [vmem:[#allocation9 + $0xcd0] sm:$0xff]
      %v4012 = vld [vmem:[#allocation9 + $0xcd8] sm:$0xff]
      %v4013 = vld [vmem:[#allocation9 + $0xce0] sm:$0xff]
      %v4014 = vld [vmem:[#allocation9 + $0xce8] sm:$0xff]
      %v4015 = vld [vmem:[#allocation9 + $0xcf0] sm:$0xff]
      %v4016 = vld [vmem:[#allocation9 + $0xcf8] sm:$0xff]
      %v4017 = vld [vmem:[#allocation9 + $0xd00] sm:$0xff]
      %v4018 = vld [vmem:[#allocation9 + $0xd08] sm:$0xff]
      %v4019 = vld [vmem:[#allocation9 + $0xd10] sm:$0xff]
      %v4020 = vld [vmem:[#allocation9 + $0xd18] sm:$0xff]
      %v4021 = vld [vmem:[#allocation9 + $0xd20] sm:$0xff]
      %v4022 = vld [vmem:[#allocation9 + $0xd28] sm:$0xff]
      %v4023 = vld [vmem:[#allocation9 + $0xd30] sm:$0xff]
      %v4024 = vld [vmem:[#allocation9 + $0xd38] sm:$0xff]
      %v4025 = vld [vmem:[#allocation9 + $0xd40] sm:$0xff]
      %v4026 = vld [vmem:[#allocation9 + $0xd48] sm:$0xff]
      %v4027 = vld [vmem:[#allocation9 + $0xd50] sm:$0xff]
      %v4028 = vld [vmem:[#allocation9 + $0xd58] sm:$0xff]
      %v4029 = vld [vmem:[#allocation9 + $0xd60] sm:$0xff]
      %v4030 = vld [vmem:[#allocation9 + $0xd68] sm:$0xff]
      %v4031 = vld [vmem:[#allocation9 + $0xd70] sm:$0xff]
      %v4032 = vld [vmem:[#allocation9 + $0xd78] sm:$0xff]
      %v4033 = vld [vmem:[#allocation9 + $0xd80] sm:$0xff]
      %v4034 = vld [vmem:[#allocation9 + $0xd88] sm:$0xff]
      %v4035 = vld [vmem:[#allocation9 + $0xd90] sm:$0xff]
      %v4036 = vld [vmem:[#allocation9 + $0xd98] sm:$0xff]
      %v4037 = vld [vmem:[#allocation9 + $0xda0] sm:$0xff]
      %v4038 = vld [vmem:[#allocation9 + $0xda8] sm:$0xff]
      %v4039 = vld [vmem:[#allocation9 + $0xdb0] sm:$0xff]
      %v4040 = vld [vmem:[#allocation9 + $0xdb8] sm:$0xff]
      %v4041 = vld [vmem:[#allocation9 + $0xdc0] sm:$0xff]
      %v4042 = vld [vmem:[#allocation9 + $0xdc8] sm:$0xff]
      %v4043 = vld [vmem:[#allocation9 + $0xdd0] sm:$0xff]
      %v4044 = vld [vmem:[#allocation9 + $0xdd8] sm:$0xff]
      %v4045 = vld [vmem:[#allocation9 + $0xde0] sm:$0xff]
      %v4046 = vld [vmem:[#allocation9 + $0xde8] sm:$0xff]
      %v4047 = vld [vmem:[#allocation9 + $0xdf0] sm:$0xff]
      %v4048 = vld [vmem:[#allocation9 + $0xdf8] sm:$0xff]
      %v4049 = vld [vmem:[#allocation9 + $0xe00] sm:$0xff]
      %v4050 = vld [vmem:[#allocation9 + $0xe08] sm:$0xff]
      %v4051 = vld [vmem:[#allocation9 + $0xe10] sm:$0xff]
      %v4052 = vld [vmem:[#allocation9 + $0xe18] sm:$0xff]
      %v4053 = vld [vmem:[#allocation9 + $0xe20] sm:$0xff]
      %v4054 = vld [vmem:[#allocation9 + $0xe28] sm:$0xff]
      %v4055 = vld [vmem:[#allocation9 + $0xe30] sm:$0xff]
      %v4056 = vld [vmem:[#allocation9 + $0xe38] sm:$0xff]
      %v4057 = vld [vmem:[#allocation9 + $0xe40] sm:$0xff]
      %v4058 = vld [vmem:[#allocation9 + $0xe48] sm:$0xff]
      %v4059 = vld [vmem:[#allocation9 + $0xe50] sm:$0xff]
      %v4060 = vld [vmem:[#allocation9 + $0xe58] sm:$0xff]
      %v4061 = vld [vmem:[#allocation9 + $0xe60] sm:$0xff]
      %v4062 = vld [vmem:[#allocation9 + $0xe68] sm:$0xff]
      %v4063 = vld [vmem:[#allocation9 + $0xe70] sm:$0xff]
      %v4064 = vld [vmem:[#allocation9 + $0xe78] sm:$0xff]
      %v4065 = vld [vmem:[#allocation9 + $0xe80] sm:$0xff]
      %v4066 = vld [vmem:[#allocation9 + $0xe88] sm:$0xff]
      %v4067 = vld [vmem:[#allocation9 + $0xe90] sm:$0xff]
      %v4068 = vld [vmem:[#allocation9 + $0xe98] sm:$0xff]
      %v4069 = vld [vmem:[#allocation9 + $0xea0] sm:$0xff]
      %v4070 = vld [vmem:[#allocation9 + $0xea8] sm:$0xff]
      %v4071 = vld [vmem:[#allocation9 + $0xeb0] sm:$0xff]
      %v4072 = vld [vmem:[#allocation9 + $0xeb8] sm:$0xff]
      %v4073 = vld [vmem:[#allocation9 + $0xec0] sm:$0xff]
      %v4074 = vld [vmem:[#allocation9 + $0xec8] sm:$0xff]
      %v4075 = vld [vmem:[#allocation9 + $0xed0] sm:$0xff]
      %v4076 = vld [vmem:[#allocation9 + $0xed8] sm:$0xff]
      %v4077 = vld [vmem:[#allocation9 + $0xee0] sm:$0xff]
      %v4078 = vld [vmem:[#allocation9 + $0xee8] sm:$0xff]
      %v4079 = vld [vmem:[#allocation9 + $0xef0] sm:$0xff]
      %v4080 = vld [vmem:[#allocation9 + $0xef8] sm:$0xff]
      %v4081 = vld [vmem:[#allocation9 + $0xf00] sm:$0xff]
      %v4082 = vld [vmem:[#allocation9 + $0xf08] sm:$0xff]
      %v4083 = vld [vmem:[#allocation9 + $0xf10] sm:$0xff]
      %v4084 = vld [vmem:[#allocation9 + $0xf18] sm:$0xff]
      %v4085 = vld [vmem:[#allocation9 + $0xf20] sm:$0xff]
      %v4086 = vld [vmem:[#allocation9 + $0xf28] sm:$0xff]
      %v4087 = vld [vmem:[#allocation9 + $0xf30] sm:$0xff]
      %v4088 = vld [vmem:[#allocation9 + $0xf38] sm:$0xff]
      %v4089 = vld [vmem:[#allocation9 + $0xf40] sm:$0xff]
      %v4090 = vld [vmem:[#allocation9 + $0xf48] sm:$0xff]
      %v4091 = vld [vmem:[#allocation9 + $0xf50] sm:$0xff]
      %v4092 = vld [vmem:[#allocation9 + $0xf58] sm:$0xff]
      %v4093 = vld [vmem:[#allocation9 + $0xf60] sm:$0xff]
      %v4094 = vld [vmem:[#allocation9 + $0xf68] sm:$0xff]
      %v4095 = vld [vmem:[#allocation9 + $0xf70] sm:$0xff]
      %v4096 = vld [vmem:[#allocation9 + $0xf78] sm:$0xff]
      %v4097 = vld [vmem:[#allocation9 + $0xf80] sm:$0xff]
      %v4098 = vld [vmem:[#allocation9 + $0xf88] sm:$0xff]
      %v4099 = vld [vmem:[#allocation9 + $0xf90] sm:$0xff]
      %v4100 = vld [vmem:[#allocation9 + $0xf98] sm:$0xff]
      %v4101 = vld [vmem:[#allocation9 + $0xfa0] sm:$0xff]
      %v4102 = vld [vmem:[#allocation9 + $0xfa8] sm:$0xff]
      %v4103 = vld [vmem:[#allocation9 + $0xfb0] sm:$0xff]
      %v4104 = vld [vmem:[#allocation9 + $0xfb8] sm:$0xff]
      %v4105 = vld [vmem:[#allocation9 + $0xfc0] sm:$0xff]
      %v4106 = vld [vmem:[#allocation9 + $0xfc8] sm:$0xff]
      %v4107 = vld [vmem:[#allocation9 + $0xfd0] sm:$0xff]
      %v4108 = vld [vmem:[#allocation9 + $0xfd8] sm:$0xff]
      %v4109 = vld [vmem:[#allocation9 + $0xfe0] sm:$0xff]
      %v4110 = vld [vmem:[#allocation9 + $0xfe8] sm:$0xff]
      %v4111 = vld [vmem:[#allocation9 + $0xff0] sm:$0xff]
      %v4112 = vld [vmem:[#allocation9 + $0xff8] sm:$0xff]
      %v4113 = vld [vmem:[#allocation11] sm:$0xff]
      %v4115 = vlaneseq
      %v4116 = vshrl.u32 %v4115, 7
      %v4117 = vsub.s32 0, %v4116
      %v4118 = vrot.slane %v4113, %v4117
      %v4119 = vlaneseq
      %v4120 = vshrl.u32 %v4119, 7
      %v4121 = vsub.s32 1, %v4120
      %v4122 = vrot.slane %v4113, %v4121
      %v4123 = vlaneseq
      %v4124 = vshrl.u32 %v4123, 7
      %v4125 = vsub.s32 2, %v4124
      %v4126 = vrot.slane %v4113, %v4125
      %v4127 = vlaneseq
      %v4128 = vshrl.u32 %v4127, 7
      %v4129 = vsub.s32 3, %v4128
      %v4130 = vrot.slane %v4113, %v4129
      %v4131 = vlaneseq
      %v4132 = vshrl.u32 %v4131, 7
      %v4133 = vsub.s32 4, %v4132
      %v4134 = vrot.slane %v4113, %v4133
      %v4135 = vlaneseq
      %v4136 = vshrl.u32 %v4135, 7
      %v4137 = vsub.s32 5, %v4136
      %v4138 = vrot.slane %v4113, %v4137
      %v4139 = vlaneseq
      %v4140 = vshrl.u32 %v4139, 7
      %v4141 = vsub.s32 6, %v4140
      %v4142 = vrot.slane %v4113, %v4141
      %v4143 = vlaneseq
      %v4144 = vshrl.u32 %v4143, 7
      %v4145 = vsub.s32 7, %v4144
      %v4146 = vrot.slane %v4113, %v4145
      %v4667 = vunpack.c.l.b16 %v3601
      %v4668 = vunpack.c.h.b16 %v3601
      %v4669 = vunpack.c.l.b16 %v3602
      %v4670 = vunpack.c.h.b16 %v3602
      %v4671 = vunpack.c.l.b16 %v3603
      %v4672 = vunpack.c.h.b16 %v3603
      %v4673 = vunpack.c.l.b16 %v3604
      %v4674 = vunpack.c.h.b16 %v3604
      %v4675 = vunpack.c.l.b16 %v3605
      %v4676 = vunpack.c.h.b16 %v3605
      %v4677 = vunpack.c.l.b16 %v3606
      %v4678 = vunpack.c.h.b16 %v3606
      %v4679 = vunpack.c.l.b16 %v3607
      %v4680 = vunpack.c.h.b16 %v3607
      %v4681 = vunpack.c.l.b16 %v3608
      %v4682 = vunpack.c.h.b16 %v3608
      %v4683 = vunpack.c.l.b16 %v3609
      %v4684 = vunpack.c.h.b16 %v3609
      %v4685 = vunpack.c.l.b16 %v3610
      %v4686 = vunpack.c.h.b16 %v3610
      %v4687 = vunpack.c.l.b16 %v3611
      %v4688 = vunpack.c.h.b16 %v3611
      %v4689 = vunpack.c.l.b16 %v3612
      %v4690 = vunpack.c.h.b16 %v3612
      %v4691 = vunpack.c.l.b16 %v3613
      %v4692 = vunpack.c.h.b16 %v3613
      %v4693 = vunpack.c.l.b16 %v3614
      %v4694 = vunpack.c.h.b16 %v3614
      %v4695 = vunpack.c.l.b16 %v3615
      %v4696 = vunpack.c.h.b16 %v3615
      %v4697 = vunpack.c.l.b16 %v3616
      %v4698 = vunpack.c.h.b16 %v3616
      %v4699 = vunpack.c.l.b16 %v3617
      %v4700 = vunpack.c.h.b16 %v3617
      %v4701 = vunpack.c.l.b16 %v3618
      %v4702 = vunpack.c.h.b16 %v3618
      %v4703 = vunpack.c.l.b16 %v3619
      %v4704 = vunpack.c.h.b16 %v3619
      %v4705 = vunpack.c.l.b16 %v3620
      %v4706 = vunpack.c.h.b16 %v3620
      %v4707 = vunpack.c.l.b16 %v3621
      %v4708 = vunpack.c.h.b16 %v3621
      %v4709 = vunpack.c.l.b16 %v3622
      %v4710 = vunpack.c.h.b16 %v3622
      %v4711 = vunpack.c.l.b16 %v3623
      %v4712 = vunpack.c.h.b16 %v3623
      %v4713 = vunpack.c.l.b16 %v3624
      %v4714 = vunpack.c.h.b16 %v3624
      %v4715 = vunpack.c.l.b16 %v3625
      %v4716 = vunpack.c.h.b16 %v3625
      %v4717 = vunpack.c.l.b16 %v3626
      %v4718 = vunpack.c.h.b16 %v3626
      %v4719 = vunpack.c.l.b16 %v3627
      %v4720 = vunpack.c.h.b16 %v3627
      %v4721 = vunpack.c.l.b16 %v3628
      %v4722 = vunpack.c.h.b16 %v3628
      %v4723 = vunpack.c.l.b16 %v3629
      %v4724 = vunpack.c.h.b16 %v3629
      %v4725 = vunpack.c.l.b16 %v3630
      %v4726 = vunpack.c.h.b16 %v3630
      %v4727 = vunpack.c.l.b16 %v3631
      %v4728 = vunpack.c.h.b16 %v3631
      %v4729 = vunpack.c.l.b16 %v3632
      %v4730 = vunpack.c.h.b16 %v3632
      %v4731 = vunpack.c.l.b16 %v3633
      %v4732 = vunpack.c.h.b16 %v3633
      %v4733 = vunpack.c.l.b16 %v3634
      %v4734 = vunpack.c.h.b16 %v3634
      %v4735 = vunpack.c.l.b16 %v3635
      %v4736 = vunpack.c.h.b16 %v3635
      %v4737 = vunpack.c.l.b16 %v3636
      %v4738 = vunpack.c.h.b16 %v3636
      %v4739 = vunpack.c.l.b16 %v3637
      %v4740 = vunpack.c.h.b16 %v3637
      %v4741 = vunpack.c.l.b16 %v3638
      %v4742 = vunpack.c.h.b16 %v3638
      %v4743 = vunpack.c.l.b16 %v3639
      %v4744 = vunpack.c.h.b16 %v3639
      %v4745 = vunpack.c.l.b16 %v3640
      %v4746 = vunpack.c.h.b16 %v3640
      %v4747 = vunpack.c.l.b16 %v3641
      %v4748 = vunpack.c.h.b16 %v3641
      %v4749 = vunpack.c.l.b16 %v3642
      %v4750 = vunpack.c.h.b16 %v3642
      %v4751 = vunpack.c.l.b16 %v3643
      %v4752 = vunpack.c.h.b16 %v3643
      %v4753 = vunpack.c.l.b16 %v3644
      %v4754 = vunpack.c.h.b16 %v3644
      %v4755 = vunpack.c.l.b16 %v3645
      %v4756 = vunpack.c.h.b16 %v3645
      %v4757 = vunpack.c.l.b16 %v3646
      %v4758 = vunpack.c.h.b16 %v3646
      %v4759 = vunpack.c.l.b16 %v3647
      %v4760 = vunpack.c.h.b16 %v3647
      %v4761 = vunpack.c.l.b16 %v3648
      %v4762 = vunpack.c.h.b16 %v3648
      %v4763 = vunpack.c.l.b16 %v3649
      %v4764 = vunpack.c.h.b16 %v3649
      %v4765 = vunpack.c.l.b16 %v3650
      %v4766 = vunpack.c.h.b16 %v3650
      %v4767 = vunpack.c.l.b16 %v3651
      %v4768 = vunpack.c.h.b16 %v3651
      %v4769 = vunpack.c.l.b16 %v3652
      %v4770 = vunpack.c.h.b16 %v3652
      %v4771 = vunpack.c.l.b16 %v3653
      %v4772 = vunpack.c.h.b16 %v3653
      %v4773 = vunpack.c.l.b16 %v3654
      %v4774 = vunpack.c.h.b16 %v3654
      %v4775 = vunpack.c.l.b16 %v3655
      %v4776 = vunpack.c.h.b16 %v3655
      %v4777 = vunpack.c.l.b16 %v3656
      %v4778 = vunpack.c.h.b16 %v3656
      %v4779 = vunpack.c.l.b16 %v3657
      %v4780 = vunpack.c.h.b16 %v3657
      %v4781 = vunpack.c.l.b16 %v3658
      %v4782 = vunpack.c.h.b16 %v3658
      %v4783 = vunpack.c.l.b16 %v3659
      %v4784 = vunpack.c.h.b16 %v3659
      %v4785 = vunpack.c.l.b16 %v3660
      %v4786 = vunpack.c.h.b16 %v3660
      %v4787 = vunpack.c.l.b16 %v3661
      %v4788 = vunpack.c.h.b16 %v3661
      %v4789 = vunpack.c.l.b16 %v3662
      %v4790 = vunpack.c.h.b16 %v3662
      %v4791 = vunpack.c.l.b16 %v3663
      %v4792 = vunpack.c.h.b16 %v3663
      %v4793 = vunpack.c.l.b16 %v3664
      %v4794 = vunpack.c.h.b16 %v3664
      %v4795 = vunpack.c.l.b16 %v3665
      %v4796 = vunpack.c.h.b16 %v3665
      %v4797 = vunpack.c.l.b16 %v3666
      %v4798 = vunpack.c.h.b16 %v3666
      %v4799 = vunpack.c.l.b16 %v3667
      %v4800 = vunpack.c.h.b16 %v3667
      %v4801 = vunpack.c.l.b16 %v3668
      %v4802 = vunpack.c.h.b16 %v3668
      %v4803 = vunpack.c.l.b16 %v3669
      %v4804 = vunpack.c.h.b16 %v3669
      %v4805 = vunpack.c.l.b16 %v3670
      %v4806 = vunpack.c.h.b16 %v3670
      %v4807 = vunpack.c.l.b16 %v3671
      %v4808 = vunpack.c.h.b16 %v3671
      %v4809 = vunpack.c.l.b16 %v3672
      %v4810 = vunpack.c.h.b16 %v3672
      %v4811 = vunpack.c.l.b16 %v3673
      %v4812 = vunpack.c.h.b16 %v3673
      %v4813 = vunpack.c.l.b16 %v3674
      %v4814 = vunpack.c.h.b16 %v3674
      %v4815 = vunpack.c.l.b16 %v3675
      %v4816 = vunpack.c.h.b16 %v3675
      %v4817 = vunpack.c.l.b16 %v3676
      %v4818 = vunpack.c.h.b16 %v3676
      %v4819 = vunpack.c.l.b16 %v3677
      %v4820 = vunpack.c.h.b16 %v3677
      %v4821 = vunpack.c.l.b16 %v3678
      %v4822 = vunpack.c.h.b16 %v3678
      %v4823 = vunpack.c.l.b16 %v3679
      %v4824 = vunpack.c.h.b16 %v3679
      %v4825 = vunpack.c.l.b16 %v3680
      %v4826 = vunpack.c.h.b16 %v3680
      %v4827 = vunpack.c.l.b16 %v3681
      %v4828 = vunpack.c.h.b16 %v3681
      %v4829 = vunpack.c.l.b16 %v3682
      %v4830 = vunpack.c.h.b16 %v3682
      %v4831 = vunpack.c.l.b16 %v3683
      %v4832 = vunpack.c.h.b16 %v3683
      %v4833 = vunpack.c.l.b16 %v3684
      %v4834 = vunpack.c.h.b16 %v3684
      %v4835 = vunpack.c.l.b16 %v3685
      %v4836 = vunpack.c.h.b16 %v3685
      %v4837 = vunpack.c.l.b16 %v3686
      %v4838 = vunpack.c.h.b16 %v3686
      %v4839 = vunpack.c.l.b16 %v3687
      %v4840 = vunpack.c.h.b16 %v3687
      %v4841 = vunpack.c.l.b16 %v3688
      %v4842 = vunpack.c.h.b16 %v3688
      %v4843 = vunpack.c.l.b16 %v3689
      %v4844 = vunpack.c.h.b16 %v3689
      %v4845 = vunpack.c.l.b16 %v3690
      %v4846 = vunpack.c.h.b16 %v3690
      %v4847 = vunpack.c.l.b16 %v3691
      %v4848 = vunpack.c.h.b16 %v3691
      %v4849 = vunpack.c.l.b16 %v3692
      %v4850 = vunpack.c.h.b16 %v3692
      %v4851 = vunpack.c.l.b16 %v3693
      %v4852 = vunpack.c.h.b16 %v3693
      %v4853 = vunpack.c.l.b16 %v3694
      %v4854 = vunpack.c.h.b16 %v3694
      %v4855 = vunpack.c.l.b16 %v3695
      %v4856 = vunpack.c.h.b16 %v3695
      %v4857 = vunpack.c.l.b16 %v3696
      %v4858 = vunpack.c.h.b16 %v3696
      %v4859 = vunpack.c.l.b16 %v3697
      %v4860 = vunpack.c.h.b16 %v3697
      %v4861 = vunpack.c.l.b16 %v3698
      %v4862 = vunpack.c.h.b16 %v3698
      %v4863 = vunpack.c.l.b16 %v3699
      %v4864 = vunpack.c.h.b16 %v3699
      %v4865 = vunpack.c.l.b16 %v3700
      %v4866 = vunpack.c.h.b16 %v3700
      %v4867 = vunpack.c.l.b16 %v3701
      %v4868 = vunpack.c.h.b16 %v3701
      %v4869 = vunpack.c.l.b16 %v3702
      %v4870 = vunpack.c.h.b16 %v3702
      %v4871 = vunpack.c.l.b16 %v3703
      %v4872 = vunpack.c.h.b16 %v3703
      %v4873 = vunpack.c.l.b16 %v3704
      %v4874 = vunpack.c.h.b16 %v3704
      %v4875 = vunpack.c.l.b16 %v3705
      %v4876 = vunpack.c.h.b16 %v3705
      %v4877 = vunpack.c.l.b16 %v3706
      %v4878 = vunpack.c.h.b16 %v3706
      %v4879 = vunpack.c.l.b16 %v3707
      %v4880 = vunpack.c.h.b16 %v3707
      %v4881 = vunpack.c.l.b16 %v3708
      %v4882 = vunpack.c.h.b16 %v3708
      %v4883 = vunpack.c.l.b16 %v3709
      %v4884 = vunpack.c.h.b16 %v3709
      %v4885 = vunpack.c.l.b16 %v3710
      %v4886 = vunpack.c.h.b16 %v3710
      %v4887 = vunpack.c.l.b16 %v3711
      %v4888 = vunpack.c.h.b16 %v3711
      %v4889 = vunpack.c.l.b16 %v3712
      %v4890 = vunpack.c.h.b16 %v3712
      %v4891 = vunpack.c.l.b16 %v3713
      %v4892 = vunpack.c.h.b16 %v3713
      %v4893 = vunpack.c.l.b16 %v3714
      %v4894 = vunpack.c.h.b16 %v3714
      %v4895 = vunpack.c.l.b16 %v3715
      %v4896 = vunpack.c.h.b16 %v3715
      %v4897 = vunpack.c.l.b16 %v3716
      %v4898 = vunpack.c.h.b16 %v3716
      %v4899 = vunpack.c.l.b16 %v3717
      %v4900 = vunpack.c.h.b16 %v3717
      %v4901 = vunpack.c.l.b16 %v3718
      %v4902 = vunpack.c.h.b16 %v3718
      %v4903 = vunpack.c.l.b16 %v3719
      %v4904 = vunpack.c.h.b16 %v3719
      %v4905 = vunpack.c.l.b16 %v3720
      %v4906 = vunpack.c.h.b16 %v3720
      %v4907 = vunpack.c.l.b16 %v3721
      %v4908 = vunpack.c.h.b16 %v3721
      %v4909 = vunpack.c.l.b16 %v3722
      %v4910 = vunpack.c.h.b16 %v3722
      %v4911 = vunpack.c.l.b16 %v3723
      %v4912 = vunpack.c.h.b16 %v3723
      %v4913 = vunpack.c.l.b16 %v3724
      %v4914 = vunpack.c.h.b16 %v3724
      %v4915 = vunpack.c.l.b16 %v3725
      %v4916 = vunpack.c.h.b16 %v3725
      %v4917 = vunpack.c.l.b16 %v3726
      %v4918 = vunpack.c.h.b16 %v3726
      %v4919 = vunpack.c.l.b16 %v3727
      %v4920 = vunpack.c.h.b16 %v3727
      %v4921 = vunpack.c.l.b16 %v3728
      %v4922 = vunpack.c.h.b16 %v3728
      %v4923 = vunpack.c.l.b16 %v3729
      %v4924 = vunpack.c.h.b16 %v3729
      %v4925 = vunpack.c.l.b16 %v3730
      %v4926 = vunpack.c.h.b16 %v3730
      %v4927 = vunpack.c.l.b16 %v3731
      %v4928 = vunpack.c.h.b16 %v3731
      %v4929 = vunpack.c.l.b16 %v3732
      %v4930 = vunpack.c.h.b16 %v3732
      %v4931 = vunpack.c.l.b16 %v3733
      %v4932 = vunpack.c.h.b16 %v3733
      %v4933 = vunpack.c.l.b16 %v3734
      %v4934 = vunpack.c.h.b16 %v3734
      %v4935 = vunpack.c.l.b16 %v3735
      %v4936 = vunpack.c.h.b16 %v3735
      %v4937 = vunpack.c.l.b16 %v3736
      %v4938 = vunpack.c.h.b16 %v3736
      %v4939 = vunpack.c.l.b16 %v3737
      %v4940 = vunpack.c.h.b16 %v3737
      %v4941 = vunpack.c.l.b16 %v3738
      %v4942 = vunpack.c.h.b16 %v3738
      %v4943 = vunpack.c.l.b16 %v3739
      %v4944 = vunpack.c.h.b16 %v3739
      %v4945 = vunpack.c.l.b16 %v3740
      %v4946 = vunpack.c.h.b16 %v3740
      %v4947 = vunpack.c.l.b16 %v3741
      %v4948 = vunpack.c.h.b16 %v3741
      %v4949 = vunpack.c.l.b16 %v3742
      %v4950 = vunpack.c.h.b16 %v3742
      %v4951 = vunpack.c.l.b16 %v3743
      %v4952 = vunpack.c.h.b16 %v3743
      %v4953 = vunpack.c.l.b16 %v3744
      %v4954 = vunpack.c.h.b16 %v3744
      %v4955 = vunpack.c.l.b16 %v3745
      %v4956 = vunpack.c.h.b16 %v3745
      %v4957 = vunpack.c.l.b16 %v3746
      %v4958 = vunpack.c.h.b16 %v3746
      %v4959 = vunpack.c.l.b16 %v3747
      %v4960 = vunpack.c.h.b16 %v3747
      %v4961 = vunpack.c.l.b16 %v3748
      %v4962 = vunpack.c.h.b16 %v3748
      %v4963 = vunpack.c.l.b16 %v3749
      %v4964 = vunpack.c.h.b16 %v3749
      %v4965 = vunpack.c.l.b16 %v3750
      %v4966 = vunpack.c.h.b16 %v3750
      %v4967 = vunpack.c.l.b16 %v3751
      %v4968 = vunpack.c.h.b16 %v3751
      %v4969 = vunpack.c.l.b16 %v3752
      %v4970 = vunpack.c.h.b16 %v3752
      %v4971 = vunpack.c.l.b16 %v3753
      %v4972 = vunpack.c.h.b16 %v3753
      %v4973 = vunpack.c.l.b16 %v3754
      %v4974 = vunpack.c.h.b16 %v3754
      %v4975 = vunpack.c.l.b16 %v3755
      %v4976 = vunpack.c.h.b16 %v3755
      %v4977 = vunpack.c.l.b16 %v3756
      %v4978 = vunpack.c.h.b16 %v3756
      %v4979 = vunpack.c.l.b16 %v3757
      %v4980 = vunpack.c.h.b16 %v3757
      %v4981 = vunpack.c.l.b16 %v3758
      %v4982 = vunpack.c.h.b16 %v3758
      %v4983 = vunpack.c.l.b16 %v3759
      %v4984 = vunpack.c.h.b16 %v3759
      %v4985 = vunpack.c.l.b16 %v3760
      %v4986 = vunpack.c.h.b16 %v3760
      %v4987 = vunpack.c.l.b16 %v3761
      %v4988 = vunpack.c.h.b16 %v3761
      %v4989 = vunpack.c.l.b16 %v3762
      %v4990 = vunpack.c.h.b16 %v3762
      %v4991 = vunpack.c.l.b16 %v3763
      %v4992 = vunpack.c.h.b16 %v3763
      %v4993 = vunpack.c.l.b16 %v3764
      %v4994 = vunpack.c.h.b16 %v3764
      %v4995 = vunpack.c.l.b16 %v3765
      %v4996 = vunpack.c.h.b16 %v3765
      %v4997 = vunpack.c.l.b16 %v3766
      %v4998 = vunpack.c.h.b16 %v3766
      %v4999 = vunpack.c.l.b16 %v3767
      %v5000 = vunpack.c.h.b16 %v3767
      %v5001 = vunpack.c.l.b16 %v3768
      %v5002 = vunpack.c.h.b16 %v3768
      %v5003 = vunpack.c.l.b16 %v3769
      %v5004 = vunpack.c.h.b16 %v3769
      %v5005 = vunpack.c.l.b16 %v3770
      %v5006 = vunpack.c.h.b16 %v3770
      %v5007 = vunpack.c.l.b16 %v3771
      %v5008 = vunpack.c.h.b16 %v3771
      %v5009 = vunpack.c.l.b16 %v3772
      %v5010 = vunpack.c.h.b16 %v3772
      %v5011 = vunpack.c.l.b16 %v3773
      %v5012 = vunpack.c.h.b16 %v3773
      %v5013 = vunpack.c.l.b16 %v3774
      %v5014 = vunpack.c.h.b16 %v3774
      %v5015 = vunpack.c.l.b16 %v3775
      %v5016 = vunpack.c.h.b16 %v3775
      %v5017 = vunpack.c.l.b16 %v3776
      %v5018 = vunpack.c.h.b16 %v3776
      %v5019 = vunpack.c.l.b16 %v3777
      %v5020 = vunpack.c.h.b16 %v3777
      %v5021 = vunpack.c.l.b16 %v3778
      %v5022 = vunpack.c.h.b16 %v3778
      %v5023 = vunpack.c.l.b16 %v3779
      %v5024 = vunpack.c.h.b16 %v3779
      %v5025 = vunpack.c.l.b16 %v3780
      %v5026 = vunpack.c.h.b16 %v3780
      %v5027 = vunpack.c.l.b16 %v3781
      %v5028 = vunpack.c.h.b16 %v3781
      %v5029 = vunpack.c.l.b16 %v3782
      %v5030 = vunpack.c.h.b16 %v3782
      %v5031 = vunpack.c.l.b16 %v3783
      %v5032 = vunpack.c.h.b16 %v3783
      %v5033 = vunpack.c.l.b16 %v3784
      %v5034 = vunpack.c.h.b16 %v3784
      %v5035 = vunpack.c.l.b16 %v3785
      %v5036 = vunpack.c.h.b16 %v3785
      %v5037 = vunpack.c.l.b16 %v3786
      %v5038 = vunpack.c.h.b16 %v3786
      %v5039 = vunpack.c.l.b16 %v3787
      %v5040 = vunpack.c.h.b16 %v3787
      %v5041 = vunpack.c.l.b16 %v3788
      %v5042 = vunpack.c.h.b16 %v3788
      %v5043 = vunpack.c.l.b16 %v3789
      %v5044 = vunpack.c.h.b16 %v3789
      %v5045 = vunpack.c.l.b16 %v3790
      %v5046 = vunpack.c.h.b16 %v3790
      %v5047 = vunpack.c.l.b16 %v3791
      %v5048 = vunpack.c.h.b16 %v3791
      %v5049 = vunpack.c.l.b16 %v3792
      %v5050 = vunpack.c.h.b16 %v3792
      %v5051 = vunpack.c.l.b16 %v3793
      %v5052 = vunpack.c.h.b16 %v3793
      %v5053 = vunpack.c.l.b16 %v3794
      %v5054 = vunpack.c.h.b16 %v3794
      %v5055 = vunpack.c.l.b16 %v3795
      %v5056 = vunpack.c.h.b16 %v3795
      %v5057 = vunpack.c.l.b16 %v3796
      %v5058 = vunpack.c.h.b16 %v3796
      %v5059 = vunpack.c.l.b16 %v3797
      %v5060 = vunpack.c.h.b16 %v3797
      %v5061 = vunpack.c.l.b16 %v3798
      %v5062 = vunpack.c.h.b16 %v3798
      %v5063 = vunpack.c.l.b16 %v3799
      %v5064 = vunpack.c.h.b16 %v3799
      %v5065 = vunpack.c.l.b16 %v3800
      %v5066 = vunpack.c.h.b16 %v3800
      %v5067 = vunpack.c.l.b16 %v3801
      %v5068 = vunpack.c.h.b16 %v3801
      %v5069 = vunpack.c.l.b16 %v3802
      %v5070 = vunpack.c.h.b16 %v3802
      %v5071 = vunpack.c.l.b16 %v3803
      %v5072 = vunpack.c.h.b16 %v3803
      %v5073 = vunpack.c.l.b16 %v3804
      %v5074 = vunpack.c.h.b16 %v3804
      %v5075 = vunpack.c.l.b16 %v3805
      %v5076 = vunpack.c.h.b16 %v3805
      %v5077 = vunpack.c.l.b16 %v3806
      %v5078 = vunpack.c.h.b16 %v3806
      %v5079 = vunpack.c.l.b16 %v3807
      %v5080 = vunpack.c.h.b16 %v3807
      %v5081 = vunpack.c.l.b16 %v3808
      %v5082 = vunpack.c.h.b16 %v3808
      %v5083 = vunpack.c.l.b16 %v3809
      %v5084 = vunpack.c.h.b16 %v3809
      %v5085 = vunpack.c.l.b16 %v3810
      %v5086 = vunpack.c.h.b16 %v3810
      %v5087 = vunpack.c.l.b16 %v3811
      %v5088 = vunpack.c.h.b16 %v3811
      %v5089 = vunpack.c.l.b16 %v3812
      %v5090 = vunpack.c.h.b16 %v3812
      %v5091 = vunpack.c.l.b16 %v3813
      %v5092 = vunpack.c.h.b16 %v3813
      %v5093 = vunpack.c.l.b16 %v3814
      %v5094 = vunpack.c.h.b16 %v3814
      %v5095 = vunpack.c.l.b16 %v3815
      %v5096 = vunpack.c.h.b16 %v3815
      %v5097 = vunpack.c.l.b16 %v3816
      %v5098 = vunpack.c.h.b16 %v3816
      %v5099 = vunpack.c.l.b16 %v3817
      %v5100 = vunpack.c.h.b16 %v3817
      %v5101 = vunpack.c.l.b16 %v3818
      %v5102 = vunpack.c.h.b16 %v3818
      %v5103 = vunpack.c.l.b16 %v3819
      %v5104 = vunpack.c.h.b16 %v3819
      %v5105 = vunpack.c.l.b16 %v3820
      %v5106 = vunpack.c.h.b16 %v3820
      %v5107 = vunpack.c.l.b16 %v3821
      %v5108 = vunpack.c.h.b16 %v3821
      %v5109 = vunpack.c.l.b16 %v3822
      %v5110 = vunpack.c.h.b16 %v3822
      %v5111 = vunpack.c.l.b16 %v3823
      %v5112 = vunpack.c.h.b16 %v3823
      %v5113 = vunpack.c.l.b16 %v3824
      %v5114 = vunpack.c.h.b16 %v3824
      %v5115 = vunpack.c.l.b16 %v3825
      %v5116 = vunpack.c.h.b16 %v3825
      %v5117 = vunpack.c.l.b16 %v3826
      %v5118 = vunpack.c.h.b16 %v3826
      %v5119 = vunpack.c.l.b16 %v3827
      %v5120 = vunpack.c.h.b16 %v3827
      %v5121 = vunpack.c.l.b16 %v3828
      %v5122 = vunpack.c.h.b16 %v3828
      %v5123 = vunpack.c.l.b16 %v3829
      %v5124 = vunpack.c.h.b16 %v3829
      %v5125 = vunpack.c.l.b16 %v3830
      %v5126 = vunpack.c.h.b16 %v3830
      %v5127 = vunpack.c.l.b16 %v3831
      %v5128 = vunpack.c.h.b16 %v3831
      %v5129 = vunpack.c.l.b16 %v3832
      %v5130 = vunpack.c.h.b16 %v3832
      %v5131 = vunpack.c.l.b16 %v3833
      %v5132 = vunpack.c.h.b16 %v3833
      %v5133 = vunpack.c.l.b16 %v3834
      %v5134 = vunpack.c.h.b16 %v3834
      %v5135 = vunpack.c.l.b16 %v3835
      %v5136 = vunpack.c.h.b16 %v3835
      %v5137 = vunpack.c.l.b16 %v3836
      %v5138 = vunpack.c.h.b16 %v3836
      %v5139 = vunpack.c.l.b16 %v3837
      %v5140 = vunpack.c.h.b16 %v3837
      %v5141 = vunpack.c.l.b16 %v3838
      %v5142 = vunpack.c.h.b16 %v3838
      %v5143 = vunpack.c.l.b16 %v3839
      %v5144 = vunpack.c.h.b16 %v3839
      %v5145 = vunpack.c.l.b16 %v3840
      %v5146 = vunpack.c.h.b16 %v3840
      %v5147 = vunpack.c.l.b16 %v3841
      %v5148 = vunpack.c.h.b16 %v3841
      %v5149 = vunpack.c.l.b16 %v3842
      %v5150 = vunpack.c.h.b16 %v3842
      %v5151 = vunpack.c.l.b16 %v3843
      %v5152 = vunpack.c.h.b16 %v3843
      %v5153 = vunpack.c.l.b16 %v3844
      %v5154 = vunpack.c.h.b16 %v3844
      %v5155 = vunpack.c.l.b16 %v3845
      %v5156 = vunpack.c.h.b16 %v3845
      %v5157 = vunpack.c.l.b16 %v3846
      %v5158 = vunpack.c.h.b16 %v3846
      %v5159 = vunpack.c.l.b16 %v3847
      %v5160 = vunpack.c.h.b16 %v3847
      %v5161 = vunpack.c.l.b16 %v3848
      %v5162 = vunpack.c.h.b16 %v3848
      %v5163 = vunpack.c.l.b16 %v3849
      %v5164 = vunpack.c.h.b16 %v3849
      %v5165 = vunpack.c.l.b16 %v3850
      %v5166 = vunpack.c.h.b16 %v3850
      %v5167 = vunpack.c.l.b16 %v3851
      %v5168 = vunpack.c.h.b16 %v3851
      %v5169 = vunpack.c.l.b16 %v3852
      %v5170 = vunpack.c.h.b16 %v3852
      %v5171 = vunpack.c.l.b16 %v3853
      %v5172 = vunpack.c.h.b16 %v3853
      %v5173 = vunpack.c.l.b16 %v3854
      %v5174 = vunpack.c.h.b16 %v3854
      %v5175 = vunpack.c.l.b16 %v3855
      %v5176 = vunpack.c.h.b16 %v3855
      %v5177 = vunpack.c.l.b16 %v3856
      %v5178 = vunpack.c.h.b16 %v3856
      %v5179 = vunpack.c.l.b16 %v3857
      %v5180 = vunpack.c.h.b16 %v3857
      %v5181 = vunpack.c.l.b16 %v3858
      %v5182 = vunpack.c.h.b16 %v3858
      %v5183 = vunpack.c.l.b16 %v3859
      %v5184 = vunpack.c.h.b16 %v3859
      %v5185 = vunpack.c.l.b16 %v3860
      %v5186 = vunpack.c.h.b16 %v3860
      %v5187 = vunpack.c.l.b16 %v3861
      %v5188 = vunpack.c.h.b16 %v3861
      %v5189 = vunpack.c.l.b16 %v3862
      %v5190 = vunpack.c.h.b16 %v3862
      %v5191 = vunpack.c.l.b16 %v3863
      %v5192 = vunpack.c.h.b16 %v3863
      %v5193 = vunpack.c.l.b16 %v3864
      %v5194 = vunpack.c.h.b16 %v3864
      %v5195 = vunpack.c.l.b16 %v3865
      %v5196 = vunpack.c.h.b16 %v3865
      %v5197 = vunpack.c.l.b16 %v3866
      %v5198 = vunpack.c.h.b16 %v3866
      %v5199 = vunpack.c.l.b16 %v3867
      %v5200 = vunpack.c.h.b16 %v3867
      %v5201 = vunpack.c.l.b16 %v3868
      %v5202 = vunpack.c.h.b16 %v3868
      %v5203 = vunpack.c.l.b16 %v3869
      %v5204 = vunpack.c.h.b16 %v3869
      %v5205 = vunpack.c.l.b16 %v3870
      %v5206 = vunpack.c.h.b16 %v3870
      %v5207 = vunpack.c.l.b16 %v3871
      %v5208 = vunpack.c.h.b16 %v3871
      %v5209 = vunpack.c.l.b16 %v3872
      %v5210 = vunpack.c.h.b16 %v3872
      %v5211 = vunpack.c.l.b16 %v3873
      %v5212 = vunpack.c.h.b16 %v3873
      %v5213 = vunpack.c.l.b16 %v3874
      %v5214 = vunpack.c.h.b16 %v3874
      %v5215 = vunpack.c.l.b16 %v3875
      %v5216 = vunpack.c.h.b16 %v3875
      %v5217 = vunpack.c.l.b16 %v3876
      %v5218 = vunpack.c.h.b16 %v3876
      %v5219 = vunpack.c.l.b16 %v3877
      %v5220 = vunpack.c.h.b16 %v3877
      %v5221 = vunpack.c.l.b16 %v3878
      %v5222 = vunpack.c.h.b16 %v3878
      %v5223 = vunpack.c.l.b16 %v3879
      %v5224 = vunpack.c.h.b16 %v3879
      %v5225 = vunpack.c.l.b16 %v3880
      %v5226 = vunpack.c.h.b16 %v3880
      %v5227 = vunpack.c.l.b16 %v3881
      %v5228 = vunpack.c.h.b16 %v3881
      %v5229 = vunpack.c.l.b16 %v3882
      %v5230 = vunpack.c.h.b16 %v3882
      %v5231 = vunpack.c.l.b16 %v3883
      %v5232 = vunpack.c.h.b16 %v3883
      %v5233 = vunpack.c.l.b16 %v3884
      %v5234 = vunpack.c.h.b16 %v3884
      %v5235 = vunpack.c.l.b16 %v3885
      %v5236 = vunpack.c.h.b16 %v3885
      %v5237 = vunpack.c.l.b16 %v3886
      %v5238 = vunpack.c.h.b16 %v3886
      %v5239 = vunpack.c.l.b16 %v3887
      %v5240 = vunpack.c.h.b16 %v3887
      %v5241 = vunpack.c.l.b16 %v3888
      %v5242 = vunpack.c.h.b16 %v3888
      %v5243 = vunpack.c.l.b16 %v3889
      %v5244 = vunpack.c.h.b16 %v3889
      %v5245 = vunpack.c.l.b16 %v3890
      %v5246 = vunpack.c.h.b16 %v3890
      %v5247 = vunpack.c.l.b16 %v3891
      %v5248 = vunpack.c.h.b16 %v3891
      %v5249 = vunpack.c.l.b16 %v3892
      %v5250 = vunpack.c.h.b16 %v3892
      %v5251 = vunpack.c.l.b16 %v3893
      %v5252 = vunpack.c.h.b16 %v3893
      %v5253 = vunpack.c.l.b16 %v3894
      %v5254 = vunpack.c.h.b16 %v3894
      %v5255 = vunpack.c.l.b16 %v3895
      %v5256 = vunpack.c.h.b16 %v3895
      %v5257 = vunpack.c.l.b16 %v3896
      %v5258 = vunpack.c.h.b16 %v3896
      %v5259 = vunpack.c.l.b16 %v3897
      %v5260 = vunpack.c.h.b16 %v3897
      %v5261 = vunpack.c.l.b16 %v3898
      %v5262 = vunpack.c.h.b16 %v3898
      %v5263 = vunpack.c.l.b16 %v3899
      %v5264 = vunpack.c.h.b16 %v3899
      %v5265 = vunpack.c.l.b16 %v3900
      %v5266 = vunpack.c.h.b16 %v3900
      %v5267 = vunpack.c.l.b16 %v3901
      %v5268 = vunpack.c.h.b16 %v3901
      %v5269 = vunpack.c.l.b16 %v3902
      %v5270 = vunpack.c.h.b16 %v3902
      %v5271 = vunpack.c.l.b16 %v3903
      %v5272 = vunpack.c.h.b16 %v3903
      %v5273 = vunpack.c.l.b16 %v3904
      %v5274 = vunpack.c.h.b16 %v3904
      %v5275 = vunpack.c.l.b16 %v3905
      %v5276 = vunpack.c.h.b16 %v3905
      %v5277 = vunpack.c.l.b16 %v3906
      %v5278 = vunpack.c.h.b16 %v3906
      %v5279 = vunpack.c.l.b16 %v3907
      %v5280 = vunpack.c.h.b16 %v3907
      %v5281 = vunpack.c.l.b16 %v3908
      %v5282 = vunpack.c.h.b16 %v3908
      %v5283 = vunpack.c.l.b16 %v3909
      %v5284 = vunpack.c.h.b16 %v3909
      %v5285 = vunpack.c.l.b16 %v3910
      %v5286 = vunpack.c.h.b16 %v3910
      %v5287 = vunpack.c.l.b16 %v3911
      %v5288 = vunpack.c.h.b16 %v3911
      %v5289 = vunpack.c.l.b16 %v3912
      %v5290 = vunpack.c.h.b16 %v3912
      %v5291 = vunpack.c.l.b16 %v3913
      %v5292 = vunpack.c.h.b16 %v3913
      %v5293 = vunpack.c.l.b16 %v3914
      %v5294 = vunpack.c.h.b16 %v3914
      %v5295 = vunpack.c.l.b16 %v3915
      %v5296 = vunpack.c.h.b16 %v3915
      %v5297 = vunpack.c.l.b16 %v3916
      %v5298 = vunpack.c.h.b16 %v3916
      %v5299 = vunpack.c.l.b16 %v3917
      %v5300 = vunpack.c.h.b16 %v3917
      %v5301 = vunpack.c.l.b16 %v3918
      %v5302 = vunpack.c.h.b16 %v3918
      %v5303 = vunpack.c.l.b16 %v3919
      %v5304 = vunpack.c.h.b16 %v3919
      %v5305 = vunpack.c.l.b16 %v3920
      %v5306 = vunpack.c.h.b16 %v3920
      %v5307 = vunpack.c.l.b16 %v3921
      %v5308 = vunpack.c.h.b16 %v3921
      %v5309 = vunpack.c.l.b16 %v3922
      %v5310 = vunpack.c.h.b16 %v3922
      %v5311 = vunpack.c.l.b16 %v3923
      %v5312 = vunpack.c.h.b16 %v3923
      %v5313 = vunpack.c.l.b16 %v3924
      %v5314 = vunpack.c.h.b16 %v3924
      %v5315 = vunpack.c.l.b16 %v3925
      %v5316 = vunpack.c.h.b16 %v3925
      %v5317 = vunpack.c.l.b16 %v3926
      %v5318 = vunpack.c.h.b16 %v3926
      %v5319 = vunpack.c.l.b16 %v3927
      %v5320 = vunpack.c.h.b16 %v3927
      %v5321 = vunpack.c.l.b16 %v3928
      %v5322 = vunpack.c.h.b16 %v3928
      %v5323 = vunpack.c.l.b16 %v3929
      %v5324 = vunpack.c.h.b16 %v3929
      %v5325 = vunpack.c.l.b16 %v3930
      %v5326 = vunpack.c.h.b16 %v3930
      %v5327 = vunpack.c.l.b16 %v3931
      %v5328 = vunpack.c.h.b16 %v3931
      %v5329 = vunpack.c.l.b16 %v3932
      %v5330 = vunpack.c.h.b16 %v3932
      %v5331 = vunpack.c.l.b16 %v3933
      %v5332 = vunpack.c.h.b16 %v3933
      %v5333 = vunpack.c.l.b16 %v3934
      %v5334 = vunpack.c.h.b16 %v3934
      %v5335 = vunpack.c.l.b16 %v3935
      %v5336 = vunpack.c.h.b16 %v3935
      %v5337 = vunpack.c.l.b16 %v3936
      %v5338 = vunpack.c.h.b16 %v3936
      %v5339 = vunpack.c.l.b16 %v3937
      %v5340 = vunpack.c.h.b16 %v3937
      %v5341 = vunpack.c.l.b16 %v3938
      %v5342 = vunpack.c.h.b16 %v3938
      %v5343 = vunpack.c.l.b16 %v3939
      %v5344 = vunpack.c.h.b16 %v3939
      %v5345 = vunpack.c.l.b16 %v3940
      %v5346 = vunpack.c.h.b16 %v3940
      %v5347 = vunpack.c.l.b16 %v3941
      %v5348 = vunpack.c.h.b16 %v3941
      %v5349 = vunpack.c.l.b16 %v3942
      %v5350 = vunpack.c.h.b16 %v3942
      %v5351 = vunpack.c.l.b16 %v3943
      %v5352 = vunpack.c.h.b16 %v3943
      %v5353 = vunpack.c.l.b16 %v3944
      %v5354 = vunpack.c.h.b16 %v3944
      %v5355 = vunpack.c.l.b16 %v3945
      %v5356 = vunpack.c.h.b16 %v3945
      %v5357 = vunpack.c.l.b16 %v3946
      %v5358 = vunpack.c.h.b16 %v3946
      %v5359 = vunpack.c.l.b16 %v3947
      %v5360 = vunpack.c.h.b16 %v3947
      %v5361 = vunpack.c.l.b16 %v3948
      %v5362 = vunpack.c.h.b16 %v3948
      %v5363 = vunpack.c.l.b16 %v3949
      %v5364 = vunpack.c.h.b16 %v3949
      %v5365 = vunpack.c.l.b16 %v3950
      %v5366 = vunpack.c.h.b16 %v3950
      %v5367 = vunpack.c.l.b16 %v3951
      %v5368 = vunpack.c.h.b16 %v3951
      %v5369 = vunpack.c.l.b16 %v3952
      %v5370 = vunpack.c.h.b16 %v3952
      %v5371 = vunpack.c.l.b16 %v3953
      %v5372 = vunpack.c.h.b16 %v3953
      %v5373 = vunpack.c.l.b16 %v3954
      %v5374 = vunpack.c.h.b16 %v3954
      %v5375 = vunpack.c.l.b16 %v3955
      %v5376 = vunpack.c.h.b16 %v3955
      %v5377 = vunpack.c.l.b16 %v3956
      %v5378 = vunpack.c.h.b16 %v3956
      %v5379 = vunpack.c.l.b16 %v3957
      %v5380 = vunpack.c.h.b16 %v3957
      %v5381 = vunpack.c.l.b16 %v3958
      %v5382 = vunpack.c.h.b16 %v3958
      %v5383 = vunpack.c.l.b16 %v3959
      %v5384 = vunpack.c.h.b16 %v3959
      %v5385 = vunpack.c.l.b16 %v3960
      %v5386 = vunpack.c.h.b16 %v3960
      %v5387 = vunpack.c.l.b16 %v3961
      %v5388 = vunpack.c.h.b16 %v3961
      %v5389 = vunpack.c.l.b16 %v3962
      %v5390 = vunpack.c.h.b16 %v3962
      %v5391 = vunpack.c.l.b16 %v3963
      %v5392 = vunpack.c.h.b16 %v3963
      %v5393 = vunpack.c.l.b16 %v3964
      %v5394 = vunpack.c.h.b16 %v3964
      %v5395 = vunpack.c.l.b16 %v3965
      %v5396 = vunpack.c.h.b16 %v3965
      %v5397 = vunpack.c.l.b16 %v3966
      %v5398 = vunpack.c.h.b16 %v3966
      %v5399 = vunpack.c.l.b16 %v3967
      %v5400 = vunpack.c.h.b16 %v3967
      %v5401 = vunpack.c.l.b16 %v3968
      %v5402 = vunpack.c.h.b16 %v3968
      %v5403 = vunpack.c.l.b16 %v3969
      %v5404 = vunpack.c.h.b16 %v3969
      %v5405 = vunpack.c.l.b16 %v3970
      %v5406 = vunpack.c.h.b16 %v3970
      %v5407 = vunpack.c.l.b16 %v3971
      %v5408 = vunpack.c.h.b16 %v3971
      %v5409 = vunpack.c.l.b16 %v3972
      %v5410 = vunpack.c.h.b16 %v3972
      %v5411 = vunpack.c.l.b16 %v3973
      %v5412 = vunpack.c.h.b16 %v3973
      %v5413 = vunpack.c.l.b16 %v3974
      %v5414 = vunpack.c.h.b16 %v3974
      %v5415 = vunpack.c.l.b16 %v3975
      %v5416 = vunpack.c.h.b16 %v3975
      %v5417 = vunpack.c.l.b16 %v3976
      %v5418 = vunpack.c.h.b16 %v3976
      %v5419 = vunpack.c.l.b16 %v3977
      %v5420 = vunpack.c.h.b16 %v3977
      %v5421 = vunpack.c.l.b16 %v3978
      %v5422 = vunpack.c.h.b16 %v3978
      %v5423 = vunpack.c.l.b16 %v3979
      %v5424 = vunpack.c.h.b16 %v3979
      %v5425 = vunpack.c.l.b16 %v3980
      %v5426 = vunpack.c.h.b16 %v3980
      %v5427 = vunpack.c.l.b16 %v3981
      %v5428 = vunpack.c.h.b16 %v3981
      %v5429 = vunpack.c.l.b16 %v3982
      %v5430 = vunpack.c.h.b16 %v3982
      %v5431 = vunpack.c.l.b16 %v3983
      %v5432 = vunpack.c.h.b16 %v3983
      %v5433 = vunpack.c.l.b16 %v3984
      %v5434 = vunpack.c.h.b16 %v3984
      %v5435 = vunpack.c.l.b16 %v3985
      %v5436 = vunpack.c.h.b16 %v3985
      %v5437 = vunpack.c.l.b16 %v3986
      %v5438 = vunpack.c.h.b16 %v3986
      %v5439 = vunpack.c.l.b16 %v3987
      %v5440 = vunpack.c.h.b16 %v3987
      %v5441 = vunpack.c.l.b16 %v3988
      %v5442 = vunpack.c.h.b16 %v3988
      %v5443 = vunpack.c.l.b16 %v3989
      %v5444 = vunpack.c.h.b16 %v3989
      %v5445 = vunpack.c.l.b16 %v3990
      %v5446 = vunpack.c.h.b16 %v3990
      %v5447 = vunpack.c.l.b16 %v3991
      %v5448 = vunpack.c.h.b16 %v3991
      %v5449 = vunpack.c.l.b16 %v3992
      %v5450 = vunpack.c.h.b16 %v3992
      %v5451 = vunpack.c.l.b16 %v3993
      %v5452 = vunpack.c.h.b16 %v3993
      %v5453 = vunpack.c.l.b16 %v3994
      %v5454 = vunpack.c.h.b16 %v3994
      %v5455 = vunpack.c.l.b16 %v3995
      %v5456 = vunpack.c.h.b16 %v3995
      %v5457 = vunpack.c.l.b16 %v3996
      %v5458 = vunpack.c.h.b16 %v3996
      %v5459 = vunpack.c.l.b16 %v3997
      %v5460 = vunpack.c.h.b16 %v3997
      %v5461 = vunpack.c.l.b16 %v3998
      %v5462 = vunpack.c.h.b16 %v3998
      %v5463 = vunpack.c.l.b16 %v3999
      %v5464 = vunpack.c.h.b16 %v3999
      %v5465 = vunpack.c.l.b16 %v4000
      %v5466 = vunpack.c.h.b16 %v4000
      %v5467 = vunpack.c.l.b16 %v4001
      %v5468 = vunpack.c.h.b16 %v4001
      %v5469 = vunpack.c.l.b16 %v4002
      %v5470 = vunpack.c.h.b16 %v4002
      %v5471 = vunpack.c.l.b16 %v4003
      %v5472 = vunpack.c.h.b16 %v4003
      %v5473 = vunpack.c.l.b16 %v4004
      %v5474 = vunpack.c.h.b16 %v4004
      %v5475 = vunpack.c.l.b16 %v4005
      %v5476 = vunpack.c.h.b16 %v4005
      %v5477 = vunpack.c.l.b16 %v4006
      %v5478 = vunpack.c.h.b16 %v4006
      %v5479 = vunpack.c.l.b16 %v4007
      %v5480 = vunpack.c.h.b16 %v4007
      %v5481 = vunpack.c.l.b16 %v4008
      %v5482 = vunpack.c.h.b16 %v4008
      %v5483 = vunpack.c.l.b16 %v4009
      %v5484 = vunpack.c.h.b16 %v4009
      %v5485 = vunpack.c.l.b16 %v4010
      %v5486 = vunpack.c.h.b16 %v4010
      %v5487 = vunpack.c.l.b16 %v4011
      %v5488 = vunpack.c.h.b16 %v4011
      %v5489 = vunpack.c.l.b16 %v4012
      %v5490 = vunpack.c.h.b16 %v4012
      %v5491 = vunpack.c.l.b16 %v4013
      %v5492 = vunpack.c.h.b16 %v4013
      %v5493 = vunpack.c.l.b16 %v4014
      %v5494 = vunpack.c.h.b16 %v4014
      %v5495 = vunpack.c.l.b16 %v4015
      %v5496 = vunpack.c.h.b16 %v4015
      %v5497 = vunpack.c.l.b16 %v4016
      %v5498 = vunpack.c.h.b16 %v4016
      %v5499 = vunpack.c.l.b16 %v4017
      %v5500 = vunpack.c.h.b16 %v4017
      %v5501 = vunpack.c.l.b16 %v4018
      %v5502 = vunpack.c.h.b16 %v4018
      %v5503 = vunpack.c.l.b16 %v4019
      %v5504 = vunpack.c.h.b16 %v4019
      %v5505 = vunpack.c.l.b16 %v4020
      %v5506 = vunpack.c.h.b16 %v4020
      %v5507 = vunpack.c.l.b16 %v4021
      %v5508 = vunpack.c.h.b16 %v4021
      %v5509 = vunpack.c.l.b16 %v4022
      %v5510 = vunpack.c.h.b16 %v4022
      %v5511 = vunpack.c.l.b16 %v4023
      %v5512 = vunpack.c.h.b16 %v4023
      %v5513 = vunpack.c.l.b16 %v4024
      %v5514 = vunpack.c.h.b16 %v4024
      %v5515 = vunpack.c.l.b16 %v4025
      %v5516 = vunpack.c.h.b16 %v4025
      %v5517 = vunpack.c.l.b16 %v4026
      %v5518 = vunpack.c.h.b16 %v4026
      %v5519 = vunpack.c.l.b16 %v4027
      %v5520 = vunpack.c.h.b16 %v4027
      %v5521 = vunpack.c.l.b16 %v4028
      %v5522 = vunpack.c.h.b16 %v4028
      %v5523 = vunpack.c.l.b16 %v4029
      %v5524 = vunpack.c.h.b16 %v4029
      %v5525 = vunpack.c.l.b16 %v4030
      %v5526 = vunpack.c.h.b16 %v4030
      %v5527 = vunpack.c.l.b16 %v4031
      %v5528 = vunpack.c.h.b16 %v4031
      %v5529 = vunpack.c.l.b16 %v4032
      %v5530 = vunpack.c.h.b16 %v4032
      %v5531 = vunpack.c.l.b16 %v4033
      %v5532 = vunpack.c.h.b16 %v4033
      %v5533 = vunpack.c.l.b16 %v4034
      %v5534 = vunpack.c.h.b16 %v4034
      %v5535 = vunpack.c.l.b16 %v4035
      %v5536 = vunpack.c.h.b16 %v4035
      %v5537 = vunpack.c.l.b16 %v4036
      %v5538 = vunpack.c.h.b16 %v4036
      %v5539 = vunpack.c.l.b16 %v4037
      %v5540 = vunpack.c.h.b16 %v4037
      %v5541 = vunpack.c.l.b16 %v4038
      %v5542 = vunpack.c.h.b16 %v4038
      %v5543 = vunpack.c.l.b16 %v4039
      %v5544 = vunpack.c.h.b16 %v4039
      %v5545 = vunpack.c.l.b16 %v4040
      %v5546 = vunpack.c.h.b16 %v4040
      %v5547 = vunpack.c.l.b16 %v4041
      %v5548 = vunpack.c.h.b16 %v4041
      %v5549 = vunpack.c.l.b16 %v4042
      %v5550 = vunpack.c.h.b16 %v4042
      %v5551 = vunpack.c.l.b16 %v4043
      %v5552 = vunpack.c.h.b16 %v4043
      %v5553 = vunpack.c.l.b16 %v4044
      %v5554 = vunpack.c.h.b16 %v4044
      %v5555 = vunpack.c.l.b16 %v4045
      %v5556 = vunpack.c.h.b16 %v4045
      %v5557 = vunpack.c.l.b16 %v4046
      %v5558 = vunpack.c.h.b16 %v4046
      %v5559 = vunpack.c.l.b16 %v4047
      %v5560 = vunpack.c.h.b16 %v4047
      %v5561 = vunpack.c.l.b16 %v4048
      %v5562 = vunpack.c.h.b16 %v4048
      %v5563 = vunpack.c.l.b16 %v4049
      %v5564 = vunpack.c.h.b16 %v4049
      %v5565 = vunpack.c.l.b16 %v4050
      %v5566 = vunpack.c.h.b16 %v4050
      %v5567 = vunpack.c.l.b16 %v4051
      %v5568 = vunpack.c.h.b16 %v4051
      %v5569 = vunpack.c.l.b16 %v4052
      %v5570 = vunpack.c.h.b16 %v4052
      %v5571 = vunpack.c.l.b16 %v4053
      %v5572 = vunpack.c.h.b16 %v4053
      %v5573 = vunpack.c.l.b16 %v4054
      %v5574 = vunpack.c.h.b16 %v4054
      %v5575 = vunpack.c.l.b16 %v4055
      %v5576 = vunpack.c.h.b16 %v4055
      %v5577 = vunpack.c.l.b16 %v4056
      %v5578 = vunpack.c.h.b16 %v4056
      %v5579 = vunpack.c.l.b16 %v4057
      %v5580 = vunpack.c.h.b16 %v4057
      %v5581 = vunpack.c.l.b16 %v4058
      %v5582 = vunpack.c.h.b16 %v4058
      %v5583 = vunpack.c.l.b16 %v4059
      %v5584 = vunpack.c.h.b16 %v4059
      %v5585 = vunpack.c.l.b16 %v4060
      %v5586 = vunpack.c.h.b16 %v4060
      %v5587 = vunpack.c.l.b16 %v4061
      %v5588 = vunpack.c.h.b16 %v4061
      %v5589 = vunpack.c.l.b16 %v4062
      %v5590 = vunpack.c.h.b16 %v4062
      %v5591 = vunpack.c.l.b16 %v4063
      %v5592 = vunpack.c.h.b16 %v4063
      %v5593 = vunpack.c.l.b16 %v4064
      %v5594 = vunpack.c.h.b16 %v4064
      %v5595 = vunpack.c.l.b16 %v4065
      %v5596 = vunpack.c.h.b16 %v4065
      %v5597 = vunpack.c.l.b16 %v4066
      %v5598 = vunpack.c.h.b16 %v4066
      %v5599 = vunpack.c.l.b16 %v4067
      %v5600 = vunpack.c.h.b16 %v4067
      %v5601 = vunpack.c.l.b16 %v4068
      %v5602 = vunpack.c.h.b16 %v4068
      %v5603 = vunpack.c.l.b16 %v4069
      %v5604 = vunpack.c.h.b16 %v4069
      %v5605 = vunpack.c.l.b16 %v4070
      %v5606 = vunpack.c.h.b16 %v4070
      %v5607 = vunpack.c.l.b16 %v4071
      %v5608 = vunpack.c.h.b16 %v4071
      %v5609 = vunpack.c.l.b16 %v4072
      %v5610 = vunpack.c.h.b16 %v4072
      %v5611 = vunpack.c.l.b16 %v4073
      %v5612 = vunpack.c.h.b16 %v4073
      %v5613 = vunpack.c.l.b16 %v4074
      %v5614 = vunpack.c.h.b16 %v4074
      %v5615 = vunpack.c.l.b16 %v4075
      %v5616 = vunpack.c.h.b16 %v4075
      %v5617 = vunpack.c.l.b16 %v4076
      %v5618 = vunpack.c.h.b16 %v4076
      %v5619 = vunpack.c.l.b16 %v4077
      %v5620 = vunpack.c.h.b16 %v4077
      %v5621 = vunpack.c.l.b16 %v4078
      %v5622 = vunpack.c.h.b16 %v4078
      %v5623 = vunpack.c.l.b16 %v4079
      %v5624 = vunpack.c.h.b16 %v4079
      %v5625 = vunpack.c.l.b16 %v4080
      %v5626 = vunpack.c.h.b16 %v4080
      %v5627 = vunpack.c.l.b16 %v4081
      %v5628 = vunpack.c.h.b16 %v4081
      %v5629 = vunpack.c.l.b16 %v4082
      %v5630 = vunpack.c.h.b16 %v4082
      %v5631 = vunpack.c.l.b16 %v4083
      %v5632 = vunpack.c.h.b16 %v4083
      %v5633 = vunpack.c.l.b16 %v4084
      %v5634 = vunpack.c.h.b16 %v4084
      %v5635 = vunpack.c.l.b16 %v4085
      %v5636 = vunpack.c.h.b16 %v4085
      %v5637 = vunpack.c.l.b16 %v4086
      %v5638 = vunpack.c.h.b16 %v4086
      %v5639 = vunpack.c.l.b16 %v4087
      %v5640 = vunpack.c.h.b16 %v4087
      %v5641 = vunpack.c.l.b16 %v4088
      %v5642 = vunpack.c.h.b16 %v4088
      %v5643 = vunpack.c.l.b16 %v4089
      %v5644 = vunpack.c.h.b16 %v4089
      %v5645 = vunpack.c.l.b16 %v4090
      %v5646 = vunpack.c.h.b16 %v4090
      %v5647 = vunpack.c.l.b16 %v4091
      %v5648 = vunpack.c.h.b16 %v4091
      %v5649 = vunpack.c.l.b16 %v4092
      %v5650 = vunpack.c.h.b16 %v4092
      %v5651 = vunpack.c.l.b16 %v4093
      %v5652 = vunpack.c.h.b16 %v4093
      %v5653 = vunpack.c.l.b16 %v4094
      %v5654 = vunpack.c.h.b16 %v4094
      %v5655 = vunpack.c.l.b16 %v4095
      %v5656 = vunpack.c.h.b16 %v4095
      %v5657 = vunpack.c.l.b16 %v4096
      %v5658 = vunpack.c.h.b16 %v4096
      %v5659 = vunpack.c.l.b16 %v4097
      %v5660 = vunpack.c.h.b16 %v4097
      %v5661 = vunpack.c.l.b16 %v4098
      %v5662 = vunpack.c.h.b16 %v4098
      %v5663 = vunpack.c.l.b16 %v4099
      %v5664 = vunpack.c.h.b16 %v4099
      %v5665 = vunpack.c.l.b16 %v4100
      %v5666 = vunpack.c.h.b16 %v4100
      %v5667 = vunpack.c.l.b16 %v4101
      %v5668 = vunpack.c.h.b16 %v4101
      %v5669 = vunpack.c.l.b16 %v4102
      %v5670 = vunpack.c.h.b16 %v4102
      %v5671 = vunpack.c.l.b16 %v4103
      %v5672 = vunpack.c.h.b16 %v4103
      %v5673 = vunpack.c.l.b16 %v4104
      %v5674 = vunpack.c.h.b16 %v4104
      %v5675 = vunpack.c.l.b16 %v4105
      %v5676 = vunpack.c.h.b16 %v4105
      %v5677 = vunpack.c.l.b16 %v4106
      %v5678 = vunpack.c.h.b16 %v4106
      %v5679 = vunpack.c.l.b16 %v4107
      %v5680 = vunpack.c.h.b16 %v4107
      %v5681 = vunpack.c.l.b16 %v4108
      %v5682 = vunpack.c.h.b16 %v4108
      %v5683 = vunpack.c.l.b16 %v4109
      %v5684 = vunpack.c.h.b16 %v4109
      %v5685 = vunpack.c.l.b16 %v4110
      %v5686 = vunpack.c.h.b16 %v4110
      %v5687 = vunpack.c.l.b16 %v4111
      %v5688 = vunpack.c.h.b16 %v4111
      %v5689 = vunpack.c.l.b16 %v4112
      %v5690 = vunpack.c.h.b16 %v4112
      %v5691 = vpack.c.b16 %v4675, %v4667
      %v5692 = vpack.c.b16 %v4676, %v4668
      %v5693 = vpack.c.b16 %v4677, %v4669
      %v5694 = vpack.c.b16 %v4678, %v4670
      %v5695 = vpack.c.b16 %v4679, %v4671
      %v5696 = vpack.c.b16 %v4680, %v4672
      %v5697 = vpack.c.b16 %v4681, %v4673
      %v5698 = vpack.c.b16 %v4682, %v4674
      %v5699 = vpack.c.b16 %v4691, %v4683
      %v5700 = vpack.c.b16 %v4692, %v4684
      %v5701 = vpack.c.b16 %v4693, %v4685
      %v5702 = vpack.c.b16 %v4694, %v4686
      %v5703 = vpack.c.b16 %v4695, %v4687
      %v5704 = vpack.c.b16 %v4696, %v4688
      %v5705 = vpack.c.b16 %v4697, %v4689
      %v5706 = vpack.c.b16 %v4698, %v4690
      %v5707 = vpack.c.b16 %v4707, %v4699
      %v5708 = vpack.c.b16 %v4708, %v4700
      %v5709 = vpack.c.b16 %v4709, %v4701
      %v5710 = vpack.c.b16 %v4710, %v4702
      %v5711 = vpack.c.b16 %v4711, %v4703
      %v5712 = vpack.c.b16 %v4712, %v4704
      %v5713 = vpack.c.b16 %v4713, %v4705
      %v5714 = vpack.c.b16 %v4714, %v4706
      %v5715 = vpack.c.b16 %v4723, %v4715
      %v5716 = vpack.c.b16 %v4724, %v4716
      %v5717 = vpack.c.b16 %v4725, %v4717
      %v5718 = vpack.c.b16 %v4726, %v4718
      %v5719 = vpack.c.b16 %v4727, %v4719
      %v5720 = vpack.c.b16 %v4728, %v4720
      %v5721 = vpack.c.b16 %v4729, %v4721
      %v5722 = vpack.c.b16 %v4730, %v4722
      %v5723 = vpack.c.b16 %v4739, %v4731
      %v5724 = vpack.c.b16 %v4740, %v4732
      %v5725 = vpack.c.b16 %v4741, %v4733
      %v5726 = vpack.c.b16 %v4742, %v4734
      %v5727 = vpack.c.b16 %v4743, %v4735
      %v5728 = vpack.c.b16 %v4744, %v4736
      %v5729 = vpack.c.b16 %v4745, %v4737
      %v5730 = vpack.c.b16 %v4746, %v4738
      %v5731 = vpack.c.b16 %v4755, %v4747
      %v5732 = vpack.c.b16 %v4756, %v4748
      %v5733 = vpack.c.b16 %v4757, %v4749
      %v5734 = vpack.c.b16 %v4758, %v4750
      %v5735 = vpack.c.b16 %v4759, %v4751
      %v5736 = vpack.c.b16 %v4760, %v4752
      %v5737 = vpack.c.b16 %v4761, %v4753
      %v5738 = vpack.c.b16 %v4762, %v4754
      %v5739 = vpack.c.b16 %v4771, %v4763
      %v5740 = vpack.c.b16 %v4772, %v4764
      %v5741 = vpack.c.b16 %v4773, %v4765
      %v5742 = vpack.c.b16 %v4774, %v4766
      %v5743 = vpack.c.b16 %v4775, %v4767
      %v5744 = vpack.c.b16 %v4776, %v4768
      %v5745 = vpack.c.b16 %v4777, %v4769
      %v5746 = vpack.c.b16 %v4778, %v4770
      %v5747 = vpack.c.b16 %v4787, %v4779
      %v5748 = vpack.c.b16 %v4788, %v4780
      %v5749 = vpack.c.b16 %v4789, %v4781
      %v5750 = vpack.c.b16 %v4790, %v4782
      %v5751 = vpack.c.b16 %v4791, %v4783
      %v5752 = vpack.c.b16 %v4792, %v4784
      %v5753 = vpack.c.b16 %v4793, %v4785
      %v5754 = vpack.c.b16 %v4794, %v4786
      %v5755 = vpack.c.b16 %v4803, %v4795
      %v5756 = vpack.c.b16 %v4804, %v4796
      %v5757 = vpack.c.b16 %v4805, %v4797
      %v5758 = vpack.c.b16 %v4806, %v4798
      %v5759 = vpack.c.b16 %v4807, %v4799
      %v5760 = vpack.c.b16 %v4808, %v4800
      %v5761 = vpack.c.b16 %v4809, %v4801
      %v5762 = vpack.c.b16 %v4810, %v4802
      %v5763 = vpack.c.b16 %v4819, %v4811
      %v5764 = vpack.c.b16 %v4820, %v4812
      %v5765 = vpack.c.b16 %v4821, %v4813
      %v5766 = vpack.c.b16 %v4822, %v4814
      %v5767 = vpack.c.b16 %v4823, %v4815
      %v5768 = vpack.c.b16 %v4824, %v4816
      %v5769 = vpack.c.b16 %v4825, %v4817
      %v5770 = vpack.c.b16 %v4826, %v4818
      %v5771 = vpack.c.b16 %v4835, %v4827
      %v5772 = vpack.c.b16 %v4836, %v4828
      %v5773 = vpack.c.b16 %v4837, %v4829
      %v5774 = vpack.c.b16 %v4838, %v4830
      %v5775 = vpack.c.b16 %v4839, %v4831
      %v5776 = vpack.c.b16 %v4840, %v4832
      %v5777 = vpack.c.b16 %v4841, %v4833
      %v5778 = vpack.c.b16 %v4842, %v4834
      %v5779 = vpack.c.b16 %v4851, %v4843
      %v5780 = vpack.c.b16 %v4852, %v4844
      %v5781 = vpack.c.b16 %v4853, %v4845
      %v5782 = vpack.c.b16 %v4854, %v4846
      %v5783 = vpack.c.b16 %v4855, %v4847
      %v5784 = vpack.c.b16 %v4856, %v4848
      %v5785 = vpack.c.b16 %v4857, %v4849
      %v5786 = vpack.c.b16 %v4858, %v4850
      %v5787 = vpack.c.b16 %v4867, %v4859
      %v5788 = vpack.c.b16 %v4868, %v4860
      %v5789 = vpack.c.b16 %v4869, %v4861
      %v5790 = vpack.c.b16 %v4870, %v4862
      %v5791 = vpack.c.b16 %v4871, %v4863
      %v5792 = vpack.c.b16 %v4872, %v4864
      %v5793 = vpack.c.b16 %v4873, %v4865
      %v5794 = vpack.c.b16 %v4874, %v4866
      %v5795 = vpack.c.b16 %v4883, %v4875
      %v5796 = vpack.c.b16 %v4884, %v4876
      %v5797 = vpack.c.b16 %v4885, %v4877
      %v5798 = vpack.c.b16 %v4886, %v4878
      %v5799 = vpack.c.b16 %v4887, %v4879
      %v5800 = vpack.c.b16 %v4888, %v4880
      %v5801 = vpack.c.b16 %v4889, %v4881
      %v5802 = vpack.c.b16 %v4890, %v4882
      %v5803 = vpack.c.b16 %v4899, %v4891
      %v5804 = vpack.c.b16 %v4900, %v4892
      %v5805 = vpack.c.b16 %v4901, %v4893
      %v5806 = vpack.c.b16 %v4902, %v4894
      %v5807 = vpack.c.b16 %v4903, %v4895
      %v5808 = vpack.c.b16 %v4904, %v4896
      %v5809 = vpack.c.b16 %v4905, %v4897
      %v5810 = vpack.c.b16 %v4906, %v4898
      %v5811 = vpack.c.b16 %v4915, %v4907
      %v5812 = vpack.c.b16 %v4916, %v4908
      %v5813 = vpack.c.b16 %v4917, %v4909
      %v5814 = vpack.c.b16 %v4918, %v4910
      %v5815 = vpack.c.b16 %v4919, %v4911
      %v5816 = vpack.c.b16 %v4920, %v4912
      %v5817 = vpack.c.b16 %v4921, %v4913
      %v5818 = vpack.c.b16 %v4922, %v4914
      %v5819 = vpack.c.b16 %v4931, %v4923
      %v5820 = vpack.c.b16 %v4932, %v4924
      %v5821 = vpack.c.b16 %v4933, %v4925
      %v5822 = vpack.c.b16 %v4934, %v4926
      %v5823 = vpack.c.b16 %v4935, %v4927
      %v5824 = vpack.c.b16 %v4936, %v4928
      %v5825 = vpack.c.b16 %v4937, %v4929
      %v5826 = vpack.c.b16 %v4938, %v4930
      %v5827 = vpack.c.b16 %v4947, %v4939
      %v5828 = vpack.c.b16 %v4948, %v4940
      %v5829 = vpack.c.b16 %v4949, %v4941
      %v5830 = vpack.c.b16 %v4950, %v4942
      %v5831 = vpack.c.b16 %v4951, %v4943
      %v5832 = vpack.c.b16 %v4952, %v4944
      %v5833 = vpack.c.b16 %v4953, %v4945
      %v5834 = vpack.c.b16 %v4954, %v4946
      %v5835 = vpack.c.b16 %v4963, %v4955
      %v5836 = vpack.c.b16 %v4964, %v4956
      %v5837 = vpack.c.b16 %v4965, %v4957
      %v5838 = vpack.c.b16 %v4966, %v4958
      %v5839 = vpack.c.b16 %v4967, %v4959
      %v5840 = vpack.c.b16 %v4968, %v4960
      %v5841 = vpack.c.b16 %v4969, %v4961
      %v5842 = vpack.c.b16 %v4970, %v4962
      %v5843 = vpack.c.b16 %v4979, %v4971
      %v5844 = vpack.c.b16 %v4980, %v4972
      %v5845 = vpack.c.b16 %v4981, %v4973
      %v5846 = vpack.c.b16 %v4982, %v4974
      %v5847 = vpack.c.b16 %v4983, %v4975
      %v5848 = vpack.c.b16 %v4984, %v4976
      %v5849 = vpack.c.b16 %v4985, %v4977
      %v5850 = vpack.c.b16 %v4986, %v4978
      %v5851 = vpack.c.b16 %v4995, %v4987
      %v5852 = vpack.c.b16 %v4996, %v4988
      %v5853 = vpack.c.b16 %v4997, %v4989
      %v5854 = vpack.c.b16 %v4998, %v4990
      %v5855 = vpack.c.b16 %v4999, %v4991
      %v5856 = vpack.c.b16 %v5000, %v4992
      %v5857 = vpack.c.b16 %v5001, %v4993
      %v5858 = vpack.c.b16 %v5002, %v4994
      %v5859 = vpack.c.b16 %v5011, %v5003
      %v5860 = vpack.c.b16 %v5012, %v5004
      %v5861 = vpack.c.b16 %v5013, %v5005
      %v5862 = vpack.c.b16 %v5014, %v5006
      %v5863 = vpack.c.b16 %v5015, %v5007
      %v5864 = vpack.c.b16 %v5016, %v5008
      %v5865 = vpack.c.b16 %v5017, %v5009
      %v5866 = vpack.c.b16 %v5018, %v5010
      %v5867 = vpack.c.b16 %v5027, %v5019
      %v5868 = vpack.c.b16 %v5028, %v5020
      %v5869 = vpack.c.b16 %v5029, %v5021
      %v5870 = vpack.c.b16 %v5030, %v5022
      %v5871 = vpack.c.b16 %v5031, %v5023
      %v5872 = vpack.c.b16 %v5032, %v5024
      %v5873 = vpack.c.b16 %v5033, %v5025
      %v5874 = vpack.c.b16 %v5034, %v5026
      %v5875 = vpack.c.b16 %v5043, %v5035
      %v5876 = vpack.c.b16 %v5044, %v5036
      %v5877 = vpack.c.b16 %v5045, %v5037
      %v5878 = vpack.c.b16 %v5046, %v5038
      %v5879 = vpack.c.b16 %v5047, %v5039
      %v5880 = vpack.c.b16 %v5048, %v5040
      %v5881 = vpack.c.b16 %v5049, %v5041
      %v5882 = vpack.c.b16 %v5050, %v5042
      %v5883 = vpack.c.b16 %v5059, %v5051
      %v5884 = vpack.c.b16 %v5060, %v5052
      %v5885 = vpack.c.b16 %v5061, %v5053
      %v5886 = vpack.c.b16 %v5062, %v5054
      %v5887 = vpack.c.b16 %v5063, %v5055
      %v5888 = vpack.c.b16 %v5064, %v5056
      %v5889 = vpack.c.b16 %v5065, %v5057
      %v5890 = vpack.c.b16 %v5066, %v5058
      %v5891 = vpack.c.b16 %v5075, %v5067
      %v5892 = vpack.c.b16 %v5076, %v5068
      %v5893 = vpack.c.b16 %v5077, %v5069
      %v5894 = vpack.c.b16 %v5078, %v5070
      %v5895 = vpack.c.b16 %v5079, %v5071
      %v5896 = vpack.c.b16 %v5080, %v5072
      %v5897 = vpack.c.b16 %v5081, %v5073
      %v5898 = vpack.c.b16 %v5082, %v5074
      %v5899 = vpack.c.b16 %v5091, %v5083
      %v5900 = vpack.c.b16 %v5092, %v5084
      %v5901 = vpack.c.b16 %v5093, %v5085
      %v5902 = vpack.c.b16 %v5094, %v5086
      %v5903 = vpack.c.b16 %v5095, %v5087
      %v5904 = vpack.c.b16 %v5096, %v5088
      %v5905 = vpack.c.b16 %v5097, %v5089
      %v5906 = vpack.c.b16 %v5098, %v5090
      %v5907 = vpack.c.b16 %v5107, %v5099
      %v5908 = vpack.c.b16 %v5108, %v5100
      %v5909 = vpack.c.b16 %v5109, %v5101
      %v5910 = vpack.c.b16 %v5110, %v5102
      %v5911 = vpack.c.b16 %v5111, %v5103
      %v5912 = vpack.c.b16 %v5112, %v5104
      %v5913 = vpack.c.b16 %v5113, %v5105
      %v5914 = vpack.c.b16 %v5114, %v5106
      %v5915 = vpack.c.b16 %v5123, %v5115
      %v5916 = vpack.c.b16 %v5124, %v5116
      %v5917 = vpack.c.b16 %v5125, %v5117
      %v5918 = vpack.c.b16 %v5126, %v5118
      %v5919 = vpack.c.b16 %v5127, %v5119
      %v5920 = vpack.c.b16 %v5128, %v5120
      %v5921 = vpack.c.b16 %v5129, %v5121
      %v5922 = vpack.c.b16 %v5130, %v5122
      %v5923 = vpack.c.b16 %v5139, %v5131
      %v5924 = vpack.c.b16 %v5140, %v5132
      %v5925 = vpack.c.b16 %v5141, %v5133
      %v5926 = vpack.c.b16 %v5142, %v5134
      %v5927 = vpack.c.b16 %v5143, %v5135
      %v5928 = vpack.c.b16 %v5144, %v5136
      %v5929 = vpack.c.b16 %v5145, %v5137
      %v5930 = vpack.c.b16 %v5146, %v5138
      %v5931 = vpack.c.b16 %v5155, %v5147
      %v5932 = vpack.c.b16 %v5156, %v5148
      %v5933 = vpack.c.b16 %v5157, %v5149
      %v5934 = vpack.c.b16 %v5158, %v5150
      %v5935 = vpack.c.b16 %v5159, %v5151
      %v5936 = vpack.c.b16 %v5160, %v5152
      %v5937 = vpack.c.b16 %v5161, %v5153
      %v5938 = vpack.c.b16 %v5162, %v5154
      %v5939 = vpack.c.b16 %v5171, %v5163
      %v5940 = vpack.c.b16 %v5172, %v5164
      %v5941 = vpack.c.b16 %v5173, %v5165
      %v5942 = vpack.c.b16 %v5174, %v5166
      %v5943 = vpack.c.b16 %v5175, %v5167
      %v5944 = vpack.c.b16 %v5176, %v5168
      %v5945 = vpack.c.b16 %v5177, %v5169
      %v5946 = vpack.c.b16 %v5178, %v5170
      %v5947 = vpack.c.b16 %v5187, %v5179
      %v5948 = vpack.c.b16 %v5188, %v5180
      %v5949 = vpack.c.b16 %v5189, %v5181
      %v5950 = vpack.c.b16 %v5190, %v5182
      %v5951 = vpack.c.b16 %v5191, %v5183
      %v5952 = vpack.c.b16 %v5192, %v5184
      %v5953 = vpack.c.b16 %v5193, %v5185
      %v5954 = vpack.c.b16 %v5194, %v5186
      %v5955 = vpack.c.b16 %v5203, %v5195
      %v5956 = vpack.c.b16 %v5204, %v5196
      %v5957 = vpack.c.b16 %v5205, %v5197
      %v5958 = vpack.c.b16 %v5206, %v5198
      %v5959 = vpack.c.b16 %v5207, %v5199
      %v5960 = vpack.c.b16 %v5208, %v5200
      %v5961 = vpack.c.b16 %v5209, %v5201
      %v5962 = vpack.c.b16 %v5210, %v5202
      %v5963 = vpack.c.b16 %v5219, %v5211
      %v5964 = vpack.c.b16 %v5220, %v5212
      %v5965 = vpack.c.b16 %v5221, %v5213
      %v5966 = vpack.c.b16 %v5222, %v5214
      %v5967 = vpack.c.b16 %v5223, %v5215
      %v5968 = vpack.c.b16 %v5224, %v5216
      %v5969 = vpack.c.b16 %v5225, %v5217
      %v5970 = vpack.c.b16 %v5226, %v5218
      %v5971 = vpack.c.b16 %v5235, %v5227
      %v5972 = vpack.c.b16 %v5236, %v5228
      %v5973 = vpack.c.b16 %v5237, %v5229
      %v5974 = vpack.c.b16 %v5238, %v5230
      %v5975 = vpack.c.b16 %v5239, %v5231
      %v5976 = vpack.c.b16 %v5240, %v5232
      %v5977 = vpack.c.b16 %v5241, %v5233
      %v5978 = vpack.c.b16 %v5242, %v5234
      %v5979 = vpack.c.b16 %v5251, %v5243
      %v5980 = vpack.c.b16 %v5252, %v5244
      %v5981 = vpack.c.b16 %v5253, %v5245
      %v5982 = vpack.c.b16 %v5254, %v5246
      %v5983 = vpack.c.b16 %v5255, %v5247
      %v5984 = vpack.c.b16 %v5256, %v5248
      %v5985 = vpack.c.b16 %v5257, %v5249
      %v5986 = vpack.c.b16 %v5258, %v5250
      %v5987 = vpack.c.b16 %v5267, %v5259
      %v5988 = vpack.c.b16 %v5268, %v5260
      %v5989 = vpack.c.b16 %v5269, %v5261
      %v5990 = vpack.c.b16 %v5270, %v5262
      %v5991 = vpack.c.b16 %v5271, %v5263
      %v5992 = vpack.c.b16 %v5272, %v5264
      %v5993 = vpack.c.b16 %v5273, %v5265
      %v5994 = vpack.c.b16 %v5274, %v5266
      %v5995 = vpack.c.b16 %v5283, %v5275
      %v5996 = vpack.c.b16 %v5284, %v5276
      %v5997 = vpack.c.b16 %v5285, %v5277
      %v5998 = vpack.c.b16 %v5286, %v5278
      %v5999 = vpack.c.b16 %v5287, %v5279
      %v6000 = vpack.c.b16 %v5288, %v5280
      %v6001 = vpack.c.b16 %v5289, %v5281
      %v6002 = vpack.c.b16 %v5290, %v5282
      %v6003 = vpack.c.b16 %v5299, %v5291
      %v6004 = vpack.c.b16 %v5300, %v5292
      %v6005 = vpack.c.b16 %v5301, %v5293
      %v6006 = vpack.c.b16 %v5302, %v5294
      %v6007 = vpack.c.b16 %v5303, %v5295
      %v6008 = vpack.c.b16 %v5304, %v5296
      %v6009 = vpack.c.b16 %v5305, %v5297
      %v6010 = vpack.c.b16 %v5306, %v5298
      %v6011 = vpack.c.b16 %v5315, %v5307
      %v6012 = vpack.c.b16 %v5316, %v5308
      %v6013 = vpack.c.b16 %v5317, %v5309
      %v6014 = vpack.c.b16 %v5318, %v5310
      %v6015 = vpack.c.b16 %v5319, %v5311
      %v6016 = vpack.c.b16 %v5320, %v5312
      %v6017 = vpack.c.b16 %v5321, %v5313
      %v6018 = vpack.c.b16 %v5322, %v5314
      %v6019 = vpack.c.b16 %v5331, %v5323
      %v6020 = vpack.c.b16 %v5332, %v5324
      %v6021 = vpack.c.b16 %v5333, %v5325
      %v6022 = vpack.c.b16 %v5334, %v5326
      %v6023 = vpack.c.b16 %v5335, %v5327
      %v6024 = vpack.c.b16 %v5336, %v5328
      %v6025 = vpack.c.b16 %v5337, %v5329
      %v6026 = vpack.c.b16 %v5338, %v5330
      %v6027 = vpack.c.b16 %v5347, %v5339
      %v6028 = vpack.c.b16 %v5348, %v5340
      %v6029 = vpack.c.b16 %v5349, %v5341
      %v6030 = vpack.c.b16 %v5350, %v5342
      %v6031 = vpack.c.b16 %v5351, %v5343
      %v6032 = vpack.c.b16 %v5352, %v5344
      %v6033 = vpack.c.b16 %v5353, %v5345
      %v6034 = vpack.c.b16 %v5354, %v5346
      %v6035 = vpack.c.b16 %v5363, %v5355
      %v6036 = vpack.c.b16 %v5364, %v5356
      %v6037 = vpack.c.b16 %v5365, %v5357
      %v6038 = vpack.c.b16 %v5366, %v5358
      %v6039 = vpack.c.b16 %v5367, %v5359
      %v6040 = vpack.c.b16 %v5368, %v5360
      %v6041 = vpack.c.b16 %v5369, %v5361
      %v6042 = vpack.c.b16 %v5370, %v5362
      %v6043 = vpack.c.b16 %v5379, %v5371
      %v6044 = vpack.c.b16 %v5380, %v5372
      %v6045 = vpack.c.b16 %v5381, %v5373
      %v6046 = vpack.c.b16 %v5382, %v5374
      %v6047 = vpack.c.b16 %v5383, %v5375
      %v6048 = vpack.c.b16 %v5384, %v5376
      %v6049 = vpack.c.b16 %v5385, %v5377
      %v6050 = vpack.c.b16 %v5386, %v5378
      %v6051 = vpack.c.b16 %v5395, %v5387
      %v6052 = vpack.c.b16 %v5396, %v5388
      %v6053 = vpack.c.b16 %v5397, %v5389
      %v6054 = vpack.c.b16 %v5398, %v5390
      %v6055 = vpack.c.b16 %v5399, %v5391
      %v6056 = vpack.c.b16 %v5400, %v5392
      %v6057 = vpack.c.b16 %v5401, %v5393
      %v6058 = vpack.c.b16 %v5402, %v5394
      %v6059 = vpack.c.b16 %v5411, %v5403
      %v6060 = vpack.c.b16 %v5412, %v5404
      %v6061 = vpack.c.b16 %v5413, %v5405
      %v6062 = vpack.c.b16 %v5414, %v5406
      %v6063 = vpack.c.b16 %v5415, %v5407
      %v6064 = vpack.c.b16 %v5416, %v5408
      %v6065 = vpack.c.b16 %v5417, %v5409
      %v6066 = vpack.c.b16 %v5418, %v5410
      %v6067 = vpack.c.b16 %v5427, %v5419
      %v6068 = vpack.c.b16 %v5428, %v5420
      %v6069 = vpack.c.b16 %v5429, %v5421
      %v6070 = vpack.c.b16 %v5430, %v5422
      %v6071 = vpack.c.b16 %v5431, %v5423
      %v6072 = vpack.c.b16 %v5432, %v5424
      %v6073 = vpack.c.b16 %v5433, %v5425
      %v6074 = vpack.c.b16 %v5434, %v5426
      %v6075 = vpack.c.b16 %v5443, %v5435
      %v6076 = vpack.c.b16 %v5444, %v5436
      %v6077 = vpack.c.b16 %v5445, %v5437
      %v6078 = vpack.c.b16 %v5446, %v5438
      %v6079 = vpack.c.b16 %v5447, %v5439
      %v6080 = vpack.c.b16 %v5448, %v5440
      %v6081 = vpack.c.b16 %v5449, %v5441
      %v6082 = vpack.c.b16 %v5450, %v5442
      %v6083 = vpack.c.b16 %v5459, %v5451
      %v6084 = vpack.c.b16 %v5460, %v5452
      %v6085 = vpack.c.b16 %v5461, %v5453
      %v6086 = vpack.c.b16 %v5462, %v5454
      %v6087 = vpack.c.b16 %v5463, %v5455
      %v6088 = vpack.c.b16 %v5464, %v5456
      %v6089 = vpack.c.b16 %v5465, %v5457
      %v6090 = vpack.c.b16 %v5466, %v5458
      %v6091 = vpack.c.b16 %v5475, %v5467
      %v6092 = vpack.c.b16 %v5476, %v5468
      %v6093 = vpack.c.b16 %v5477, %v5469
      %v6094 = vpack.c.b16 %v5478, %v5470
      %v6095 = vpack.c.b16 %v5479, %v5471
      %v6096 = vpack.c.b16 %v5480, %v5472
      %v6097 = vpack.c.b16 %v5481, %v5473
      %v6098 = vpack.c.b16 %v5482, %v5474
      %v6099 = vpack.c.b16 %v5491, %v5483
      %v6100 = vpack.c.b16 %v5492, %v5484
      %v6101 = vpack.c.b16 %v5493, %v5485
      %v6102 = vpack.c.b16 %v5494, %v5486
      %v6103 = vpack.c.b16 %v5495, %v5487
      %v6104 = vpack.c.b16 %v5496, %v5488
      %v6105 = vpack.c.b16 %v5497, %v5489
      %v6106 = vpack.c.b16 %v5498, %v5490
      %v6107 = vpack.c.b16 %v5507, %v5499
      %v6108 = vpack.c.b16 %v5508, %v5500
      %v6109 = vpack.c.b16 %v5509, %v5501
      %v6110 = vpack.c.b16 %v5510, %v5502
      %v6111 = vpack.c.b16 %v5511, %v5503
      %v6112 = vpack.c.b16 %v5512, %v5504
      %v6113 = vpack.c.b16 %v5513, %v5505
      %v6114 = vpack.c.b16 %v5514, %v5506
      %v6115 = vpack.c.b16 %v5523, %v5515
      %v6116 = vpack.c.b16 %v5524, %v5516
      %v6117 = vpack.c.b16 %v5525, %v5517
      %v6118 = vpack.c.b16 %v5526, %v5518
      %v6119 = vpack.c.b16 %v5527, %v5519
      %v6120 = vpack.c.b16 %v5528, %v5520
      %v6121 = vpack.c.b16 %v5529, %v5521
      %v6122 = vpack.c.b16 %v5530, %v5522
      %v6123 = vpack.c.b16 %v5539, %v5531
      %v6124 = vpack.c.b16 %v5540, %v5532
      %v6125 = vpack.c.b16 %v5541, %v5533
      %v6126 = vpack.c.b16 %v5542, %v5534
      %v6127 = vpack.c.b16 %v5543, %v5535
      %v6128 = vpack.c.b16 %v5544, %v5536
      %v6129 = vpack.c.b16 %v5545, %v5537
      %v6130 = vpack.c.b16 %v5546, %v5538
      %v6131 = vpack.c.b16 %v5555, %v5547
      %v6132 = vpack.c.b16 %v5556, %v5548
      %v6133 = vpack.c.b16 %v5557, %v5549
      %v6134 = vpack.c.b16 %v5558, %v5550
      %v6135 = vpack.c.b16 %v5559, %v5551
      %v6136 = vpack.c.b16 %v5560, %v5552
      %v6137 = vpack.c.b16 %v5561, %v5553
      %v6138 = vpack.c.b16 %v5562, %v5554
      %v6139 = vpack.c.b16 %v5571, %v5563
      %v6140 = vpack.c.b16 %v5572, %v5564
      %v6141 = vpack.c.b16 %v5573, %v5565
      %v6142 = vpack.c.b16 %v5574, %v5566
      %v6143 = vpack.c.b16 %v5575, %v5567
      %v6144 = vpack.c.b16 %v5576, %v5568
      %v6145 = vpack.c.b16 %v5577, %v5569
      %v6146 = vpack.c.b16 %v5578, %v5570
      %v6147 = vpack.c.b16 %v5587, %v5579
      %v6148 = vpack.c.b16 %v5588, %v5580
      %v6149 = vpack.c.b16 %v5589, %v5581
      %v6150 = vpack.c.b16 %v5590, %v5582
      %v6151 = vpack.c.b16 %v5591, %v5583
      %v6152 = vpack.c.b16 %v5592, %v5584
      %v6153 = vpack.c.b16 %v5593, %v5585
      %v6154 = vpack.c.b16 %v5594, %v5586
      %v6155 = vpack.c.b16 %v5603, %v5595
      %v6156 = vpack.c.b16 %v5604, %v5596
      %v6157 = vpack.c.b16 %v5605, %v5597
      %v6158 = vpack.c.b16 %v5606, %v5598
      %v6159 = vpack.c.b16 %v5607, %v5599
      %v6160 = vpack.c.b16 %v5608, %v5600
      %v6161 = vpack.c.b16 %v5609, %v5601
      %v6162 = vpack.c.b16 %v5610, %v5602
      %v6163 = vpack.c.b16 %v5619, %v5611
      %v6164 = vpack.c.b16 %v5620, %v5612
      %v6165 = vpack.c.b16 %v5621, %v5613
      %v6166 = vpack.c.b16 %v5622, %v5614
      %v6167 = vpack.c.b16 %v5623, %v5615
      %v6168 = vpack.c.b16 %v5624, %v5616
      %v6169 = vpack.c.b16 %v5625, %v5617
      %v6170 = vpack.c.b16 %v5626, %v5618
      %v6171 = vpack.c.b16 %v5635, %v5627
      %v6172 = vpack.c.b16 %v5636, %v5628
      %v6173 = vpack.c.b16 %v5637, %v5629
      %v6174 = vpack.c.b16 %v5638, %v5630
      %v6175 = vpack.c.b16 %v5639, %v5631
      %v6176 = vpack.c.b16 %v5640, %v5632
      %v6177 = vpack.c.b16 %v5641, %v5633
      %v6178 = vpack.c.b16 %v5642, %v5634
      %v6179 = vpack.c.b16 %v5651, %v5643
      %v6180 = vpack.c.b16 %v5652, %v5644
      %v6181 = vpack.c.b16 %v5653, %v5645
      %v6182 = vpack.c.b16 %v5654, %v5646
      %v6183 = vpack.c.b16 %v5655, %v5647
      %v6184 = vpack.c.b16 %v5656, %v5648
      %v6185 = vpack.c.b16 %v5657, %v5649
      %v6186 = vpack.c.b16 %v5658, %v5650
      %v6187 = vpack.c.b16 %v5667, %v5659
      %v6188 = vpack.c.b16 %v5668, %v5660
      %v6189 = vpack.c.b16 %v5669, %v5661
      %v6190 = vpack.c.b16 %v5670, %v5662
      %v6191 = vpack.c.b16 %v5671, %v5663
      %v6192 = vpack.c.b16 %v5672, %v5664
      %v6193 = vpack.c.b16 %v5673, %v5665
      %v6194 = vpack.c.b16 %v5674, %v5666
      %v6195 = vpack.c.b16 %v5683, %v5675
      %v6196 = vpack.c.b16 %v5684, %v5676
      %v6197 = vpack.c.b16 %v5685, %v5677
      %v6198 = vpack.c.b16 %v5686, %v5678
      %v6199 = vpack.c.b16 %v5687, %v5679
      %v6200 = vpack.c.b16 %v5688, %v5680
      %v6201 = vpack.c.b16 %v5689, %v5681
      %v6202 = vpack.c.b16 %v5690, %v5682
      %6715 = vmatprep.subr.bf16.mxu0 %v5692
      %6716 = vmatpush1.bf16.msra.mxu0 %v5691
      %6717 = vmatprep.subr.bf16.mxu0 %v5700
      %6718 = vmatpush1.bf16.msra.mxu0 %v5699
      %6719 = vmatprep.subr.bf16.mxu0 %v5708
      %6720 = vmatpush1.bf16.msra.mxu0 %v5707
      %6721 = vmatprep.subr.bf16.mxu0 %v5716
      %6722 = vmatpush1.bf16.msra.mxu0 %v5715
      %6723 = vmatprep.subr.bf16.mxu0 %v5724
      %6724 = vmatpush1.bf16.msra.mxu0 %v5723
      %6725 = vmatprep.subr.bf16.mxu0 %v5732
      %6726 = vmatpush1.bf16.msra.mxu0 %v5731
      %6727 = vmatprep.subr.bf16.mxu0 %v5740
      %6728 = vmatpush1.bf16.msra.mxu0 %v5739
      %6729 = vmatprep.subr.bf16.mxu0 %v5748
      %6730 = vmatpush1.bf16.msra.mxu0 %v5747
      %6731 = vmatprep.subr.bf16.mxu0 %v5756
      %6732 = vmatpush1.bf16.msra.mxu0 %v5755
      %6733 = vmatprep.subr.bf16.mxu0 %v5764
      %6734 = vmatpush1.bf16.msra.mxu0 %v5763
      %6735 = vmatprep.subr.bf16.mxu0 %v5772
      %6736 = vmatpush1.bf16.msra.mxu0 %v5771
      %6737 = vmatprep.subr.bf16.mxu0 %v5780
      %6738 = vmatpush1.bf16.msra.mxu0 %v5779
      %6739 = vmatprep.subr.bf16.mxu0 %v5788
      %6740 = vmatpush1.bf16.msra.mxu0 %v5787
      %6741 = vmatprep.subr.bf16.mxu0 %v5796
      %6742 = vmatpush1.bf16.msra.mxu0 %v5795
      %6743 = vmatprep.subr.bf16.mxu0 %v5804
      %6744 = vmatpush1.bf16.msra.mxu0 %v5803
      %6745 = vmatprep.subr.bf16.mxu0 %v5812
      %6746 = vmatpush1.bf16.msra.mxu0 %v5811
      %6747 = vmatprep.mubr.bf16.mxu0 %v3594
      %6748 = vmatmul.mubr.bf16.gmra.mrb[0].mxu0 %v3593
      %v6749 = vpop.f32.mrb[0].mxu0
      %v6750 = vadd.f32 %v4118, %v6749
      %v6751 = vpop.f32.mrb[0].mxu0
      %v6752 = vadd.f32 %v4122, %v6751
      %v6753 = vpop.f32.mrb[0].mxu0
      %v6754 = vpop.f32.mrb[0].mxu0
      %6755 = vdwg.mxu0
      %6756 = vmatprep.subr.bf16.mxu0 %v5820
      %6757 = vmatpush1.bf16.msra.mxu0 %v5819
      %6758 = vmatprep.subr.bf16.mxu0 %v5828
      %6759 = vmatpush1.bf16.msra.mxu0 %v5827
      %6760 = vmatprep.subr.bf16.mxu0 %v5836
      %6761 = vmatpush1.bf16.msra.mxu0 %v5835
      %6762 = vmatprep.subr.bf16.mxu0 %v5844
      %6763 = vmatpush1.bf16.msra.mxu0 %v5843
      %6764 = vmatprep.subr.bf16.mxu0 %v5852
      %6765 = vmatpush1.bf16.msra.mxu0 %v5851
      %6766 = vmatprep.subr.bf16.mxu0 %v5860
      %6767 = vmatpush1.bf16.msra.mxu0 %v5859
      %6768 = vmatprep.subr.bf16.mxu0 %v5868
      %6769 = vmatpush1.bf16.msra.mxu0 %v5867
      %6770 = vmatprep.subr.bf16.mxu0 %v5876
      %6771 = vmatpush1.bf16.msra.mxu0 %v5875
      %6772 = vmatprep.subr.bf16.mxu0 %v5884
      %6773 = vmatpush1.bf16.msra.mxu0 %v5883
      %6774 = vmatprep.subr.bf16.mxu0 %v5892
      %6775 = vmatpush1.bf16.msra.mxu0 %v5891
      %6776 = vmatprep.subr.bf16.mxu0 %v5900
      %6777 = vmatpush1.bf16.msra.mxu0 %v5899
      %6778 = vmatprep.subr.bf16.mxu0 %v5908
      %6779 = vmatpush1.bf16.msra.mxu0 %v5907
      %6780 = vmatprep.subr.bf16.mxu0 %v5916
      %6781 = vmatpush1.bf16.msra.mxu0 %v5915
      %6782 = vmatprep.subr.bf16.mxu0 %v5924
      %6783 = vmatpush1.bf16.msra.mxu0 %v5923
      %6784 = vmatprep.subr.bf16.mxu0 %v5932
      %6785 = vmatpush1.bf16.msra.mxu0 %v5931
      %6786 = vmatprep.subr.bf16.mxu0 %v5940
      %6787 = vmatpush1.bf16.msra.mxu0 %v5939
      %6788 = vmatprep.mubr.bf16.mxu0 %v3596
      %6789 = vmatmul.mubr.bf16.gmra.mrb[0].mxu0 %v3595
      %v6790 = vpop.f32.mrb[0].mxu0
      %v6791 = vadd.f32 %v6750, %v6790
      %v6792 = vpop.f32.mrb[0].mxu0
      %v6793 = vadd.f32 %v6752, %v6792
      %v6794 = vpop.f32.mrb[0].mxu0
      %v6795 = vpop.f32.mrb[0].mxu0
      %6796 = vdwg.mxu0
      %6797 = vmatprep.subr.bf16.mxu0 %v5948
      %6798 = vmatpush1.bf16.msra.mxu0 %v5947
      %6799 = vmatprep.subr.bf16.mxu0 %v5956
      %6800 = vmatpush1.bf16.msra.mxu0 %v5955
      %6801 = vmatprep.subr.bf16.mxu0 %v5964
      %6802 = vmatpush1.bf16.msra.mxu0 %v5963
      %6803 = vmatprep.subr.bf16.mxu0 %v5972
      %6804 = vmatpush1.bf16.msra.mxu0 %v5971
      %6805 = vmatprep.subr.bf16.mxu0 %v5980
      %6806 = vmatpush1.bf16.msra.mxu0 %v5979
      %6807 = vmatprep.subr.bf16.mxu0 %v5988
      %6808 = vmatpush1.bf16.msra.mxu0 %v5987
      %6809 = vmatprep.subr.bf16.mxu0 %v5996
      %6810 = vmatpush1.bf16.msra.mxu0 %v5995
      %6811 = vmatprep.subr.bf16.mxu0 %v6004
      %6812 = vmatpush1.bf16.msra.mxu0 %v6003
      %6813 = vmatprep.subr.bf16.mxu0 %v6012
      %6814 = vmatpush1.bf16.msra.mxu0 %v6011
      %6815 = vmatprep.subr.bf16.mxu0 %v6020
      %6816 = vmatpush1.bf16.msra.mxu0 %v6019
      %6817 = vmatprep.subr.bf16.mxu0 %v6028
      %6818 = vmatpush1.bf16.msra.mxu0 %v6027
      %6819 = vmatprep.subr.bf16.mxu0 %v6036
      %6820 = vmatpush1.bf16.msra.mxu0 %v6035
      %6821 = vmatprep.subr.bf16.mxu0 %v6044
      %6822 = vmatpush1.bf16.msra.mxu0 %v6043
      %6823 = vmatprep.subr.bf16.mxu0 %v6052
      %6824 = vmatpush1.bf16.msra.mxu0 %v6051
      %6825 = vmatprep.subr.bf16.mxu0 %v6060
      %6826 = vmatpush1.bf16.msra.mxu0 %v6059
      %6827 = vmatprep.subr.bf16.mxu0 %v6068
      %6828 = vmatpush1.bf16.msra.mxu0 %v6067
      %6829 = vmatprep.mubr.bf16.mxu0 %v3598
      %6830 = vmatmul.mubr.bf16.gmra.mrb[0].mxu0 %v3597
      %v6831 = vpop.f32.mrb[0].mxu0
      %v6832 = vadd.f32 %v6791, %v6831
      %v6833 = vpop.f32.mrb[0].mxu0
      %v6834 = vadd.f32 %v6793, %v6833
      %v6835 = vpop.f32.mrb[0].mxu0
      %v6836 = vpop.f32.mrb[0].mxu0
      %6837 = vdwg.mxu0
      %6838 = vmatprep.subr.bf16.mxu0 %v6076
      %6839 = vmatpush1.bf16.msra.mxu0 %v6075
      %6840 = vmatprep.subr.bf16.mxu0 %v6084
      %6841 = vmatpush1.bf16.msra.mxu0 %v6083
      %6842 = vmatprep.subr.bf16.mxu0 %v6092
      %6843 = vmatpush1.bf16.msra.mxu0 %v6091
      %6844 = vmatprep.subr.bf16.mxu0 %v6100
      %6845 = vmatpush1.bf16.msra.mxu0 %v6099
      %6846 = vmatprep.subr.bf16.mxu0 %v6108
      %6847 = vmatpush1.bf16.msra.mxu0 %v6107
      %6848 = vmatprep.subr.bf16.mxu0 %v6116
      %6849 = vmatpush1.bf16.msra.mxu0 %v6115
      %6850 = vmatprep.subr.bf16.mxu0 %v6124
      %6851 = vmatpush1.bf16.msra.mxu0 %v6123
      %6852 = vmatprep.subr.bf16.mxu0 %v6132
      %6853 = vmatpush1.bf16.msra.mxu0 %v6131
      %6854 = vmatprep.subr.bf16.mxu0 %v6140
      %6855 = vmatpush1.bf16.msra.mxu0 %v6139
      %6856 = vmatprep.subr.bf16.mxu0 %v6148
      %6857 = vmatpush1.bf16.msra.mxu0 %v6147
      %6858 = vmatprep.subr.bf16.mxu0 %v6156
      %6859 = vmatpush1.bf16.msra.mxu0 %v6155
      %6860 = vmatprep.subr.bf16.mxu0 %v6164
      %6861 = vmatpush1.bf16.msra.mxu0 %v6163
      %6862 = vmatprep.subr.bf16.mxu0 %v6172
      %6863 = vmatpush1.bf16.msra.mxu0 %v6171
      %6864 = vmatprep.subr.bf16.mxu0 %v6180
      %6865 = vmatpush1.bf16.msra.mxu0 %v6179
      %6866 = vmatprep.subr.bf16.mxu0 %v6188
      %6867 = vmatpush1.bf16.msra.mxu0 %v6187
      %6868 = vmatprep.subr.bf16.mxu0 %v6196
      %6869 = vmatpush1.bf16.msra.mxu0 %v6195
      %6870 = vmatprep.mubr.bf16.mxu0 %v3600
      %6871 = vmatmul.mubr.bf16.gmra.mrb[0].mxu0 %v3599
      %v6872 = vpop.f32.mrb[0].mxu0
      %v6873 = vadd.f32 %v6832, %v6872
      %v6874 = vpop.f32.mrb[0].mxu0
      %v6875 = vadd.f32 %v6834, %v6874
      %v6876 = vpop.f32.mrb[0].mxu0
      %v6877 = vpop.f32.mrb[0].mxu0
      %6878 = vdwg.mxu0
      %6879 = vmatprep.subr.bf16.mxu0 %v5694
      %6880 = vmatpush1.bf16.msra.mxu0 %v5693
      %6881 = vmatprep.subr.bf16.mxu0 %v5702
      %6882 = vmatpush1.bf16.msra.mxu0 %v5701
      %6883 = vmatprep.subr.bf16.mxu0 %v5710
      %6884 = vmatpush1.bf16.msra.mxu0 %v5709
      %6885 = vmatprep.subr.bf16.mxu0 %v5718
      %6886 = vmatpush1.bf16.msra.mxu0 %v5717
      %6887 = vmatprep.subr.bf16.mxu0 %v5726
      %6888 = vmatpush1.bf16.msra.mxu0 %v5725
      %6889 = vmatprep.subr.bf16.mxu0 %v5734
      %6890 = vmatpush1.bf16.msra.mxu0 %v5733
      %6891 = vmatprep.subr.bf16.mxu0 %v5742
      %6892 = vmatpush1.bf16.msra.mxu0 %v5741
      %6893 = vmatprep.subr.bf16.mxu0 %v5750
      %6894 = vmatpush1.bf16.msra.mxu0 %v5749
      %6895 = vmatprep.subr.bf16.mxu0 %v5758
      %6896 = vmatpush1.bf16.msra.mxu0 %v5757
      %6897 = vmatprep.subr.bf16.mxu0 %v5766
      %6898 = vmatpush1.bf16.msra.mxu0 %v5765
      %6899 = vmatprep.subr.bf16.mxu0 %v5774
      %6900 = vmatpush1.bf16.msra.mxu0 %v5773
      %6901 = vmatprep.subr.bf16.mxu0 %v5782
      %6902 = vmatpush1.bf16.msra.mxu0 %v5781
      %6903 = vmatprep.subr.bf16.mxu0 %v5790
      %6904 = vmatpush1.bf16.msra.mxu0 %v5789
      %6905 = vmatprep.subr.bf16.mxu0 %v5798
      %6906 = vmatpush1.bf16.msra.mxu0 %v5797
      %6907 = vmatprep.subr.bf16.mxu0 %v5806
      %6908 = vmatpush1.bf16.msra.mxu0 %v5805
      %6909 = vmatprep.subr.bf16.mxu0 %v5814
      %6910 = vmatpush1.bf16.msra.mxu0 %v5813
      %6911 = vmatprep.mubr.bf16.mxu0 %v3594
      %6912 = vmatmul.mubr.bf16.gmra.mrb[0].mxu0 %v3593
      %v6913 = vpop.f32.mrb[0].mxu0
      %v6914 = vadd.f32 %v4126, %v6913
      %v6915 = vpop.f32.mrb[0].mxu0
      %v6916 = vadd.f32 %v4130, %v6915
      %v6917 = vpop.f32.mrb[0].mxu0
      %v6918 = vpop.f32.mrb[0].mxu0
      %6919 = vdwg.mxu0
      %6920 = vmatprep.subr.bf16.mxu0 %v5822
      %6921 = vmatpush1.bf16.msra.mxu0 %v5821
      %6922 = vmatprep.subr.bf16.mxu0 %v5830
      %6923 = vmatpush1.bf16.msra.mxu0 %v5829
      %6924 = vmatprep.subr.bf16.mxu0 %v5838
      %6925 = vmatpush1.bf16.msra.mxu0 %v5837
      %6926 = vmatprep.subr.bf16.mxu0 %v5846
      %6927 = vmatpush1.bf16.msra.mxu0 %v5845
      %6928 = vmatprep.subr.bf16.mxu0 %v5854
      %6929 = vmatpush1.bf16.msra.mxu0 %v5853
      %6930 = vmatprep.subr.bf16.mxu0 %v5862
      %6931 = vmatpush1.bf16.msra.mxu0 %v5861
      %6932 = vmatprep.subr.bf16.mxu0 %v5870
      %6933 = vmatpush1.bf16.msra.mxu0 %v5869
      %6934 = vmatprep.subr.bf16.mxu0 %v5878
      %6935 = vmatpush1.bf16.msra.mxu0 %v5877
      %6936 = vmatprep.subr.bf16.mxu0 %v5886
      %6937 = vmatpush1.bf16.msra.mxu0 %v5885
      %6938 = vmatprep.subr.bf16.mxu0 %v5894
      %6939 = vmatpush1.bf16.msra.mxu0 %v5893
      %6940 = vmatprep.subr.bf16.mxu0 %v5902
      %6941 = vmatpush1.bf16.msra.mxu0 %v5901
      %6942 = vmatprep.subr.bf16.mxu0 %v5910
      %6943 = vmatpush1.bf16.msra.mxu0 %v5909
      %6944 = vmatprep.subr.bf16.mxu0 %v5918
      %6945 = vmatpush1.bf16.msra.mxu0 %v5917
      %6946 = vmatprep.subr.bf16.mxu0 %v5926
      %6947 = vmatpush1.bf16.msra.mxu0 %v5925
      %6948 = vmatprep.subr.bf16.mxu0 %v5934
      %6949 = vmatpush1.bf16.msra.mxu0 %v5933
      %6950 = vmatprep.subr.bf16.mxu0 %v5942
      %6951 = vmatpush1.bf16.msra.mxu0 %v5941
      %6952 = vmatprep.mubr.bf16.mxu0 %v3596
      %6953 = vmatmul.mubr.bf16.gmra.mrb[0].mxu0 %v3595
      %v6954 = vpop.f32.mrb[0].mxu0
      %v6955 = vadd.f32 %v6914, %v6954
      %v6956 = vpop.f32.mrb[0].mxu0
      %v6957 = vadd.f32 %v6916, %v6956
      %v6958 = vpop.f32.mrb[0].mxu0
      %v6959 = vpop.f32.mrb[0].mxu0
      %6960 = vdwg.mxu0
      %6961 = vmatprep.subr.bf16.mxu0 %v5950
      %6962 = vmatpush1.bf16.msra.mxu0 %v5949
      %6963 = vmatprep.subr.bf16.mxu0 %v5958
      %6964 = vmatpush1.bf16.msra.mxu0 %v5957
      %6965 = vmatprep.subr.bf16.mxu0 %v5966
      %6966 = vmatpush1.bf16.msra.mxu0 %v5965
      %6967 = vmatprep.subr.bf16.mxu0 %v5974
      %6968 = vmatpush1.bf16.msra.mxu0 %v5973
      %6969 = vmatprep.subr.bf16.mxu0 %v5982
      %6970 = vmatpush1.bf16.msra.mxu0 %v5981
      %6971 = vmatprep.subr.bf16.mxu0 %v5990
      %6972 = vmatpush1.bf16.msra.mxu0 %v5989
      %6973 = vmatprep.subr.bf16.mxu0 %v5998
      %6974 = vmatpush1.bf16.msra.mxu0 %v5997
      %6975 = vmatprep.subr.bf16.mxu0 %v6006
      %6976 = vmatpush1.bf16.msra.mxu0 %v6005
      %6977 = vmatprep.subr.bf16.mxu0 %v6014
      %6978 = vmatpush1.bf16.msra.mxu0 %v6013
      %6979 = vmatprep.subr.bf16.mxu0 %v6022
      %6980 = vmatpush1.bf16.msra.mxu0 %v6021
      %6981 = vmatprep.subr.bf16.mxu0 %v6030
      %6982 = vmatpush1.bf16.msra.mxu0 %v6029
      %6983 = vmatprep.subr.bf16.mxu0 %v6038
      %6984 = vmatpush1.bf16.msra.mxu0 %v6037
      %6985 = vmatprep.subr.bf16.mxu0 %v6046
      %6986 = vmatpush1.bf16.msra.mxu0 %v6045
      %6987 = vmatprep.subr.bf16.mxu0 %v6054
      %6988 = vmatpush1.bf16.msra.mxu0 %v6053
      %6989 = vmatprep.subr.bf16.mxu0 %v6062
      %6990 = vmatpush1.bf16.msra.mxu0 %v6061
      %6991 = vmatprep.subr.bf16.mxu0 %v6070
      %6992 = vmatpush1.bf16.msra.mxu0 %v6069
      %6993 = vmatprep.mubr.bf16.mxu0 %v3598
      %6994 = vmatmul.mubr.bf16.gmra.mrb[0].mxu0 %v3597
      %v6995 = vpop.f32.mrb[0].mxu0
      %v6996 = vadd.f32 %v6955, %v6995
      %v6997 = vpop.f32.mrb[0].mxu0
      %v6998 = vadd.f32 %v6957, %v6997
      %v6999 = vpop.f32.mrb[0].mxu0
      %v7000 = vpop.f32.mrb[0].mxu0
      %7001 = vdwg.mxu0
      %7002 = vmatprep.subr.bf16.mxu0 %v6078
      %7003 = vmatpush1.bf16.msra.mxu0 %v6077
      %7004 = vmatprep.subr.bf16.mxu0 %v6086
      %7005 = vmatpush1.bf16.msra.mxu0 %v6085
      %7006 = vmatprep.subr.bf16.mxu0 %v6094
      %7007 = vmatpush1.bf16.msra.mxu0 %v6093
      %7008 = vmatprep.subr.bf16.mxu0 %v6102
      %7009 = vmatpush1.bf16.msra.mxu0 %v6101
      %7010 = vmatprep.subr.bf16.mxu0 %v6110
      %7011 = vmatpush1.bf16.msra.mxu0 %v6109
      %7012 = vmatprep.subr.bf16.mxu0 %v6118
      %7013 = vmatpush1.bf16.msra.mxu0 %v6117
      %7014 = vmatprep.subr.bf16.mxu0 %v6126
      %7015 = vmatpush1.bf16.msra.mxu0 %v6125
      %7016 = vmatprep.subr.bf16.mxu0 %v6134
      %7017 = vmatpush1.bf16.msra.mxu0 %v6133
      %7018 = vmatprep.subr.bf16.mxu0 %v6142
      %7019 = vmatpush1.bf16.msra.mxu0 %v6141
      %7020 = vmatprep.subr.bf16.mxu0 %v6150
      %7021 = vmatpush1.bf16.msra.mxu0 %v6149
      %7022 = vmatprep.subr.bf16.mxu0 %v6158
      %7023 = vmatpush1.bf16.msra.mxu0 %v6157
      %7024 = vmatprep.subr.bf16.mxu0 %v6166
      %7025 = vmatpush1.bf16.msra.mxu0 %v6165
      %7026 = vmatprep.subr.bf16.mxu0 %v6174
      %7027 = vmatpush1.bf16.msra.mxu0 %v6173
      %7028 = vmatprep.subr.bf16.mxu0 %v6182
      %7029 = vmatpush1.bf16.msra.mxu0 %v6181
      %7030 = vmatprep.subr.bf16.mxu0 %v6190
      %7031 = vmatpush1.bf16.msra.mxu0 %v6189
      %7032 = vmatprep.subr.bf16.mxu0 %v6198
      %7033 = vmatpush1.bf16.msra.mxu0 %v6197
      %7034 = vmatprep.mubr.bf16.mxu0 %v3600
      %7035 = vmatmul.mubr.bf16.gmra.mrb[0].mxu0 %v3599
      %v7036 = vpop.f32.mrb[0].mxu0
      %v7037 = vadd.f32 %v6996, %v7036
      %v7038 = vpop.f32.mrb[0].mxu0
      %v7039 = vadd.f32 %v6998, %v7038
      %v7040 = vpop.f32.mrb[0].mxu0
      %v7041 = vpop.f32.mrb[0].mxu0
      %7042 = vdwg.mxu0
      %7043 = vmatprep.subr.bf16.mxu0 %v5696
      %7044 = vmatpush1.bf16.msra.mxu0 %v5695
      %7045 = vmatprep.subr.bf16.mxu0 %v5704
      %7046 = vmatpush1.bf16.msra.mxu0 %v5703
      %7047 = vmatprep.subr.bf16.mxu0 %v5712
      %7048 = vmatpush1.bf16.msra.mxu0 %v5711
      %7049 = vmatprep.subr.bf16.mxu0 %v5720
      %7050 = vmatpush1.bf16.msra.mxu0 %v5719
      %7051 = vmatprep.subr.bf16.mxu0 %v5728
      %7052 = vmatpush1.bf16.msra.mxu0 %v5727
      %7053 = vmatprep.subr.bf16.mxu0 %v5736
      %7054 = vmatpush1.bf16.msra.mxu0 %v5735
      %7055 = vmatprep.subr.bf16.mxu0 %v5744
      %7056 = vmatpush1.bf16.msra.mxu0 %v5743
      %7057 = vmatprep.subr.bf16.mxu0 %v5752
      %7058 = vmatpush1.bf16.msra.mxu0 %v5751
      %7059 = vmatprep.subr.bf16.mxu0 %v5760
      %7060 = vmatpush1.bf16.msra.mxu0 %v5759
      %7061 = vmatprep.subr.bf16.mxu0 %v5768
      %7062 = vmatpush1.bf16.msra.mxu0 %v5767
      %7063 = vmatprep.subr.bf16.mxu0 %v5776
      %7064 = vmatpush1.bf16.msra.mxu0 %v5775
      %7065 = vmatprep.subr.bf16.mxu0 %v5784
      %7066 = vmatpush1.bf16.msra.mxu0 %v5783
      %7067 = vmatprep.subr.bf16.mxu0 %v5792
      %7068 = vmatpush1.bf16.msra.mxu0 %v5791
      %7069 = vmatprep.subr.bf16.mxu0 %v5800
      %7070 = vmatpush1.bf16.msra.mxu0 %v5799
      %7071 = vmatprep.subr.bf16.mxu0 %v5808
      %7072 = vmatpush1.bf16.msra.mxu0 %v5807
      %7073 = vmatprep.subr.bf16.mxu0 %v5816
      %7074 = vmatpush1.bf16.msra.mxu0 %v5815
      %7075 = vmatprep.mubr.bf16.mxu0 %v3594
      %7076 = vmatmul.mubr.bf16.gmra.mrb[0].mxu0 %v3593
      %v7077 = vpop.f32.mrb[0].mxu0
      %v7078 = vadd.f32 %v4134, %v7077
      %v7079 = vpop.f32.mrb[0].mxu0
      %v7080 = vadd.f32 %v4138, %v7079
      %v7081 = vpop.f32.mrb[0].mxu0
      %v7082 = vpop.f32.mrb[0].mxu0
      %7083 = vdwg.mxu0
      %7084 = vmatprep.subr.bf16.mxu0 %v5824
      %7085 = vmatpush1.bf16.msra.mxu0 %v5823
      %7086 = vmatprep.subr.bf16.mxu0 %v5832
      %7087 = vmatpush1.bf16.msra.mxu0 %v5831
      %7088 = vmatprep.subr.bf16.mxu0 %v5840
      %7089 = vmatpush1.bf16.msra.mxu0 %v5839
      %7090 = vmatprep.subr.bf16.mxu0 %v5848
      %7091 = vmatpush1.bf16.msra.mxu0 %v5847
      %7092 = vmatprep.subr.bf16.mxu0 %v5856
      %7093 = vmatpush1.bf16.msra.mxu0 %v5855
      %7094 = vmatprep.subr.bf16.mxu0 %v5864
      %7095 = vmatpush1.bf16.msra.mxu0 %v5863
      %7096 = vmatprep.subr.bf16.mxu0 %v5872
      %7097 = vmatpush1.bf16.msra.mxu0 %v5871
      %7098 = vmatprep.subr.bf16.mxu0 %v5880
      %7099 = vmatpush1.bf16.msra.mxu0 %v5879
      %7100 = vmatprep.subr.bf16.mxu0 %v5888
      %7101 = vmatpush1.bf16.msra.mxu0 %v5887
      %7102 = vmatprep.subr.bf16.mxu0 %v5896
      %7103 = vmatpush1.bf16.msra.mxu0 %v5895
      %7104 = vmatprep.subr.bf16.mxu0 %v5904
      %7105 = vmatpush1.bf16.msra.mxu0 %v5903
      %7106 = vmatprep.subr.bf16.mxu0 %v5912
      %7107 = vmatpush1.bf16.msra.mxu0 %v5911
      %7108 = vmatprep.subr.bf16.mxu0 %v5920
      %7109 = vmatpush1.bf16.msra.mxu0 %v5919
      %7110 = vmatprep.subr.bf16.mxu0 %v5928
      %7111 = vmatpush1.bf16.msra.mxu0 %v5927
      %7112 = vmatprep.subr.bf16.mxu0 %v5936
      %7113 = vmatpush1.bf16.msra.mxu0 %v5935
      %7114 = vmatprep.subr.bf16.mxu0 %v5944
      %7115 = vmatpush1.bf16.msra.mxu0 %v5943
      %7116 = vmatprep.mubr.bf16.mxu0 %v3596
      %7117 = vmatmul.mubr.bf16.gmra.mrb[0].mxu0 %v3595
      %v7118 = vpop.f32.mrb[0].mxu0
      %v7119 = vadd.f32 %v7078, %v7118
      %v7120 = vpop.f32.mrb[0].mxu0
      %v7121 = vadd.f32 %v7080, %v7120
      %v7122 = vpop.f32.mrb[0].mxu0
      %v7123 = vpop.f32.mrb[0].mxu0
      %7124 = vdwg.mxu0
      %7125 = vmatprep.subr.bf16.mxu0 %v5952
      %7126 = vmatpush1.bf16.msra.mxu0 %v5951
      %7127 = vmatprep.subr.bf16.mxu0 %v5960
      %7128 = vmatpush1.bf16.msra.mxu0 %v5959
      %7129 = vmatprep.subr.bf16.mxu0 %v5968
      %7130 = vmatpush1.bf16.msra.mxu0 %v5967
      %7131 = vmatprep.subr.bf16.mxu0 %v5976
      %7132 = vmatpush1.bf16.msra.mxu0 %v5975
      %7133 = vmatprep.subr.bf16.mxu0 %v5984
      %7134 = vmatpush1.bf16.msra.mxu0 %v5983
      %7135 = vmatprep.subr.bf16.mxu0 %v5992
      %7136 = vmatpush1.bf16.msra.mxu0 %v5991
      %7137 = vmatprep.subr.bf16.mxu0 %v6000
      %7138 = vmatpush1.bf16.msra.mxu0 %v5999
      %7139 = vmatprep.subr.bf16.mxu0 %v6008
      %7140 = vmatpush1.bf16.msra.mxu0 %v6007
      %7141 = vmatprep.subr.bf16.mxu0 %v6016
      %7142 = vmatpush1.bf16.msra.mxu0 %v6015
      %7143 = vmatprep.subr.bf16.mxu0 %v6024
      %7144 = vmatpush1.bf16.msra.mxu0 %v6023
      %7145 = vmatprep.subr.bf16.mxu0 %v6032
      %7146 = vmatpush1.bf16.msra.mxu0 %v6031
      %7147 = vmatprep.subr.bf16.mxu0 %v6040
      %7148 = vmatpush1.bf16.msra.mxu0 %v6039
      %7149 = vmatprep.subr.bf16.mxu0 %v6048
      %7150 = vmatpush1.bf16.msra.mxu0 %v6047
      %7151 = vmatprep.subr.bf16.mxu0 %v6056
      %7152 = vmatpush1.bf16.msra.mxu0 %v6055
      %7153 = vmatprep.subr.bf16.mxu0 %v6064
      %7154 = vmatpush1.bf16.msra.mxu0 %v6063
      %7155 = vmatprep.subr.bf16.mxu0 %v6072
      %7156 = vmatpush1.bf16.msra.mxu0 %v6071
      %7157 = vmatprep.mubr.bf16.mxu0 %v3598
      %7158 = vmatmul.mubr.bf16.gmra.mrb[0].mxu0 %v3597
      %v7159 = vpop.f32.mrb[0].mxu0
      %v7160 = vadd.f32 %v7119, %v7159
      %v7161 = vpop.f32.mrb[0].mxu0
      %v7162 = vadd.f32 %v7121, %v7161
      %v7163 = vpop.f32.mrb[0].mxu0
      %v7164 = vpop.f32.mrb[0].mxu0
      %7165 = vdwg.mxu0
      %7166 = vmatprep.subr.bf16.mxu0 %v6080
      %7167 = vmatpush1.bf16.msra.mxu0 %v6079
      %7168 = vmatprep.subr.bf16.mxu0 %v6088
      %7169 = vmatpush1.bf16.msra.mxu0 %v6087
      %7170 = vmatprep.subr.bf16.mxu0 %v6096
      %7171 = vmatpush1.bf16.msra.mxu0 %v6095
      %7172 = vmatprep.subr.bf16.mxu0 %v6104
      %7173 = vmatpush1.bf16.msra.mxu0 %v6103
      %7174 = vmatprep.subr.bf16.mxu0 %v6112
      %7175 = vmatpush1.bf16.msra.mxu0 %v6111
      %7176 = vmatprep.subr.bf16.mxu0 %v6120
      %7177 = vmatpush1.bf16.msra.mxu0 %v6119
      %7178 = vmatprep.subr.bf16.mxu0 %v6128
      %7179 = vmatpush1.bf16.msra.mxu0 %v6127
      %7180 = vmatprep.subr.bf16.mxu0 %v6136
      %7181 = vmatpush1.bf16.msra.mxu0 %v6135
      %7182 = vmatprep.subr.bf16.mxu0 %v6144
      %7183 = vmatpush1.bf16.msra.mxu0 %v6143
      %7184 = vmatprep.subr.bf16.mxu0 %v6152
      %7185 = vmatpush1.bf16.msra.mxu0 %v6151
      %7186 = vmatprep.subr.bf16.mxu0 %v6160
      %7187 = vmatpush1.bf16.msra.mxu0 %v6159
      %7188 = vmatprep.subr.bf16.mxu0 %v6168
      %7189 = vmatpush1.bf16.msra.mxu0 %v6167
      %7190 = vmatprep.subr.bf16.mxu0 %v6176
      %7191 = vmatpush1.bf16.msra.mxu0 %v6175
      %7192 = vmatprep.subr.bf16.mxu0 %v6184
      %7193 = vmatpush1.bf16.msra.mxu0 %v6183
      %7194 = vmatprep.subr.bf16.mxu0 %v6192
      %7195 = vmatpush1.bf16.msra.mxu0 %v6191
      %7196 = vmatprep.subr.bf16.mxu0 %v6200
      %7197 = vmatpush1.bf16.msra.mxu0 %v6199
      %7198 = vmatprep.mubr.bf16.mxu0 %v3600
      %7199 = vmatmul.mubr.bf16.gmra.mrb[0].mxu0 %v3599
      %v7200 = vpop.f32.mrb[0].mxu0
      %v7201 = vadd.f32 %v7160, %v7200
      %v7202 = vpop.f32.mrb[0].mxu0
      %v7203 = vadd.f32 %v7162, %v7202
      %v7204 = vpop.f32.mrb[0].mxu0
      %v7205 = vpop.f32.mrb[0].mxu0
      %7206 = vdwg.mxu0
      %7207 = vmatprep.subr.bf16.mxu0 %v5698
      %7208 = vmatpush1.bf16.msra.mxu0 %v5697
      %7209 = vmatprep.subr.bf16.mxu0 %v5706
      %7210 = vmatpush1.bf16.msra.mxu0 %v5705
      %7211 = vmatprep.subr.bf16.mxu0 %v5714
      %7212 = vmatpush1.bf16.msra.mxu0 %v5713
      %7213 = vmatprep.subr.bf16.mxu0 %v5722
      %7214 = vmatpush1.bf16.msra.mxu0 %v5721
      %7215 = vmatprep.subr.bf16.mxu0 %v5730
      %7216 = vmatpush1.bf16.msra.mxu0 %v5729
      %7217 = vmatprep.subr.bf16.mxu0 %v5738
      %7218 = vmatpush1.bf16.msra.mxu0 %v5737
      %7219 = vmatprep.subr.bf16.mxu0 %v5746
      %7220 = vmatpush1.bf16.msra.mxu0 %v5745
      %7221 = vmatprep.subr.bf16.mxu0 %v5754
      %7222 = vmatpush1.bf16.msra.mxu0 %v5753
      %7223 = vmatprep.subr.bf16.mxu0 %v5762
      %7224 = vmatpush1.bf16.msra.mxu0 %v5761
      %7225 = vmatprep.subr.bf16.mxu0 %v5770
      %7226 = vmatpush1.bf16.msra.mxu0 %v5769
      %7227 = vmatprep.subr.bf16.mxu0 %v5778
      %7228 = vmatpush1.bf16.msra.mxu0 %v5777
      %7229 = vmatprep.subr.bf16.mxu0 %v5786
      %7230 = vmatpush1.bf16.msra.mxu0 %v5785
      %7231 = vmatprep.subr.bf16.mxu0 %v5794
      %7232 = vmatpush1.bf16.msra.mxu0 %v5793
      %7233 = vmatprep.subr.bf16.mxu0 %v5802
      %7234 = vmatpush1.bf16.msra.mxu0 %v5801
      %7235 = vmatprep.subr.bf16.mxu0 %v5810
      %7236 = vmatpush1.bf16.msra.mxu0 %v5809
      %7237 = vmatprep.subr.bf16.mxu0 %v5818
      %7238 = vmatpush1.bf16.msra.mxu0 %v5817
      %7239 = vmatprep.mubr.bf16.mxu0 %v3594
      %7240 = vmatmul.mubr.bf16.gmra.mrb[0].mxu0 %v3593
      %v7241 = vpop.f32.mrb[0].mxu0
      %v7242 = vadd.f32 %v4142, %v7241
      %v7243 = vpop.f32.mrb[0].mxu0
      %v7244 = vadd.f32 %v4146, %v7243
      %v7245 = vpop.f32.mrb[0].mxu0
      %v7246 = vpop.f32.mrb[0].mxu0
      %7247 = vdwg.mxu0
      %7248 = vmatprep.subr.bf16.mxu0 %v5826
      %7249 = vmatpush1.bf16.msra.mxu0 %v5825
      %7250 = vmatprep.subr.bf16.mxu0 %v5834
      %7251 = vmatpush1.bf16.msra.mxu0 %v5833
      %7252 = vmatprep.subr.bf16.mxu0 %v5842
      %7253 = vmatpush1.bf16.msra.mxu0 %v5841
      %7254 = vmatprep.subr.bf16.mxu0 %v5850
      %7255 = vmatpush1.bf16.msra.mxu0 %v5849
      %7256 = vmatprep.subr.bf16.mxu0 %v5858
      %7257 = vmatpush1.bf16.msra.mxu0 %v5857
      %7258 = vmatprep.subr.bf16.mxu0 %v5866
      %7259 = vmatpush1.bf16.msra.mxu0 %v5865
      %7260 = vmatprep.subr.bf16.mxu0 %v5874
      %7261 = vmatpush1.bf16.msra.mxu0 %v5873
      %7262 = vmatprep.subr.bf16.mxu0 %v5882
      %7263 = vmatpush1.bf16.msra.mxu0 %v5881
      %7264 = vmatprep.subr.bf16.mxu0 %v5890
      %7265 = vmatpush1.bf16.msra.mxu0 %v5889
      %7266 = vmatprep.subr.bf16.mxu0 %v5898
      %7267 = vmatpush1.bf16.msra.mxu0 %v5897
      %7268 = vmatprep.subr.bf16.mxu0 %v5906
      %7269 = vmatpush1.bf16.msra.mxu0 %v5905
      %7270 = vmatprep.subr.bf16.mxu0 %v5914
      %7271 = vmatpush1.bf16.msra.mxu0 %v5913
      %7272 = vmatprep.subr.bf16.mxu0 %v5922
      %7273 = vmatpush1.bf16.msra.mxu0 %v5921
      %7274 = vmatprep.subr.bf16.mxu0 %v5930
      %7275 = vmatpush1.bf16.msra.mxu0 %v5929
      %7276 = vmatprep.subr.bf16.mxu0 %v5938
      %7277 = vmatpush1.bf16.msra.mxu0 %v5937
      %7278 = vmatprep.subr.bf16.mxu0 %v5946
      %7279 = vmatpush1.bf16.msra.mxu0 %v5945
      %7280 = vmatprep.mubr.bf16.mxu0 %v3596
      %7281 = vmatmul.mubr.bf16.gmra.mrb[0].mxu0 %v3595
      %v7282 = vpop.f32.mrb[0].mxu0
      %v7283 = vadd.f32 %v7242, %v7282
      %v7284 = vpop.f32.mrb[0].mxu0
      %v7285 = vadd.f32 %v7244, %v7284
      %v7286 = vpop.f32.mrb[0].mxu0
      %v7287 = vpop.f32.mrb[0].mxu0
      %7288 = vdwg.mxu0
      %7289 = vmatprep.subr.bf16.mxu0 %v5954
      %7290 = vmatpush1.bf16.msra.mxu0 %v5953
      %7291 = vmatprep.subr.bf16.mxu0 %v5962
      %7292 = vmatpush1.bf16.msra.mxu0 %v5961
      %7293 = vmatprep.subr.bf16.mxu0 %v5970
      %7294 = vmatpush1.bf16.msra.mxu0 %v5969
      %7295 = vmatprep.subr.bf16.mxu0 %v5978
      %7296 = vmatpush1.bf16.msra.mxu0 %v5977
      %7297 = vmatprep.subr.bf16.mxu0 %v5986
      %7298 = vmatpush1.bf16.msra.mxu0 %v5985
      %7299 = vmatprep.subr.bf16.mxu0 %v5994
      %7300 = vmatpush1.bf16.msra.mxu0 %v5993
      %7301 = vmatprep.subr.bf16.mxu0 %v6002
      %7302 = vmatpush1.bf16.msra.mxu0 %v6001
      %7303 = vmatprep.subr.bf16.mxu0 %v6010
      %7304 = vmatpush1.bf16.msra.mxu0 %v6009
      %7305 = vmatprep.subr.bf16.mxu0 %v6018
      %7306 = vmatpush1.bf16.msra.mxu0 %v6017
      %7307 = vmatprep.subr.bf16.mxu0 %v6026
      %7308 = vmatpush1.bf16.msra.mxu0 %v6025
      %7309 = vmatprep.subr.bf16.mxu0 %v6034
      %7310 = vmatpush1.bf16.msra.mxu0 %v6033
      %7311 = vmatprep.subr.bf16.mxu0 %v6042
      %7312 = vmatpush1.bf16.msra.mxu0 %v6041
      %7313 = vmatprep.subr.bf16.mxu0 %v6050
      %7314 = vmatpush1.bf16.msra.mxu0 %v6049
      %7315 = vmatprep.subr.bf16.mxu0 %v6058
      %7316 = vmatpush1.bf16.msra.mxu0 %v6057
      %7317 = vmatprep.subr.bf16.mxu0 %v6066
      %7318 = vmatpush1.bf16.msra.mxu0 %v6065
      %7319 = vmatprep.subr.bf16.mxu0 %v6074
      %7320 = vmatpush1.bf16.msra.mxu0 %v6073
      %7321 = vmatprep.mubr.bf16.mxu0 %v3598
      %7322 = vmatmul.mubr.bf16.gmra.mrb[0].mxu0 %v3597
      %v7323 = vpop.f32.mrb[0].mxu0
      %v7324 = vadd.f32 %v7283, %v7323
      %v7325 = vpop.f32.mrb[0].mxu0
      %v7326 = vadd.f32 %v7285, %v7325
      %v7327 = vpop.f32.mrb[0].mxu0
      %v7328 = vpop.f32.mrb[0].mxu0
      %7329 = vdwg.mxu0
      %7330 = vmatprep.subr.bf16.mxu0 %v6082
      %7331 = vmatpush1.bf16.msra.mxu0 %v6081
      %7332 = vmatprep.subr.bf16.mxu0 %v6090
      %7333 = vmatpush1.bf16.msra.mxu0 %v6089
      %7334 = vmatprep.subr.bf16.mxu0 %v6098
      %7335 = vmatpush1.bf16.msra.mxu0 %v6097
      %7336 = vmatprep.subr.bf16.mxu0 %v6106
      %7337 = vmatpush1.bf16.msra.mxu0 %v6105
      %7338 = vmatprep.subr.bf16.mxu0 %v6114
      %7339 = vmatpush1.bf16.msra.mxu0 %v6113
      %7340 = vmatprep.subr.bf16.mxu0 %v6122
      %7341 = vmatpush1.bf16.msra.mxu0 %v6121
      %7342 = vmatprep.subr.bf16.mxu0 %v6130
      %7343 = vmatpush1.bf16.msra.mxu0 %v6129
      %7344 = vmatprep.subr.bf16.mxu0 %v6138
      %7345 = vmatpush1.bf16.msra.mxu0 %v6137
      %7346 = vmatprep.subr.bf16.mxu0 %v6146
      %7347 = vmatpush1.bf16.msra.mxu0 %v6145
      %7348 = vmatprep.subr.bf16.mxu0 %v6154
      %7349 = vmatpush1.bf16.msra.mxu0 %v6153
      %7350 = vmatprep.subr.bf16.mxu0 %v6162
      %7351 = vmatpush1.bf16.msra.mxu0 %v6161
      %7352 = vmatprep.subr.bf16.mxu0 %v6170
      %7353 = vmatpush1.bf16.msra.mxu0 %v6169
      %7354 = vmatprep.subr.bf16.mxu0 %v6178
      %7355 = vmatpush1.bf16.msra.mxu0 %v6177
      %7356 = vmatprep.subr.bf16.mxu0 %v6186
      %7357 = vmatpush1.bf16.msra.mxu0 %v6185
      %7358 = vmatprep.subr.bf16.mxu0 %v6194
      %7359 = vmatpush1.bf16.msra.mxu0 %v6193
      %7360 = vmatprep.subr.bf16.mxu0 %v6202
      %7361 = vmatpush1.bf16.msra.mxu0 %v6201
      %7362 = vmatprep.mubr.bf16.mxu0 %v3600
      %7363 = vmatmul.mubr.bf16.gmra.mrb[0].mxu0 %v3599
      %v7364 = vpop.f32.mrb[0].mxu0
      %v7365 = vadd.f32 %v7324, %v7364
      %v7366 = vpop.f32.mrb[0].mxu0
      %v7367 = vadd.f32 %v7326, %v7366
      %v7368 = vpop.f32.mrb[0].mxu0
      %v7369 = vpop.f32.mrb[0].mxu0
      %7370 = vdwg.mxu0
      %v7371 = vmax.f32 %v6873, 0.0
      %v7372 = vmax.f32 %v6875, 0.0
      %v7373 = vmax.f32 %v7037, 0.0
      %v7374 = vmax.f32 %v7039, 0.0
      %v7375 = vmax.f32 %v7201, 0.0
      %v7376 = vmax.f32 %v7203, 0.0
      %v7377 = vmax.f32 %v7365, 0.0
      %v7378 = vmax.f32 %v7367, 0.0
      %v7379 = vpack.c.bf16 %v7371, %v7371
      %v7380 = vpack.c.bf16 %v7372, %v7372
      %v7381 = vpack.c.bf16 %v7373, %v7373
      %v7382 = vpack.c.bf16 %v7374, %v7374
      %v7383 = vpack.c.bf16 %v7375, %v7375
      %v7384 = vpack.c.bf16 %v7376, %v7376
      %v7385 = vpack.c.bf16 %v7377, %v7377
      %v7386 = vpack.c.bf16 %v7378, %v7378
      %v7387 = vld [vmem:[#allocation12] sm:$0xf]
      %v7388 = vld [vmem:[#allocation12 + $0x4] sm:$0xf]
      %v7389 = vld [vmem:[#allocation12 + $0x8] sm:$0xf]
      %v7390 = vld [vmem:[#allocation12 + $0xc] sm:$0xf]
      %v7391 = vld [vmem:[#allocation12 + $0x10] sm:$0xf]
      %v7392 = vld [vmem:[#allocation12 + $0x14] sm:$0xf]
      %v7393 = vld [vmem:[#allocation12 + $0x18] sm:$0xf]
      %v7394 = vld [vmem:[#allocation12 + $0x1c] sm:$0xf]
      %v7395 = vld [vmem:[#allocation12 + $0x20] sm:$0xf]
      %v7396 = vld [vmem:[#allocation12 + $0x24] sm:$0xf]
      %v7397 = vld [vmem:[#allocation12 + $0x28] sm:$0xf]
      %v7398 = vld [vmem:[#allocation12 + $0x2c] sm:$0xf]
      %v7399 = vld [vmem:[#allocation12 + $0x30] sm:$0xf]
      %v7400 = vld [vmem:[#allocation12 + $0x34] sm:$0xf]
      %v7401 = vld [vmem:[#allocation12 + $0x38] sm:$0xf]
      %v7402 = vld [vmem:[#allocation12 + $0x3c] sm:$0xf]
      %v7403 = vld [vmem:[#allocation12 + $0x40] sm:$0xf]
      %v7404 = vld [vmem:[#allocation12 + $0x44] sm:$0xf]
      %v7405 = vld [vmem:[#allocation12 + $0x48] sm:$0xf]
      %v7406 = vld [vmem:[#allocation12 + $0x4c] sm:$0xf]
      %v7407 = vld [vmem:[#allocation12 + $0x50] sm:$0xf]
      %v7408 = vld [vmem:[#allocation12 + $0x54] sm:$0xf]
      %v7409 = vld [vmem:[#allocation12 + $0x58] sm:$0xf]
      %v7410 = vld [vmem:[#allocation12 + $0x5c] sm:$0xf]
      %v7411 = vld [vmem:[#allocation12 + $0x60] sm:$0xf]
      %v7412 = vld [vmem:[#allocation12 + $0x64] sm:$0xf]
      %v7413 = vld [vmem:[#allocation12 + $0x68] sm:$0xf]
      %v7414 = vld [vmem:[#allocation12 + $0x6c] sm:$0xf]
      %v7415 = vld [vmem:[#allocation12 + $0x70] sm:$0xf]
      %v7416 = vld [vmem:[#allocation12 + $0x74] sm:$0xf]
      %v7417 = vld [vmem:[#allocation12 + $0x78] sm:$0xf]
      %v7418 = vld [vmem:[#allocation12 + $0x7c] sm:$0xf]
      %v7419 = vld [vmem:[#allocation12 + $0x80] sm:$0xf]
      %v7420 = vld [vmem:[#allocation12 + $0x84] sm:$0xf]
      %v7421 = vld [vmem:[#allocation12 + $0x88] sm:$0xf]
      %v7422 = vld [vmem:[#allocation12 + $0x8c] sm:$0xf]
      %v7423 = vld [vmem:[#allocation12 + $0x90] sm:$0xf]
      %v7424 = vld [vmem:[#allocation12 + $0x94] sm:$0xf]
      %v7425 = vld [vmem:[#allocation12 + $0x98] sm:$0xf]
      %v7426 = vld [vmem:[#allocation12 + $0x9c] sm:$0xf]
      %v7427 = vld [vmem:[#allocation12 + $0xa0] sm:$0xf]
      %v7428 = vld [vmem:[#allocation12 + $0xa4] sm:$0xf]
      %v7429 = vld [vmem:[#allocation12 + $0xa8] sm:$0xf]
      %v7430 = vld [vmem:[#allocation12 + $0xac] sm:$0xf]
      %v7431 = vld [vmem:[#allocation12 + $0xb0] sm:$0xf]
      %v7432 = vld [vmem:[#allocation12 + $0xb4] sm:$0xf]
      %v7433 = vld [vmem:[#allocation12 + $0xb8] sm:$0xf]
      %v7434 = vld [vmem:[#allocation12 + $0xbc] sm:$0xf]
      %v7435 = vld [vmem:[#allocation12 + $0xc0] sm:$0xf]
      %v7436 = vld [vmem:[#allocation12 + $0xc4] sm:$0xf]
      %v7437 = vld [vmem:[#allocation12 + $0xc8] sm:$0xf]
      %v7438 = vld [vmem:[#allocation12 + $0xcc] sm:$0xf]
      %v7439 = vld [vmem:[#allocation12 + $0xd0] sm:$0xf]
      %v7440 = vld [vmem:[#allocation12 + $0xd4] sm:$0xf]
      %v7441 = vld [vmem:[#allocation12 + $0xd8] sm:$0xf]
      %v7442 = vld [vmem:[#allocation12 + $0xdc] sm:$0xf]
      %v7443 = vld [vmem:[#allocation12 + $0xe0] sm:$0xf]
      %v7444 = vld [vmem:[#allocation12 + $0xe4] sm:$0xf]
      %v7445 = vld [vmem:[#allocation12 + $0xe8] sm:$0xf]
      %v7446 = vld [vmem:[#allocation12 + $0xec] sm:$0xf]
      %v7447 = vld [vmem:[#allocation12 + $0xf0] sm:$0xf]
      %v7448 = vld [vmem:[#allocation12 + $0xf4] sm:$0xf]
      %v7449 = vld [vmem:[#allocation12 + $0xf8] sm:$0xf]
      %v7450 = vld [vmem:[#allocation12 + $0xfc] sm:$0xf]
      %v7451 = vld [vmem:[#allocation12 + $0x100] sm:$0xf]
      %v7452 = vld [vmem:[#allocation12 + $0x104] sm:$0xf]
      %v7453 = vld [vmem:[#allocation12 + $0x108] sm:$0xf]
      %v7454 = vld [vmem:[#allocation12 + $0x10c] sm:$0xf]
      %v7455 = vld [vmem:[#allocation12 + $0x110] sm:$0xf]
      %v7456 = vld [vmem:[#allocation12 + $0x114] sm:$0xf]
      %v7457 = vld [vmem:[#allocation12 + $0x118] sm:$0xf]
      %v7458 = vld [vmem:[#allocation12 + $0x11c] sm:$0xf]
      %v7459 = vld [vmem:[#allocation12 + $0x120] sm:$0xf]
      %v7460 = vld [vmem:[#allocation12 + $0x124] sm:$0xf]
      %v7461 = vld [vmem:[#allocation12 + $0x128] sm:$0xf]
      %v7462 = vld [vmem:[#allocation12 + $0x12c] sm:$0xf]
      %v7463 = vld [vmem:[#allocation12 + $0x130] sm:$0xf]
      %v7464 = vld [vmem:[#allocation12 + $0x134] sm:$0xf]
      %v7465 = vld [vmem:[#allocation12 + $0x138] sm:$0xf]
      %v7466 = vld [vmem:[#allocation12 + $0x13c] sm:$0xf]
      %v7467 = vld [vmem:[#allocation12 + $0x140] sm:$0xf]
      %v7468 = vld [vmem:[#allocation12 + $0x144] sm:$0xf]
      %v7469 = vld [vmem:[#allocation12 + $0x148] sm:$0xf]
      %v7470 = vld [vmem:[#allocation12 + $0x14c] sm:$0xf]
      %v7471 = vld [vmem:[#allocation12 + $0x150] sm:$0xf]
      %v7472 = vld [vmem:[#allocation12 + $0x154] sm:$0xf]
      %v7473 = vld [vmem:[#allocation12 + $0x158] sm:$0xf]
      %v7474 = vld [vmem:[#allocation12 + $0x15c] sm:$0xf]
      %v7475 = vld [vmem:[#allocation12 + $0x160] sm:$0xf]
      %v7476 = vld [vmem:[#allocation12 + $0x164] sm:$0xf]
      %v7477 = vld [vmem:[#allocation12 + $0x168] sm:$0xf]
      %v7478 = vld [vmem:[#allocation12 + $0x16c] sm:$0xf]
      %v7479 = vld [vmem:[#allocation12 + $0x170] sm:$0xf]
      %v7480 = vld [vmem:[#allocation12 + $0x174] sm:$0xf]
      %v7481 = vld [vmem:[#allocation12 + $0x178] sm:$0xf]
      %v7482 = vld [vmem:[#allocation12 + $0x17c] sm:$0xf]
      %v7483 = vld [vmem:[#allocation12 + $0x180] sm:$0xf]
      %v7484 = vld [vmem:[#allocation12 + $0x184] sm:$0xf]
      %v7485 = vld [vmem:[#allocation12 + $0x188] sm:$0xf]
      %v7486 = vld [vmem:[#allocation12 + $0x18c] sm:$0xf]
      %v7487 = vld [vmem:[#allocation12 + $0x190] sm:$0xf]
      %v7488 = vld [vmem:[#allocation12 + $0x194] sm:$0xf]
      %v7489 = vld [vmem:[#allocation12 + $0x198] sm:$0xf]
      %v7490 = vld [vmem:[#allocation12 + $0x19c] sm:$0xf]
      %v7491 = vld [vmem:[#allocation12 + $0x1a0] sm:$0xf]
      %v7492 = vld [vmem:[#allocation12 + $0x1a4] sm:$0xf]
      %v7493 = vld [vmem:[#allocation12 + $0x1a8] sm:$0xf]
      %v7494 = vld [vmem:[#allocation12 + $0x1ac] sm:$0xf]
      %v7495 = vld [vmem:[#allocation12 + $0x1b0] sm:$0xf]
      %v7496 = vld [vmem:[#allocation12 + $0x1b4] sm:$0xf]
      %v7497 = vld [vmem:[#allocation12 + $0x1b8] sm:$0xf]
      %v7498 = vld [vmem:[#allocation12 + $0x1bc] sm:$0xf]
      %v7499 = vld [vmem:[#allocation12 + $0x1c0] sm:$0xf]
      %v7500 = vld [vmem:[#allocation12 + $0x1c4] sm:$0xf]
      %v7501 = vld [vmem:[#allocation12 + $0x1c8] sm:$0xf]
      %v7502 = vld [vmem:[#allocation12 + $0x1cc] sm:$0xf]
      %v7503 = vld [vmem:[#allocation12 + $0x1d0] sm:$0xf]
      %v7504 = vld [vmem:[#allocation12 + $0x1d4] sm:$0xf]
      %v7505 = vld [vmem:[#allocation12 + $0x1d8] sm:$0xf]
      %v7506 = vld [vmem:[#allocation12 + $0x1dc] sm:$0xf]
      %v7507 = vld [vmem:[#allocation12 + $0x1e0] sm:$0xf]
      %v7508 = vld [vmem:[#allocation12 + $0x1e4] sm:$0xf]
      %v7509 = vld [vmem:[#allocation12 + $0x1e8] sm:$0xf]
      %v7510 = vld [vmem:[#allocation12 + $0x1ec] sm:$0xf]
      %v7511 = vld [vmem:[#allocation12 + $0x1f0] sm:$0xf]
      %v7512 = vld [vmem:[#allocation12 + $0x1f4] sm:$0xf]
      %v7513 = vld [vmem:[#allocation12 + $0x1f8] sm:$0xf]
      %v7514 = vld [vmem:[#allocation12 + $0x1fc] sm:$0xf]
      %v7515 = vld [vmem:[#allocation14] sm:$0x1]
      %v7517 = vlaneseq
      %v7518 = vshrl.u32 %v7517, 7
      %v7519 = vsub.s32 0, %v7518
      %v7520 = vrot.slane %v7515, %v7519
      %v7650 = vunpack.c.l.b16 %v7387
      %v7651 = vunpack.c.l.b16 %v7388
      %v7652 = vunpack.c.l.b16 %v7389
      %v7653 = vunpack.c.l.b16 %v7390
      %v7654 = vunpack.c.l.b16 %v7391
      %v7655 = vunpack.c.l.b16 %v7392
      %v7656 = vunpack.c.l.b16 %v7393
      %v7657 = vunpack.c.l.b16 %v7394
      %v7658 = vunpack.c.l.b16 %v7395
      %v7659 = vunpack.c.l.b16 %v7396
      %v7660 = vunpack.c.l.b16 %v7397
      %v7661 = vunpack.c.l.b16 %v7398
      %v7662 = vunpack.c.l.b16 %v7399
      %v7663 = vunpack.c.l.b16 %v7400
      %v7664 = vunpack.c.l.b16 %v7401
      %v7665 = vunpack.c.l.b16 %v7402
      %v7666 = vunpack.c.l.b16 %v7403
      %v7667 = vunpack.c.l.b16 %v7404
      %v7668 = vunpack.c.l.b16 %v7405
      %v7669 = vunpack.c.l.b16 %v7406
      %v7670 = vunpack.c.l.b16 %v7407
      %v7671 = vunpack.c.l.b16 %v7408
      %v7672 = vunpack.c.l.b16 %v7409
      %v7673 = vunpack.c.l.b16 %v7410
      %v7674 = vunpack.c.l.b16 %v7411
      %v7675 = vunpack.c.l.b16 %v7412
      %v7676 = vunpack.c.l.b16 %v7413
      %v7677 = vunpack.c.l.b16 %v7414
      %v7678 = vunpack.c.l.b16 %v7415
      %v7679 = vunpack.c.l.b16 %v7416
      %v7680 = vunpack.c.l.b16 %v7417
      %v7681 = vunpack.c.l.b16 %v7418
      %v7682 = vunpack.c.l.b16 %v7419
      %v7683 = vunpack.c.l.b16 %v7420
      %v7684 = vunpack.c.l.b16 %v7421
      %v7685 = vunpack.c.l.b16 %v7422
      %v7686 = vunpack.c.l.b16 %v7423
      %v7687 = vunpack.c.l.b16 %v7424
      %v7688 = vunpack.c.l.b16 %v7425
      %v7689 = vunpack.c.l.b16 %v7426
      %v7690 = vunpack.c.l.b16 %v7427
      %v7691 = vunpack.c.l.b16 %v7428
      %v7692 = vunpack.c.l.b16 %v7429
      %v7693 = vunpack.c.l.b16 %v7430
      %v7694 = vunpack.c.l.b16 %v7431
      %v7695 = vunpack.c.l.b16 %v7432
      %v7696 = vunpack.c.l.b16 %v7433
      %v7697 = vunpack.c.l.b16 %v7434
      %v7698 = vunpack.c.l.b16 %v7435
      %v7699 = vunpack.c.l.b16 %v7436
      %v7700 = vunpack.c.l.b16 %v7437
      %v7701 = vunpack.c.l.b16 %v7438
      %v7702 = vunpack.c.l.b16 %v7439
      %v7703 = vunpack.c.l.b16 %v7440
      %v7704 = vunpack.c.l.b16 %v7441
      %v7705 = vunpack.c.l.b16 %v7442
      %v7706 = vunpack.c.l.b16 %v7443
      %v7707 = vunpack.c.l.b16 %v7444
      %v7708 = vunpack.c.l.b16 %v7445
      %v7709 = vunpack.c.l.b16 %v7446
      %v7710 = vunpack.c.l.b16 %v7447
      %v7711 = vunpack.c.l.b16 %v7448
      %v7712 = vunpack.c.l.b16 %v7449
      %v7713 = vunpack.c.l.b16 %v7450
      %v7714 = vunpack.c.l.b16 %v7451
      %v7715 = vunpack.c.l.b16 %v7452
      %v7716 = vunpack.c.l.b16 %v7453
      %v7717 = vunpack.c.l.b16 %v7454
      %v7718 = vunpack.c.l.b16 %v7455
      %v7719 = vunpack.c.l.b16 %v7456
      %v7720 = vunpack.c.l.b16 %v7457
      %v7721 = vunpack.c.l.b16 %v7458
      %v7722 = vunpack.c.l.b16 %v7459
      %v7723 = vunpack.c.l.b16 %v7460
      %v7724 = vunpack.c.l.b16 %v7461
      %v7725 = vunpack.c.l.b16 %v7462
      %v7726 = vunpack.c.l.b16 %v7463
      %v7727 = vunpack.c.l.b16 %v7464
      %v7728 = vunpack.c.l.b16 %v7465
      %v7729 = vunpack.c.l.b16 %v7466
      %v7730 = vunpack.c.l.b16 %v7467
      %v7731 = vunpack.c.l.b16 %v7468
      %v7732 = vunpack.c.l.b16 %v7469
      %v7733 = vunpack.c.l.b16 %v7470
      %v7734 = vunpack.c.l.b16 %v7471
      %v7735 = vunpack.c.l.b16 %v7472
      %v7736 = vunpack.c.l.b16 %v7473
      %v7737 = vunpack.c.l.b16 %v7474
      %v7738 = vunpack.c.l.b16 %v7475
      %v7739 = vunpack.c.l.b16 %v7476
      %v7740 = vunpack.c.l.b16 %v7477
      %v7741 = vunpack.c.l.b16 %v7478
      %v7742 = vunpack.c.l.b16 %v7479
      %v7743 = vunpack.c.l.b16 %v7480
      %v7744 = vunpack.c.l.b16 %v7481
      %v7745 = vunpack.c.l.b16 %v7482
      %v7746 = vunpack.c.l.b16 %v7483
      %v7747 = vunpack.c.l.b16 %v7484
      %v7748 = vunpack.c.l.b16 %v7485
      %v7749 = vunpack.c.l.b16 %v7486
      %v7750 = vunpack.c.l.b16 %v7487
      %v7751 = vunpack.c.l.b16 %v7488
      %v7752 = vunpack.c.l.b16 %v7489
      %v7753 = vunpack.c.l.b16 %v7490
      %v7754 = vunpack.c.l.b16 %v7491
      %v7755 = vunpack.c.l.b16 %v7492
      %v7756 = vunpack.c.l.b16 %v7493
      %v7757 = vunpack.c.l.b16 %v7494
      %v7758 = vunpack.c.l.b16 %v7495
      %v7759 = vunpack.c.l.b16 %v7496
      %v7760 = vunpack.c.l.b16 %v7497
      %v7761 = vunpack.c.l.b16 %v7498
      %v7762 = vunpack.c.l.b16 %v7499
      %v7763 = vunpack.c.l.b16 %v7500
      %v7764 = vunpack.c.l.b16 %v7501
      %v7765 = vunpack.c.l.b16 %v7502
      %v7766 = vunpack.c.l.b16 %v7503
      %v7767 = vunpack.c.l.b16 %v7504
      %v7768 = vunpack.c.l.b16 %v7505
      %v7769 = vunpack.c.l.b16 %v7506
      %v7770 = vunpack.c.l.b16 %v7507
      %v7771 = vunpack.c.l.b16 %v7508
      %v7772 = vunpack.c.l.b16 %v7509
      %v7773 = vunpack.c.l.b16 %v7510
      %v7774 = vunpack.c.l.b16 %v7511
      %v7775 = vunpack.c.l.b16 %v7512
      %v7776 = vunpack.c.l.b16 %v7513
      %v7777 = vunpack.c.l.b16 %v7514
      %v7778 = vpack.c.b16 %v7651, %v7650
      %v7779 = vpack.c.b16 %v7653, %v7652
      %v7780 = vpack.c.b16 %v7655, %v7654
      %v7781 = vpack.c.b16 %v7657, %v7656
      %v7782 = vpack.c.b16 %v7659, %v7658
      %v7783 = vpack.c.b16 %v7661, %v7660
      %v7784 = vpack.c.b16 %v7663, %v7662
      %v7785 = vpack.c.b16 %v7665, %v7664
      %v7786 = vpack.c.b16 %v7667, %v7666
      %v7787 = vpack.c.b16 %v7669, %v7668
      %v7788 = vpack.c.b16 %v7671, %v7670
      %v7789 = vpack.c.b16 %v7673, %v7672
      %v7790 = vpack.c.b16 %v7675, %v7674
      %v7791 = vpack.c.b16 %v7677, %v7676
      %v7792 = vpack.c.b16 %v7679, %v7678
      %v7793 = vpack.c.b16 %v7681, %v7680
      %v7794 = vpack.c.b16 %v7683, %v7682
      %v7795 = vpack.c.b16 %v7685, %v7684
      %v7796 = vpack.c.b16 %v7687, %v7686
      %v7797 = vpack.c.b16 %v7689, %v7688
      %v7798 = vpack.c.b16 %v7691, %v7690
      %v7799 = vpack.c.b16 %v7693, %v7692
      %v7800 = vpack.c.b16 %v7695, %v7694
      %v7801 = vpack.c.b16 %v7697, %v7696
      %v7802 = vpack.c.b16 %v7699, %v7698
      %v7803 = vpack.c.b16 %v7701, %v7700
      %v7804 = vpack.c.b16 %v7703, %v7702
      %v7805 = vpack.c.b16 %v7705, %v7704
      %v7806 = vpack.c.b16 %v7707, %v7706
      %v7807 = vpack.c.b16 %v7709, %v7708
      %v7808 = vpack.c.b16 %v7711, %v7710
      %v7809 = vpack.c.b16 %v7713, %v7712
      %v7810 = vpack.c.b16 %v7715, %v7714
      %v7811 = vpack.c.b16 %v7717, %v7716
      %v7812 = vpack.c.b16 %v7719, %v7718
      %v7813 = vpack.c.b16 %v7721, %v7720
      %v7814 = vpack.c.b16 %v7723, %v7722
      %v7815 = vpack.c.b16 %v7725, %v7724
      %v7816 = vpack.c.b16 %v7727, %v7726
      %v7817 = vpack.c.b16 %v7729, %v7728
      %v7818 = vpack.c.b16 %v7731, %v7730
      %v7819 = vpack.c.b16 %v7733, %v7732
      %v7820 = vpack.c.b16 %v7735, %v7734
      %v7821 = vpack.c.b16 %v7737, %v7736
      %v7822 = vpack.c.b16 %v7739, %v7738
      %v7823 = vpack.c.b16 %v7741, %v7740
      %v7824 = vpack.c.b16 %v7743, %v7742
      %v7825 = vpack.c.b16 %v7745, %v7744
      %v7826 = vpack.c.b16 %v7747, %v7746
      %v7827 = vpack.c.b16 %v7749, %v7748
      %v7828 = vpack.c.b16 %v7751, %v7750
      %v7829 = vpack.c.b16 %v7753, %v7752
      %v7830 = vpack.c.b16 %v7755, %v7754
      %v7831 = vpack.c.b16 %v7757, %v7756
      %v7832 = vpack.c.b16 %v7759, %v7758
      %v7833 = vpack.c.b16 %v7761, %v7760
      %v7834 = vpack.c.b16 %v7763, %v7762
      %v7835 = vpack.c.b16 %v7765, %v7764
      %v7836 = vpack.c.b16 %v7767, %v7766
      %v7837 = vpack.c.b16 %v7769, %v7768
      %v7838 = vpack.c.b16 %v7771, %v7770
      %v7839 = vpack.c.b16 %v7773, %v7772
      %v7840 = vpack.c.b16 %v7775, %v7774
      %v7841 = vpack.c.b16 %v7777, %v7776
      %7906 = vmatprep.subr.bf16.mxu0 0
      %7907 = vmatpush1.bf16.msra.mxu0 %v7778
      %7908 = vmatprep.subr.bf16.mxu0 0
      %7909 = vmatpush1.bf16.msra.mxu0 %v7779
      %7910 = vmatprep.subr.bf16.mxu0 0
      %7911 = vmatpush1.bf16.msra.mxu0 %v7780
      %7912 = vmatprep.subr.bf16.mxu0 0
      %7913 = vmatpush1.bf16.msra.mxu0 %v7781
      %7914 = vmatprep.subr.bf16.mxu0 0
      %7915 = vmatpush1.bf16.msra.mxu0 %v7782
      %7916 = vmatprep.subr.bf16.mxu0 0
      %7917 = vmatpush1.bf16.msra.mxu0 %v7783
      %7918 = vmatprep.subr.bf16.mxu0 0
      %7919 = vmatpush1.bf16.msra.mxu0 %v7784
      %7920 = vmatprep.subr.bf16.mxu0 0
      %7921 = vmatpush1.bf16.msra.mxu0 %v7785
      %7922 = vmatprep.subr.bf16.mxu0 0
      %7923 = vmatpush1.bf16.msra.mxu0 %v7786
      %7924 = vmatprep.subr.bf16.mxu0 0
      %7925 = vmatpush1.bf16.msra.mxu0 %v7787
      %7926 = vmatprep.subr.bf16.mxu0 0
      %7927 = vmatpush1.bf16.msra.mxu0 %v7788
      %7928 = vmatprep.subr.bf16.mxu0 0
      %7929 = vmatpush1.bf16.msra.mxu0 %v7789
      %7930 = vmatprep.subr.bf16.mxu0 0
      %7931 = vmatpush1.bf16.msra.mxu0 %v7790
      %7932 = vmatprep.subr.bf16.mxu0 0
      %7933 = vmatpush1.bf16.msra.mxu0 %v7791
      %7934 = vmatprep.subr.bf16.mxu0 0
      %7935 = vmatpush1.bf16.msra.mxu0 %v7792
      %7936 = vmatprep.subr.bf16.mxu0 0
      %7937 = vmatpush1.bf16.msra.mxu0 %v7793
      %7938 = vmatprep.mubr.bf16.mxu0 %v7380
      %7939 = vmatmul.mubr.bf16.gmra.mrb[0].mxu0 %v7379
      %v7940 = vpop.f32.mrb[0].mxu0
      %v7941 = vadd.f32 %v7520, %v7940
      %v7942 = vpop.f32.mrb[0].mxu0
      %v7943 = vpop.f32.mrb[0].mxu0
      %v7944 = vpop.f32.mrb[0].mxu0
      %7945 = vdwg.mxu0
      %7946 = vmatprep.subr.bf16.mxu0 0
      %7947 = vmatpush1.bf16.msra.mxu0 %v7794
      %7948 = vmatprep.subr.bf16.mxu0 0
      %7949 = vmatpush1.bf16.msra.mxu0 %v7795
      %7950 = vmatprep.subr.bf16.mxu0 0
      %7951 = vmatpush1.bf16.msra.mxu0 %v7796
      %7952 = vmatprep.subr.bf16.mxu0 0
      %7953 = vmatpush1.bf16.msra.mxu0 %v7797
      %7954 = vmatprep.subr.bf16.mxu0 0
      %7955 = vmatpush1.bf16.msra.mxu0 %v7798
      %7956 = vmatprep.subr.bf16.mxu0 0
      %7957 = vmatpush1.bf16.msra.mxu0 %v7799
      %7958 = vmatprep.subr.bf16.mxu0 0
      %7959 = vmatpush1.bf16.msra.mxu0 %v7800
      %7960 = vmatprep.subr.bf16.mxu0 0
      %7961 = vmatpush1.bf16.msra.mxu0 %v7801
      %7962 = vmatprep.subr.bf16.mxu0 0
      %7963 = vmatpush1.bf16.msra.mxu0 %v7802
      %7964 = vmatprep.subr.bf16.mxu0 0
      %7965 = vmatpush1.bf16.msra.mxu0 %v7803
      %7966 = vmatprep.subr.bf16.mxu0 0
      %7967 = vmatpush1.bf16.msra.mxu0 %v7804
      %7968 = vmatprep.subr.bf16.mxu0 0
      %7969 = vmatpush1.bf16.msra.mxu0 %v7805
      %7970 = vmatprep.subr.bf16.mxu0 0
      %7971 = vmatpush1.bf16.msra.mxu0 %v7806
      %7972 = vmatprep.subr.bf16.mxu0 0
      %7973 = vmatpush1.bf16.msra.mxu0 %v7807
      %7974 = vmatprep.subr.bf16.mxu0 0
      %7975 = vmatpush1.bf16.msra.mxu0 %v7808
      %7976 = vmatprep.subr.bf16.mxu0 0
      %7977 = vmatpush1.bf16.msra.mxu0 %v7809
      %7978 = vmatprep.mubr.bf16.mxu0 %v7382
      %7979 = vmatmul.mubr.bf16.gmra.mrb[0].mxu0 %v7381
      %v7980 = vpop.f32.mrb[0].mxu0
      %v7981 = vadd.f32 %v7941, %v7980
      %v7982 = vpop.f32.mrb[0].mxu0
      %v7983 = vpop.f32.mrb[0].mxu0
      %v7984 = vpop.f32.mrb[0].mxu0
      %7985 = vdwg.mxu0
      %7986 = vmatprep.subr.bf16.mxu0 0
      %7987 = vmatpush1.bf16.msra.mxu0 %v7810
      %7988 = vmatprep.subr.bf16.mxu0 0
      %7989 = vmatpush1.bf16.msra.mxu0 %v7811
      %7990 = vmatprep.subr.bf16.mxu0 0
      %7991 = vmatpush1.bf16.msra.mxu0 %v7812
      %7992 = vmatprep.subr.bf16.mxu0 0
      %7993 = vmatpush1.bf16.msra.mxu0 %v7813
      %7994 = vmatprep.subr.bf16.mxu0 0
      %7995 = vmatpush1.bf16.msra.mxu0 %v7814
      %7996 = vmatprep.subr.bf16.mxu0 0
      %7997 = vmatpush1.bf16.msra.mxu0 %v7815
      %7998 = vmatprep.subr.bf16.mxu0 0
      %7999 = vmatpush1.bf16.msra.mxu0 %v7816
      %8000 = vmatprep.subr.bf16.mxu0 0
      %8001 = vmatpush1.bf16.msra.mxu0 %v7817
      %8002 = vmatprep.subr.bf16.mxu0 0
      %8003 = vmatpush1.bf16.msra.mxu0 %v7818
      %8004 = vmatprep.subr.bf16.mxu0 0
      %8005 = vmatpush1.bf16.msra.mxu0 %v7819
      %8006 = vmatprep.subr.bf16.mxu0 0
      %8007 = vmatpush1.bf16.msra.mxu0 %v7820
      %8008 = vmatprep.subr.bf16.mxu0 0
      %8009 = vmatpush1.bf16.msra.mxu0 %v7821
      %8010 = vmatprep.subr.bf16.mxu0 0
      %8011 = vmatpush1.bf16.msra.mxu0 %v7822
      %8012 = vmatprep.subr.bf16.mxu0 0
      %8013 = vmatpush1.bf16.msra.mxu0 %v7823
      %8014 = vmatprep.subr.bf16.mxu0 0
      %8015 = vmatpush1.bf16.msra.mxu0 %v7824
      %8016 = vmatprep.subr.bf16.mxu0 0
      %8017 = vmatpush1.bf16.msra.mxu0 %v7825
      %8018 = vmatprep.mubr.bf16.mxu0 %v7384
      %8019 = vmatmul.mubr.bf16.gmra.mrb[0].mxu0 %v7383
      %v8020 = vpop.f32.mrb[0].mxu0
      %v8021 = vadd.f32 %v7981, %v8020
      %v8022 = vpop.f32.mrb[0].mxu0
      %v8023 = vpop.f32.mrb[0].mxu0
      %v8024 = vpop.f32.mrb[0].mxu0
      %8025 = vdwg.mxu0
      %8026 = vmatprep.subr.bf16.mxu0 0
      %8027 = vmatpush1.bf16.msra.mxu0 %v7826
      %8028 = vmatprep.subr.bf16.mxu0 0
      %8029 = vmatpush1.bf16.msra.mxu0 %v7827
      %8030 = vmatprep.subr.bf16.mxu0 0
      %8031 = vmatpush1.bf16.msra.mxu0 %v7828
      %8032 = vmatprep.subr.bf16.mxu0 0
      %8033 = vmatpush1.bf16.msra.mxu0 %v7829
      %8034 = vmatprep.subr.bf16.mxu0 0
      %8035 = vmatpush1.bf16.msra.mxu0 %v7830
      %8036 = vmatprep.subr.bf16.mxu0 0
      %8037 = vmatpush1.bf16.msra.mxu0 %v7831
      %8038 = vmatprep.subr.bf16.mxu0 0
      %8039 = vmatpush1.bf16.msra.mxu0 %v7832
      %8040 = vmatprep.subr.bf16.mxu0 0
      %8041 = vmatpush1.bf16.msra.mxu0 %v7833
      %8042 = vmatprep.subr.bf16.mxu0 0
      %8043 = vmatpush1.bf16.msra.mxu0 %v7834
      %8044 = vmatprep.subr.bf16.mxu0 0
      %8045 = vmatpush1.bf16.msra.mxu0 %v7835
      %8046 = vmatprep.subr.bf16.mxu0 0
      %8047 = vmatpush1.bf16.msra.mxu0 %v7836
      %8048 = vmatprep.subr.bf16.mxu0 0
      %8049 = vmatpush1.bf16.msra.mxu0 %v7837
      %8050 = vmatprep.subr.bf16.mxu0 0
      %8051 = vmatpush1.bf16.msra.mxu0 %v7838
      %8052 = vmatprep.subr.bf16.mxu0 0
      %8053 = vmatpush1.bf16.msra.mxu0 %v7839
      %8054 = vmatprep.subr.bf16.mxu0 0
      %8055 = vmatpush1.bf16.msra.mxu0 %v7840
      %8056 = vmatprep.subr.bf16.mxu0 0
      %8057 = vmatpush1.bf16.msra.mxu0 %v7841
      %8058 = vmatprep.mubr.bf16.mxu0 %v7386
      %8059 = vmatmul.mubr.bf16.gmra.mrb[0].mxu0 %v7385
      %v8060 = vpop.f32.mrb[0].mxu0
      %v8061 = vadd.f32 %v8021, %v8060
      %v8062 = vpop.f32.mrb[0].mxu0
      %v8063 = vpop.f32.mrb[0].mxu0
      %v8064 = vpop.f32.mrb[0].mxu0
      %8065 = vdwg.mxu0
      %8066 = vst [vmem:[#allocation15] sm:$0xff] %v8061
    $region65: #{tpu_custom_call.1} parent=1 // pred_fallthru
      _
    // Predicated region
    $region66: #{tpu_custom_call.1} parent=1 // pred_check
      _
    $region67: #{tpu_custom_call.1} parent=1 // pred_check_branch
      %8068 = sbr.rel (0) target = $region69
    $region68: #{tpu_custom_call.1} parent=1 // pred_region
      %s8070 = ssub.s32 128, 128
      %8071 = vsyncadd [#allocation5], %s8070
      %s8073 = sshll.u32 [#allocation15], 4
      %s8074 = int_to_ptr.vmem [resolvable:$true] %s8073
      %8076 = dma.vmem_to_hbm [thread:$0]  %s8074, 128, %s7, [#allocation5]
    $region69: #{tpu_custom_call.1} parent=1 // pred_fallthru
      _
    // Predicated region
    $region70: #{tpu_custom_call.1} parent=1 // pred_check
      _
    $region71: #{tpu_custom_call.1} parent=1 // pred_check_branch
      %8078 = sbr.rel (0) target = $region73
    $region72: #{tpu_custom_call.1} parent=1 // pred_region
      %8079 = dma.done [#allocation5], 128
    $region73: #{tpu_custom_call.1} parent=1 // pred_fallthru
      _
    %8080 = vsyncpa [#allocation4], 1
    %8081 = vsyncpa [#allocation7], 1
    %8082 = vsyncpa [#allocation10], 1
    %8083 = vsyncpa [#allocation13], 1
    %8084 = vsyncpa [#allocation5], 1

</llo_original>
